<compile_context>
chip_gen: v7x
topology: tpu7x:2x2x1
jax: 0.10.0
libtpu: 0.0.40
codegen_flags: <defaults>
</compile_context>

<pallas_src>
import jax
import jax.numpy as jnp
from jax import lax
from jax.experimental import pallas as pl
from jax.experimental.pallas import tpu as pltpu


# Static LeNet geometry for 28x28 single-channel input (16*5*5 = 400 features).
_H = 28
_C1, _C1P = 6, 8          # conv1 out channels, padded to a full sublane tile
_C2 = 16
_C1H, _P1H = 26, 13       # conv1 / pool1 spatial
_C2H, _P2H = 11, 5        # conv2 / pool2 spatial (floor pool drops row/col 10)
_NFEAT = _P2H * _P2H * _C2        # 400
_CONV_BT = 4              # images per conv-kernel grid step (tunable)
_FC_BT = 8                # rows per FC-kernel grid step (tunable, multiple of 8)


# ---------------------------------------------------------------------------
# Trace-time weight re-layout helpers
# ---------------------------------------------------------------------------
def _pool_selectors(n_in, n_out, dtype=jnp.float32):
    """Exact 0/1 matrices (n_in, n_out) selecting even / odd columns."""
    i = lax.broadcasted_iota(jnp.int32, (n_in, n_out), 0)
    j = lax.broadcasted_iota(jnp.int32, (n_in, n_out), 1)
    return (i == 2 * j).astype(dtype), (i == 2 * j + 1).astype(dtype)


def _conv1_banded(w1, parity, kw):
    """(104, 28) banded matrix: rows p*8+o, cols = input image rows."""
    w1p = jnp.concatenate(
        [w1[:, 0, :, kw], jnp.zeros((_C1P - _C1, 3), w1.dtype)], axis=0)  # (8,3)
    blocks = []
    for p in range(_P1H):
        i = 2 * p + parity                       # conv1 output row
        blocks.append(jnp.zeros((_C1P, _H), w1.dtype).at[:, i:i + 3].set(w1p))
    return jnp.concatenate(blocks, axis=0)       # (104, 28)


def _conv2_banded(w2, parity, kw):
    """(80, 104) banded matrix: rows q*16+o, cols = pool1 rows (p*8+c)."""
    wkk = jnp.transpose(w2[:, :, :, kw], (0, 2, 1))            # (16, 3, 6): (o,kh,c)
    wkk = jnp.pad(wkk, ((0, 0), (0, 0), (0, _C1P - _C1)))      # (16, 3, 8)
    wkk = wkk.reshape(_C2, 3 * _C1P)                           # col = kh*8 + c
    blocks = []
    for q in range(_P2H):
        i = 2 * q + parity                       # conv2 output row
        blk = jnp.zeros((_C2, _P1H * _C1P), w2.dtype)
        blocks.append(blk.at[:, i * _C1P:i * _C1P + 3 * _C1P].set(wkk))
    return jnp.concatenate(blocks, axis=0)       # (80, 104)


# ---------------------------------------------------------------------------
# Kernel A: conv1 -> pool1 -> conv2 -> pool2, batched over a tile of images.
# Activation layout: (batch, rows=h*channels, width-in-lanes).
# ---------------------------------------------------------------------------
def conv_pool_kernel(x_ref, a1_ref, b1_ref, a2_ref, b2_ref,
                     s1e_ref, s1o_ref, s2e_ref, s2o_ref, o_ref):
    f32 = jnp.float32
    bt = x_ref.shape[0]
    x = x_ref[...]                                           # (bt, 28, 28)

    def bcast(m):                                            # (R,C) -> (bt,R,C)
        return jnp.broadcast_to(m[None], (bt,) + m.shape)

    # ---- conv1 + ReLU (even / odd output rows) ----------------------------
    def conv1_half(par):
        acc = jnp.zeros((bt, _P1H * _C1P, _C1H), f32)
        for kw in range(3):
            acc = acc + jnp.einsum('bor,brw->bow',
                                   bcast(a1_ref[par * 3 + kw]),
                                   x[:, :, kw:kw + _C1H],
                                   preferred_element_type=f32)
        return jnp.maximum(acc + b1_ref[...][None], 0.0)     # (bt, 104, 26)

    rm1 = jnp.maximum(conv1_half(0), conv1_half(1))          # row-pool fused

    # ---- pool1 columns (26 -> 13) via selector matmuls ---------------------
    p1 = jnp.maximum(
        jnp.einsum('brw,bwp->brp', rm1, bcast(s1e_ref[...]),
                   preferred_element_type=f32),
        jnp.einsum('brw,bwp->brp', rm1, bcast(s1o_ref[...]),
                   preferred_element_type=f32))              # (bt, 104, 13)

    # ---- conv2 + ReLU (even / odd output rows) -----------------------------
    def conv2_half(par):
        acc = jnp.zeros((bt, _P2H * _C2, _C2H), f32)
        for kw in range(3):
            acc = acc + jnp.einsum('bor,brw->bow',
                                   bcast(a2_ref[par * 3 + kw]),
                                   p1[:, :, kw:kw + _C2H],
                                   preferred_element_type=f32)
        return jnp.maximum(acc + b2_ref[...][None], 0.0)     # (bt, 80, 11)

    rm2 = jnp.maximum(conv2_half(0), conv2_half(1))          # row-pool fused

    # ---- pool2 columns (11 -> 5), selector on the LEFT so the 80-wide
    #      (channel, pooled-row) axis lands in lanes --------------------------
    p2 = jnp.maximum(
        jnp.einsum('bpw,brw->bpr', bcast(s2e_ref[...]), rm2,
                   preferred_element_type=f32),
        jnp.einsum('bpw,brw->bpr', bcast(s2o_ref[...]), rm2,
                   preferred_element_type=f32))              # (bt, 5, 80)

    o_ref[...] = p2.astype(o_ref.dtype)


# ---------------------------------------------------------------------------
# Kernel B: batched MLP head as real 2-D MXU GEMMs on a lane-dense slab.
# ---------------------------------------------------------------------------
def mlp_kernel(f_ref, wf1_ref, bf1_ref, wf2_ref, bf2_ref, wf3_ref, bf3_ref,
               o_ref):
    f32 = jnp.float32
    h = jnp.dot(f_ref[...], wf1_ref[...], preferred_element_type=f32)
    h = jnp.maximum(h + bf1_ref[...], 0.0)                   # (bt, 120)
    h = jnp.dot(h, wf2_ref[...], preferred_element_type=f32)
    h = jnp.maximum(h + bf2_ref[...], 0.0)                   # (bt, 84)
    h = jnp.dot(h, wf3_ref[...], preferred_element_type=f32) + bf3_ref[...]
    o_ref[...] = h.astype(o_ref.dtype)                       # (bt, 10)


# ---------------------------------------------------------------------------
# Wrapper
# ---------------------------------------------------------------------------
def _full_spec(arr):
    zeros = (0,) * arr.ndim
    return pl.BlockSpec(arr.shape, lambda i, _z=zeros: _z)


def net_forward(x_nchw, params):
    (w1, b1, w2, b2, wf1, bf1, wf2, bf2, wf3, bf3) = params
    n, cin, h, w = x_nchw.shape
    assert cin == 1 and h == _H and w == _H, "Net expects (N, 1, 28, 28) input"
    f32 = jnp.float32
    x = x_nchw.reshape(n, _H, _H).astype(f32)

    pad_to = max(_CONV_BT, _FC_BT)
    n_pad = ((n + pad_to - 1) // pad_to) * pad_to
    if n_pad != n:
        x = jnp.pad(x, ((0, n_pad - n), (0, 0), (0, 0)))

    # ---- one-time (trace-time) weight re-layout ----------------------------
    a1 = jnp.stack([_conv1_banded(w1, par, kw)
                    for par in (0, 1) for kw in range(3)])    # (6, 104, 28)
    a2 = jnp.stack([_conv2_banded(w2, par, kw)
                    for par in (0, 1) for kw in range(3)])    # (6, 80, 104)
    b1rows = jnp.tile(jnp.concatenate([b1, jnp.zeros((_C1P - _C1,), f32)]),
                      _P1H).reshape(_P1H * _C1P, 1)           # (104, 1)
    b2rows = jnp.tile(b2, _P2H).reshape(_P2H * _C2, 1)        # (80, 1)
    s1e, s1o = _pool_selectors(_C1H, _P1H)                    # (26, 13)
    s2e_c, s2o_c = _pool_selectors(_C2H, _P2H)                # (11, 5)
    s2e, s2o = s2e_c.T, s2o_c.T                               # (5, 11)

    # fc1 columns permuted from torch's (c, h, w) flatten to (w, h, c) order
    wf1_arr = jnp.transpose(wf1.reshape(120, _C2, _P2H, _P2H),
                            (3, 2, 1, 0)).reshape(_NFEAT, 120)
    wf2t, wf3t = wf2.T, wf3.T
    bf1r, bf2r, bf3r = bf1.reshape(1, 120), bf2.reshape(1, 84), bf3.reshape(1, 10)

    # ---- kernel A: conv/pool feature extractor -----------------------------
    feat = pl.pallas_call(
        conv_pool_kernel,
        out_shape=jax.ShapeDtypeStruct((n_pad, _P2H, _P2H * _C2), f32),
        grid=(n_pad // _CONV_BT,),
        in_specs=[pl.BlockSpec((_CONV_BT, _H, _H), lambda i: (i, 0, 0)),
                  _full_spec(a1), _full_spec(b1rows),
                  _full_spec(a2), _full_spec(b2rows),
                  _full_spec(s1e), _full_spec(s1o),
                  _full_spec(s2e), _full_spec(s2o)],
        out_specs=pl.BlockSpec((_CONV_BT, _P2H, _P2H * _C2),
                               lambda i: (i, 0, 0)),
        compiler_params=pltpu.CompilerParams(
            dimension_semantics=("parallel",)),
    )(x, a1, b1rows, a2, b2rows, s1e, s1o, s2e, s2o)

    # lane-dense (N, 400) activation slab (feature order matches wf1_arr rows)
    feat2d = feat.reshape(n_pad, _NFEAT)

    # ---- kernel B: batched FC head ------------------------------------------
    logits = pl.pallas_call(
        mlp_kernel,
        out_shape=jax.ShapeDtypeStruct((n_pad, 10), f32),
        grid=(n_pad // _FC_BT,),
        in_specs=[pl.BlockSpec((_FC_BT, _NFEAT), lambda i: (i, 0)),
                  _full_spec(wf1_arr), _full_spec(bf1r),
                  _full_spec(wf2t), _full_spec(bf2r),
                  _full_spec(wf3t), _full_spec(bf3r)],
        out_specs=pl.BlockSpec((_FC_BT, 10), lambda i: (i, 0)),
        compiler_params=pltpu.CompilerParams(
            dimension_semantics=("parallel",)),
    )(feat2d, wf1_arr, bf1r, wf2t, bf2r, wf3t, bf3r)

    return logits[:n]


# ---------------------------------------------------------------------------
# Pure-JAX reference (sanity check)
# ---------------------------------------------------------------------------
def ref_forward(x, params):
    (w1, b1, w2, b2, wf1, bf1, wf2, bf2, wf3, bf3) = params
    dn = ('NCHW', 'OIHW', 'NCHW')
    hp = lax.Precision.HIGHEST

    def pool(v):
        return lax.reduce_window(v, -jnp.inf, lax.max,
                                 (1, 1, 2, 2), (1, 1, 2, 2), 'VALID')

    y = lax.conv_general_dilated(x, w1, (1, 1), 'VALID',
                                 dimension_numbers=dn, precision=hp)
    y = pool(jnp.maximum(y + b1[None, :, None, None], 0.0))
    y = lax.conv_general_dilated(y, w2, (1, 1), 'VALID',
                                 dimension_numbers=dn, precision=hp)
    y = pool(jnp.maximum(y + b2[None, :, None, None], 0.0))
    y = y.reshape(y.shape[0], -1)
    y = jnp.maximum(jnp.dot(y, wf1.T, precision=hp) + bf1, 0.0)
    y = jnp.maximum(jnp.dot(y, wf2.T, precision=hp) + bf2, 0.0)
    return jnp.dot(y, wf3.T, precision=hp) + bf3


# ---------------------------------------------------------------------------
if __name__ == "__main__":
    key = jax.random.PRNGKey(0)
    ks = jax.random.split(key, 11)

    params = (
        jax.random.normal(ks[0], (6, 1, 3, 3), jnp.float32) * 0.2,    # conv1.w
        jax.random.normal(ks[1], (6,), jnp.float32) * 0.1,            # conv1.b
        jax.random.normal(ks[2], (16, 6, 3, 3), jnp.float32) * 0.1,   # conv2.w
        jax.random.normal(ks[3], (16,), jnp.float32) * 0.1,           # conv2.b
        jax.random.normal(ks[4], (120, 400), jnp.float32) * 0.05,     # fc1.w
        jax.random.normal(ks[5], (120,), jnp.float32) * 0.05,         # fc1.b
        jax.random.normal(ks[6], (84, 120), jnp.float32) * 0.05,      # fc2.w
        jax.random.normal(ks[7], (84,), jnp.float32) * 0.05,          # fc2.b
        jax.random.normal(ks[8], (10, 84), jnp.float32) * 0.05,       # fc3.w
        jax.random.normal(ks[9], (10,), jnp.float32) * 0.05,          # fc3.b
    )

    # MNIST-sized input (28x28) so the flatten matches fc1's 400 features.
    x = jax.random.normal(ks[10], (8, 1, 28, 28), jnp.float32)

    fwd = jax.jit(net_forward)
    out = jax.block_until_ready(fwd(x, params))
    assert out.shape == (8, 10) and out.dtype == jnp.float32

    ref = jax.block_until_ready(ref_forward(x, params))
    # 2e-2 tolerance: in-kernel f32 matmuls may be decomposed into bf16 MXU
    # passes under default precision; this guards layout/semantic correctness.
    assert jnp.allclose(out, ref, rtol=2e-2, atol=2e-2), (
        f"mismatch: max abs err = {jnp.max(jnp.abs(out - ref))}")

    print("KERNEL_OK")
</pallas_src>

<mosaic_0001>
module attributes {stable_mosaic.version = 11 : i64} {
  func.func @mlp_kernel(%arg0: i32, %arg1: memref<8x400xf32, #tpu.memory_space<vmem>>, %arg2: memref<400x120xf32, #tpu.memory_space<vmem>>, %arg3: memref<1x120xf32, #tpu.memory_space<vmem>>, %arg4: memref<120x84xf32, #tpu.memory_space<vmem>>, %arg5: memref<1x84xf32, #tpu.memory_space<vmem>>, %arg6: memref<84x10xf32, #tpu.memory_space<vmem>>, %arg7: memref<1x10xf32, #tpu.memory_space<vmem>>, %arg8: memref<8x10xf32, #tpu.memory_space<vmem>>) attributes {dimension_semantics = [#tpu.dimension_semantics<parallel>], iteration_bounds = array<i64: 1>, scalar_prefetch = 0 : i64, scratch_operands = 0 : i64, tpu.core_type = #tpu.core_type<tc>, window_params = [{transform_indices = @transform_0, window_bounds = array<i64: 8, 400>}, {pipeline_mode = #tpu.pipeline_mode<synchronous>, transform_indices = @transform_1, window_bounds = array<i64: 400, 120>}, {pipeline_mode = #tpu.pipeline_mode<synchronous>, transform_indices = @transform_2, window_bounds = array<i64: 1, 120>}, {pipeline_mode = #tpu.pipeline_mode<synchronous>, transform_indices = @transform_3, window_bounds = array<i64: 120, 84>}, {pipeline_mode = #tpu.pipeline_mode<synchronous>, transform_indices = @transform_4, window_bounds = array<i64: 1, 84>}, {pipeline_mode = #tpu.pipeline_mode<synchronous>, transform_indices = @transform_5, window_bounds = array<i64: 84, 10>}, {pipeline_mode = #tpu.pipeline_mode<synchronous>, transform_indices = @transform_6, window_bounds = array<i64: 1, 10>}, {transform_indices = @transform_7, window_bounds = array<i64: 8, 10>}]} {
    %c0 = arith.constant 0 : index
    %c0_0 = arith.constant 0 : index
    %0 = vector.load %arg1[%c0, %c0_0] : memref<8x400xf32, #tpu.memory_space<vmem>>, vector<8x400xf32>
    %c0_1 = arith.constant 0 : index
    %c0_2 = arith.constant 0 : index
    %1 = vector.load %arg2[%c0_1, %c0_2] : memref<400x120xf32, #tpu.memory_space<vmem>>, vector<400x120xf32>
    %cst = arith.constant dense<0.000000e+00> : vector<8x120xf32>
    %2 = tpu.matmul %0, %1, %cst {dimension_numbers = #tpu.dot_dimension_numbers<[1], [0], [0], [1], [0, 0, 1, 1], [], []>} : vector<8x400xf32>, vector<400x120xf32>, vector<8x120xf32> -> vector<8x120xf32>
    %c0_3 = arith.constant 0 : index
    %c0_4 = arith.constant 0 : index
    %3 = vector.load %arg3[%c0_3, %c0_4] : memref<1x120xf32, #tpu.memory_space<vmem>>, vector<1x120xf32>
    %4 = vector.broadcast %3 : vector<1x120xf32> to vector<8x120xf32>
    %5 = arith.addf %2, %4 : vector<8x120xf32>
    %cst_5 = arith.constant 0.000000e+00 : f32
    %6 = vector.broadcast %cst_5 : f32 to vector<8x120xf32>
    %7 = arith.maximumf %5, %6 : vector<8x120xf32>
    %c0_6 = arith.constant 0 : index
    %c0_7 = arith.constant 0 : index
    %8 = vector.load %arg4[%c0_6, %c0_7] : memref<120x84xf32, #tpu.memory_space<vmem>>, vector<120x84xf32>
    %cst_8 = arith.constant dense<0.000000e+00> : vector<8x84xf32>
    %9 = tpu.matmul %7, %8, %cst_8 {dimension_numbers = #tpu.dot_dimension_numbers<[1], [0], [0], [1], [0, 0, 1, 1], [], []>} : vector<8x120xf32>, vector<120x84xf32>, vector<8x84xf32> -> vector<8x84xf32>
    %c0_9 = arith.constant 0 : index
    %c0_10 = arith.constant 0 : index
    %10 = vector.load %arg5[%c0_9, %c0_10] : memref<1x84xf32, #tpu.memory_space<vmem>>, vector<1x84xf32>
    %11 = vector.broadcast %10 : vector<1x84xf32> to vector<8x84xf32>
    %12 = arith.addf %9, %11 : vector<8x84xf32>
    %cst_11 = arith.constant 0.000000e+00 : f32
    %13 = vector.broadcast %cst_11 : f32 to vector<8x84xf32>
    %14 = arith.maximumf %12, %13 : vector<8x84xf32>
    %c0_12 = arith.constant 0 : index
    %c0_13 = arith.constant 0 : index
    %15 = vector.load %arg6[%c0_12, %c0_13] : memref<84x10xf32, #tpu.memory_space<vmem>>, vector<84x10xf32>
    %cst_14 = arith.constant dense<0.000000e+00> : vector<8x10xf32>
    %16 = tpu.matmul %14, %15, %cst_14 {dimension_numbers = #tpu.dot_dimension_numbers<[1], [0], [0], [1], [0, 0, 1, 1], [], []>} : vector<8x84xf32>, vector<84x10xf32>, vector<8x10xf32> -> vector<8x10xf32>
    %c0_15 = arith.constant 0 : index
    %c0_16 = arith.constant 0 : index
    %17 = vector.load %arg7[%c0_15, %c0_16] : memref<1x10xf32, #tpu.memory_space<vmem>>, vector<1x10xf32>
    %18 = vector.broadcast %17 : vector<1x10xf32> to vector<8x10xf32>
    %19 = arith.addf %16, %18 : vector<8x10xf32>
    %c0_17 = arith.constant 0 : index
    %c0_18 = arith.constant 0 : index
    %20 = vector.load %arg8[%c0_17, %c0_18] : memref<8x10xf32, #tpu.memory_space<vmem>>, vector<8x10xf32>
    tpu.vector_store %arg8[%c0_17, %c0_18], %19 {strides = array<i32>} : memref<8x10xf32, #tpu.memory_space<vmem>>, vector<8x10xf32>,
    return
  }
  func.func @transform_0(%arg0: i32) -> (i32, i32) {
    %c0_i32 = arith.constant 0 : i32
    %c0_i32_0 = arith.constant 0 : i32
    return %arg0, %c0_i32 : i32, i32
  }
  func.func @transform_1(%arg0: i32) -> (i32, i32) {
    %c0_i32 = arith.constant 0 : i32
    %c0_i32_0 = arith.constant 0 : i32
    %c0_i32_1 = arith.constant 0 : i32
    return %c0_i32, %c0_i32_0 : i32, i32
  }
  func.func @transform_2(%arg0: i32) -> (i32, i32) {
    %c0_i32 = arith.constant 0 : i32
    %c0_i32_0 = arith.constant 0 : i32
    %c0_i32_1 = arith.constant 0 : i32
    return %c0_i32, %c0_i32_0 : i32, i32
  }
  func.func @transform_3(%arg0: i32) -> (i32, i32) {
    %c0_i32 = arith.constant 0 : i32
    %c0_i32_0 = arith.constant 0 : i32
    %c0_i32_1 = arith.constant 0 : i32
    return %c0_i32, %c0_i32_0 : i32, i32
  }
  func.func @transform_4(%arg0: i32) -> (i32, i32) {
    %c0_i32 = arith.constant 0 : i32
    %c0_i32_0 = arith.constant 0 : i32
    %c0_i32_1 = arith.constant 0 : i32
    return %c0_i32, %c0_i32_0 : i32, i32
  }
  func.func @transform_5(%arg0: i32) -> (i32, i32) {
    %c0_i32 = arith.constant 0 : i32
    %c0_i32_0 = arith.constant 0 : i32
    %c0_i32_1 = arith.constant 0 : i32
    return %c0_i32, %c0_i32_0 : i32, i32
  }
  func.func @transform_6(%arg0: i32) -> (i32, i32) {
    %c0_i32 = arith.constant 0 : i32
    %c0_i32_0 = arith.constant 0 : i32
    %c0_i32_1 = arith.constant 0 : i32
    return %c0_i32, %c0_i32_0 : i32, i32
  }
  func.func @transform_7(%arg0: i32) -> (i32, i32) {
    %c0_i32 = arith.constant 0 : i32
    %c0_i32_0 = arith.constant 0 : i32
    return %arg0, %c0_i32 : i32, i32
  }
}

module attributes {stable_mosaic.version = 11 : i64} {
  func.func @conv_pool_kernel(%arg0: i32, %arg1: memref<4x28x28xf32, #tpu.memory_space<vmem>>, %arg2: memref<6x104x28xf32, #tpu.memory_space<vmem>>, %arg3: memref<104x1xf32, #tpu.memory_space<vmem>>, %arg4: memref<6x80x104xf32, #tpu.memory_space<vmem>>, %arg5: memref<80x1xf32, #tpu.memory_space<vmem>>, %arg6: memref<26x13xf32, #tpu.memory_space<vmem>>, %arg7: memref<26x13xf32, #tpu.memory_space<vmem>>, %arg8: memref<5x11xf32, #tpu.memory_space<vmem>>, %arg9: memref<5x11xf32, #tpu.memory_space<vmem>>, %arg10: memref<4x5x80xf32, #tpu.memory_space<vmem>>) attributes {dimension_semantics = [#tpu.dimension_semantics<parallel>], iteration_bounds = array<i64: 2>, scalar_prefetch = 0 : i64, scratch_operands = 0 : i64, tpu.core_type = #tpu.core_type<tc>, window_params = [{transform_indices = @transform_0, window_bounds = array<i64: 4, 28, 28>}, {pipeline_mode = #tpu.pipeline_mode<synchronous>, transform_indices = @transform_1, window_bounds = array<i64: 6, 104, 28>}, {pipeline_mode = #tpu.pipeline_mode<synchronous>, transform_indices = @transform_2, window_bounds = array<i64: 104, 1>}, {pipeline_mode = #tpu.pipeline_mode<synchronous>, transform_indices = @transform_3, window_bounds = array<i64: 6, 80, 104>}, {pipeline_mode = #tpu.pipeline_mode<synchronous>, transform_indices = @transform_4, window_bounds = array<i64: 80, 1>}, {pipeline_mode = #tpu.pipeline_mode<synchronous>, transform_indices = @transform_5, window_bounds = array<i64: 26, 13>}, {pipeline_mode = #tpu.pipeline_mode<synchronous>, transform_indices = @transform_6, window_bounds = array<i64: 26, 13>}, {pipeline_mode = #tpu.pipeline_mode<synchronous>, transform_indices = @transform_7, window_bounds = array<i64: 5, 11>}, {pipeline_mode = #tpu.pipeline_mode<synchronous>, transform_indices = @transform_8, window_bounds = array<i64: 5, 11>}, {transform_indices = @transform_9, window_bounds = array<i64: 4, 5, 80>}]} {
    %c0 = arith.constant 0 : index
    %c0_0 = arith.constant 0 : index
    %c0_1 = arith.constant 0 : index
    %0 = vector.load %arg1[%c0, %c0_0, %c0_1] : memref<4x28x28xf32, #tpu.memory_space<vmem>>, vector<4x28x28xf32>
    %cst = arith.constant 0.000000e+00 : f32
    %1 = vector.broadcast %cst : f32 to vector<4x104x26xf32>
    %c0_2 = arith.constant 0 : index
    %c0_3 = arith.constant 0 : index
    %c0_4 = arith.constant 0 : index
    %2 = vector.load %arg2[%c0_2, %c0_3, %c0_4] : memref<6x104x28xf32, #tpu.memory_space<vmem>>, vector<1x104x28xf32>
    %3 = vector.shape_cast %2 : vector<1x104x28xf32> to vector<104x28xf32>
    %4 = vector.shape_cast %3 : vector<104x28xf32> to vector<1x104x28xf32>
    %5 = vector.shape_cast %4 : vector<1x104x28xf32> to vector<1x104x28xf32>
    %6 = vector.broadcast %5 : vector<1x104x28xf32> to vector<4x104x28xf32>
    %7 = vector.extract_strided_slice %0 {offsets = [0, 0, 0], sizes = [4, 28, 26], strides = [1, 1, 1]} : vector<4x28x28xf32> to vector<4x28x26xf32>
    "tpu.trace_start"() <{level = 10 : i32, message = "bor,brw->bow"}> : () -> ()
    %cst_5 = arith.constant dense<0.000000e+00> : vector<4x104x26xf32>
    %8 = tpu.matmul %6, %7, %cst_5 {dimension_numbers = #tpu.dot_dimension_numbers<[2], [1], [1], [2], [0, 0, 0, 1, 1, 2], [0], [0]>} : vector<4x104x28xf32>, vector<4x28x26xf32>, vector<4x104x26xf32> -> vector<4x104x26xf32>
    "tpu.trace_stop"() : () -> ()
    %9 = arith.addf %1, %8 : vector<4x104x26xf32>
    %c1 = arith.constant 1 : index
    %c0_6 = arith.constant 0 : index
    %c0_7 = arith.constant 0 : index
    %10 = vector.load %arg2[%c1, %c0_6, %c0_7] : memref<6x104x28xf32, #tpu.memory_space<vmem>>, vector<1x104x28xf32>
    %11 = vector.shape_cast %10 : vector<1x104x28xf32> to vector<104x28xf32>
    %12 = vector.shape_cast %11 : vector<104x28xf32> to vector<1x104x28xf32>
    %13 = vector.shape_cast %12 : vector<1x104x28xf32> to vector<1x104x28xf32>
    %14 = vector.broadcast %13 : vector<1x104x28xf32> to vector<4x104x28xf32>
    %15 = vector.extract_strided_slice %0 {offsets = [0, 0, 1], sizes = [4, 28, 26], strides = [1, 1, 1]} : vector<4x28x28xf32> to vector<4x28x26xf32>
    "tpu.trace_start"() <{level = 10 : i32, message = "bor,brw->bow"}> : () -> ()
    %cst_8 = arith.constant dense<0.000000e+00> : vector<4x104x26xf32>
    %16 = tpu.matmul %14, %15, %cst_8 {dimension_numbers = #tpu.dot_dimension_numbers<[2], [1], [1], [2], [0, 0, 0, 1, 1, 2], [0], [0]>} : vector<4x104x28xf32>, vector<4x28x26xf32>, vector<4x104x26xf32> -> vector<4x104x26xf32>
    "tpu.trace_stop"() : () -> ()
    %17 = arith.addf %9, %16 : vector<4x104x26xf32>
    %c2 = arith.constant 2 : index
    %c0_9 = arith.constant 0 : index
    %c0_10 = arith.constant 0 : index
    %18 = vector.load %arg2[%c2, %c0_9, %c0_10] : memref<6x104x28xf32, #tpu.memory_space<vmem>>, vector<1x104x28xf32>
    %19 = vector.shape_cast %18 : vector<1x104x28xf32> to vector<104x28xf32>
    %20 = vector.shape_cast %19 : vector<104x28xf32> to vector<1x104x28xf32>
    %21 = vector.shape_cast %20 : vector<1x104x28xf32> to vector<1x104x28xf32>
    %22 = vector.broadcast %21 : vector<1x104x28xf32> to vector<4x104x28xf32>
    %23 = vector.extract_strided_slice %0 {offsets = [0, 0, 2], sizes = [4, 28, 26], strides = [1, 1, 1]} : vector<4x28x28xf32> to vector<4x28x26xf32>
    "tpu.trace_start"() <{level = 10 : i32, message = "bor,brw->bow"}> : () -> ()
    %cst_11 = arith.constant dense<0.000000e+00> : vector<4x104x26xf32>
    %24 = tpu.matmul %22, %23, %cst_11 {dimension_numbers = #tpu.dot_dimension_numbers<[2], [1], [1], [2], [0, 0, 0, 1, 1, 2], [0], [0]>} : vector<4x104x28xf32>, vector<4x28x26xf32>, vector<4x104x26xf32> -> vector<4x104x26xf32>
    "tpu.trace_stop"() : () -> ()
    %25 = arith.addf %17, %24 : vector<4x104x26xf32>
    %c0_12 = arith.constant 0 : index
    %c0_13 = arith.constant 0 : index
    %26 = vector.load %arg3[%c0_12, %c0_13] : memref<104x1xf32, #tpu.memory_space<vmem>>, vector<104x1xf32>
    %27 = vector.shape_cast %26 : vector<104x1xf32> to vector<1x104x1xf32>
    %28 = vector.broadcast %27 : vector<1x104x1xf32> to vector<4x104x26xf32>
    %29 = arith.addf %25, %28 : vector<4x104x26xf32>
    %cst_14 = arith.constant 0.000000e+00 : f32
    %30 = vector.broadcast %cst_14 : f32 to vector<4x104x26xf32>
    %31 = arith.maximumf %29, %30 : vector<4x104x26xf32>
    %cst_15 = arith.constant 0.000000e+00 : f32
    %32 = vector.broadcast %cst_15 : f32 to vector<4x104x26xf32>
    %c3 = arith.constant 3 : index
    %c0_16 = arith.constant 0 : index
    %c0_17 = arith.constant 0 : index
    %33 = vector.load %arg2[%c3, %c0_16, %c0_17] : memref<6x104x28xf32, #tpu.memory_space<vmem>>, vector<1x104x28xf32>
    %34 = vector.shape_cast %33 : vector<1x104x28xf32> to vector<104x28xf32>
    %35 = vector.shape_cast %34 : vector<104x28xf32> to vector<1x104x28xf32>
    %36 = vector.shape_cast %35 : vector<1x104x28xf32> to vector<1x104x28xf32>
    %37 = vector.broadcast %36 : vector<1x104x28xf32> to vector<4x104x28xf32>
    %38 = vector.extract_strided_slice %0 {offsets = [0, 0, 0], sizes = [4, 28, 26], strides = [1, 1, 1]} : vector<4x28x28xf32> to vector<4x28x26xf32>
    "tpu.trace_start"() <{level = 10 : i32, message = "bor,brw->bow"}> : () -> ()
    %cst_18 = arith.constant dense<0.000000e+00> : vector<4x104x26xf32>
    %39 = tpu.matmul %37, %38, %cst_18 {dimension_numbers = #tpu.dot_dimension_numbers<[2], [1], [1], [2], [0, 0, 0, 1, 1, 2], [0], [0]>} : vector<4x104x28xf32>, vector<4x28x26xf32>, vector<4x104x26xf32> -> vector<4x104x26xf32>
    "tpu.trace_stop"() : () -> ()
    %40 = arith.addf %32, %39 : vector<4x104x26xf32>
    %c4 = arith.constant 4 : index
    %c0_19 = arith.constant 0 : index
    %c0_20 = arith.constant 0 : index
    %41 = vector.load %arg2[%c4, %c0_19, %c0_20] : memref<6x104x28xf32, #tpu.memory_space<vmem>>, vector<1x104x28xf32>
    %42 = vector.shape_cast %41 : vector<1x104x28xf32> to vector<104x28xf32>
    %43 = vector.shape_cast %42 : vector<104x28xf32> to vector<1x104x28xf32>
    %44 = vector.shape_cast %43 : vector<1x104x28xf32> to vector<1x104x28xf32>
    %45 = vector.broadcast %44 : vector<1x104x28xf32> to vector<4x104x28xf32>
    %46 = vector.extract_strided_slice %0 {offsets = [0, 0, 1], sizes = [4, 28, 26], strides = [1, 1, 1]} : vector<4x28x28xf32> to vector<4x28x26xf32>
    "tpu.trace_start"() <{level = 10 : i32, message = "bor,brw->bow"}> : () -> ()
    %cst_21 = arith.constant dense<0.000000e+00> : vector<4x104x26xf32>
    %47 = tpu.matmul %45, %46, %cst_21 {dimension_numbers = #tpu.dot_dimension_numbers<[2], [1], [1], [2], [0, 0, 0, 1, 1, 2], [0], [0]>} : vector<4x104x28xf32>, vector<4x28x26xf32>, vector<4x104x26xf32> -> vector<4x104x26xf32>
    "tpu.trace_stop"() : () -> ()
    %48 = arith.addf %40, %47 : vector<4x104x26xf32>
    %c5 = arith.constant 5 : index
    %c0_22 = arith.constant 0 : index
    %c0_23 = arith.constant 0 : index
    %49 = vector.load %arg2[%c5, %c0_22, %c0_23] : memref<6x104x28xf32, #tpu.memory_space<vmem>>, vector<1x104x28xf32>
    %50 = vector.shape_cast %49 : vector<1x104x28xf32> to vector<104x28xf32>
    %51 = vector.shape_cast %50 : vector<104x28xf32> to vector<1x104x28xf32>
    %52 = vector.shape_cast %51 : vector<1x104x28xf32> to vector<1x104x28xf32>
    %53 = vector.broadcast %52 : vector<1x104x28xf32> to vector<4x104x28xf32>
    %54 = vector.extract_strided_slice %0 {offsets = [0, 0, 2], sizes = [4, 28, 26], strides = [1, 1, 1]} : vector<4x28x28xf32> to vector<4x28x26xf32>
    "tpu.trace_start"() <{level = 10 : i32, message = "bor,brw->bow"}> : () -> ()
    %cst_24 = arith.constant dense<0.000000e+00> : vector<4x104x26xf32>
    %55 = tpu.matmul %53, %54, %cst_24 {dimension_numbers = #tpu.dot_dimension_numbers<[2], [1], [1], [2], [0, 0, 0, 1, 1, 2], [0], [0]>} : vector<4x104x28xf32>, vector<4x28x26xf32>, vector<4x104x26xf32> -> vector<4x104x26xf32>
    "tpu.trace_stop"() : () -> ()
    %56 = arith.addf %48, %55 : vector<4x104x26xf32>
    %c0_25 = arith.constant 0 : index
    %c0_26 = arith.constant 0 : index
    %57 = vector.load %arg3[%c0_25, %c0_26] : memref<104x1xf32, #tpu.memory_space<vmem>>, vector<104x1xf32>
    %58 = vector.shape_cast %57 : vector<104x1xf32> to vector<1x104x1xf32>
    %59 = vector.broadcast %58 : vector<1x104x1xf32> to vector<4x104x26xf32>
    %60 = arith.addf %56, %59 : vector<4x104x26xf32>
    %cst_27 = arith.constant 0.000000e+00 : f32
    %61 = vector.broadcast %cst_27 : f32 to vector<4x104x26xf32>
    %62 = arith.maximumf %60, %61 : vector<4x104x26xf32>
    %63 = arith.maximumf %31, %62 : vector<4x104x26xf32>
    %c0_28 = arith.constant 0 : index
    %c0_29 = arith.constant 0 : index
    %64 = vector.load %arg6[%c0_28, %c0_29] : memref<26x13xf32, #tpu.memory_space<vmem>>, vector<26x13xf32>
    %65 = vector.shape_cast %64 : vector<26x13xf32> to vector<1x26x13xf32>
    %66 = vector.shape_cast %65 : vector<1x26x13xf32> to vector<1x26x13xf32>
    %67 = vector.broadcast %66 : vector<1x26x13xf32> to vector<4x26x13xf32>
    "tpu.trace_start"() <{level = 10 : i32, message = "brw,bwp->brp"}> : () -> ()
    %cst_30 = arith.constant dense<0.000000e+00> : vector<4x104x13xf32>
    %68 = tpu.matmul %63, %67, %cst_30 {dimension_numbers = #tpu.dot_dimension_numbers<[2], [1], [1], [2], [0, 0, 0, 1, 1, 2], [0], [0]>} : vector<4x104x26xf32>, vector<4x26x13xf32>, vector<4x104x13xf32> -> vector<4x104x13xf32>
    "tpu.trace_stop"() : () -> ()
    %c0_31 = arith.constant 0 : index
    %c0_32 = arith.constant 0 : index
    %69 = vector.load %arg7[%c0_31, %c0_32] : memref<26x13xf32, #tpu.memory_space<vmem>>, vector<26x13xf32>
    %70 = vector.shape_cast %69 : vector<26x13xf32> to vector<1x26x13xf32>
    %71 = vector.shape_cast %70 : vector<1x26x13xf32> to vector<1x26x13xf32>
    %72 = vector.broadcast %71 : vector<1x26x13xf32> to vector<4x26x13xf32>
    "tpu.trace_start"() <{level = 10 : i32, message = "brw,bwp->brp"}> : () -> ()
    %cst_33 = arith.constant dense<0.000000e+00> : vector<4x104x13xf32>
    %73 = tpu.matmul %63, %72, %cst_33 {dimension_numbers = #tpu.dot_dimension_numbers<[2], [1], [1], [2], [0, 0, 0, 1, 1, 2], [0], [0]>} : vector<4x104x26xf32>, vector<4x26x13xf32>, vector<4x104x13xf32> -> vector<4x104x13xf32>
    "tpu.trace_stop"() : () -> ()
    %74 = arith.maximumf %68, %73 : vector<4x104x13xf32>
    %cst_34 = arith.constant 0.000000e+00 : f32
    %75 = vector.broadcast %cst_34 : f32 to vector<4x80x11xf32>
    %c0_35 = arith.constant 0 : index
    %c0_36 = arith.constant 0 : index
    %c0_37 = arith.constant 0 : index
    %76 = vector.load %arg4[%c0_35, %c0_36, %c0_37] : memref<6x80x104xf32, #tpu.memory_space<vmem>>, vector<1x80x104xf32>
    %77 = vector.shape_cast %76 : vector<1x80x104xf32> to vector<80x104xf32>
    %78 = vector.shape_cast %77 : vector<80x104xf32> to vector<1x80x104xf32>
    %79 = vector.shape_cast %78 : vector<1x80x104xf32> to vector<1x80x104xf32>
    %80 = vector.broadcast %79 : vector<1x80x104xf32> to vector<4x80x104xf32>
    %81 = vector.extract_strided_slice %74 {offsets = [0, 0, 0], sizes = [4, 104, 11], strides = [1, 1, 1]} : vector<4x104x13xf32> to vector<4x104x11xf32>
    "tpu.trace_start"() <{level = 10 : i32, message = "bor,brw->bow"}> : () -> ()
    %cst_38 = arith.constant dense<0.000000e+00> : vector<4x80x11xf32>
    %82 = tpu.matmul %80, %81, %cst_38 {dimension_numbers = #tpu.dot_dimension_numbers<[2], [1], [1], [2], [0, 0, 0, 1, 1, 2], [0], [0]>} : vector<4x80x104xf32>, vector<4x104x11xf32>, vector<4x80x11xf32> -> vector<4x80x11xf32>
    "tpu.trace_stop"() : () -> ()
    %83 = arith.addf %75, %82 : vector<4x80x11xf32>
    %c1_39 = arith.constant 1 : index
    %c0_40 = arith.constant 0 : index
    %c0_41 = arith.constant 0 : index
    %84 = vector.load %arg4[%c1_39, %c0_40, %c0_41] : memref<6x80x104xf32, #tpu.memory_space<vmem>>, vector<1x80x104xf32>
    %85 = vector.shape_cast %84 : vector<1x80x104xf32> to vector<80x104xf32>
    %86 = vector.shape_cast %85 : vector<80x104xf32> to vector<1x80x104xf32>
    %87 = vector.shape_cast %86 : vector<1x80x104xf32> to vector<1x80x104xf32>
    %88 = vector.broadcast %87 : vector<1x80x104xf32> to vector<4x80x104xf32>
    %89 = vector.extract_strided_slice %74 {offsets = [0, 0, 1], sizes = [4, 104, 11], strides = [1, 1, 1]} : vector<4x104x13xf32> to vector<4x104x11xf32>
    "tpu.trace_start"() <{level = 10 : i32, message = "bor,brw->bow"}> : () -> ()
    %cst_42 = arith.constant dense<0.000000e+00> : vector<4x80x11xf32>
    %90 = tpu.matmul %88, %89, %cst_42 {dimension_numbers = #tpu.dot_dimension_numbers<[2], [1], [1], [2], [0, 0, 0, 1, 1, 2], [0], [0]>} : vector<4x80x104xf32>, vector<4x104x11xf32>, vector<4x80x11xf32> -> vector<4x80x11xf32>
    "tpu.trace_stop"() : () -> ()
    %91 = arith.addf %83, %90 : vector<4x80x11xf32>
    %c2_43 = arith.constant 2 : index
    %c0_44 = arith.constant 0 : index
    %c0_45 = arith.constant 0 : index
    %92 = vector.load %arg4[%c2_43, %c0_44, %c0_45] : memref<6x80x104xf32, #tpu.memory_space<vmem>>, vector<1x80x104xf32>
    %93 = vector.shape_cast %92 : vector<1x80x104xf32> to vector<80x104xf32>
    %94 = vector.shape_cast %93 : vector<80x104xf32> to vector<1x80x104xf32>
    %95 = vector.shape_cast %94 : vector<1x80x104xf32> to vector<1x80x104xf32>
    %96 = vector.broadcast %95 : vector<1x80x104xf32> to vector<4x80x104xf32>
    %97 = vector.extract_strided_slice %74 {offsets = [0, 0, 2], sizes = [4, 104, 11], strides = [1, 1, 1]} : vector<4x104x13xf32> to vector<4x104x11xf32>
    "tpu.trace_start"() <{level = 10 : i32, message = "bor,brw->bow"}> : () -> ()
    %cst_46 = arith.constant dense<0.000000e+00> : vector<4x80x11xf32>
    %98 = tpu.matmul %96, %97, %cst_46 {dimension_numbers = #tpu.dot_dimension_numbers<[2], [1], [1], [2], [0, 0, 0, 1, 1, 2], [0], [0]>} : vector<4x80x104xf32>, vector<4x104x11xf32>, vector<4x80x11xf32> -> vector<4x80x11xf32>
    "tpu.trace_stop"() : () -> ()
    %99 = arith.addf %91, %98 : vector<4x80x11xf32>
    %c0_47 = arith.constant 0 : index
    %c0_48 = arith.constant 0 : index
    %100 = vector.load %arg5[%c0_47, %c0_48] : memref<80x1xf32, #tpu.memory_space<vmem>>, vector<80x1xf32>
    %101 = vector.shape_cast %100 : vector<80x1xf32> to vector<1x80x1xf32>
    %102 = vector.broadcast %101 : vector<1x80x1xf32> to vector<4x80x11xf32>
    %103 = arith.addf %99, %102 : vector<4x80x11xf32>
    %cst_49 = arith.constant 0.000000e+00 : f32
    %104 = vector.broadcast %cst_49 : f32 to vector<4x80x11xf32>
    %105 = arith.maximumf %103, %104 : vector<4x80x11xf32>
    %cst_50 = arith.constant 0.000000e+00 : f32
    %106 = vector.broadcast %cst_50 : f32 to vector<4x80x11xf32>
    %c3_51 = arith.constant 3 : index
    %c0_52 = arith.constant 0 : index
    %c0_53 = arith.constant 0 : index
    %107 = vector.load %arg4[%c3_51, %c0_52, %c0_53] : memref<6x80x104xf32, #tpu.memory_space<vmem>>, vector<1x80x104xf32>
    %108 = vector.shape_cast %107 : vector<1x80x104xf32> to vector<80x104xf32>
    %109 = vector.shape_cast %108 : vector<80x104xf32> to vector<1x80x104xf32>
    %110 = vector.shape_cast %109 : vector<1x80x104xf32> to vector<1x80x104xf32>
    %111 = vector.broadcast %110 : vector<1x80x104xf32> to vector<4x80x104xf32>
    %112 = vector.extract_strided_slice %74 {offsets = [0, 0, 0], sizes = [4, 104, 11], strides = [1, 1, 1]} : vector<4x104x13xf32> to vector<4x104x11xf32>
    "tpu.trace_start"() <{level = 10 : i32, message = "bor,brw->bow"}> : () -> ()
    %cst_54 = arith.constant dense<0.000000e+00> : vector<4x80x11xf32>
    %113 = tpu.matmul %111, %112, %cst_54 {dimension_numbers = #tpu.dot_dimension_numbers<[2], [1], [1], [2], [0, 0, 0, 1, 1, 2], [0], [0]>} : vector<4x80x104xf32>, vector<4x104x11xf32>, vector<4x80x11xf32> -> vector<4x80x11xf32>
    "tpu.trace_stop"() : () -> ()
    %114 = arith.addf %106, %113 : vector<4x80x11xf32>
    %c4_55 = arith.constant 4 : index
    %c0_56 = arith.constant 0 : index
    %c0_57 = arith.constant 0 : index
    %115 = vector.load %arg4[%c4_55, %c0_56, %c0_57] : memref<6x80x104xf32, #tpu.memory_space<vmem>>, vector<1x80x104xf32>
    %116 = vector.shape_cast %115 : vector<1x80x104xf32> to vector<80x104xf32>
    %117 = vector.shape_cast %116 : vector<80x104xf32> to vector<1x80x104xf32>
    %118 = vector.shape_cast %117 : vector<1x80x104xf32> to vector<1x80x104xf32>
    %119 = vector.broadcast %118 : vector<1x80x104xf32> to vector<4x80x104xf32>
    %120 = vector.extract_strided_slice %74 {offsets = [0, 0, 1], sizes = [4, 104, 11], strides = [1, 1, 1]} : vector<4x104x13xf32> to vector<4x104x11xf32>
    "tpu.trace_start"() <{level = 10 : i32, message = "bor,brw->bow"}> : () -> ()
    %cst_58 = arith.constant dense<0.000000e+00> : vector<4x80x11xf32>
    %121 = tpu.matmul %119, %120, %cst_58 {dimension_numbers = #tpu.dot_dimension_numbers<[2], [1], [1], [2], [0, 0, 0, 1, 1, 2], [0], [0]>} : vector<4x80x104xf32>, vector<4x104x11xf32>, vector<4x80x11xf32> -> vector<4x80x11xf32>
    "tpu.trace_stop"() : () -> ()
    %122 = arith.addf %114, %121 : vector<4x80x11xf32>
    %c5_59 = arith.constant 5 : index
    %c0_60 = arith.constant 0 : index
    %c0_61 = arith.constant 0 : index
    %123 = vector.load %arg4[%c5_59, %c0_60, %c0_61] : memref<6x80x104xf32, #tpu.memory_space<vmem>>, vector<1x80x104xf32>
    %124 = vector.shape_cast %123 : vector<1x80x104xf32> to vector<80x104xf32>
    %125 = vector.shape_cast %124 : vector<80x104xf32> to vector<1x80x104xf32>
    %126 = vector.shape_cast %125 : vector<1x80x104xf32> to vector<1x80x104xf32>
    %127 = vector.broadcast %126 : vector<1x80x104xf32> to vector<4x80x104xf32>
    %128 = vector.extract_strided_slice %74 {offsets = [0, 0, 2], sizes = [4, 104, 11], strides = [1, 1, 1]} : vector<4x104x13xf32> to vector<4x104x11xf32>
    "tpu.trace_start"() <{level = 10 : i32, message = "bor,brw->bow"}> : () -> ()
    %cst_62 = arith.constant dense<0.000000e+00> : vector<4x80x11xf32>
    %129 = tpu.matmul %127, %128, %cst_62 {dimension_numbers = #tpu.dot_dimension_numbers<[2], [1], [1], [2], [0, 0, 0, 1, 1, 2], [0], [0]>} : vector<4x80x104xf32>, vector<4x104x11xf32>, vector<4x80x11xf32> -> vector<4x80x11xf32>
    "tpu.trace_stop"() : () -> ()
    %130 = arith.addf %122, %129 : vector<4x80x11xf32>
    %c0_63 = arith.constant 0 : index
    %c0_64 = arith.constant 0 : index
    %131 = vector.load %arg5[%c0_63, %c0_64] : memref<80x1xf32, #tpu.memory_space<vmem>>, vector<80x1xf32>
    %132 = vector.shape_cast %131 : vector<80x1xf32> to vector<1x80x1xf32>
    %133 = vector.broadcast %132 : vector<1x80x1xf32> to vector<4x80x11xf32>
    %134 = arith.addf %130, %133 : vector<4x80x11xf32>
    %cst_65 = arith.constant 0.000000e+00 : f32
    %135 = vector.broadcast %cst_65 : f32 to vector<4x80x11xf32>
    %136 = arith.maximumf %134, %135 : vector<4x80x11xf32>
    %137 = arith.maximumf %105, %136 : vector<4x80x11xf32>
    %c0_66 = arith.constant 0 : index
    %c0_67 = arith.constant 0 : index
    %138 = vector.load %arg8[%c0_66, %c0_67] : memref<5x11xf32, #tpu.memory_space<vmem>>, vector<5x11xf32>
    %139 = vector.shape_cast %138 : vector<5x11xf32> to vector<1x5x11xf32>
    %140 = vector.shape_cast %139 : vector<1x5x11xf32> to vector<1x5x11xf32>
    %141 = vector.broadcast %140 : vector<1x5x11xf32> to vector<4x5x11xf32>
    "tpu.trace_start"() <{level = 10 : i32, message = "bpw,brw->bpr"}> : () -> ()
    %cst_68 = arith.constant dense<0.000000e+00> : vector<4x5x80xf32>
    %142 = tpu.matmul %141, %137, %cst_68 {dimension_numbers = #tpu.dot_dimension_numbers<[2], [2], [1], [1], [0, 0, 0, 1, 1, 1], [0], [0]>} : vector<4x5x11xf32>, vector<4x80x11xf32>, vector<4x5x80xf32> -> vector<4x5x80xf32>
    "tpu.trace_stop"() : () -> ()
    %c0_69 = arith.constant 0 : index
    %c0_70 = arith.constant 0 : index
    %143 = vector.load %arg9[%c0_69, %c0_70] : memref<5x11xf32, #tpu.memory_space<vmem>>, vector<5x11xf32>
    %144 = vector.shape_cast %143 : vector<5x11xf32> to vector<1x5x11xf32>
    %145 = vector.shape_cast %144 : vector<1x5x11xf32> to vector<1x5x11xf32>
    %146 = vector.broadcast %145 : vector<1x5x11xf32> to vector<4x5x11xf32>
    "tpu.trace_start"() <{level = 10 : i32, message = "bpw,brw->bpr"}> : () -> ()
    %cst_71 = arith.constant dense<0.000000e+00> : vector<4x5x80xf32>
    %147 = tpu.matmul %146, %137, %cst_71 {dimension_numbers = #tpu.dot_dimension_numbers<[2], [2], [1], [1], [0, 0, 0, 1, 1, 1], [0], [0]>} : vector<4x5x11xf32>, vector<4x80x11xf32>, vector<4x5x80xf32> -> vector<4x5x80xf32>
    "tpu.trace_stop"() : () -> ()
    %148 = arith.maximumf %142, %147 : vector<4x5x80xf32>
    %c0_72 = arith.constant 0 : index
    %c0_73 = arith.constant 0 : index
    %c0_74 = arith.constant 0 : index
    %149 = vector.load %arg10[%c0_72, %c0_73, %c0_74] : memref<4x5x80xf32, #tpu.memory_space<vmem>>, vector<4x5x80xf32>
    tpu.vector_store %arg10[%c0_72, %c0_73, %c0_74], %148 {strides = array<i32>} : memref<4x5x80xf32, #tpu.memory_space<vmem>>, vector<4x5x80xf32>,
    return
  }
  func.func @transform_0(%arg0: i32) -> (i32, i32, i32) {
    %c0_i32 = arith.constant 0 : i32
    %c0_i32_0 = arith.constant 0 : i32
    %c0_i32_1 = arith.constant 0 : i32
    return %arg0, %c0_i32, %c0_i32_0 : i32, i32, i32
  }
  func.func @transform_1(%arg0: i32) -> (i32, i32, i32) {
    %c0_i32 = arith.constant 0 : i32
    %c0_i32_0 = arith.constant 0 : i32
    %c0_i32_1 = arith.constant 0 : i32
    %c0_i32_2 = arith.constant 0 : i32
    return %c0_i32, %c0_i32_0, %c0_i32_1 : i32, i32, i32
  }
  func.func @transform_2(%arg0: i32) -> (i32, i32) {
    %c0_i32 = arith.constant 0 : i32
    %c0_i32_0 = arith.constant 0 : i32
    %c0_i32_1 = arith.constant 0 : i32
    return %c0_i32, %c0_i32_0 : i32, i32
  }
  func.func @transform_3(%arg0: i32) -> (i32, i32, i32) {
    %c0_i32 = arith.constant 0 : i32
    %c0_i32_0 = arith.constant 0 : i32
    %c0_i32_1 = arith.constant 0 : i32
    %c0_i32_2 = arith.constant 0 : i32
    return %c0_i32, %c0_i32_0, %c0_i32_1 : i32, i32, i32
  }
  func.func @transform_4(%arg0: i32) -> (i32, i32) {
    %c0_i32 = arith.constant 0 : i32
    %c0_i32_0 = arith.constant 0 : i32
    %c0_i32_1 = arith.constant 0 : i32
    return %c0_i32, %c0_i32_0 : i32, i32
  }
  func.func @transform_5(%arg0: i32) -> (i32, i32) {
    %c0_i32 = arith.constant 0 : i32
    %c0_i32_0 = arith.constant 0 : i32
    %c0_i32_1 = arith.constant 0 : i32
    return %c0_i32, %c0_i32_0 : i32, i32
  }
  func.func @transform_6(%arg0: i32) -> (i32, i32) {
    %c0_i32 = arith.constant 0 : i32
    %c0_i32_0 = arith.constant 0 : i32
    %c0_i32_1 = arith.constant 0 : i32
    return %c0_i32, %c0_i32_0 : i32, i32
  }
  func.func @transform_7(%arg0: i32) -> (i32, i32) {
    %c0_i32 = arith.constant 0 : i32
    %c0_i32_0 = arith.constant 0 : i32
    %c0_i32_1 = arith.constant 0 : i32
    return %c0_i32, %c0_i32_0 : i32, i32
  }
  func.func @transform_8(%arg0: i32) -> (i32, i32) {
    %c0_i32 = arith.constant 0 : i32
    %c0_i32_0 = arith.constant 0 : i32
    %c0_i32_1 = arith.constant 0 : i32
    return %c0_i32, %c0_i32_0 : i32, i32
  }
  func.func @transform_9(%arg0: i32) -> (i32, i32, i32) {
    %c0_i32 = arith.constant 0 : i32
    %c0_i32_0 = arith.constant 0 : i32
    %c0_i32_1 = arith.constant 0 : i32
    return %arg0, %c0_i32, %c0_i32_0 : i32, i32, i32
  }
}

</mosaic_0001>

<llo_original>
// kernel: tile.13
$region0: #{tile.13}
  #allocation0 [shape = 's32[1]{0}', space=sflag, size = 0x4, scoped, tag = 'scoped memory for tile.13']
  %s0 = inlined_call_operand.vmem [shape: f32[8], index: 0, kind: input, shape index: {}]
  %s1 = inlined_call_operand.vmem [shape: f32[13,8], index: 1, kind: output, shape index: {}]
  // Predicated region
  $region2: #{tile.13} parent=0 // pred_check
    _
  $region3: #{tile.13} parent=0 // pred_check_branch
    %3 = sbr.rel (0) target = $region5
  $region4: #{tile.13} parent=0 // pred_region
    _
  $region5: #{tile.13} parent=0 // pred_fallthru
    _
  %v4 = vld [vmem:[%s0] ss:$0 sm:$0xff]
  %5 = vst [vmem:[%s1] sm:$0xff] %v4
  %s6 = scalar_lea.vmem %s1, 8
  %7 = vst [vmem:[%s6] sm:$0xff] %v4

// kernel: tile.0
$region0: #{tile.0}
  %s0 = inlined_call_operand.vmem [shape: f32[13,8], index: 0, kind: input, shape index: {}]
  %s1 = inlined_call_operand.vmem [shape: f32[104,1], index: 1, kind: output, shape index: {}]
  %v2 = vld [vmem:[%s0] sm:$0xff]
  %vm3 = vcmask 7168
  %4 = vst.msk [vmem:[%s1] ss:$8 sm:$0xf] %vm3, %v2
  %5 = vst.msk [vmem:[%s1] ss:$8 sm:$0xf0] %vm3, %v2
  %s6 = scalar_lea.vmem %s0, 8
  %v7 = vld [vmem:[%s6] sm:$0x1f]
  %vm8 = vcmask 7168
  %s9 = scalar_lea.vmem %s1, 64
  %10 = vst.msk [vmem:[%s9] ss:$8 sm:$0xf] %vm8, %v7
  %s11 = scalar_lea.vmem %s1, 92
  %12 = vst.msk [vmem:[%s11] sm:$0x10] %vm8, %v7
  %v13 = vld [vmem:[%s0] sm:$0xff]
  %14 = vrot.lane.b32.xlu0 %v13, 127
  %v15 = vpop.permute.xlu0 %14
  %vm16 = vcmask 7168
  %s17 = scalar_lea.vmem %s1, 1
  %18 = vst.msk [vmem:[%s17] ss:$8 sm:$0xf] %vm16, %v15
  %s19 = scalar_lea.vmem %s1, 1
  %20 = vst.msk [vmem:[%s19] ss:$8 sm:$0xf0] %vm16, %v15
  %s21 = scalar_lea.vmem %s0, 8
  %v22 = vld [vmem:[%s21] sm:$0x1f]
  %23 = vrot.lane.b32.xlu0 %v22, 127
  %v24 = vpop.permute.xlu0 %23
  %vm25 = vcmask 7168
  %s26 = scalar_lea.vmem %s1, 65
  %27 = vst.msk [vmem:[%s26] ss:$8 sm:$0xf] %vm25, %v24
  %s28 = scalar_lea.vmem %s1, 93
  %29 = vst.msk [vmem:[%s28] sm:$0x10] %vm25, %v24
  %v30 = vld [vmem:[%s0] sm:$0xff]
  %31 = vrot.lane.b32.xlu0 %v30, 126
  %v32 = vpop.permute.xlu0 %31
  %vm33 = vcmask 7168
  %s34 = scalar_lea.vmem %s1, 2
  %35 = vst.msk [vmem:[%s34] ss:$8 sm:$0xf] %vm33, %v32
  %s36 = scalar_lea.vmem %s1, 2
  %37 = vst.msk [vmem:[%s36] ss:$8 sm:$0xf0] %vm33, %v32
  %s38 = scalar_lea.vmem %s0, 8
  %v39 = vld [vmem:[%s38] sm:$0x1f]
  %40 = vrot.lane.b32.xlu0 %v39, 126
  %v41 = vpop.permute.xlu0 %40
  %vm42 = vcmask 7168
  %s43 = scalar_lea.vmem %s1, 66
  %44 = vst.msk [vmem:[%s43] ss:$8 sm:$0xf] %vm42, %v41
  %s45 = scalar_lea.vmem %s1, 94
  %46 = vst.msk [vmem:[%s45] sm:$0x10] %vm42, %v41
  %v47 = vld [vmem:[%s0] sm:$0xff]
  %48 = vrot.lane.b32.xlu0 %v47, 125
  %v49 = vpop.permute.xlu0 %48
  %vm50 = vcmask 7168
  %s51 = scalar_lea.vmem %s1, 3
  %52 = vst.msk [vmem:[%s51] ss:$8 sm:$0xf] %vm50, %v49
  %s53 = scalar_lea.vmem %s1, 3
  %54 = vst.msk [vmem:[%s53] ss:$8 sm:$0xf0] %vm50, %v49
  %s55 = scalar_lea.vmem %s0, 8
  %v56 = vld [vmem:[%s55] sm:$0x1f]
  %57 = vrot.lane.b32.xlu0 %v56, 125
  %v58 = vpop.permute.xlu0 %57
  %vm59 = vcmask 7168
  %s60 = scalar_lea.vmem %s1, 67
  %61 = vst.msk [vmem:[%s60] ss:$8 sm:$0xf] %vm59, %v58
  %s62 = scalar_lea.vmem %s1, 95
  %63 = vst.msk [vmem:[%s62] sm:$0x10] %vm59, %v58
  %v64 = vld [vmem:[%s0] sm:$0xff]
  %65 = vrot.lane.b32.xlu0 %v64, 124
  %v66 = vpop.permute.xlu0 %65
  %vm67 = vcmask 7168
  %s68 = scalar_lea.vmem %s1, 4
  %69 = vst.msk [vmem:[%s68] ss:$8 sm:$0xf] %vm67, %v66
  %s70 = scalar_lea.vmem %s1, 4
  %71 = vst.msk [vmem:[%s70] ss:$8 sm:$0xf0] %vm67, %v66
  %s72 = scalar_lea.vmem %s0, 8
  %v73 = vld [vmem:[%s72] sm:$0x1f]
  %74 = vrot.lane.b32.xlu0 %v73, 124
  %v75 = vpop.permute.xlu0 %74
  %vm76 = vcmask 7168
  %s77 = scalar_lea.vmem %s1, 68
  %78 = vst.msk [vmem:[%s77] ss:$8 sm:$0xf] %vm76, %v75
  %s79 = scalar_lea.vmem %s1, 96
  %80 = vst.msk [vmem:[%s79] sm:$0x10] %vm76, %v75
  %v81 = vld [vmem:[%s0] sm:$0xff]
  %82 = vrot.lane.b32.xlu0 %v81, 123
  %v83 = vpop.permute.xlu0 %82
  %vm84 = vcmask 7168
  %s85 = scalar_lea.vmem %s1, 5
  %86 = vst.msk [vmem:[%s85] ss:$8 sm:$0xf] %vm84, %v83
  %s87 = scalar_lea.vmem %s1, 5
  %88 = vst.msk [vmem:[%s87] ss:$8 sm:$0xf0] %vm84, %v83
  %s89 = scalar_lea.vmem %s0, 8
  %v90 = vld [vmem:[%s89] sm:$0x1f]
  %91 = vrot.lane.b32.xlu0 %v90, 123
  %v92 = vpop.permute.xlu0 %91
  %vm93 = vcmask 7168
  %s94 = scalar_lea.vmem %s1, 69
  %95 = vst.msk [vmem:[%s94] ss:$8 sm:$0xf] %vm93, %v92
  %s96 = scalar_lea.vmem %s1, 97
  %97 = vst.msk [vmem:[%s96] sm:$0x10] %vm93, %v92
  %v98 = vld [vmem:[%s0] sm:$0xff]
  %99 = vrot.lane.b32.xlu0 %v98, 122
  %v100 = vpop.permute.xlu0 %99
  %vm101 = vcmask 7168
  %s102 = scalar_lea.vmem %s1, 6
  %103 = vst.msk [vmem:[%s102] ss:$8 sm:$0xf] %vm101, %v100
  %s104 = scalar_lea.vmem %s1, 6
  %105 = vst.msk [vmem:[%s104] ss:$8 sm:$0xf0] %vm101, %v100
  %s106 = scalar_lea.vmem %s0, 8
  %v107 = vld [vmem:[%s106] sm:$0x1f]
  %108 = vrot.lane.b32.xlu0 %v107, 122
  %v109 = vpop.permute.xlu0 %108
  %vm110 = vcmask 7168
  %s111 = scalar_lea.vmem %s1, 70
  %112 = vst.msk [vmem:[%s111] ss:$8 sm:$0xf] %vm110, %v109
  %s113 = scalar_lea.vmem %s1, 98
  %114 = vst.msk [vmem:[%s113] sm:$0x10] %vm110, %v109
  %v115 = vld [vmem:[%s0] sm:$0xff]
  %116 = vrot.lane.b32.xlu0 %v115, 121
  %v117 = vpop.permute.xlu0 %116
  %vm118 = vcmask 7168
  %s119 = scalar_lea.vmem %s1, 7
  %120 = vst.msk [vmem:[%s119] ss:$8 sm:$0xf] %vm118, %v117
  %s121 = scalar_lea.vmem %s1, 7
  %122 = vst.msk [vmem:[%s121] ss:$8 sm:$0xf0] %vm118, %v117
  %s123 = scalar_lea.vmem %s0, 8
  %v124 = vld [vmem:[%s123] sm:$0x1f]
  %125 = vrot.lane.b32.xlu0 %v124, 121
  %v126 = vpop.permute.xlu0 %125
  %vm127 = vcmask 7168
  %s128 = scalar_lea.vmem %s1, 71
  %129 = vst.msk [vmem:[%s128] ss:$8 sm:$0xf] %vm127, %v126
  %s130 = scalar_lea.vmem %s1, 99
  %131 = vst.msk [vmem:[%s130] sm:$0x10] %vm127, %v126

// kernel: tile.18
$region0: #{tile.18}
  #allocation0 [shape = 's32[1]{0}', space=sflag, size = 0x4, scoped, tag = 'scoped memory for tile.18']
  %s0 = inlined_call_operand.vmem [shape: f32[16], index: 0, kind: input, shape index: {}]
  %s1 = inlined_call_operand.vmem [shape: f32[5,16], index: 1, kind: output, shape index: {}]
  // Predicated region
  $region2: #{tile.18} parent=0 // pred_check
    _
  $region3: #{tile.18} parent=0 // pred_check_branch
    %3 = sbr.rel (0) target = $region5
  $region4: #{tile.18} parent=0 // pred_region
    _
  $region5: #{tile.18} parent=0 // pred_fallthru
    _
  %v4 = vld [vmem:[%s0] ss:$0 sm:$0xff]
  %5 = vst [vmem:[%s1] sm:$0xff] %v4

// kernel: tile.1
$region0: #{tile.1}
  %s0 = inlined_call_operand.vmem [shape: f32[5,16], index: 0, kind: input, shape index: {}]
  %s1 = inlined_call_operand.vmem [shape: f32[80,1], index: 1, kind: output, shape index: {}]
  %v2 = vld [vmem:[%s0] sm:$0x1f]
  %vm3 = vcmask 7168
  %4 = vst.msk [vmem:[%s1] ss:$16 sm:$0x3] %vm3, %v2
  %5 = vst.msk [vmem:[%s1] ss:$16 sm:$0xc] %vm3, %v2
  %s6 = scalar_lea.vmem %s1, 60
  %7 = vst.msk [vmem:[%s6] sm:$0x10] %vm3, %v2
  %v8 = vld [vmem:[%s0] sm:$0x1f]
  %9 = vrot.lane.b32.xlu0 %v8, 127
  %v10 = vpop.permute.xlu0 %9
  %vm11 = vcmask 7168
  %s12 = scalar_lea.vmem %s1, 1
  %13 = vst.msk [vmem:[%s12] ss:$16 sm:$0x3] %vm11, %v10
  %s14 = scalar_lea.vmem %s1, 1
  %15 = vst.msk [vmem:[%s14] ss:$16 sm:$0xc] %vm11, %v10
  %s16 = scalar_lea.vmem %s1, 61
  %17 = vst.msk [vmem:[%s16] sm:$0x10] %vm11, %v10
  %v18 = vld [vmem:[%s0] sm:$0x1f]
  %19 = vrot.lane.b32.xlu0 %v18, 126
  %v20 = vpop.permute.xlu0 %19
  %vm21 = vcmask 7168
  %s22 = scalar_lea.vmem %s1, 2
  %23 = vst.msk [vmem:[%s22] ss:$16 sm:$0x3] %vm21, %v20
  %s24 = scalar_lea.vmem %s1, 2
  %25 = vst.msk [vmem:[%s24] ss:$16 sm:$0xc] %vm21, %v20
  %s26 = scalar_lea.vmem %s1, 62
  %27 = vst.msk [vmem:[%s26] sm:$0x10] %vm21, %v20
  %v28 = vld [vmem:[%s0] sm:$0x1f]
  %29 = vrot.lane.b32.xlu0 %v28, 125
  %v30 = vpop.permute.xlu0 %29
  %vm31 = vcmask 7168
  %s32 = scalar_lea.vmem %s1, 3
  %33 = vst.msk [vmem:[%s32] ss:$16 sm:$0x3] %vm31, %v30
  %s34 = scalar_lea.vmem %s1, 3
  %35 = vst.msk [vmem:[%s34] ss:$16 sm:$0xc] %vm31, %v30
  %s36 = scalar_lea.vmem %s1, 63
  %37 = vst.msk [vmem:[%s36] sm:$0x10] %vm31, %v30
  %v38 = vld [vmem:[%s0] sm:$0x1f]
  %39 = vrot.lane.b32.xlu0 %v38, 124
  %v40 = vpop.permute.xlu0 %39
  %vm41 = vcmask 7168
  %s42 = scalar_lea.vmem %s1, 4
  %43 = vst.msk [vmem:[%s42] ss:$16 sm:$0x3] %vm41, %v40
  %s44 = scalar_lea.vmem %s1, 4
  %45 = vst.msk [vmem:[%s44] ss:$16 sm:$0xc] %vm41, %v40
  %s46 = scalar_lea.vmem %s1, 64
  %47 = vst.msk [vmem:[%s46] sm:$0x10] %vm41, %v40
  %v48 = vld [vmem:[%s0] sm:$0x1f]
  %49 = vrot.lane.b32.xlu0 %v48, 123
  %v50 = vpop.permute.xlu0 %49
  %vm51 = vcmask 7168
  %s52 = scalar_lea.vmem %s1, 5
  %53 = vst.msk [vmem:[%s52] ss:$16 sm:$0x3] %vm51, %v50
  %s54 = scalar_lea.vmem %s1, 5
  %55 = vst.msk [vmem:[%s54] ss:$16 sm:$0xc] %vm51, %v50
  %s56 = scalar_lea.vmem %s1, 65
  %57 = vst.msk [vmem:[%s56] sm:$0x10] %vm51, %v50
  %v58 = vld [vmem:[%s0] sm:$0x1f]
  %59 = vrot.lane.b32.xlu0 %v58, 122
  %v60 = vpop.permute.xlu0 %59
  %vm61 = vcmask 7168
  %s62 = scalar_lea.vmem %s1, 6
  %63 = vst.msk [vmem:[%s62] ss:$16 sm:$0x3] %vm61, %v60
  %s64 = scalar_lea.vmem %s1, 6
  %65 = vst.msk [vmem:[%s64] ss:$16 sm:$0xc] %vm61, %v60
  %s66 = scalar_lea.vmem %s1, 66
  %67 = vst.msk [vmem:[%s66] sm:$0x10] %vm61, %v60
  %v68 = vld [vmem:[%s0] sm:$0x1f]
  %69 = vrot.lane.b32.xlu0 %v68, 121
  %v70 = vpop.permute.xlu0 %69
  %vm71 = vcmask 7168
  %s72 = scalar_lea.vmem %s1, 7
  %73 = vst.msk [vmem:[%s72] ss:$16 sm:$0x3] %vm71, %v70
  %s74 = scalar_lea.vmem %s1, 7
  %75 = vst.msk [vmem:[%s74] ss:$16 sm:$0xc] %vm71, %v70
  %s76 = scalar_lea.vmem %s1, 67
  %77 = vst.msk [vmem:[%s76] sm:$0x10] %vm71, %v70
  %v78 = vld [vmem:[%s0] sm:$0x1f]
  %79 = vrot.lane.b32.xlu0 %v78, 120
  %v80 = vpop.permute.xlu0 %79
  %vm81 = vcmask 7168
  %s82 = scalar_lea.vmem %s1, 8
  %83 = vst.msk [vmem:[%s82] ss:$16 sm:$0x3] %vm81, %v80
  %s84 = scalar_lea.vmem %s1, 8
  %85 = vst.msk [vmem:[%s84] ss:$16 sm:$0xc] %vm81, %v80
  %s86 = scalar_lea.vmem %s1, 68
  %87 = vst.msk [vmem:[%s86] sm:$0x10] %vm81, %v80
  %v88 = vld [vmem:[%s0] sm:$0x1f]
  %89 = vrot.lane.b32.xlu0 %v88, 119
  %v90 = vpop.permute.xlu0 %89
  %vm91 = vcmask 7168
  %s92 = scalar_lea.vmem %s1, 9
  %93 = vst.msk [vmem:[%s92] ss:$16 sm:$0x3] %vm91, %v90
  %s94 = scalar_lea.vmem %s1, 9
  %95 = vst.msk [vmem:[%s94] ss:$16 sm:$0xc] %vm91, %v90
  %s96 = scalar_lea.vmem %s1, 69
  %97 = vst.msk [vmem:[%s96] sm:$0x10] %vm91, %v90
  %v98 = vld [vmem:[%s0] sm:$0x1f]
  %99 = vrot.lane.b32.xlu0 %v98, 118
  %v100 = vpop.permute.xlu0 %99
  %vm101 = vcmask 7168
  %s102 = scalar_lea.vmem %s1, 10
  %103 = vst.msk [vmem:[%s102] ss:$16 sm:$0x3] %vm101, %v100
  %s104 = scalar_lea.vmem %s1, 10
  %105 = vst.msk [vmem:[%s104] ss:$16 sm:$0xc] %vm101, %v100
  %s106 = scalar_lea.vmem %s1, 70
  %107 = vst.msk [vmem:[%s106] sm:$0x10] %vm101, %v100
  %v108 = vld [vmem:[%s0] sm:$0x1f]
  %109 = vrot.lane.b32.xlu0 %v108, 117
  %v110 = vpop.permute.xlu0 %109
  %vm111 = vcmask 7168
  %s112 = scalar_lea.vmem %s1, 11
  %113 = vst.msk [vmem:[%s112] ss:$16 sm:$0x3] %vm111, %v110
  %s114 = scalar_lea.vmem %s1, 11
  %115 = vst.msk [vmem:[%s114] ss:$16 sm:$0xc] %vm111, %v110
  %s116 = scalar_lea.vmem %s1, 71
  %117 = vst.msk [vmem:[%s116] sm:$0x10] %vm111, %v110
  %v118 = vld [vmem:[%s0] sm:$0x1f]
  %119 = vrot.lane.b32.xlu0 %v118, 116
  %v120 = vpop.permute.xlu0 %119
  %vm121 = vcmask 7168
  %s122 = scalar_lea.vmem %s1, 12
  %123 = vst.msk [vmem:[%s122] ss:$16 sm:$0x3] %vm121, %v120
  %s124 = scalar_lea.vmem %s1, 12
  %125 = vst.msk [vmem:[%s124] ss:$16 sm:$0xc] %vm121, %v120
  %s126 = scalar_lea.vmem %s1, 72
  %127 = vst.msk [vmem:[%s126] sm:$0x10] %vm121, %v120
  %v128 = vld [vmem:[%s0] sm:$0x1f]
  %129 = vrot.lane.b32.xlu0 %v128, 115
  %v130 = vpop.permute.xlu0 %129
  %vm131 = vcmask 7168
  %s132 = scalar_lea.vmem %s1, 13
  %133 = vst.msk [vmem:[%s132] ss:$16 sm:$0x3] %vm131, %v130
  %s134 = scalar_lea.vmem %s1, 13
  %135 = vst.msk [vmem:[%s134] ss:$16 sm:$0xc] %vm131, %v130
  %s136 = scalar_lea.vmem %s1, 73
  %137 = vst.msk [vmem:[%s136] sm:$0x10] %vm131, %v130
  %v138 = vld [vmem:[%s0] sm:$0x1f]
  %139 = vrot.lane.b32.xlu0 %v138, 114
  %v140 = vpop.permute.xlu0 %139
  %vm141 = vcmask 7168
  %s142 = scalar_lea.vmem %s1, 14
  %143 = vst.msk [vmem:[%s142] ss:$16 sm:$0x3] %vm141, %v140
  %s144 = scalar_lea.vmem %s1, 14
  %145 = vst.msk [vmem:[%s144] ss:$16 sm:$0xc] %vm141, %v140
  %s146 = scalar_lea.vmem %s1, 74
  %147 = vst.msk [vmem:[%s146] sm:$0x10] %vm141, %v140
  %v148 = vld [vmem:[%s0] sm:$0x1f]
  %149 = vrot.lane.b32.xlu0 %v148, 113
  %v150 = vpop.permute.xlu0 %149
  %vm151 = vcmask 7168
  %s152 = scalar_lea.vmem %s1, 15
  %153 = vst.msk [vmem:[%s152] ss:$16 sm:$0x3] %vm151, %v150
  %s154 = scalar_lea.vmem %s1, 15
  %155 = vst.msk [vmem:[%s154] ss:$16 sm:$0xc] %vm151, %v150
  %s156 = scalar_lea.vmem %s1, 75
  %157 = vst.msk [vmem:[%s156] sm:$0x10] %vm151, %v150

// kernel: net_forward.3
$region0: #{net_forward.3}
  #allocation0 [shape = 'u32[]', space=smem, size = 0x4, offset = 0x4, fixed_abs, tag = 'smem constant byte address 0x4 - core index']
  #allocation1 [shape = 'u32[144,128]{1,0:T(1,128)}', space=vmem, size = 0x12000, scoped, tag = 'internal scratch']
  %s0 = inlined_call_operand.vmem [shape: f32[8,400], index: 0, kind: input, shape index: {}]
  %s1 = inlined_call_operand.vmem [shape: f32[400,120], index: 1, kind: input, shape index: {}]
  %s2 = inlined_call_operand.vmem [shape: f32[1,120], index: 2, kind: input, shape index: {}]
  %s3 = inlined_call_operand.vmem [shape: f32[120,84], index: 3, kind: input, shape index: {}]
  %s4 = inlined_call_operand.vmem [shape: f32[1,84], index: 4, kind: input, shape index: {}]
  %s5 = inlined_call_operand.vmem [shape: f32[84,10], index: 5, kind: input, shape index: {}]
  %s6 = inlined_call_operand.vmem [shape: f32[1,10], index: 6, kind: input, shape index: {}]
  %s7 = inlined_call_operand.hbm [shape: f32[8,10], index: 7, kind: output, shape index: {}]
  %s8 = sld [smem:[#allocation0]]
  $region38: #{net_forward.3} parent=0
    _
  %s10 = ssub.s32 1, %s8
  %s11 = scalar_select 0, %s10, %s8
  $region1: #{net_forward.3} parent=0
    #allocation2 [shape = 'u8[4096]{0}', space=vmem, size = 0x1000, scoped, tag = 'output window, operand 0, single buffered']
    #allocation3 [shape = 's32[1]{0}', space=sflag, size = 0x4, scoped, tag = 'scoped memory for net_forward.3']
    %12 = vsyncpa [#allocation3], 0
    // Predicated region
    $region2: #{net_forward.3} parent=1 // pred_check
      _
    $region3: #{net_forward.3} parent=1 // pred_check_branch
      %14 = sbr.rel (0) target = $region5
    $region4: #{net_forward.3} parent=1 // pred_region
      _
    $region5: #{net_forward.3} parent=1 // pred_fallthru
      _
    // Predicated region
    $region6: #{net_forward.3} parent=1 // pred_check
      _
    $region7: #{net_forward.3} parent=1 // pred_check_branch
      %16 = sbr.rel (0) target = $region9
    $region8: #{net_forward.3} parent=1 // pred_region
      _
    $region9: #{net_forward.3} parent=1 // pred_fallthru
      _
    // Predicated region
    $region10: #{net_forward.3} parent=1 // pred_check
      _
    $region11: #{net_forward.3} parent=1 // pred_check_branch
      %18 = sbr.rel (0) target = $region13
    $region12: #{net_forward.3} parent=1 // pred_region
      _
    $region13: #{net_forward.3} parent=1 // pred_fallthru
      _
    // Predicated region
    $region14: #{net_forward.3} parent=1 // pred_check
      _
    $region15: #{net_forward.3} parent=1 // pred_check_branch
      %20 = sbr.rel (0) target = $region17
    $region16: #{net_forward.3} parent=1 // pred_region
      _
    $region17: #{net_forward.3} parent=1 // pred_fallthru
      _
    // Predicated region
    $region18: #{net_forward.3} parent=1 // pred_check
      _
    $region19: #{net_forward.3} parent=1 // pred_check_branch
      %22 = sbr.rel (0) target = $region21
    $region20: #{net_forward.3} parent=1 // pred_region
      _
    $region21: #{net_forward.3} parent=1 // pred_fallthru
      _
    // Predicated region
    $region22: #{net_forward.3} parent=1 // pred_check
      _
    $region23: #{net_forward.3} parent=1 // pred_check_branch
      %24 = sbr.rel (0) target = $region25
    $region24: #{net_forward.3} parent=1 // pred_region
      _
    $region25: #{net_forward.3} parent=1 // pred_fallthru
      _
    // Predicated region
    $region26: #{net_forward.3} parent=1 // pred_check
      _
    $region27: #{net_forward.3} parent=1 // pred_check_branch
      %26 = sbr.rel (0) target = $region29
    $region28: #{net_forward.3} parent=1 // pred_region
      _
    $region29: #{net_forward.3} parent=1 // pred_fallthru
      _
    %v27 = vld [vmem:[%s0] sm:$0xff]
    %v28 = vld [vmem:[%s0 + $0x8] sm:$0xff]
    %v29 = vld [vmem:[%s0 + $0x10] sm:$0xff]
    %v30 = vld [vmem:[%s0 + $0x18] sm:$0xff]
    %v31 = vld [vmem:[%s1] sm:$0xff]
    %v32 = vld [vmem:[%s1 + $0x8] sm:$0xff]
    %v33 = vld [vmem:[%s1 + $0x10] sm:$0xff]
    %v34 = vld [vmem:[%s1 + $0x18] sm:$0xff]
    %v35 = vld [vmem:[%s1 + $0x20] sm:$0xff]
    %v36 = vld [vmem:[%s1 + $0x28] sm:$0xff]
    %v37 = vld [vmem:[%s1 + $0x30] sm:$0xff]
    %v38 = vld [vmem:[%s1 + $0x38] sm:$0xff]
    %v39 = vld [vmem:[%s1 + $0x40] sm:$0xff]
    %v40 = vld [vmem:[%s1 + $0x48] sm:$0xff]
    %v41 = vld [vmem:[%s1 + $0x50] sm:$0xff]
    %v42 = vld [vmem:[%s1 + $0x58] sm:$0xff]
    %v43 = vld [vmem:[%s1 + $0x60] sm:$0xff]
    %v44 = vld [vmem:[%s1 + $0x68] sm:$0xff]
    %v45 = vld [vmem:[%s1 + $0x70] sm:$0xff]
    %v46 = vld [vmem:[%s1 + $0x78] sm:$0xff]
    %v47 = vld [vmem:[%s1 + $0x80] sm:$0xff]
    %v48 = vld [vmem:[%s1 + $0x88] sm:$0xff]
    %v49 = vld [vmem:[%s1 + $0x90] sm:$0xff]
    %v50 = vld [vmem:[%s1 + $0x98] sm:$0xff]
    %v51 = vld [vmem:[%s1 + $0xa0] sm:$0xff]
    %v52 = vld [vmem:[%s1 + $0xa8] sm:$0xff]
    %v53 = vld [vmem:[%s1 + $0xb0] sm:$0xff]
    %v54 = vld [vmem:[%s1 + $0xb8] sm:$0xff]
    %v55 = vld [vmem:[%s1 + $0xc0] sm:$0xff]
    %v56 = vld [vmem:[%s1 + $0xc8] sm:$0xff]
    %v57 = vld [vmem:[%s1 + $0xd0] sm:$0xff]
    %v58 = vld [vmem:[%s1 + $0xd8] sm:$0xff]
    %v59 = vld [vmem:[%s1 + $0xe0] sm:$0xff]
    %v60 = vld [vmem:[%s1 + $0xe8] sm:$0xff]
    %v61 = vld [vmem:[%s1 + $0xf0] sm:$0xff]
    %v62 = vld [vmem:[%s1 + $0xf8] sm:$0xff]
    %v63 = vld [vmem:[%s1 + $0x100] sm:$0xff]
    %v64 = vld [vmem:[%s1 + $0x108] sm:$0xff]
    %v65 = vld [vmem:[%s1 + $0x110] sm:$0xff]
    %v66 = vld [vmem:[%s1 + $0x118] sm:$0xff]
    %v67 = vld [vmem:[%s1 + $0x120] sm:$0xff]
    %v68 = vld [vmem:[%s1 + $0x128] sm:$0xff]
    %v69 = vld [vmem:[%s1 + $0x130] sm:$0xff]
    %v70 = vld [vmem:[%s1 + $0x138] sm:$0xff]
    %v71 = vld [vmem:[%s1 + $0x140] sm:$0xff]
    %v72 = vld [vmem:[%s1 + $0x148] sm:$0xff]
    %v73 = vld [vmem:[%s1 + $0x150] sm:$0xff]
    %v74 = vld [vmem:[%s1 + $0x158] sm:$0xff]
    %v75 = vld [vmem:[%s1 + $0x160] sm:$0xff]
    %v76 = vld [vmem:[%s1 + $0x168] sm:$0xff]
    %v77 = vld [vmem:[%s1 + $0x170] sm:$0xff]
    %v78 = vld [vmem:[%s1 + $0x178] sm:$0xff]
    %v79 = vld [vmem:[%s1 + $0x180] sm:$0xff]
    %v80 = vld [vmem:[%s1 + $0x188] sm:$0xff]
    %v81 = vld [vmem:[%s2] sm:$0x1]
    %v83 = vlaneseq
    %v84 = vshrl.u32 %v83, 7
    %v85 = vsub.s32 0, %v84
    %v86 = vrot.slane %v81, %v85
    %vm88 = vcmask 130048
    %v90 = vsel %vm88, %v30, 0
    %92 = vmatprep.subr.mxu0 0.0
    %93 = vmatpush1.msra.mxu0 %v31
    %94 = vmatprep.subr.mxu0 0.0
    %95 = vmatpush1.msra.mxu0 %v32
    %96 = vmatprep.subr.mxu0 0.0
    %97 = vmatpush1.msra.mxu0 %v33
    %98 = vmatprep.subr.mxu0 0.0
    %99 = vmatpush1.msra.mxu0 %v34
    %100 = vmatprep.subr.mxu0 0.0
    %101 = vmatpush1.msra.mxu0 %v35
    %102 = vmatprep.subr.mxu0 0.0
    %103 = vmatpush1.msra.mxu0 %v36
    %104 = vmatprep.subr.mxu0 0.0
    %105 = vmatpush1.msra.mxu0 %v37
    %106 = vmatprep.subr.mxu0 0.0
    %107 = vmatpush1.msra.mxu0 %v38
    %108 = vmatprep.subr.mxu0 0.0
    %109 = vmatpush1.msra.mxu0 %v39
    %110 = vmatprep.subr.mxu0 0.0
    %111 = vmatpush1.msra.mxu0 %v40
    %112 = vmatprep.subr.mxu0 0.0
    %113 = vmatpush1.msra.mxu0 %v41
    %114 = vmatprep.subr.mxu0 0.0
    %115 = vmatpush1.msra.mxu0 %v42
    %116 = vmatprep.subr.mxu0 0.0
    %117 = vmatpush1.msra.mxu0 %v43
    %118 = vmatprep.subr.mxu0 0.0
    %119 = vmatpush1.msra.mxu0 %v44
    %120 = vmatprep.subr.mxu0 0.0
    %121 = vmatpush1.msra.mxu0 %v45
    %122 = vmatprep.subr.mxu0 0.0
    %123 = vmatpush1.msra.mxu0 %v46
    %124 = vmatprep.subr.mxu0 0.0
    %125 = vmatpush1.msra.mxu0 %v47
    %126 = vmatprep.subr.mxu0 0.0
    %127 = vmatpush1.msra.mxu0 %v48
    %128 = vmatprep.subr.mxu0 0.0
    %129 = vmatpush1.msra.mxu0 %v49
    %130 = vmatprep.subr.mxu0 0.0
    %131 = vmatpush1.msra.mxu0 %v50
    %132 = vmatprep.subr.mxu0 0.0
    %133 = vmatpush1.msra.mxu0 %v51
    %134 = vmatprep.subr.mxu0 0.0
    %135 = vmatpush1.msra.mxu0 %v52
    %136 = vmatprep.subr.mxu0 0.0
    %137 = vmatpush1.msra.mxu0 %v53
    %138 = vmatprep.subr.mxu0 0.0
    %139 = vmatpush1.msra.mxu0 %v54
    %140 = vmatprep.subr.mxu0 0.0
    %141 = vmatpush1.msra.mxu0 %v55
    %142 = vmatprep.subr.mxu0 0.0
    %143 = vmatpush1.msra.mxu0 %v56
    %144 = vmatprep.subr.mxu0 0.0
    %145 = vmatpush1.msra.mxu0 %v57
    %146 = vmatprep.subr.mxu0 0.0
    %147 = vmatpush1.msra.mxu0 %v58
    %148 = vmatprep.subr.mxu0 0.0
    %149 = vmatpush1.msra.mxu0 %v59
    %150 = vmatprep.subr.mxu0 0.0
    %151 = vmatpush1.msra.mxu0 %v60
    %152 = vmatprep.subr.mxu0 0.0
    %153 = vmatpush1.msra.mxu0 %v61
    %154 = vmatprep.subr.mxu0 0.0
    %155 = vmatpush1.msra.mxu0 %v62
    %156 = vmatprep.mubr.f32.mxu0 %v28
    %157 = vmatmul.mubr.f32.gmra.mrb[0].mxu0 %v27
    %v158 = vpop.f32.mrb[0].mxu0
    %v159 = vadd.f32 %v86, %v158
    %v160 = vpop.f32.mrb[0].mxu0
    %161 = vdwg.mxu0
    %162 = vmatprep.subr.mxu0 0.0
    %163 = vmatpush1.msra.mxu0 %v63
    %164 = vmatprep.subr.mxu0 0.0
    %165 = vmatpush1.msra.mxu0 %v64
    %166 = vmatprep.subr.mxu0 0.0
    %167 = vmatpush1.msra.mxu0 %v65
    %168 = vmatprep.subr.mxu0 0.0
    %169 = vmatpush1.msra.mxu0 %v66
    %170 = vmatprep.subr.mxu0 0.0
    %171 = vmatpush1.msra.mxu0 %v67
    %172 = vmatprep.subr.mxu0 0.0
    %173 = vmatpush1.msra.mxu0 %v68
    %174 = vmatprep.subr.mxu0 0.0
    %175 = vmatpush1.msra.mxu0 %v69
    %176 = vmatprep.subr.mxu0 0.0
    %177 = vmatpush1.msra.mxu0 %v70
    %178 = vmatprep.subr.mxu0 0.0
    %179 = vmatpush1.msra.mxu0 %v71
    %180 = vmatprep.subr.mxu0 0.0
    %181 = vmatpush1.msra.mxu0 %v72
    %182 = vmatprep.subr.mxu0 0.0
    %183 = vmatpush1.msra.mxu0 %v73
    %184 = vmatprep.subr.mxu0 0.0
    %185 = vmatpush1.msra.mxu0 %v74
    %186 = vmatprep.subr.mxu0 0.0
    %187 = vmatpush1.msra.mxu0 %v75
    %188 = vmatprep.subr.mxu0 0.0
    %189 = vmatpush1.msra.mxu0 %v76
    %190 = vmatprep.subr.mxu0 0.0
    %191 = vmatpush1.msra.mxu0 %v77
    %192 = vmatprep.subr.mxu0 0.0
    %193 = vmatpush1.msra.mxu0 %v78
    %194 = vmatprep.subr.mxu0 0.0
    %195 = vmatpush1.msra.mxu0 %v79
    %196 = vmatprep.subr.mxu0 0.0
    %197 = vmatpush1.msra.mxu0 %v80
    %198 = vmatprep.subr.mxu0 0.0
    %199 = vmatpush1.msra.mxu0 0.0
    %200 = vmatprep.subr.mxu0 0.0
    %201 = vmatpush1.msra.mxu0 0.0
    %202 = vmatprep.subr.mxu0 0.0
    %203 = vmatpush1.msra.mxu0 0.0
    %204 = vmatprep.subr.mxu0 0.0
    %205 = vmatpush1.msra.mxu0 0.0
    %206 = vmatprep.subr.mxu0 0.0
    %207 = vmatpush1.msra.mxu0 0.0
    %208 = vmatprep.subr.mxu0 0.0
    %209 = vmatpush1.msra.mxu0 0.0
    %210 = vmatprep.subr.mxu0 0.0
    %211 = vmatpush1.msra.mxu0 0.0
    %212 = vmatprep.subr.mxu0 0.0
    %213 = vmatpush1.msra.mxu0 0.0
    %214 = vmatprep.subr.mxu0 0.0
    %215 = vmatpush1.msra.mxu0 0.0
    %216 = vmatprep.subr.mxu0 0.0
    %217 = vmatpush1.msra.mxu0 0.0
    %218 = vmatprep.subr.mxu0 0.0
    %219 = vmatpush1.msra.mxu0 0.0
    %220 = vmatprep.subr.mxu0 0.0
    %221 = vmatpush1.msra.mxu0 0.0
    %222 = vmatprep.subr.mxu0 0.0
    %223 = vmatpush1.msra.mxu0 0.0
    %224 = vmatprep.subr.mxu0 0.0
    %225 = vmatpush1.msra.mxu0 0.0
    %226 = vmatprep.mubr.f32.mxu0 %v90
    %227 = vmatmul.mubr.f32.gmra.mrb[0].mxu0 %v29
    %v228 = vpop.f32.mrb[0].mxu0
    %v229 = vadd.f32 %v159, %v228
    %v230 = vpop.f32.mrb[0].mxu0
    %231 = vdwg.mxu0
    %v232 = vmax.f32 %v229, 0.0
    %v233 = vld [vmem:[%s3] sm:$0xff]
    %v234 = vld [vmem:[%s3 + $0x8] sm:$0xff]
    %v235 = vld [vmem:[%s3 + $0x10] sm:$0xff]
    %v236 = vld [vmem:[%s3 + $0x18] sm:$0xff]
    %v237 = vld [vmem:[%s3 + $0x20] sm:$0xff]
    %v238 = vld [vmem:[%s3 + $0x28] sm:$0xff]
    %v239 = vld [vmem:[%s3 + $0x30] sm:$0xff]
    %v240 = vld [vmem:[%s3 + $0x38] sm:$0xff]
    %v241 = vld [vmem:[%s3 + $0x40] sm:$0xff]
    %v242 = vld [vmem:[%s3 + $0x48] sm:$0xff]
    %v243 = vld [vmem:[%s3 + $0x50] sm:$0xff]
    %v244 = vld [vmem:[%s3 + $0x58] sm:$0xff]
    %v245 = vld [vmem:[%s3 + $0x60] sm:$0xff]
    %v246 = vld [vmem:[%s3 + $0x68] sm:$0xff]
    %v247 = vld [vmem:[%s3 + $0x70] sm:$0xff]
    %v248 = vld [vmem:[%s4] sm:$0x1]
    %v250 = vlaneseq
    %v251 = vshrl.u32 %v250, 7
    %v252 = vsub.s32 0, %v251
    %v253 = vrot.slane %v248, %v252
    %vm255 = vcmask 982016
    %v257 = vsel %vm255, %v232, 0
    %259 = vmatprep.subr.mxu0 0.0
    %260 = vmatpush1.msra.mxu0 %v233
    %261 = vmatprep.subr.mxu0 0.0
    %262 = vmatpush1.msra.mxu0 %v234
    %263 = vmatprep.subr.mxu0 0.0
    %264 = vmatpush1.msra.mxu0 %v235
    %265 = vmatprep.subr.mxu0 0.0
    %266 = vmatpush1.msra.mxu0 %v236
    %267 = vmatprep.subr.mxu0 0.0
    %268 = vmatpush1.msra.mxu0 %v237
    %269 = vmatprep.subr.mxu0 0.0
    %270 = vmatpush1.msra.mxu0 %v238
    %271 = vmatprep.subr.mxu0 0.0
    %272 = vmatpush1.msra.mxu0 %v239
    %273 = vmatprep.subr.mxu0 0.0
    %274 = vmatpush1.msra.mxu0 %v240
    %275 = vmatprep.subr.mxu0 0.0
    %276 = vmatpush1.msra.mxu0 %v241
    %277 = vmatprep.subr.mxu0 0.0
    %278 = vmatpush1.msra.mxu0 %v242
    %279 = vmatprep.subr.mxu0 0.0
    %280 = vmatpush1.msra.mxu0 %v243
    %281 = vmatprep.subr.mxu0 0.0
    %282 = vmatpush1.msra.mxu0 %v244
    %283 = vmatprep.subr.mxu0 0.0
    %284 = vmatpush1.msra.mxu0 %v245
    %285 = vmatprep.subr.mxu0 0.0
    %286 = vmatpush1.msra.mxu0 %v246
    %287 = vmatprep.subr.mxu0 0.0
    %288 = vmatpush1.msra.mxu0 %v247
    %289 = vmatprep.subr.mxu0 0.0
    %290 = vmatpush1.msra.mxu0 0.0
    %291 = vmatprep.subr.mxu0 0.0
    %292 = vmatpush1.msra.mxu0 0.0
    %293 = vmatprep.subr.mxu0 0.0
    %294 = vmatpush1.msra.mxu0 0.0
    %295 = vmatprep.subr.mxu0 0.0
    %296 = vmatpush1.msra.mxu0 0.0
    %297 = vmatprep.subr.mxu0 0.0
    %298 = vmatpush1.msra.mxu0 0.0
    %299 = vmatprep.subr.mxu0 0.0
    %300 = vmatpush1.msra.mxu0 0.0
    %301 = vmatprep.subr.mxu0 0.0
    %302 = vmatpush1.msra.mxu0 0.0
    %303 = vmatprep.subr.mxu0 0.0
    %304 = vmatpush1.msra.mxu0 0.0
    %305 = vmatprep.subr.mxu0 0.0
    %306 = vmatpush1.msra.mxu0 0.0
    %307 = vmatprep.subr.mxu0 0.0
    %308 = vmatpush1.msra.mxu0 0.0
    %309 = vmatprep.subr.mxu0 0.0
    %310 = vmatpush1.msra.mxu0 0.0
    %311 = vmatprep.subr.mxu0 0.0
    %312 = vmatpush1.msra.mxu0 0.0
    %313 = vmatprep.subr.mxu0 0.0
    %314 = vmatpush1.msra.mxu0 0.0
    %315 = vmatprep.subr.mxu0 0.0
    %316 = vmatpush1.msra.mxu0 0.0
    %317 = vmatprep.subr.mxu0 0.0
    %318 = vmatpush1.msra.mxu0 0.0
    %319 = vmatprep.subr.mxu0 0.0
    %320 = vmatpush1.msra.mxu0 0.0
    %321 = vmatprep.subr.mxu0 0.0
    %322 = vmatpush1.msra.mxu0 0.0
    %323 = vmatprep.mubr.f32.mxu0 0.0
    %324 = vmatmul.mubr.f32.gmra.mrb[0].mxu0 %v257
    %v325 = vpop.f32.mrb[0].mxu0
    %v326 = vadd.f32 %v253, %v325
    %v327 = vpop.f32.mrb[0].mxu0
    %328 = vdwg.mxu0
    %v329 = vmax.f32 %v326, 0.0
    %v330 = vld [vmem:[%s5] sm:$0xff]
    %v331 = vld [vmem:[%s5 + $0x8] sm:$0xff]
    %v332 = vld [vmem:[%s5 + $0x10] sm:$0xff]
    %v333 = vld [vmem:[%s5 + $0x18] sm:$0xff]
    %v334 = vld [vmem:[%s5 + $0x20] sm:$0xff]
    %v335 = vld [vmem:[%s5 + $0x28] sm:$0xff]
    %v336 = vld [vmem:[%s5 + $0x30] sm:$0xff]
    %v337 = vld [vmem:[%s5 + $0x38] sm:$0xff]
    %v338 = vld [vmem:[%s5 + $0x40] sm:$0xff]
    %v339 = vld [vmem:[%s5 + $0x48] sm:$0xff]
    %v340 = vld [vmem:[%s5 + $0x50] sm:$0xf]
    %v341 = vld [vmem:[%s6] sm:$0x1]
    %v343 = vlaneseq
    %v344 = vshrl.u32 %v343, 7
    %v345 = vsub.s32 0, %v344
    %v346 = vrot.slane %v341, %v345
    %vm348 = vcmask 687104
    %v350 = vsel %vm348, %v329, 0
    %vm352 = vcmask 1043456
    %v354 = vsel %vm352, %v340, 0
    %356 = vmatprep.subr.mxu0 0.0
    %357 = vmatpush1.msra.mxu0 %v330
    %358 = vmatprep.subr.mxu0 0.0
    %359 = vmatpush1.msra.mxu0 %v331
    %360 = vmatprep.subr.mxu0 0.0
    %361 = vmatpush1.msra.mxu0 %v332
    %362 = vmatprep.subr.mxu0 0.0
    %363 = vmatpush1.msra.mxu0 %v333
    %364 = vmatprep.subr.mxu0 0.0
    %365 = vmatpush1.msra.mxu0 %v334
    %366 = vmatprep.subr.mxu0 0.0
    %367 = vmatpush1.msra.mxu0 %v335
    %368 = vmatprep.subr.mxu0 0.0
    %369 = vmatpush1.msra.mxu0 %v336
    %370 = vmatprep.subr.mxu0 0.0
    %371 = vmatpush1.msra.mxu0 %v337
    %372 = vmatprep.subr.mxu0 0.0
    %373 = vmatpush1.msra.mxu0 %v338
    %374 = vmatprep.subr.mxu0 0.0
    %375 = vmatpush1.msra.mxu0 %v339
    %376 = vmatprep.subr.mxu0 0.0
    %377 = vmatpush1.msra.mxu0 %v354
    %378 = vmatprep.subr.mxu0 0.0
    %379 = vmatpush1.msra.mxu0 0.0
    %380 = vmatprep.subr.mxu0 0.0
    %381 = vmatpush1.msra.mxu0 0.0
    %382 = vmatprep.subr.mxu0 0.0
    %383 = vmatpush1.msra.mxu0 0.0
    %384 = vmatprep.subr.mxu0 0.0
    %385 = vmatpush1.msra.mxu0 0.0
    %386 = vmatprep.subr.mxu0 0.0
    %387 = vmatpush1.msra.mxu0 0.0
    %388 = vmatprep.subr.mxu0 0.0
    %389 = vmatpush1.msra.mxu0 0.0
    %390 = vmatprep.subr.mxu0 0.0
    %391 = vmatpush1.msra.mxu0 0.0
    %392 = vmatprep.subr.mxu0 0.0
    %393 = vmatpush1.msra.mxu0 0.0
    %394 = vmatprep.subr.mxu0 0.0
    %395 = vmatpush1.msra.mxu0 0.0
    %396 = vmatprep.subr.mxu0 0.0
    %397 = vmatpush1.msra.mxu0 0.0
    %398 = vmatprep.subr.mxu0 0.0
    %399 = vmatpush1.msra.mxu0 0.0
    %400 = vmatprep.subr.mxu0 0.0
    %401 = vmatpush1.msra.mxu0 0.0
    %402 = vmatprep.subr.mxu0 0.0
    %403 = vmatpush1.msra.mxu0 0.0
    %404 = vmatprep.subr.mxu0 0.0
    %405 = vmatpush1.msra.mxu0 0.0
    %406 = vmatprep.subr.mxu0 0.0
    %407 = vmatpush1.msra.mxu0 0.0
    %408 = vmatprep.subr.mxu0 0.0
    %409 = vmatpush1.msra.mxu0 0.0
    %410 = vmatprep.subr.mxu0 0.0
    %411 = vmatpush1.msra.mxu0 0.0
    %412 = vmatprep.subr.mxu0 0.0
    %413 = vmatpush1.msra.mxu0 0.0
    %414 = vmatprep.subr.mxu0 0.0
    %415 = vmatpush1.msra.mxu0 0.0
    %416 = vmatprep.subr.mxu0 0.0
    %417 = vmatpush1.msra.mxu0 0.0
    %418 = vmatprep.subr.mxu0 0.0
    %419 = vmatpush1.msra.mxu0 0.0
    %420 = vmatprep.mubr.f32.mxu0 0.0
    %421 = vmatmul.mubr.f32.gmra.mrb[0].mxu0 %v350
    %v422 = vpop.f32.mrb[0].mxu0
    %v423 = vadd.f32 %v346, %v422
    %v424 = vpop.f32.mrb[0].mxu0
    %425 = vdwg.mxu0
    %vm426 = vcmask 80896
    %427 = vst.msk [vmem:[#allocation2] sm:$0xff] %vm426, %v423
    // Predicated region
    $region30: #{net_forward.3} parent=1 // pred_check
      _
    $region31: #{net_forward.3} parent=1 // pred_check_branch
      %429 = sbr.rel (0) target = $region33
    $region32: #{net_forward.3} parent=1 // pred_region
      %s431 = ssub.s32 128, 128
      %432 = vsyncadd [#allocation3], %s431
      %s434 = sshll.u32 [#allocation2], 4
      %s435 = int_to_ptr.vmem [resolvable:$true] %s434
      %437 = dma.vmem_to_hbm [thread:$0]  %s435, 128, %s7, [#allocation3]
    $region33: #{net_forward.3} parent=1 // pred_fallthru
      _
    // Predicated region
    $region34: #{net_forward.3} parent=1 // pred_check
      _
    $region35: #{net_forward.3} parent=1 // pred_check_branch
      %439 = sbr.rel (0) target = $region37
    $region36: #{net_forward.3} parent=1 // pred_region
      %440 = dma.done [#allocation3], 128
    $region37: #{net_forward.3} parent=1 // pred_fallthru
      _
    %441 = vsyncpa [#allocation3], 1

// kernel: net_forward.2
$region0: #{net_forward.2}
  #allocation0 [shape = 'u32[]', space=smem, size = 0x4, offset = 0x4, fixed_abs, tag = 'smem constant byte address 0x4 - core index']
  #allocation1 [shape = 'u32[144,128]{1,0:T(1,128)}', space=vmem, size = 0x12000, scoped, tag = 'internal scratch']
  %s0 = inlined_call_operand.vmem [shape: f32[8,28,28], index: 0, kind: input, shape index: {}]
  %s1 = inlined_call_operand.vmem [shape: f32[6,104,28], index: 1, kind: input, shape index: {}]
  %s2 = inlined_call_operand.vmem [shape: f32[104,1], index: 2, kind: input, shape index: {}]
  %s3 = inlined_call_operand.vmem [shape: f32[6,80,104], index: 3, kind: input, shape index: {}]
  %s4 = inlined_call_operand.vmem [shape: f32[80,1], index: 4, kind: input, shape index: {}]
  %s5 = inlined_call_operand.vmem [shape: f32[26,13], index: 5, kind: input, shape index: {}]
  %s6 = inlined_call_operand.vmem [shape: f32[26,13], index: 6, kind: input, shape index: {}]
  %s7 = inlined_call_operand.vmem [shape: f32[5,11], index: 7, kind: input, shape index: {}]
  %s8 = inlined_call_operand.vmem [shape: f32[5,11], index: 8, kind: input, shape index: {}]
  %s9 = inlined_call_operand.vmem [shape: f32[8,5,80], index: 9, kind: output, shape index: {}]
  %s10 = sld [smem:[#allocation0]]
  $region69: #{net_forward.2} parent=0
    _
  %s12 = ssub.s32 1, %s10
  %s13 = scalar_select 0, %s12, %s10
  loop: start=0, step=1, limit=4
  $region2: #{net_forward.2} parent=0 // loop_pre_header
    _
  $region3: #{net_forward.2} parent=0 // loop_header
    %s15 = sphi 0, %s19
    %p16 = scmp.ge.s32.totalorder %s15, 4
    %s25 = sphi 0, %s27
    %s28 = sphi 0, %s25
    %s29 = sphi 0, %s28
    %s45 = sphi 0, %s29
    %s49 = sphi 0, %s49
    %s51 = sphi 0, %s49
    %s52 = sphi 0, %s51
    %s66 = sphi 0, %s52
    %s70 = sphi 0, %s70
    %s72 = sphi 0, %s70
    %s73 = sphi 0, %s72
    %s87 = sphi 0, %s73
    %s91 = sphi 0, %s91
    %s93 = sphi 0, %s91
    %s94 = sphi 0, %s93
    %s108 = sphi 0, %s94
    %s112 = sphi 0, %s112
    %s114 = sphi 0, %s112
    %s115 = sphi 0, %s114
    %s129 = sphi 0, %s115
    %s133 = sphi 0, %s133
    %s135 = sphi 0, %s133
    %s136 = sphi 0, %s135
    %s150 = sphi 0, %s136
    %s154 = sphi 0, %s154
    %s156 = sphi 0, %s154
    %s157 = sphi 0, %s156
    %s171 = sphi 0, %s157
    %s175 = sphi 0, %s175
    %s177 = sphi 0, %s175
    %s178 = sphi 0, %s177
    %s192 = sphi 0, %s178
    %s196 = sphi 0, %s196
    %s198 = sphi 0, %s196
    %s199 = sphi 0, %s198
    %s213 = sphi 0, %s199
    %s219 = sphi 0, %s221
    %s222 = sphi 0, %s219
    %s223 = sphi 0, %s222
    %s239 = sphi 0, %s223
  $region4: #{net_forward.2} parent=0 // loop_header_branch
    %18 = sbr.rel (%p16) target = $region8
  $region5: #{net_forward.2} parent=0 // loop_body
    %s20 = ssub.s32 %s15, 1
    %s21 = ssub.s32 %s15, 2
    %s22 = sadd.s32 %s15, 1
    %s23 = ssub.s32 %s15, %s22
    %p24 = scmp.eq.s32.totalorder %s23, 0
    %s26 = sadd.s32 %s25, 1
    %s27 = scalar_select %p24, %s25, %s26
    %p30 = pneg %p24
    %p31 = scmp.eq.s32.totalorder %s15, 1
    %p32 = por %p30, %p31
    %p33 = scmp.ne.s32.totalorder %s25, %s28
    %p34 = scmp.eq.s32.totalorder %s15, 0
    %p35 = por %p33, %p34
    %p36 = scmp.ne.s32.totalorder %s25, %s28
    %p37 = scmp.eq.s32.totalorder %s20, 1
    %p38 = por %p36, %p37
    %p39 = scmp.ne.s32.totalorder %s28, %s29
    %p40 = scmp.eq.s32.totalorder %s20, 0
    %p41 = por %p39, %p40
    %p42 = scmp.ne.s32.totalorder %s28, %s29
    %p43 = scmp.eq.s32.totalorder %s21, 1
    %p44 = por %p42, %p43
    %p46 = scmp.ne.s32.totalorder %s29, %s45
    %p47 = scmp.eq.s32.totalorder %s21, 0
    %p48 = por %p46, %p47
    %s50 = sadd.s32 %s49, 1
    %p53 = scmp.eq.s32.totalorder %s15, 1
    %p54 = scmp.ne.s32.totalorder %s49, %s51
    %p55 = scmp.eq.s32.totalorder %s15, 0
    %p56 = por %p54, %p55
    %p57 = scmp.ne.s32.totalorder %s49, %s51
    %p58 = scmp.eq.s32.totalorder %s20, 1
    %p59 = por %p57, %p58
    %p60 = scmp.ne.s32.totalorder %s51, %s52
    %p61 = scmp.eq.s32.totalorder %s20, 0
    %p62 = por %p60, %p61
    %p63 = scmp.ne.s32.totalorder %s51, %s52
    %p64 = scmp.eq.s32.totalorder %s21, 1
    %p65 = por %p63, %p64
    %p67 = scmp.ne.s32.totalorder %s52, %s66
    %p68 = scmp.eq.s32.totalorder %s21, 0
    %p69 = por %p67, %p68
    %s71 = sadd.s32 %s70, 1
    %p74 = scmp.eq.s32.totalorder %s15, 1
    %p75 = scmp.ne.s32.totalorder %s70, %s72
    %p76 = scmp.eq.s32.totalorder %s15, 0
    %p77 = por %p75, %p76
    %p78 = scmp.ne.s32.totalorder %s70, %s72
    %p79 = scmp.eq.s32.totalorder %s20, 1
    %p80 = por %p78, %p79
    %p81 = scmp.ne.s32.totalorder %s72, %s73
    %p82 = scmp.eq.s32.totalorder %s20, 0
    %p83 = por %p81, %p82
    %p84 = scmp.ne.s32.totalorder %s72, %s73
    %p85 = scmp.eq.s32.totalorder %s21, 1
    %p86 = por %p84, %p85
    %p88 = scmp.ne.s32.totalorder %s73, %s87
    %p89 = scmp.eq.s32.totalorder %s21, 0
    %p90 = por %p88, %p89
    %s92 = sadd.s32 %s91, 1
    %p95 = scmp.eq.s32.totalorder %s15, 1
    %p96 = scmp.ne.s32.totalorder %s91, %s93
    %p97 = scmp.eq.s32.totalorder %s15, 0
    %p98 = por %p96, %p97
    %p99 = scmp.ne.s32.totalorder %s91, %s93
    %p100 = scmp.eq.s32.totalorder %s20, 1
    %p101 = por %p99, %p100
    %p102 = scmp.ne.s32.totalorder %s93, %s94
    %p103 = scmp.eq.s32.totalorder %s20, 0
    %p104 = por %p102, %p103
    %p105 = scmp.ne.s32.totalorder %s93, %s94
    %p106 = scmp.eq.s32.totalorder %s21, 1
    %p107 = por %p105, %p106
    %p109 = scmp.ne.s32.totalorder %s94, %s108
    %p110 = scmp.eq.s32.totalorder %s21, 0
    %p111 = por %p109, %p110
    %s113 = sadd.s32 %s112, 1
    %p116 = scmp.eq.s32.totalorder %s15, 1
    %p117 = scmp.ne.s32.totalorder %s112, %s114
    %p118 = scmp.eq.s32.totalorder %s15, 0
    %p119 = por %p117, %p118
    %p120 = scmp.ne.s32.totalorder %s112, %s114
    %p121 = scmp.eq.s32.totalorder %s20, 1
    %p122 = por %p120, %p121
    %p123 = scmp.ne.s32.totalorder %s114, %s115
    %p124 = scmp.eq.s32.totalorder %s20, 0
    %p125 = por %p123, %p124
    %p126 = scmp.ne.s32.totalorder %s114, %s115
    %p127 = scmp.eq.s32.totalorder %s21, 1
    %p128 = por %p126, %p127
    %p130 = scmp.ne.s32.totalorder %s115, %s129
    %p131 = scmp.eq.s32.totalorder %s21, 0
    %p132 = por %p130, %p131
    %s134 = sadd.s32 %s133, 1
    %p137 = scmp.eq.s32.totalorder %s15, 1
    %p138 = scmp.ne.s32.totalorder %s133, %s135
    %p139 = scmp.eq.s32.totalorder %s15, 0
    %p140 = por %p138, %p139
    %p141 = scmp.ne.s32.totalorder %s133, %s135
    %p142 = scmp.eq.s32.totalorder %s20, 1
    %p143 = por %p141, %p142
    %p144 = scmp.ne.s32.totalorder %s135, %s136
    %p145 = scmp.eq.s32.totalorder %s20, 0
    %p146 = por %p144, %p145
    %p147 = scmp.ne.s32.totalorder %s135, %s136
    %p148 = scmp.eq.s32.totalorder %s21, 1
    %p149 = por %p147, %p148
    %p151 = scmp.ne.s32.totalorder %s136, %s150
    %p152 = scmp.eq.s32.totalorder %s21, 0
    %p153 = por %p151, %p152
    %s155 = sadd.s32 %s154, 1
    %p158 = scmp.eq.s32.totalorder %s15, 1
    %p159 = scmp.ne.s32.totalorder %s154, %s156
    %p160 = scmp.eq.s32.totalorder %s15, 0
    %p161 = por %p159, %p160
    %p162 = scmp.ne.s32.totalorder %s154, %s156
    %p163 = scmp.eq.s32.totalorder %s20, 1
    %p164 = por %p162, %p163
    %p165 = scmp.ne.s32.totalorder %s156, %s157
    %p166 = scmp.eq.s32.totalorder %s20, 0
    %p167 = por %p165, %p166
    %p168 = scmp.ne.s32.totalorder %s156, %s157
    %p169 = scmp.eq.s32.totalorder %s21, 1
    %p170 = por %p168, %p169
    %p172 = scmp.ne.s32.totalorder %s157, %s171
    %p173 = scmp.eq.s32.totalorder %s21, 0
    %p174 = por %p172, %p173
    %s176 = sadd.s32 %s175, 1
    %p179 = scmp.eq.s32.totalorder %s15, 1
    %p180 = scmp.ne.s32.totalorder %s175, %s177
    %p181 = scmp.eq.s32.totalorder %s15, 0
    %p182 = por %p180, %p181
    %p183 = scmp.ne.s32.totalorder %s175, %s177
    %p184 = scmp.eq.s32.totalorder %s20, 1
    %p185 = por %p183, %p184
    %p186 = scmp.ne.s32.totalorder %s177, %s178
    %p187 = scmp.eq.s32.totalorder %s20, 0
    %p188 = por %p186, %p187
    %p189 = scmp.ne.s32.totalorder %s177, %s178
    %p190 = scmp.eq.s32.totalorder %s21, 1
    %p191 = por %p189, %p190
    %p193 = scmp.ne.s32.totalorder %s178, %s192
    %p194 = scmp.eq.s32.totalorder %s21, 0
    %p195 = por %p193, %p194
    %s197 = sadd.s32 %s196, 1
    %p200 = scmp.eq.s32.totalorder %s15, 1
    %p201 = scmp.ne.s32.totalorder %s196, %s198
    %p202 = scmp.eq.s32.totalorder %s15, 0
    %p203 = por %p201, %p202
    %p204 = scmp.ne.s32.totalorder %s196, %s198
    %p205 = scmp.eq.s32.totalorder %s20, 1
    %p206 = por %p204, %p205
    %p207 = scmp.ne.s32.totalorder %s198, %s199
    %p208 = scmp.eq.s32.totalorder %s20, 0
    %p209 = por %p207, %p208
    %p210 = scmp.ne.s32.totalorder %s198, %s199
    %p211 = scmp.eq.s32.totalorder %s21, 1
    %p212 = por %p210, %p211
    %p214 = scmp.ne.s32.totalorder %s199, %s213
    %p215 = scmp.eq.s32.totalorder %s21, 0
    %p216 = por %p214, %p215
    %s217 = ssub.s32 %s15, %s22
    %p218 = scmp.eq.s32.totalorder %s217, 0
    %s220 = sadd.s32 %s219, 1
    %s221 = scalar_select %p218, %s219, %s220
    %p224 = pneg %p218
    %p225 = scmp.eq.s32.totalorder %s15, 1
    %p226 = por %p224, %p225
    %p227 = scmp.ne.s32.totalorder %s219, %s222
    %p228 = scmp.eq.s32.totalorder %s15, 0
    %p229 = por %p227, %p228
    %p230 = scmp.ne.s32.totalorder %s219, %s222
    %p231 = scmp.eq.s32.totalorder %s20, 1
    %p232 = por %p230, %p231
    %p233 = scmp.ne.s32.totalorder %s222, %s223
    %p234 = scmp.eq.s32.totalorder %s20, 0
    %p235 = por %p233, %p234
    %p236 = scmp.ne.s32.totalorder %s222, %s223
    %p237 = scmp.eq.s32.totalorder %s21, 1
    %p238 = por %p236, %p237
    %p240 = scmp.ne.s32.totalorder %s223, %s239
    %p241 = scmp.eq.s32.totalorder %s21, 0
    %p242 = por %p240, %p241
    %p243 = scmp.le.s32.totalorder 1, %s15
    %p244 = scmp.lt.s32.totalorder %s15, 3
    %p245 = pnand %p243, %p244
    %p246 = pneg %p245
    // Predicated region
    $region9: #{net_forward.2} parent=5 // pred_check
      _
    $region10: #{net_forward.2} parent=5 // pred_check_branch
      %248 = sbr.rel (%p245) target = $region12
    $region11: #{net_forward.2} parent=5 // pred_region
      %s249 = ssub.s32 %s15, 1
      // Predicated region
      $region13: #{net_forward.2} parent=11 // pred_check
        %p250 = pneg %p62
      $region14: #{net_forward.2} parent=11 // pred_check_branch
        %252 = sbr.rel (%p250) target = $region16
      $region15: #{net_forward.2} parent=11 // pred_region
        _
      $region16: #{net_forward.2} parent=11 // pred_fallthru
        _
      // Predicated region
      $region17: #{net_forward.2} parent=11 // pred_check
        %p253 = pneg %p83
      $region18: #{net_forward.2} parent=11 // pred_check_branch
        %255 = sbr.rel (%p253) target = $region20
      $region19: #{net_forward.2} parent=11 // pred_region
        _
      $region20: #{net_forward.2} parent=11 // pred_fallthru
        _
      // Predicated region
      $region21: #{net_forward.2} parent=11 // pred_check
        %p256 = pneg %p104
      $region22: #{net_forward.2} parent=11 // pred_check_branch
        %258 = sbr.rel (%p256) target = $region24
      $region23: #{net_forward.2} parent=11 // pred_region
        _
      $region24: #{net_forward.2} parent=11 // pred_fallthru
        _
      // Predicated region
      $region25: #{net_forward.2} parent=11 // pred_check
        %p259 = pneg %p125
      $region26: #{net_forward.2} parent=11 // pred_check_branch
        %261 = sbr.rel (%p259) target = $region28
      $region27: #{net_forward.2} parent=11 // pred_region
        _
      $region28: #{net_forward.2} parent=11 // pred_fallthru
        _
      // Predicated region
      $region29: #{net_forward.2} parent=11 // pred_check
        %p262 = pneg %p146
      $region30: #{net_forward.2} parent=11 // pred_check_branch
        %264 = sbr.rel (%p262) target = $region32
      $region31: #{net_forward.2} parent=11 // pred_region
        _
      $region32: #{net_forward.2} parent=11 // pred_fallthru
        _
      // Predicated region
      $region33: #{net_forward.2} parent=11 // pred_check
        %p265 = pneg %p167
      $region34: #{net_forward.2} parent=11 // pred_check_branch
        %267 = sbr.rel (%p265) target = $region36
      $region35: #{net_forward.2} parent=11 // pred_region
        _
      $region36: #{net_forward.2} parent=11 // pred_fallthru
        _
      // Predicated region
      $region37: #{net_forward.2} parent=11 // pred_check
        %p268 = pneg %p188
      $region38: #{net_forward.2} parent=11 // pred_check_branch
        %270 = sbr.rel (%p268) target = $region40
      $region39: #{net_forward.2} parent=11 // pred_region
        _
      $region40: #{net_forward.2} parent=11 // pred_fallthru
        _
      // Predicated region
      $region41: #{net_forward.2} parent=11 // pred_check
        %p271 = pneg %p209
      $region42: #{net_forward.2} parent=11 // pred_check_branch
        %273 = sbr.rel (%p271) target = $region44
      $region43: #{net_forward.2} parent=11 // pred_region
        _
      $region44: #{net_forward.2} parent=11 // pred_fallthru
        _
    $region12: #{net_forward.2} parent=5 // pred_fallthru
      _
    %p274 = scmp.lt.s32.totalorder %s15, 2
    // Predicated region
    $region45: #{net_forward.2} parent=5 // pred_check
      %p275 = pneg %p274
    $region46: #{net_forward.2} parent=5 // pred_check_branch
      %277 = sbr.rel (%p275) target = $region48
    $region47: #{net_forward.2} parent=5 // pred_region
      // Predicated region
      $region49: #{net_forward.2} parent=47 // pred_check
        %p278 = pneg %p35
      $region50: #{net_forward.2} parent=47 // pred_check_branch
        %280 = sbr.rel (%p278) target = $region52
      $region51: #{net_forward.2} parent=47 // pred_region
        %s281 = smul.u32 4, %s15
        %p282 = scmp.lt.s32.totalorder %s281, 7
        %s283 = scalar_select %p282, %s281, 7
        %s284 = smul.addr %s283, 4
        %s285 = smul.addr %s284, 8
        %s286 = scalar_lea.vmem %s0, %s285
        %s287 = smul.u32 4, %s15
      $region52: #{net_forward.2} parent=47 // pred_fallthru
        _
    $region48: #{net_forward.2} parent=5 // pred_fallthru
      _
    %p288 = scmp.le.s32.totalorder 1, %s15
    %p289 = scmp.lt.s32.totalorder %s15, 3
    %p290 = pnand %p288, %p289
    %p291 = pneg %p290
    // Predicated region
    $region53: #{net_forward.2} parent=5 // pred_check
      _
    $region54: #{net_forward.2} parent=5 // pred_check_branch
      %293 = sbr.rel (%p290) target = $region56
    $region55: #{net_forward.2} parent=5 // pred_region
      %s294 = ssub.s32 %s15, 1
      %s295 = smul.u32 4, %s20
      %p296 = scmp.lt.s32.totalorder %s295, 7
      %s297 = scalar_select %p296, %s295, 7
      %s298 = smul.addr %s297, 4
      %s299 = smul.addr %s298, 8
      %s300 = scalar_lea.vmem %s0, %s299
      %p301 = pneg %p41
      %p302 = pneg %p38
      %p303 = pneg %p62
      %p304 = pneg %p59
      %p305 = pneg %p83
      %p306 = pneg %p80
      %p307 = pneg %p104
      %p308 = pneg %p101
      %p309 = pneg %p125
      %p310 = pneg %p122
      %p311 = pneg %p146
      %p312 = pneg %p143
      %p313 = pneg %p167
      %p314 = pneg %p164
      %p315 = pneg %p188
      %p316 = pneg %p185
      %p317 = pneg %p209
      %p318 = pneg %p206
      %p319 = pneg %p235
      %p320 = pneg %p232
      %s321 = smul.u32 4, %s20
      %p322 = scmp.lt.s32.totalorder %s321, 7
      %s323 = scalar_select %p322, %s321, 7
      %s324 = smul.addr %s323, 8
      %s325 = scalar_lea.vmem %s9, %s324
      %s326 = smul.u32 4, %s20
      %p327 = scmp.lt.s32.totalorder %s326, 7
      %s328 = scalar_select %p327, %s326, 7
      %s329 = smul.addr %s328, 4
      %s330 = smul.addr %s329, 8
      %s331 = scalar_lea.vmem %s0, %s330
      %s332 = smul.u32 4, %s20
      %s333 = smul.u32 4, %s20
      %p334 = scmp.lt.s32.totalorder %s333, 7
      %s335 = scalar_select %p334, %s333, 7
      %s336 = smul.addr %s335, 8
      %s337 = scalar_lea.vmem %s9, %s336
      %s338 = smul.u32 4, %s20
      %v339 = vld [vmem:[%s331] sm:$0xff]
      %v340 = vld [vmem:[%s331 + $0x8] sm:$0xff]
      %v341 = vld [vmem:[%s331 + $0x10] sm:$0xff]
      %v342 = vld [vmem:[%s331 + $0x18] sm:$0xf]
      %v343 = vld [vmem:[%s331 + $0x20] sm:$0xff]
      %v344 = vld [vmem:[%s331 + $0x28] sm:$0xff]
      %v345 = vld [vmem:[%s331 + $0x30] sm:$0xff]
      %v346 = vld [vmem:[%s331 + $0x38] sm:$0xf]
      %v347 = vld [vmem:[%s331 + $0x40] sm:$0xff]
      %v348 = vld [vmem:[%s331 + $0x48] sm:$0xff]
      %v349 = vld [vmem:[%s331 + $0x50] sm:$0xff]
      %v350 = vld [vmem:[%s331 + $0x58] sm:$0xf]
      %v351 = vld [vmem:[%s331 + $0x60] sm:$0xff]
      %v352 = vld [vmem:[%s331 + $0x68] sm:$0xff]
      %v353 = vld [vmem:[%s331 + $0x70] sm:$0xff]
      %v354 = vld [vmem:[%s331 + $0x78] sm:$0xf]
      %v355 = vld [vmem:[%s1] sm:$0xff]
      %v356 = vld [vmem:[%s1 + $0x8] sm:$0xff]
      %v357 = vld [vmem:[%s1 + $0x10] sm:$0xff]
      %v358 = vld [vmem:[%s1 + $0x18] sm:$0xff]
      %v359 = vld [vmem:[%s1 + $0x20] sm:$0xff]
      %v360 = vld [vmem:[%s1 + $0x28] sm:$0xff]
      %v361 = vld [vmem:[%s1 + $0x30] sm:$0xff]
      %v362 = vld [vmem:[%s1 + $0x38] sm:$0xff]
      %v363 = vld [vmem:[%s1 + $0x40] sm:$0xff]
      %v364 = vld [vmem:[%s1 + $0x48] sm:$0xff]
      %v365 = vld [vmem:[%s1 + $0x50] sm:$0xff]
      %v366 = vld [vmem:[%s1 + $0x58] sm:$0xff]
      %v367 = vld [vmem:[%s1 + $0x60] sm:$0xff]
      %s368 = scalar_lea.vmem %s1, 104
      %v369 = vld [vmem:[%s368] sm:$0xff]
      %v370 = vld [vmem:[%s368 + $0x8] sm:$0xff]
      %v371 = vld [vmem:[%s368 + $0x10] sm:$0xff]
      %v372 = vld [vmem:[%s368 + $0x18] sm:$0xff]
      %v373 = vld [vmem:[%s368 + $0x20] sm:$0xff]
      %v374 = vld [vmem:[%s368 + $0x28] sm:$0xff]
      %v375 = vld [vmem:[%s368 + $0x30] sm:$0xff]
      %v376 = vld [vmem:[%s368 + $0x38] sm:$0xff]
      %v377 = vld [vmem:[%s368 + $0x40] sm:$0xff]
      %v378 = vld [vmem:[%s368 + $0x48] sm:$0xff]
      %v379 = vld [vmem:[%s368 + $0x50] sm:$0xff]
      %v380 = vld [vmem:[%s368 + $0x58] sm:$0xff]
      %v381 = vld [vmem:[%s368 + $0x60] sm:$0xff]
      %386 = vrot.lane.b32.xlu0 %v339, 127
      %v387 = vpop.permute.xlu0 %386
      %388 = vrot.lane.b32.xlu0 %v340, 127
      %v389 = vpop.permute.xlu0 %388
      %390 = vrot.lane.b32.xlu0 %v341, 127
      %v391 = vpop.permute.xlu0 %390
      %392 = vrot.lane.b32.xlu0 %v342, 127
      %v393 = vpop.permute.xlu0 %392
      %vm397 = vcmask 228352
      %v399 = vsel %vm397, %v369, 0
      %v402 = vsel %vm397, %v370, 0
      %v405 = vsel %vm397, %v371, 0
      %v408 = vsel %vm397, %v372, 0
      %v411 = vsel %vm397, %v373, 0
      %v414 = vsel %vm397, %v374, 0
      %v417 = vsel %vm397, %v375, 0
      %v420 = vsel %vm397, %v376, 0
      %v423 = vsel %vm397, %v377, 0
      %v426 = vsel %vm397, %v378, 0
      %v429 = vsel %vm397, %v379, 0
      %v432 = vsel %vm397, %v380, 0
      %v435 = vsel %vm397, %v381, 0
      %vm437 = vcmask 1043456
      %v438 = vsel %vm437, %v393, 0
      %440 = vmatprep.subr.mxu0 0.0
      %441 = vmatpush1.msra.mxu0 %v387
      %442 = vmatprep.subr.mxu0 0.0
      %443 = vmatpush1.msra.mxu0 %v389
      %444 = vmatprep.subr.mxu0 0.0
      %445 = vmatpush1.msra.mxu0 %v391
      %446 = vmatprep.subr.mxu0 0.0
      %447 = vmatpush1.msra.mxu0 %v438
      %448 = vmatprep.subr.mxu0 0.0
      %449 = vmatpush1.msra.mxu0 0.0
      %450 = vmatprep.subr.mxu0 0.0
      %451 = vmatpush1.msra.mxu0 0.0
      %452 = vmatprep.subr.mxu0 0.0
      %453 = vmatpush1.msra.mxu0 0.0
      %454 = vmatprep.subr.mxu0 0.0
      %455 = vmatpush1.msra.mxu0 0.0
      %456 = vmatprep.subr.mxu0 0.0
      %457 = vmatpush1.msra.mxu0 0.0
      %458 = vmatprep.subr.mxu0 0.0
      %459 = vmatpush1.msra.mxu0 0.0
      %460 = vmatprep.subr.mxu0 0.0
      %461 = vmatpush1.msra.mxu0 0.0
      %462 = vmatprep.subr.mxu0 0.0
      %463 = vmatpush1.msra.mxu0 0.0
      %464 = vmatprep.subr.mxu0 0.0
      %465 = vmatpush1.msra.mxu0 0.0
      %466 = vmatprep.subr.mxu0 0.0
      %467 = vmatpush1.msra.mxu0 0.0
      %468 = vmatprep.subr.mxu0 0.0
      %469 = vmatpush1.msra.mxu0 0.0
      %470 = vmatprep.subr.mxu0 0.0
      %471 = vmatpush1.msra.mxu0 0.0
      %472 = vmatprep.subr.mxu0 0.0
      %473 = vmatpush1.msra.mxu0 0.0
      %474 = vmatprep.subr.mxu0 0.0
      %475 = vmatpush1.msra.mxu0 0.0
      %476 = vmatprep.subr.mxu0 0.0
      %477 = vmatpush1.msra.mxu0 0.0
      %478 = vmatprep.subr.mxu0 0.0
      %479 = vmatpush1.msra.mxu0 0.0
      %480 = vmatprep.subr.mxu0 0.0
      %481 = vmatpush1.msra.mxu0 0.0
      %482 = vmatprep.subr.mxu0 0.0
      %483 = vmatpush1.msra.mxu0 0.0
      %484 = vmatprep.subr.mxu0 0.0
      %485 = vmatpush1.msra.mxu0 0.0
      %486 = vmatprep.subr.mxu0 0.0
      %487 = vmatpush1.msra.mxu0 0.0
      %488 = vmatprep.subr.mxu0 0.0
      %489 = vmatpush1.msra.mxu0 0.0
      %490 = vmatprep.subr.mxu0 0.0
      %491 = vmatpush1.msra.mxu0 0.0
      %492 = vmatprep.subr.mxu0 0.0
      %493 = vmatpush1.msra.mxu0 0.0
      %494 = vmatprep.subr.mxu0 0.0
      %495 = vmatpush1.msra.mxu0 0.0
      %496 = vmatprep.subr.mxu0 0.0
      %497 = vmatpush1.msra.mxu0 0.0
      %498 = vmatprep.subr.mxu0 0.0
      %499 = vmatpush1.msra.mxu0 0.0
      %500 = vmatprep.subr.mxu0 0.0
      %501 = vmatpush1.msra.mxu0 0.0
      %502 = vmatprep.subr.mxu0 0.0
      %503 = vmatpush1.msra.mxu0 0.0
      %504 = vmatprep.mubr.f32.mxu0 0.0
      %505 = vmatmul.mubr.f32.gmra.mrb[0].mxu0 %v399
      %v506 = vpop.f32.mrb[0].mxu0
      %v507 = vadd.f32 0.0, %v506
      %v508 = vpop.f32.mrb[0].mxu0
      %509 = vmatprep.mubr.f32.mxu0 0.0
      %510 = vmatmul.mubr.f32.gmra.mrb[0].mxu0 %v402
      %v511 = vpop.f32.mrb[0].mxu0
      %v512 = vadd.f32 0.0, %v511
      %v513 = vpop.f32.mrb[0].mxu0
      %514 = vmatprep.mubr.f32.mxu0 0.0
      %515 = vmatmul.mubr.f32.gmra.mrb[0].mxu0 %v405
      %v516 = vpop.f32.mrb[0].mxu0
      %v517 = vadd.f32 0.0, %v516
      %v518 = vpop.f32.mrb[0].mxu0
      %519 = vmatprep.mubr.f32.mxu0 0.0
      %520 = vmatmul.mubr.f32.gmra.mrb[0].mxu0 %v408
      %v521 = vpop.f32.mrb[0].mxu0
      %v522 = vadd.f32 0.0, %v521
      %v523 = vpop.f32.mrb[0].mxu0
      %524 = vmatprep.mubr.f32.mxu0 0.0
      %525 = vmatmul.mubr.f32.gmra.mrb[0].mxu0 %v411
      %v526 = vpop.f32.mrb[0].mxu0
      %v527 = vadd.f32 0.0, %v526
      %v528 = vpop.f32.mrb[0].mxu0
      %529 = vmatprep.mubr.f32.mxu0 0.0
      %530 = vmatmul.mubr.f32.gmra.mrb[0].mxu0 %v414
      %v531 = vpop.f32.mrb[0].mxu0
      %v532 = vadd.f32 0.0, %v531
      %v533 = vpop.f32.mrb[0].mxu0
      %534 = vmatprep.mubr.f32.mxu0 0.0
      %535 = vmatmul.mubr.f32.gmra.mrb[0].mxu0 %v417
      %v536 = vpop.f32.mrb[0].mxu0
      %v537 = vadd.f32 0.0, %v536
      %v538 = vpop.f32.mrb[0].mxu0
      %539 = vmatprep.mubr.f32.mxu0 0.0
      %540 = vmatmul.mubr.f32.gmra.mrb[0].mxu0 %v420
      %v541 = vpop.f32.mrb[0].mxu0
      %v542 = vadd.f32 0.0, %v541
      %v543 = vpop.f32.mrb[0].mxu0
      %544 = vmatprep.mubr.f32.mxu0 0.0
      %545 = vmatmul.mubr.f32.gmra.mrb[0].mxu0 %v423
      %v546 = vpop.f32.mrb[0].mxu0
      %v547 = vadd.f32 0.0, %v546
      %v548 = vpop.f32.mrb[0].mxu0
      %549 = vmatprep.mubr.f32.mxu0 0.0
      %550 = vmatmul.mubr.f32.gmra.mrb[0].mxu0 %v426
      %v551 = vpop.f32.mrb[0].mxu0
      %v552 = vadd.f32 0.0, %v551
      %v553 = vpop.f32.mrb[0].mxu0
      %554 = vmatprep.mubr.f32.mxu0 0.0
      %555 = vmatmul.mubr.f32.gmra.mrb[0].mxu0 %v429
      %v556 = vpop.f32.mrb[0].mxu0
      %v557 = vadd.f32 0.0, %v556
      %v558 = vpop.f32.mrb[0].mxu0
      %559 = vmatprep.mubr.f32.mxu0 0.0
      %560 = vmatmul.mubr.f32.gmra.mrb[0].mxu0 %v432
      %v561 = vpop.f32.mrb[0].mxu0
      %v562 = vadd.f32 0.0, %v561
      %v563 = vpop.f32.mrb[0].mxu0
      %564 = vmatprep.mubr.f32.mxu0 0.0
      %565 = vmatmul.mubr.f32.gmra.mrb[0].mxu0 %v435
      %v566 = vpop.f32.mrb[0].mxu0
      %v567 = vadd.f32 0.0, %v566
      %v568 = vpop.f32.mrb[0].mxu0
      %569 = vdwg.mxu0
      %574 = vrot.lane.b32.xlu0 %v343, 127
      %v575 = vpop.permute.xlu0 %574
      %576 = vrot.lane.b32.xlu0 %v344, 127
      %v577 = vpop.permute.xlu0 %576
      %578 = vrot.lane.b32.xlu0 %v345, 127
      %v579 = vpop.permute.xlu0 %578
      %580 = vrot.lane.b32.xlu0 %v346, 127
      %v581 = vpop.permute.xlu0 %580
      %v585 = vsel %vm437, %v581, 0
      %587 = vmatprep.subr.mxu0 0.0
      %588 = vmatpush1.msra.mxu0 %v575
      %589 = vmatprep.subr.mxu0 0.0
      %590 = vmatpush1.msra.mxu0 %v577
      %591 = vmatprep.subr.mxu0 0.0
      %592 = vmatpush1.msra.mxu0 %v579
      %593 = vmatprep.subr.mxu0 0.0
      %594 = vmatpush1.msra.mxu0 %v585
      %595 = vmatprep.subr.mxu0 0.0
      %596 = vmatpush1.msra.mxu0 0.0
      %597 = vmatprep.subr.mxu0 0.0
      %598 = vmatpush1.msra.mxu0 0.0
      %599 = vmatprep.subr.mxu0 0.0
      %600 = vmatpush1.msra.mxu0 0.0
      %601 = vmatprep.subr.mxu0 0.0
      %602 = vmatpush1.msra.mxu0 0.0
      %603 = vmatprep.subr.mxu0 0.0
      %604 = vmatpush1.msra.mxu0 0.0
      %605 = vmatprep.subr.mxu0 0.0
      %606 = vmatpush1.msra.mxu0 0.0
      %607 = vmatprep.subr.mxu0 0.0
      %608 = vmatpush1.msra.mxu0 0.0
      %609 = vmatprep.subr.mxu0 0.0
      %610 = vmatpush1.msra.mxu0 0.0
      %611 = vmatprep.subr.mxu0 0.0
      %612 = vmatpush1.msra.mxu0 0.0
      %613 = vmatprep.subr.mxu0 0.0
      %614 = vmatpush1.msra.mxu0 0.0
      %615 = vmatprep.subr.mxu0 0.0
      %616 = vmatpush1.msra.mxu0 0.0
      %617 = vmatprep.subr.mxu0 0.0
      %618 = vmatpush1.msra.mxu0 0.0
      %619 = vmatprep.subr.mxu0 0.0
      %620 = vmatpush1.msra.mxu0 0.0
      %621 = vmatprep.subr.mxu0 0.0
      %622 = vmatpush1.msra.mxu0 0.0
      %623 = vmatprep.subr.mxu0 0.0
      %624 = vmatpush1.msra.mxu0 0.0
      %625 = vmatprep.subr.mxu0 0.0
      %626 = vmatpush1.msra.mxu0 0.0
      %627 = vmatprep.subr.mxu0 0.0
      %628 = vmatpush1.msra.mxu0 0.0
      %629 = vmatprep.subr.mxu0 0.0
      %630 = vmatpush1.msra.mxu0 0.0
      %631 = vmatprep.subr.mxu0 0.0
      %632 = vmatpush1.msra.mxu0 0.0
      %633 = vmatprep.subr.mxu0 0.0
      %634 = vmatpush1.msra.mxu0 0.0
      %635 = vmatprep.subr.mxu0 0.0
      %636 = vmatpush1.msra.mxu0 0.0
      %637 = vmatprep.subr.mxu0 0.0
      %638 = vmatpush1.msra.mxu0 0.0
      %639 = vmatprep.subr.mxu0 0.0
      %640 = vmatpush1.msra.mxu0 0.0
      %641 = vmatprep.subr.mxu0 0.0
      %642 = vmatpush1.msra.mxu0 0.0
      %643 = vmatprep.subr.mxu0 0.0
      %644 = vmatpush1.msra.mxu0 0.0
      %645 = vmatprep.subr.mxu0 0.0
      %646 = vmatpush1.msra.mxu0 0.0
      %647 = vmatprep.subr.mxu0 0.0
      %648 = vmatpush1.msra.mxu0 0.0
      %649 = vmatprep.subr.mxu0 0.0
      %650 = vmatpush1.msra.mxu0 0.0
      %651 = vmatprep.mubr.f32.mxu0 0.0
      %652 = vmatmul.mubr.f32.gmra.mrb[0].mxu0 %v399
      %v653 = vpop.f32.mrb[0].mxu0
      %v654 = vadd.f32 0.0, %v653
      %v655 = vpop.f32.mrb[0].mxu0
      %656 = vmatprep.mubr.f32.mxu0 0.0
      %657 = vmatmul.mubr.f32.gmra.mrb[0].mxu0 %v402
      %v658 = vpop.f32.mrb[0].mxu0
      %v659 = vadd.f32 0.0, %v658
      %v660 = vpop.f32.mrb[0].mxu0
      %661 = vmatprep.mubr.f32.mxu0 0.0
      %662 = vmatmul.mubr.f32.gmra.mrb[0].mxu0 %v405
      %v663 = vpop.f32.mrb[0].mxu0
      %v664 = vadd.f32 0.0, %v663
      %v665 = vpop.f32.mrb[0].mxu0
      %666 = vmatprep.mubr.f32.mxu0 0.0
      %667 = vmatmul.mubr.f32.gmra.mrb[0].mxu0 %v408
      %v668 = vpop.f32.mrb[0].mxu0
      %v669 = vadd.f32 0.0, %v668
      %v670 = vpop.f32.mrb[0].mxu0
      %671 = vmatprep.mubr.f32.mxu0 0.0
      %672 = vmatmul.mubr.f32.gmra.mrb[0].mxu0 %v411
      %v673 = vpop.f32.mrb[0].mxu0
      %v674 = vadd.f32 0.0, %v673
      %v675 = vpop.f32.mrb[0].mxu0
      %676 = vmatprep.mubr.f32.mxu0 0.0
      %677 = vmatmul.mubr.f32.gmra.mrb[0].mxu0 %v414
      %v678 = vpop.f32.mrb[0].mxu0
      %v679 = vadd.f32 0.0, %v678
      %v680 = vpop.f32.mrb[0].mxu0
      %681 = vmatprep.mubr.f32.mxu0 0.0
      %682 = vmatmul.mubr.f32.gmra.mrb[0].mxu0 %v417
      %v683 = vpop.f32.mrb[0].mxu0
      %v684 = vadd.f32 0.0, %v683
      %v685 = vpop.f32.mrb[0].mxu0
      %686 = vmatprep.mubr.f32.mxu0 0.0
      %687 = vmatmul.mubr.f32.gmra.mrb[0].mxu0 %v420
      %v688 = vpop.f32.mrb[0].mxu0
      %v689 = vadd.f32 0.0, %v688
      %v690 = vpop.f32.mrb[0].mxu0
      %691 = vmatprep.mubr.f32.mxu0 0.0
      %692 = vmatmul.mubr.f32.gmra.mrb[0].mxu0 %v423
      %v693 = vpop.f32.mrb[0].mxu0
      %v694 = vadd.f32 0.0, %v693
      %v695 = vpop.f32.mrb[0].mxu0
      %696 = vmatprep.mubr.f32.mxu0 0.0
      %697 = vmatmul.mubr.f32.gmra.mrb[0].mxu0 %v426
      %v698 = vpop.f32.mrb[0].mxu0
      %v699 = vadd.f32 0.0, %v698
      %v700 = vpop.f32.mrb[0].mxu0
      %701 = vmatprep.mubr.f32.mxu0 0.0
      %702 = vmatmul.mubr.f32.gmra.mrb[0].mxu0 %v429
      %v703 = vpop.f32.mrb[0].mxu0
      %v704 = vadd.f32 0.0, %v703
      %v705 = vpop.f32.mrb[0].mxu0
      %706 = vmatprep.mubr.f32.mxu0 0.0
      %707 = vmatmul.mubr.f32.gmra.mrb[0].mxu0 %v432
      %v708 = vpop.f32.mrb[0].mxu0
      %v709 = vadd.f32 0.0, %v708
      %v710 = vpop.f32.mrb[0].mxu0
      %711 = vmatprep.mubr.f32.mxu0 0.0
      %712 = vmatmul.mubr.f32.gmra.mrb[0].mxu0 %v435
      %v713 = vpop.f32.mrb[0].mxu0
      %v714 = vadd.f32 0.0, %v713
      %v715 = vpop.f32.mrb[0].mxu0
      %716 = vdwg.mxu0
      %721 = vrot.lane.b32.xlu0 %v347, 127
      %v722 = vpop.permute.xlu0 %721
      %723 = vrot.lane.b32.xlu0 %v348, 127
      %v724 = vpop.permute.xlu0 %723
      %725 = vrot.lane.b32.xlu0 %v349, 127
      %v726 = vpop.permute.xlu0 %725
      %727 = vrot.lane.b32.xlu0 %v350, 127
      %v728 = vpop.permute.xlu0 %727
      %v732 = vsel %vm437, %v728, 0
      %734 = vmatprep.subr.mxu0 0.0
      %735 = vmatpush1.msra.mxu0 %v722
      %736 = vmatprep.subr.mxu0 0.0
      %737 = vmatpush1.msra.mxu0 %v724
      %738 = vmatprep.subr.mxu0 0.0
      %739 = vmatpush1.msra.mxu0 %v726
      %740 = vmatprep.subr.mxu0 0.0
      %741 = vmatpush1.msra.mxu0 %v732
      %742 = vmatprep.subr.mxu0 0.0
      %743 = vmatpush1.msra.mxu0 0.0
      %744 = vmatprep.subr.mxu0 0.0
      %745 = vmatpush1.msra.mxu0 0.0
      %746 = vmatprep.subr.mxu0 0.0
      %747 = vmatpush1.msra.mxu0 0.0
      %748 = vmatprep.subr.mxu0 0.0
      %749 = vmatpush1.msra.mxu0 0.0
      %750 = vmatprep.subr.mxu0 0.0
      %751 = vmatpush1.msra.mxu0 0.0
      %752 = vmatprep.subr.mxu0 0.0
      %753 = vmatpush1.msra.mxu0 0.0
      %754 = vmatprep.subr.mxu0 0.0
      %755 = vmatpush1.msra.mxu0 0.0
      %756 = vmatprep.subr.mxu0 0.0
      %757 = vmatpush1.msra.mxu0 0.0
      %758 = vmatprep.subr.mxu0 0.0
      %759 = vmatpush1.msra.mxu0 0.0
      %760 = vmatprep.subr.mxu0 0.0
      %761 = vmatpush1.msra.mxu0 0.0
      %762 = vmatprep.subr.mxu0 0.0
      %763 = vmatpush1.msra.mxu0 0.0
      %764 = vmatprep.subr.mxu0 0.0
      %765 = vmatpush1.msra.mxu0 0.0
      %766 = vmatprep.subr.mxu0 0.0
      %767 = vmatpush1.msra.mxu0 0.0
      %768 = vmatprep.subr.mxu0 0.0
      %769 = vmatpush1.msra.mxu0 0.0
      %770 = vmatprep.subr.mxu0 0.0
      %771 = vmatpush1.msra.mxu0 0.0
      %772 = vmatprep.subr.mxu0 0.0
      %773 = vmatpush1.msra.mxu0 0.0
      %774 = vmatprep.subr.mxu0 0.0
      %775 = vmatpush1.msra.mxu0 0.0
      %776 = vmatprep.subr.mxu0 0.0
      %777 = vmatpush1.msra.mxu0 0.0
      %778 = vmatprep.subr.mxu0 0.0
      %779 = vmatpush1.msra.mxu0 0.0
      %780 = vmatprep.subr.mxu0 0.0
      %781 = vmatpush1.msra.mxu0 0.0
      %782 = vmatprep.subr.mxu0 0.0
      %783 = vmatpush1.msra.mxu0 0.0
      %784 = vmatprep.subr.mxu0 0.0
      %785 = vmatpush1.msra.mxu0 0.0
      %786 = vmatprep.subr.mxu0 0.0
      %787 = vmatpush1.msra.mxu0 0.0
      %788 = vmatprep.subr.mxu0 0.0
      %789 = vmatpush1.msra.mxu0 0.0
      %790 = vmatprep.subr.mxu0 0.0
      %791 = vmatpush1.msra.mxu0 0.0
      %792 = vmatprep.subr.mxu0 0.0
      %793 = vmatpush1.msra.mxu0 0.0
      %794 = vmatprep.subr.mxu0 0.0
      %795 = vmatpush1.msra.mxu0 0.0
      %796 = vmatprep.subr.mxu0 0.0
      %797 = vmatpush1.msra.mxu0 0.0
      %798 = vmatprep.mubr.f32.mxu0 0.0
      %799 = vmatmul.mubr.f32.gmra.mrb[0].mxu0 %v399
      %v800 = vpop.f32.mrb[0].mxu0
      %v801 = vadd.f32 0.0, %v800
      %v802 = vpop.f32.mrb[0].mxu0
      %803 = vmatprep.mubr.f32.mxu0 0.0
      %804 = vmatmul.mubr.f32.gmra.mrb[0].mxu0 %v402
      %v805 = vpop.f32.mrb[0].mxu0
      %v806 = vadd.f32 0.0, %v805
      %v807 = vpop.f32.mrb[0].mxu0
      %808 = vmatprep.mubr.f32.mxu0 0.0
      %809 = vmatmul.mubr.f32.gmra.mrb[0].mxu0 %v405
      %v810 = vpop.f32.mrb[0].mxu0
      %v811 = vadd.f32 0.0, %v810
      %v812 = vpop.f32.mrb[0].mxu0
      %813 = vmatprep.mubr.f32.mxu0 0.0
      %814 = vmatmul.mubr.f32.gmra.mrb[0].mxu0 %v408
      %v815 = vpop.f32.mrb[0].mxu0
      %v816 = vadd.f32 0.0, %v815
      %v817 = vpop.f32.mrb[0].mxu0
      %818 = vmatprep.mubr.f32.mxu0 0.0
      %819 = vmatmul.mubr.f32.gmra.mrb[0].mxu0 %v411
      %v820 = vpop.f32.mrb[0].mxu0
      %v821 = vadd.f32 0.0, %v820
      %v822 = vpop.f32.mrb[0].mxu0
      %823 = vmatprep.mubr.f32.mxu0 0.0
      %824 = vmatmul.mubr.f32.gmra.mrb[0].mxu0 %v414
      %v825 = vpop.f32.mrb[0].mxu0
      %v826 = vadd.f32 0.0, %v825
      %v827 = vpop.f32.mrb[0].mxu0
      %828 = vmatprep.mubr.f32.mxu0 0.0
      %829 = vmatmul.mubr.f32.gmra.mrb[0].mxu0 %v417
      %v830 = vpop.f32.mrb[0].mxu0
      %v831 = vadd.f32 0.0, %v830
      %v832 = vpop.f32.mrb[0].mxu0
      %833 = vmatprep.mubr.f32.mxu0 0.0
      %834 = vmatmul.mubr.f32.gmra.mrb[0].mxu0 %v420
      %v835 = vpop.f32.mrb[0].mxu0
      %v836 = vadd.f32 0.0, %v835
      %v837 = vpop.f32.mrb[0].mxu0
      %838 = vmatprep.mubr.f32.mxu0 0.0
      %839 = vmatmul.mubr.f32.gmra.mrb[0].mxu0 %v423
      %v840 = vpop.f32.mrb[0].mxu0
      %v841 = vadd.f32 0.0, %v840
      %v842 = vpop.f32.mrb[0].mxu0
      %843 = vmatprep.mubr.f32.mxu0 0.0
      %844 = vmatmul.mubr.f32.gmra.mrb[0].mxu0 %v426
      %v845 = vpop.f32.mrb[0].mxu0
      %v846 = vadd.f32 0.0, %v845
      %v847 = vpop.f32.mrb[0].mxu0
      %848 = vmatprep.mubr.f32.mxu0 0.0
      %849 = vmatmul.mubr.f32.gmra.mrb[0].mxu0 %v429
      %v850 = vpop.f32.mrb[0].mxu0
      %v851 = vadd.f32 0.0, %v850
      %v852 = vpop.f32.mrb[0].mxu0
      %853 = vmatprep.mubr.f32.mxu0 0.0
      %854 = vmatmul.mubr.f32.gmra.mrb[0].mxu0 %v432
      %v855 = vpop.f32.mrb[0].mxu0
      %v856 = vadd.f32 0.0, %v855
      %v857 = vpop.f32.mrb[0].mxu0
      %858 = vmatprep.mubr.f32.mxu0 0.0
      %859 = vmatmul.mubr.f32.gmra.mrb[0].mxu0 %v435
      %v860 = vpop.f32.mrb[0].mxu0
      %v861 = vadd.f32 0.0, %v860
      %v862 = vpop.f32.mrb[0].mxu0
      %863 = vdwg.mxu0
      %868 = vrot.lane.b32.xlu0 %v351, 127
      %v869 = vpop.permute.xlu0 %868
      %870 = vrot.lane.b32.xlu0 %v352, 127
      %v871 = vpop.permute.xlu0 %870
      %872 = vrot.lane.b32.xlu0 %v353, 127
      %v873 = vpop.permute.xlu0 %872
      %874 = vrot.lane.b32.xlu0 %v354, 127
      %v875 = vpop.permute.xlu0 %874
      %v879 = vsel %vm437, %v875, 0
      %881 = vmatprep.subr.mxu0 0.0
      %882 = vmatpush1.msra.mxu0 %v869
      %883 = vmatprep.subr.mxu0 0.0
      %884 = vmatpush1.msra.mxu0 %v871
      %885 = vmatprep.subr.mxu0 0.0
      %886 = vmatpush1.msra.mxu0 %v873
      %887 = vmatprep.subr.mxu0 0.0
      %888 = vmatpush1.msra.mxu0 %v879
      %889 = vmatprep.subr.mxu0 0.0
      %890 = vmatpush1.msra.mxu0 0.0
      %891 = vmatprep.subr.mxu0 0.0
      %892 = vmatpush1.msra.mxu0 0.0
      %893 = vmatprep.subr.mxu0 0.0
      %894 = vmatpush1.msra.mxu0 0.0
      %895 = vmatprep.subr.mxu0 0.0
      %896 = vmatpush1.msra.mxu0 0.0
      %897 = vmatprep.subr.mxu0 0.0
      %898 = vmatpush1.msra.mxu0 0.0
      %899 = vmatprep.subr.mxu0 0.0
      %900 = vmatpush1.msra.mxu0 0.0
      %901 = vmatprep.subr.mxu0 0.0
      %902 = vmatpush1.msra.mxu0 0.0
      %903 = vmatprep.subr.mxu0 0.0
      %904 = vmatpush1.msra.mxu0 0.0
      %905 = vmatprep.subr.mxu0 0.0
      %906 = vmatpush1.msra.mxu0 0.0
      %907 = vmatprep.subr.mxu0 0.0
      %908 = vmatpush1.msra.mxu0 0.0
      %909 = vmatprep.subr.mxu0 0.0
      %910 = vmatpush1.msra.mxu0 0.0
      %911 = vmatprep.subr.mxu0 0.0
      %912 = vmatpush1.msra.mxu0 0.0
      %913 = vmatprep.subr.mxu0 0.0
      %914 = vmatpush1.msra.mxu0 0.0
      %915 = vmatprep.subr.mxu0 0.0
      %916 = vmatpush1.msra.mxu0 0.0
      %917 = vmatprep.subr.mxu0 0.0
      %918 = vmatpush1.msra.mxu0 0.0
      %919 = vmatprep.subr.mxu0 0.0
      %920 = vmatpush1.msra.mxu0 0.0
      %921 = vmatprep.subr.mxu0 0.0
      %922 = vmatpush1.msra.mxu0 0.0
      %923 = vmatprep.subr.mxu0 0.0
      %924 = vmatpush1.msra.mxu0 0.0
      %925 = vmatprep.subr.mxu0 0.0
      %926 = vmatpush1.msra.mxu0 0.0
      %927 = vmatprep.subr.mxu0 0.0
      %928 = vmatpush1.msra.mxu0 0.0
      %929 = vmatprep.subr.mxu0 0.0
      %930 = vmatpush1.msra.mxu0 0.0
      %931 = vmatprep.subr.mxu0 0.0
      %932 = vmatpush1.msra.mxu0 0.0
      %933 = vmatprep.subr.mxu0 0.0
      %934 = vmatpush1.msra.mxu0 0.0
      %935 = vmatprep.subr.mxu0 0.0
      %936 = vmatpush1.msra.mxu0 0.0
      %937 = vmatprep.subr.mxu0 0.0
      %938 = vmatpush1.msra.mxu0 0.0
      %939 = vmatprep.subr.mxu0 0.0
      %940 = vmatpush1.msra.mxu0 0.0
      %941 = vmatprep.subr.mxu0 0.0
      %942 = vmatpush1.msra.mxu0 0.0
      %943 = vmatprep.subr.mxu0 0.0
      %944 = vmatpush1.msra.mxu0 0.0
      %945 = vmatprep.mubr.f32.mxu0 0.0
      %946 = vmatmul.mubr.f32.gmra.mrb[0].mxu0 %v399
      %v947 = vpop.f32.mrb[0].mxu0
      %v948 = vadd.f32 0.0, %v947
      %v949 = vpop.f32.mrb[0].mxu0
      %950 = vmatprep.mubr.f32.mxu0 0.0
      %951 = vmatmul.mubr.f32.gmra.mrb[0].mxu0 %v402
      %v952 = vpop.f32.mrb[0].mxu0
      %v953 = vadd.f32 0.0, %v952
      %v954 = vpop.f32.mrb[0].mxu0
      %955 = vmatprep.mubr.f32.mxu0 0.0
      %956 = vmatmul.mubr.f32.gmra.mrb[0].mxu0 %v405
      %v957 = vpop.f32.mrb[0].mxu0
      %v958 = vadd.f32 0.0, %v957
      %v959 = vpop.f32.mrb[0].mxu0
      %960 = vmatprep.mubr.f32.mxu0 0.0
      %961 = vmatmul.mubr.f32.gmra.mrb[0].mxu0 %v408
      %v962 = vpop.f32.mrb[0].mxu0
      %v963 = vadd.f32 0.0, %v962
      %v964 = vpop.f32.mrb[0].mxu0
      %965 = vmatprep.mubr.f32.mxu0 0.0
      %966 = vmatmul.mubr.f32.gmra.mrb[0].mxu0 %v411
      %v967 = vpop.f32.mrb[0].mxu0
      %v968 = vadd.f32 0.0, %v967
      %v969 = vpop.f32.mrb[0].mxu0
      %970 = vmatprep.mubr.f32.mxu0 0.0
      %971 = vmatmul.mubr.f32.gmra.mrb[0].mxu0 %v414
      %v972 = vpop.f32.mrb[0].mxu0
      %v973 = vadd.f32 0.0, %v972
      %v974 = vpop.f32.mrb[0].mxu0
      %975 = vmatprep.mubr.f32.mxu0 0.0
      %976 = vmatmul.mubr.f32.gmra.mrb[0].mxu0 %v417
      %v977 = vpop.f32.mrb[0].mxu0
      %v978 = vadd.f32 0.0, %v977
      %v979 = vpop.f32.mrb[0].mxu0
      %980 = vmatprep.mubr.f32.mxu0 0.0
      %981 = vmatmul.mubr.f32.gmra.mrb[0].mxu0 %v420
      %v982 = vpop.f32.mrb[0].mxu0
      %v983 = vadd.f32 0.0, %v982
      %v984 = vpop.f32.mrb[0].mxu0
      %985 = vmatprep.mubr.f32.mxu0 0.0
      %986 = vmatmul.mubr.f32.gmra.mrb[0].mxu0 %v423
      %v987 = vpop.f32.mrb[0].mxu0
      %v988 = vadd.f32 0.0, %v987
      %v989 = vpop.f32.mrb[0].mxu0
      %990 = vmatprep.mubr.f32.mxu0 0.0
      %991 = vmatmul.mubr.f32.gmra.mrb[0].mxu0 %v426
      %v992 = vpop.f32.mrb[0].mxu0
      %v993 = vadd.f32 0.0, %v992
      %v994 = vpop.f32.mrb[0].mxu0
      %995 = vmatprep.mubr.f32.mxu0 0.0
      %996 = vmatmul.mubr.f32.gmra.mrb[0].mxu0 %v429
      %v997 = vpop.f32.mrb[0].mxu0
      %v998 = vadd.f32 0.0, %v997
      %v999 = vpop.f32.mrb[0].mxu0
      %1000 = vmatprep.mubr.f32.mxu0 0.0
      %1001 = vmatmul.mubr.f32.gmra.mrb[0].mxu0 %v432
      %v1002 = vpop.f32.mrb[0].mxu0
      %v1003 = vadd.f32 0.0, %v1002
      %v1004 = vpop.f32.mrb[0].mxu0
      %1005 = vmatprep.mubr.f32.mxu0 0.0
      %1006 = vmatmul.mubr.f32.gmra.mrb[0].mxu0 %v435
      %v1007 = vpop.f32.mrb[0].mxu0
      %v1008 = vadd.f32 0.0, %v1007
      %v1009 = vpop.f32.mrb[0].mxu0
      %1010 = vdwg.mxu0
      %v1012 = vsel %vm397, %v355, 0
      %v1015 = vsel %vm397, %v356, 0
      %v1018 = vsel %vm397, %v357, 0
      %v1021 = vsel %vm397, %v358, 0
      %v1024 = vsel %vm397, %v359, 0
      %v1027 = vsel %vm397, %v360, 0
      %v1030 = vsel %vm397, %v361, 0
      %v1033 = vsel %vm397, %v362, 0
      %v1036 = vsel %vm397, %v363, 0
      %v1039 = vsel %vm397, %v364, 0
      %v1042 = vsel %vm397, %v365, 0
      %v1045 = vsel %vm397, %v366, 0
      %v1048 = vsel %vm397, %v367, 0
      %v1050 = vsel %vm437, %v342, 0
      %1052 = vmatprep.subr.mxu0 0.0
      %1053 = vmatpush1.msra.mxu0 %v339
      %1054 = vmatprep.subr.mxu0 0.0
      %1055 = vmatpush1.msra.mxu0 %v340
      %1056 = vmatprep.subr.mxu0 0.0
      %1057 = vmatpush1.msra.mxu0 %v341
      %1058 = vmatprep.subr.mxu0 0.0
      %1059 = vmatpush1.msra.mxu0 %v1050
      %1060 = vmatprep.subr.mxu0 0.0
      %1061 = vmatpush1.msra.mxu0 0.0
      %1062 = vmatprep.subr.mxu0 0.0
      %1063 = vmatpush1.msra.mxu0 0.0
      %1064 = vmatprep.subr.mxu0 0.0
      %1065 = vmatpush1.msra.mxu0 0.0
      %1066 = vmatprep.subr.mxu0 0.0
      %1067 = vmatpush1.msra.mxu0 0.0
      %1068 = vmatprep.subr.mxu0 0.0
      %1069 = vmatpush1.msra.mxu0 0.0
      %1070 = vmatprep.subr.mxu0 0.0
      %1071 = vmatpush1.msra.mxu0 0.0
      %1072 = vmatprep.subr.mxu0 0.0
      %1073 = vmatpush1.msra.mxu0 0.0
      %1074 = vmatprep.subr.mxu0 0.0
      %1075 = vmatpush1.msra.mxu0 0.0
      %1076 = vmatprep.subr.mxu0 0.0
      %1077 = vmatpush1.msra.mxu0 0.0
      %1078 = vmatprep.subr.mxu0 0.0
      %1079 = vmatpush1.msra.mxu0 0.0
      %1080 = vmatprep.subr.mxu0 0.0
      %1081 = vmatpush1.msra.mxu0 0.0
      %1082 = vmatprep.subr.mxu0 0.0
      %1083 = vmatpush1.msra.mxu0 0.0
      %1084 = vmatprep.subr.mxu0 0.0
      %1085 = vmatpush1.msra.mxu0 0.0
      %1086 = vmatprep.subr.mxu0 0.0
      %1087 = vmatpush1.msra.mxu0 0.0
      %1088 = vmatprep.subr.mxu0 0.0
      %1089 = vmatpush1.msra.mxu0 0.0
      %1090 = vmatprep.subr.mxu0 0.0
      %1091 = vmatpush1.msra.mxu0 0.0
      %1092 = vmatprep.subr.mxu0 0.0
      %1093 = vmatpush1.msra.mxu0 0.0
      %1094 = vmatprep.subr.mxu0 0.0
      %1095 = vmatpush1.msra.mxu0 0.0
      %1096 = vmatprep.subr.mxu0 0.0
      %1097 = vmatpush1.msra.mxu0 0.0
      %1098 = vmatprep.subr.mxu0 0.0
      %1099 = vmatpush1.msra.mxu0 0.0
      %1100 = vmatprep.subr.mxu0 0.0
      %1101 = vmatpush1.msra.mxu0 0.0
      %1102 = vmatprep.subr.mxu0 0.0
      %1103 = vmatpush1.msra.mxu0 0.0
      %1104 = vmatprep.subr.mxu0 0.0
      %1105 = vmatpush1.msra.mxu0 0.0
      %1106 = vmatprep.subr.mxu0 0.0
      %1107 = vmatpush1.msra.mxu0 0.0
      %1108 = vmatprep.subr.mxu0 0.0
      %1109 = vmatpush1.msra.mxu0 0.0
      %1110 = vmatprep.subr.mxu0 0.0
      %1111 = vmatpush1.msra.mxu0 0.0
      %1112 = vmatprep.subr.mxu0 0.0
      %1113 = vmatpush1.msra.mxu0 0.0
      %1114 = vmatprep.subr.mxu0 0.0
      %1115 = vmatpush1.msra.mxu0 0.0
      %1116 = vmatprep.mubr.f32.mxu0 0.0
      %1117 = vmatmul.mubr.f32.gmra.mrb[0].mxu0 %v1012
      %v1118 = vpop.f32.mrb[0].mxu0
      %v1119 = vadd.f32 %v507, %v1118
      %v1120 = vpop.f32.mrb[0].mxu0
      %1121 = vmatprep.mubr.f32.mxu0 0.0
      %1122 = vmatmul.mubr.f32.gmra.mrb[0].mxu0 %v1015
      %v1123 = vpop.f32.mrb[0].mxu0
      %v1124 = vadd.f32 %v512, %v1123
      %v1125 = vpop.f32.mrb[0].mxu0
      %1126 = vmatprep.mubr.f32.mxu0 0.0
      %1127 = vmatmul.mubr.f32.gmra.mrb[0].mxu0 %v1018
      %v1128 = vpop.f32.mrb[0].mxu0
      %v1129 = vadd.f32 %v517, %v1128
      %v1130 = vpop.f32.mrb[0].mxu0
      %1131 = vmatprep.mubr.f32.mxu0 0.0
      %1132 = vmatmul.mubr.f32.gmra.mrb[0].mxu0 %v1021
      %v1133 = vpop.f32.mrb[0].mxu0
      %v1134 = vadd.f32 %v522, %v1133
      %v1135 = vpop.f32.mrb[0].mxu0
      %1136 = vmatprep.mubr.f32.mxu0 0.0
      %1137 = vmatmul.mubr.f32.gmra.mrb[0].mxu0 %v1024
      %v1138 = vpop.f32.mrb[0].mxu0
      %v1139 = vadd.f32 %v527, %v1138
      %v1140 = vpop.f32.mrb[0].mxu0
      %1141 = vmatprep.mubr.f32.mxu0 0.0
      %1142 = vmatmul.mubr.f32.gmra.mrb[0].mxu0 %v1027
      %v1143 = vpop.f32.mrb[0].mxu0
      %v1144 = vadd.f32 %v532, %v1143
      %v1145 = vpop.f32.mrb[0].mxu0
      %1146 = vmatprep.mubr.f32.mxu0 0.0
      %1147 = vmatmul.mubr.f32.gmra.mrb[0].mxu0 %v1030
      %v1148 = vpop.f32.mrb[0].mxu0
      %v1149 = vadd.f32 %v537, %v1148
      %v1150 = vpop.f32.mrb[0].mxu0
      %1151 = vmatprep.mubr.f32.mxu0 0.0
      %1152 = vmatmul.mubr.f32.gmra.mrb[0].mxu0 %v1033
      %v1153 = vpop.f32.mrb[0].mxu0
      %v1154 = vadd.f32 %v542, %v1153
      %v1155 = vpop.f32.mrb[0].mxu0
      %1156 = vmatprep.mubr.f32.mxu0 0.0
      %1157 = vmatmul.mubr.f32.gmra.mrb[0].mxu0 %v1036
      %v1158 = vpop.f32.mrb[0].mxu0
      %v1159 = vadd.f32 %v547, %v1158
      %v1160 = vpop.f32.mrb[0].mxu0
      %1161 = vmatprep.mubr.f32.mxu0 0.0
      %1162 = vmatmul.mubr.f32.gmra.mrb[0].mxu0 %v1039
      %v1163 = vpop.f32.mrb[0].mxu0
      %v1164 = vadd.f32 %v552, %v1163
      %v1165 = vpop.f32.mrb[0].mxu0
      %1166 = vmatprep.mubr.f32.mxu0 0.0
      %1167 = vmatmul.mubr.f32.gmra.mrb[0].mxu0 %v1042
      %v1168 = vpop.f32.mrb[0].mxu0
      %v1169 = vadd.f32 %v557, %v1168
      %v1170 = vpop.f32.mrb[0].mxu0
      %1171 = vmatprep.mubr.f32.mxu0 0.0
      %1172 = vmatmul.mubr.f32.gmra.mrb[0].mxu0 %v1045
      %v1173 = vpop.f32.mrb[0].mxu0
      %v1174 = vadd.f32 %v562, %v1173
      %v1175 = vpop.f32.mrb[0].mxu0
      %1176 = vmatprep.mubr.f32.mxu0 0.0
      %1177 = vmatmul.mubr.f32.gmra.mrb[0].mxu0 %v1048
      %v1178 = vpop.f32.mrb[0].mxu0
      %v1179 = vadd.f32 %v567, %v1178
      %v1180 = vpop.f32.mrb[0].mxu0
      %1181 = vdwg.mxu0
      %v1182 = vsel %vm437, %v346, 0
      %1184 = vmatprep.subr.mxu0 0.0
      %1185 = vmatpush1.msra.mxu0 %v343
      %1186 = vmatprep.subr.mxu0 0.0
      %1187 = vmatpush1.msra.mxu0 %v344
      %1188 = vmatprep.subr.mxu0 0.0
      %1189 = vmatpush1.msra.mxu0 %v345
      %1190 = vmatprep.subr.mxu0 0.0
      %1191 = vmatpush1.msra.mxu0 %v1182
      %1192 = vmatprep.subr.mxu0 0.0
      %1193 = vmatpush1.msra.mxu0 0.0
      %1194 = vmatprep.subr.mxu0 0.0
      %1195 = vmatpush1.msra.mxu0 0.0
      %1196 = vmatprep.subr.mxu0 0.0
      %1197 = vmatpush1.msra.mxu0 0.0
      %1198 = vmatprep.subr.mxu0 0.0
      %1199 = vmatpush1.msra.mxu0 0.0
      %1200 = vmatprep.subr.mxu0 0.0
      %1201 = vmatpush1.msra.mxu0 0.0
      %1202 = vmatprep.subr.mxu0 0.0
      %1203 = vmatpush1.msra.mxu0 0.0
      %1204 = vmatprep.subr.mxu0 0.0
      %1205 = vmatpush1.msra.mxu0 0.0
      %1206 = vmatprep.subr.mxu0 0.0
      %1207 = vmatpush1.msra.mxu0 0.0
      %1208 = vmatprep.subr.mxu0 0.0
      %1209 = vmatpush1.msra.mxu0 0.0
      %1210 = vmatprep.subr.mxu0 0.0
      %1211 = vmatpush1.msra.mxu0 0.0
      %1212 = vmatprep.subr.mxu0 0.0
      %1213 = vmatpush1.msra.mxu0 0.0
      %1214 = vmatprep.subr.mxu0 0.0
      %1215 = vmatpush1.msra.mxu0 0.0
      %1216 = vmatprep.subr.mxu0 0.0
      %1217 = vmatpush1.msra.mxu0 0.0
      %1218 = vmatprep.subr.mxu0 0.0
      %1219 = vmatpush1.msra.mxu0 0.0
      %1220 = vmatprep.subr.mxu0 0.0
      %1221 = vmatpush1.msra.mxu0 0.0
      %1222 = vmatprep.subr.mxu0 0.0
      %1223 = vmatpush1.msra.mxu0 0.0
      %1224 = vmatprep.subr.mxu0 0.0
      %1225 = vmatpush1.msra.mxu0 0.0
      %1226 = vmatprep.subr.mxu0 0.0
      %1227 = vmatpush1.msra.mxu0 0.0
      %1228 = vmatprep.subr.mxu0 0.0
      %1229 = vmatpush1.msra.mxu0 0.0
      %1230 = vmatprep.subr.mxu0 0.0
      %1231 = vmatpush1.msra.mxu0 0.0
      %1232 = vmatprep.subr.mxu0 0.0
      %1233 = vmatpush1.msra.mxu0 0.0
      %1234 = vmatprep.subr.mxu0 0.0
      %1235 = vmatpush1.msra.mxu0 0.0
      %1236 = vmatprep.subr.mxu0 0.0
      %1237 = vmatpush1.msra.mxu0 0.0
      %1238 = vmatprep.subr.mxu0 0.0
      %1239 = vmatpush1.msra.mxu0 0.0
      %1240 = vmatprep.subr.mxu0 0.0
      %1241 = vmatpush1.msra.mxu0 0.0
      %1242 = vmatprep.subr.mxu0 0.0
      %1243 = vmatpush1.msra.mxu0 0.0
      %1244 = vmatprep.subr.mxu0 0.0
      %1245 = vmatpush1.msra.mxu0 0.0
      %1246 = vmatprep.subr.mxu0 0.0
      %1247 = vmatpush1.msra.mxu0 0.0
      %1248 = vmatprep.mubr.f32.mxu0 0.0
      %1249 = vmatmul.mubr.f32.gmra.mrb[0].mxu0 %v1012
      %v1250 = vpop.f32.mrb[0].mxu0
      %v1251 = vadd.f32 %v654, %v1250
      %v1252 = vpop.f32.mrb[0].mxu0
      %1253 = vmatprep.mubr.f32.mxu0 0.0
      %1254 = vmatmul.mubr.f32.gmra.mrb[0].mxu0 %v1015
      %v1255 = vpop.f32.mrb[0].mxu0
      %v1256 = vadd.f32 %v659, %v1255
      %v1257 = vpop.f32.mrb[0].mxu0
      %1258 = vmatprep.mubr.f32.mxu0 0.0
      %1259 = vmatmul.mubr.f32.gmra.mrb[0].mxu0 %v1018
      %v1260 = vpop.f32.mrb[0].mxu0
      %v1261 = vadd.f32 %v664, %v1260
      %v1262 = vpop.f32.mrb[0].mxu0
      %1263 = vmatprep.mubr.f32.mxu0 0.0
      %1264 = vmatmul.mubr.f32.gmra.mrb[0].mxu0 %v1021
      %v1265 = vpop.f32.mrb[0].mxu0
      %v1266 = vadd.f32 %v669, %v1265
      %v1267 = vpop.f32.mrb[0].mxu0
      %1268 = vmatprep.mubr.f32.mxu0 0.0
      %1269 = vmatmul.mubr.f32.gmra.mrb[0].mxu0 %v1024
      %v1270 = vpop.f32.mrb[0].mxu0
      %v1271 = vadd.f32 %v674, %v1270
      %v1272 = vpop.f32.mrb[0].mxu0
      %1273 = vmatprep.mubr.f32.mxu0 0.0
      %1274 = vmatmul.mubr.f32.gmra.mrb[0].mxu0 %v1027
      %v1275 = vpop.f32.mrb[0].mxu0
      %v1276 = vadd.f32 %v679, %v1275
      %v1277 = vpop.f32.mrb[0].mxu0
      %1278 = vmatprep.mubr.f32.mxu0 0.0
      %1279 = vmatmul.mubr.f32.gmra.mrb[0].mxu0 %v1030
      %v1280 = vpop.f32.mrb[0].mxu0
      %v1281 = vadd.f32 %v684, %v1280
      %v1282 = vpop.f32.mrb[0].mxu0
      %1283 = vmatprep.mubr.f32.mxu0 0.0
      %1284 = vmatmul.mubr.f32.gmra.mrb[0].mxu0 %v1033
      %v1285 = vpop.f32.mrb[0].mxu0
      %v1286 = vadd.f32 %v689, %v1285
      %v1287 = vpop.f32.mrb[0].mxu0
      %1288 = vmatprep.mubr.f32.mxu0 0.0
      %1289 = vmatmul.mubr.f32.gmra.mrb[0].mxu0 %v1036
      %v1290 = vpop.f32.mrb[0].mxu0
      %v1291 = vadd.f32 %v694, %v1290
      %v1292 = vpop.f32.mrb[0].mxu0
      %1293 = vmatprep.mubr.f32.mxu0 0.0
      %1294 = vmatmul.mubr.f32.gmra.mrb[0].mxu0 %v1039
      %v1295 = vpop.f32.mrb[0].mxu0
      %v1296 = vadd.f32 %v699, %v1295
      %v1297 = vpop.f32.mrb[0].mxu0
      %1298 = vmatprep.mubr.f32.mxu0 0.0
      %1299 = vmatmul.mubr.f32.gmra.mrb[0].mxu0 %v1042
      %v1300 = vpop.f32.mrb[0].mxu0
      %v1301 = vadd.f32 %v704, %v1300
      %v1302 = vpop.f32.mrb[0].mxu0
      %1303 = vmatprep.mubr.f32.mxu0 0.0
      %1304 = vmatmul.mubr.f32.gmra.mrb[0].mxu0 %v1045
      %v1305 = vpop.f32.mrb[0].mxu0
      %v1306 = vadd.f32 %v709, %v1305
      %v1307 = vpop.f32.mrb[0].mxu0
      %1308 = vmatprep.mubr.f32.mxu0 0.0
      %1309 = vmatmul.mubr.f32.gmra.mrb[0].mxu0 %v1048
      %v1310 = vpop.f32.mrb[0].mxu0
      %v1311 = vadd.f32 %v714, %v1310
      %v1312 = vpop.f32.mrb[0].mxu0
      %1313 = vdwg.mxu0
      %v1314 = vsel %vm437, %v350, 0
      %1316 = vmatprep.subr.mxu0 0.0
      %1317 = vmatpush1.msra.mxu0 %v347
      %1318 = vmatprep.subr.mxu0 0.0
      %1319 = vmatpush1.msra.mxu0 %v348
      %1320 = vmatprep.subr.mxu0 0.0
      %1321 = vmatpush1.msra.mxu0 %v349
      %1322 = vmatprep.subr.mxu0 0.0
      %1323 = vmatpush1.msra.mxu0 %v1314
      %1324 = vmatprep.subr.mxu0 0.0
      %1325 = vmatpush1.msra.mxu0 0.0
      %1326 = vmatprep.subr.mxu0 0.0
      %1327 = vmatpush1.msra.mxu0 0.0
      %1328 = vmatprep.subr.mxu0 0.0
      %1329 = vmatpush1.msra.mxu0 0.0
      %1330 = vmatprep.subr.mxu0 0.0
      %1331 = vmatpush1.msra.mxu0 0.0
      %1332 = vmatprep.subr.mxu0 0.0
      %1333 = vmatpush1.msra.mxu0 0.0
      %1334 = vmatprep.subr.mxu0 0.0
      %1335 = vmatpush1.msra.mxu0 0.0
      %1336 = vmatprep.subr.mxu0 0.0
      %1337 = vmatpush1.msra.mxu0 0.0
      %1338 = vmatprep.subr.mxu0 0.0
      %1339 = vmatpush1.msra.mxu0 0.0
      %1340 = vmatprep.subr.mxu0 0.0
      %1341 = vmatpush1.msra.mxu0 0.0
      %1342 = vmatprep.subr.mxu0 0.0
      %1343 = vmatpush1.msra.mxu0 0.0
      %1344 = vmatprep.subr.mxu0 0.0
      %1345 = vmatpush1.msra.mxu0 0.0
      %1346 = vmatprep.subr.mxu0 0.0
      %1347 = vmatpush1.msra.mxu0 0.0
      %1348 = vmatprep.subr.mxu0 0.0
      %1349 = vmatpush1.msra.mxu0 0.0
      %1350 = vmatprep.subr.mxu0 0.0
      %1351 = vmatpush1.msra.mxu0 0.0
      %1352 = vmatprep.subr.mxu0 0.0
      %1353 = vmatpush1.msra.mxu0 0.0
      %1354 = vmatprep.subr.mxu0 0.0
      %1355 = vmatpush1.msra.mxu0 0.0
      %1356 = vmatprep.subr.mxu0 0.0
      %1357 = vmatpush1.msra.mxu0 0.0
      %1358 = vmatprep.subr.mxu0 0.0
      %1359 = vmatpush1.msra.mxu0 0.0
      %1360 = vmatprep.subr.mxu0 0.0
      %1361 = vmatpush1.msra.mxu0 0.0
      %1362 = vmatprep.subr.mxu0 0.0
      %1363 = vmatpush1.msra.mxu0 0.0
      %1364 = vmatprep.subr.mxu0 0.0
      %1365 = vmatpush1.msra.mxu0 0.0
      %1366 = vmatprep.subr.mxu0 0.0
      %1367 = vmatpush1.msra.mxu0 0.0
      %1368 = vmatprep.subr.mxu0 0.0
      %1369 = vmatpush1.msra.mxu0 0.0
      %1370 = vmatprep.subr.mxu0 0.0
      %1371 = vmatpush1.msra.mxu0 0.0
      %1372 = vmatprep.subr.mxu0 0.0
      %1373 = vmatpush1.msra.mxu0 0.0
      %1374 = vmatprep.subr.mxu0 0.0
      %1375 = vmatpush1.msra.mxu0 0.0
      %1376 = vmatprep.subr.mxu0 0.0
      %1377 = vmatpush1.msra.mxu0 0.0
      %1378 = vmatprep.subr.mxu0 0.0
      %1379 = vmatpush1.msra.mxu0 0.0
      %1380 = vmatprep.mubr.f32.mxu0 0.0
      %1381 = vmatmul.mubr.f32.gmra.mrb[0].mxu0 %v1012
      %v1382 = vpop.f32.mrb[0].mxu0
      %v1383 = vadd.f32 %v801, %v1382
      %v1384 = vpop.f32.mrb[0].mxu0
      %1385 = vmatprep.mubr.f32.mxu0 0.0
      %1386 = vmatmul.mubr.f32.gmra.mrb[0].mxu0 %v1015
      %v1387 = vpop.f32.mrb[0].mxu0
      %v1388 = vadd.f32 %v806, %v1387
      %v1389 = vpop.f32.mrb[0].mxu0
      %1390 = vmatprep.mubr.f32.mxu0 0.0
      %1391 = vmatmul.mubr.f32.gmra.mrb[0].mxu0 %v1018
      %v1392 = vpop.f32.mrb[0].mxu0
      %v1393 = vadd.f32 %v811, %v1392
      %v1394 = vpop.f32.mrb[0].mxu0
      %1395 = vmatprep.mubr.f32.mxu0 0.0
      %1396 = vmatmul.mubr.f32.gmra.mrb[0].mxu0 %v1021
      %v1397 = vpop.f32.mrb[0].mxu0
      %v1398 = vadd.f32 %v816, %v1397
      %v1399 = vpop.f32.mrb[0].mxu0
      %1400 = vmatprep.mubr.f32.mxu0 0.0
      %1401 = vmatmul.mubr.f32.gmra.mrb[0].mxu0 %v1024
      %v1402 = vpop.f32.mrb[0].mxu0
      %v1403 = vadd.f32 %v821, %v1402
      %v1404 = vpop.f32.mrb[0].mxu0
      %1405 = vmatprep.mubr.f32.mxu0 0.0
      %1406 = vmatmul.mubr.f32.gmra.mrb[0].mxu0 %v1027
      %v1407 = vpop.f32.mrb[0].mxu0
      %v1408 = vadd.f32 %v826, %v1407
      %v1409 = vpop.f32.mrb[0].mxu0
      %1410 = vmatprep.mubr.f32.mxu0 0.0
      %1411 = vmatmul.mubr.f32.gmra.mrb[0].mxu0 %v1030
      %v1412 = vpop.f32.mrb[0].mxu0
      %v1413 = vadd.f32 %v831, %v1412
      %v1414 = vpop.f32.mrb[0].mxu0
      %1415 = vmatprep.mubr.f32.mxu0 0.0
      %1416 = vmatmul.mubr.f32.gmra.mrb[0].mxu0 %v1033
      %v1417 = vpop.f32.mrb[0].mxu0
      %v1418 = vadd.f32 %v836, %v1417
      %v1419 = vpop.f32.mrb[0].mxu0
      %1420 = vmatprep.mubr.f32.mxu0 0.0
      %1421 = vmatmul.mubr.f32.gmra.mrb[0].mxu0 %v1036
      %v1422 = vpop.f32.mrb[0].mxu0
      %v1423 = vadd.f32 %v841, %v1422
      %v1424 = vpop.f32.mrb[0].mxu0
      %1425 = vmatprep.mubr.f32.mxu0 0.0
      %1426 = vmatmul.mubr.f32.gmra.mrb[0].mxu0 %v1039
      %v1427 = vpop.f32.mrb[0].mxu0
      %v1428 = vadd.f32 %v846, %v1427
      %v1429 = vpop.f32.mrb[0].mxu0
      %1430 = vmatprep.mubr.f32.mxu0 0.0
      %1431 = vmatmul.mubr.f32.gmra.mrb[0].mxu0 %v1042
      %v1432 = vpop.f32.mrb[0].mxu0
      %v1433 = vadd.f32 %v851, %v1432
      %v1434 = vpop.f32.mrb[0].mxu0
      %1435 = vmatprep.mubr.f32.mxu0 0.0
      %1436 = vmatmul.mubr.f32.gmra.mrb[0].mxu0 %v1045
      %v1437 = vpop.f32.mrb[0].mxu0
      %v1438 = vadd.f32 %v856, %v1437
      %v1439 = vpop.f32.mrb[0].mxu0
      %1440 = vmatprep.mubr.f32.mxu0 0.0
      %1441 = vmatmul.mubr.f32.gmra.mrb[0].mxu0 %v1048
      %v1442 = vpop.f32.mrb[0].mxu0
      %v1443 = vadd.f32 %v861, %v1442
      %v1444 = vpop.f32.mrb[0].mxu0
      %1445 = vdwg.mxu0
      %v1446 = vsel %vm437, %v354, 0
      %1448 = vmatprep.subr.mxu0 0.0
      %1449 = vmatpush1.msra.mxu0 %v351
      %1450 = vmatprep.subr.mxu0 0.0
      %1451 = vmatpush1.msra.mxu0 %v352
      %1452 = vmatprep.subr.mxu0 0.0
      %1453 = vmatpush1.msra.mxu0 %v353
      %1454 = vmatprep.subr.mxu0 0.0
      %1455 = vmatpush1.msra.mxu0 %v1446
      %1456 = vmatprep.subr.mxu0 0.0
      %1457 = vmatpush1.msra.mxu0 0.0
      %1458 = vmatprep.subr.mxu0 0.0
      %1459 = vmatpush1.msra.mxu0 0.0
      %1460 = vmatprep.subr.mxu0 0.0
      %1461 = vmatpush1.msra.mxu0 0.0
      %1462 = vmatprep.subr.mxu0 0.0
      %1463 = vmatpush1.msra.mxu0 0.0
      %1464 = vmatprep.subr.mxu0 0.0
      %1465 = vmatpush1.msra.mxu0 0.0
      %1466 = vmatprep.subr.mxu0 0.0
      %1467 = vmatpush1.msra.mxu0 0.0
      %1468 = vmatprep.subr.mxu0 0.0
      %1469 = vmatpush1.msra.mxu0 0.0
      %1470 = vmatprep.subr.mxu0 0.0
      %1471 = vmatpush1.msra.mxu0 0.0
      %1472 = vmatprep.subr.mxu0 0.0
      %1473 = vmatpush1.msra.mxu0 0.0
      %1474 = vmatprep.subr.mxu0 0.0
      %1475 = vmatpush1.msra.mxu0 0.0
      %1476 = vmatprep.subr.mxu0 0.0
      %1477 = vmatpush1.msra.mxu0 0.0
      %1478 = vmatprep.subr.mxu0 0.0
      %1479 = vmatpush1.msra.mxu0 0.0
      %1480 = vmatprep.subr.mxu0 0.0
      %1481 = vmatpush1.msra.mxu0 0.0
      %1482 = vmatprep.subr.mxu0 0.0
      %1483 = vmatpush1.msra.mxu0 0.0
      %1484 = vmatprep.subr.mxu0 0.0
      %1485 = vmatpush1.msra.mxu0 0.0
      %1486 = vmatprep.subr.mxu0 0.0
      %1487 = vmatpush1.msra.mxu0 0.0
      %1488 = vmatprep.subr.mxu0 0.0
      %1489 = vmatpush1.msra.mxu0 0.0
      %1490 = vmatprep.subr.mxu0 0.0
      %1491 = vmatpush1.msra.mxu0 0.0
      %1492 = vmatprep.subr.mxu0 0.0
      %1493 = vmatpush1.msra.mxu0 0.0
      %1494 = vmatprep.subr.mxu0 0.0
      %1495 = vmatpush1.msra.mxu0 0.0
      %1496 = vmatprep.subr.mxu0 0.0
      %1497 = vmatpush1.msra.mxu0 0.0
      %1498 = vmatprep.subr.mxu0 0.0
      %1499 = vmatpush1.msra.mxu0 0.0
      %1500 = vmatprep.subr.mxu0 0.0
      %1501 = vmatpush1.msra.mxu0 0.0
      %1502 = vmatprep.subr.mxu0 0.0
      %1503 = vmatpush1.msra.mxu0 0.0
      %1504 = vmatprep.subr.mxu0 0.0
      %1505 = vmatpush1.msra.mxu0 0.0
      %1506 = vmatprep.subr.mxu0 0.0
      %1507 = vmatpush1.msra.mxu0 0.0
      %1508 = vmatprep.subr.mxu0 0.0
      %1509 = vmatpush1.msra.mxu0 0.0
      %1510 = vmatprep.subr.mxu0 0.0
      %1511 = vmatpush1.msra.mxu0 0.0
      %1512 = vmatprep.mubr.f32.mxu0 0.0
      %1513 = vmatmul.mubr.f32.gmra.mrb[0].mxu0 %v1012
      %v1514 = vpop.f32.mrb[0].mxu0
      %v1515 = vadd.f32 %v948, %v1514
      %v1516 = vpop.f32.mrb[0].mxu0
      %1517 = vmatprep.mubr.f32.mxu0 0.0
      %1518 = vmatmul.mubr.f32.gmra.mrb[0].mxu0 %v1015
      %v1519 = vpop.f32.mrb[0].mxu0
      %v1520 = vadd.f32 %v953, %v1519
      %v1521 = vpop.f32.mrb[0].mxu0
      %1522 = vmatprep.mubr.f32.mxu0 0.0
      %1523 = vmatmul.mubr.f32.gmra.mrb[0].mxu0 %v1018
      %v1524 = vpop.f32.mrb[0].mxu0
      %v1525 = vadd.f32 %v958, %v1524
      %v1526 = vpop.f32.mrb[0].mxu0
      %1527 = vmatprep.mubr.f32.mxu0 0.0
      %1528 = vmatmul.mubr.f32.gmra.mrb[0].mxu0 %v1021
      %v1529 = vpop.f32.mrb[0].mxu0
      %v1530 = vadd.f32 %v963, %v1529
      %v1531 = vpop.f32.mrb[0].mxu0
      %1532 = vmatprep.mubr.f32.mxu0 0.0
      %1533 = vmatmul.mubr.f32.gmra.mrb[0].mxu0 %v1024
      %v1534 = vpop.f32.mrb[0].mxu0
      %v1535 = vadd.f32 %v968, %v1534
      %v1536 = vpop.f32.mrb[0].mxu0
      %1537 = vmatprep.mubr.f32.mxu0 0.0
      %1538 = vmatmul.mubr.f32.gmra.mrb[0].mxu0 %v1027
      %v1539 = vpop.f32.mrb[0].mxu0
      %v1540 = vadd.f32 %v973, %v1539
      %v1541 = vpop.f32.mrb[0].mxu0
      %1542 = vmatprep.mubr.f32.mxu0 0.0
      %1543 = vmatmul.mubr.f32.gmra.mrb[0].mxu0 %v1030
      %v1544 = vpop.f32.mrb[0].mxu0
      %v1545 = vadd.f32 %v978, %v1544
      %v1546 = vpop.f32.mrb[0].mxu0
      %1547 = vmatprep.mubr.f32.mxu0 0.0
      %1548 = vmatmul.mubr.f32.gmra.mrb[0].mxu0 %v1033
      %v1549 = vpop.f32.mrb[0].mxu0
      %v1550 = vadd.f32 %v983, %v1549
      %v1551 = vpop.f32.mrb[0].mxu0
      %1552 = vmatprep.mubr.f32.mxu0 0.0
      %1553 = vmatmul.mubr.f32.gmra.mrb[0].mxu0 %v1036
      %v1554 = vpop.f32.mrb[0].mxu0
      %v1555 = vadd.f32 %v988, %v1554
      %v1556 = vpop.f32.mrb[0].mxu0
      %1557 = vmatprep.mubr.f32.mxu0 0.0
      %1558 = vmatmul.mubr.f32.gmra.mrb[0].mxu0 %v1039
      %v1559 = vpop.f32.mrb[0].mxu0
      %v1560 = vadd.f32 %v993, %v1559
      %v1561 = vpop.f32.mrb[0].mxu0
      %1562 = vmatprep.mubr.f32.mxu0 0.0
      %1563 = vmatmul.mubr.f32.gmra.mrb[0].mxu0 %v1042
      %v1564 = vpop.f32.mrb[0].mxu0
      %v1565 = vadd.f32 %v998, %v1564
      %v1566 = vpop.f32.mrb[0].mxu0
      %1567 = vmatprep.mubr.f32.mxu0 0.0
      %1568 = vmatmul.mubr.f32.gmra.mrb[0].mxu0 %v1045
      %v1569 = vpop.f32.mrb[0].mxu0
      %v1570 = vadd.f32 %v1003, %v1569
      %v1571 = vpop.f32.mrb[0].mxu0
      %1572 = vmatprep.mubr.f32.mxu0 0.0
      %1573 = vmatmul.mubr.f32.gmra.mrb[0].mxu0 %v1048
      %v1574 = vpop.f32.mrb[0].mxu0
      %v1575 = vadd.f32 %v1008, %v1574
      %v1576 = vpop.f32.mrb[0].mxu0
      %1577 = vdwg.mxu0
      %s1578 = scalar_lea.vmem %s1, 208
      %v1579 = vld [vmem:[%s1578] sm:$0xff]
      %v1580 = vld [vmem:[%s1578 + $0x8] sm:$0xff]
      %v1581 = vld [vmem:[%s1578 + $0x10] sm:$0xff]
      %v1582 = vld [vmem:[%s1578 + $0x18] sm:$0xff]
      %v1583 = vld [vmem:[%s1578 + $0x20] sm:$0xff]
      %v1584 = vld [vmem:[%s1578 + $0x28] sm:$0xff]
      %v1585 = vld [vmem:[%s1578 + $0x30] sm:$0xff]
      %v1586 = vld [vmem:[%s1578 + $0x38] sm:$0xff]
      %v1587 = vld [vmem:[%s1578 + $0x40] sm:$0xff]
      %v1588 = vld [vmem:[%s1578 + $0x48] sm:$0xff]
      %v1589 = vld [vmem:[%s1578 + $0x50] sm:$0xff]
      %v1590 = vld [vmem:[%s1578 + $0x58] sm:$0xff]
      %v1591 = vld [vmem:[%s1578 + $0x60] sm:$0xff]
      %1592 = vrot.lane.b32.xlu0 %v339, 126
      %v1593 = vpop.permute.xlu0 %1592
      %1594 = vrot.lane.b32.xlu0 %v340, 126
      %v1595 = vpop.permute.xlu0 %1594
      %1596 = vrot.lane.b32.xlu0 %v341, 126
      %v1597 = vpop.permute.xlu0 %1596
      %1598 = vrot.lane.b32.xlu0 %v342, 126
      %v1599 = vpop.permute.xlu0 %1598
      %v1604 = vsel %vm397, %v1579, 0
      %v1607 = vsel %vm397, %v1580, 0
      %v1610 = vsel %vm397, %v1581, 0
      %v1613 = vsel %vm397, %v1582, 0
      %v1616 = vsel %vm397, %v1583, 0
      %v1619 = vsel %vm397, %v1584, 0
      %v1622 = vsel %vm397, %v1585, 0
      %v1625 = vsel %vm397, %v1586, 0
      %v1628 = vsel %vm397, %v1587, 0
      %v1631 = vsel %vm397, %v1588, 0
      %v1634 = vsel %vm397, %v1589, 0
      %v1637 = vsel %vm397, %v1590, 0
      %v1640 = vsel %vm397, %v1591, 0
      %v1642 = vsel %vm437, %v1599, 0
      %1644 = vmatprep.subr.mxu0 0.0
      %1645 = vmatpush1.msra.mxu0 %v1593
      %1646 = vmatprep.subr.mxu0 0.0
      %1647 = vmatpush1.msra.mxu0 %v1595
      %1648 = vmatprep.subr.mxu0 0.0
      %1649 = vmatpush1.msra.mxu0 %v1597
      %1650 = vmatprep.subr.mxu0 0.0
      %1651 = vmatpush1.msra.mxu0 %v1642
      %1652 = vmatprep.subr.mxu0 0.0
      %1653 = vmatpush1.msra.mxu0 0.0
      %1654 = vmatprep.subr.mxu0 0.0
      %1655 = vmatpush1.msra.mxu0 0.0
      %1656 = vmatprep.subr.mxu0 0.0
      %1657 = vmatpush1.msra.mxu0 0.0
      %1658 = vmatprep.subr.mxu0 0.0
      %1659 = vmatpush1.msra.mxu0 0.0
      %1660 = vmatprep.subr.mxu0 0.0
      %1661 = vmatpush1.msra.mxu0 0.0
      %1662 = vmatprep.subr.mxu0 0.0
      %1663 = vmatpush1.msra.mxu0 0.0
      %1664 = vmatprep.subr.mxu0 0.0
      %1665 = vmatpush1.msra.mxu0 0.0
      %1666 = vmatprep.subr.mxu0 0.0
      %1667 = vmatpush1.msra.mxu0 0.0
      %1668 = vmatprep.subr.mxu0 0.0
      %1669 = vmatpush1.msra.mxu0 0.0
      %1670 = vmatprep.subr.mxu0 0.0
      %1671 = vmatpush1.msra.mxu0 0.0
      %1672 = vmatprep.subr.mxu0 0.0
      %1673 = vmatpush1.msra.mxu0 0.0
      %1674 = vmatprep.subr.mxu0 0.0
      %1675 = vmatpush1.msra.mxu0 0.0
      %1676 = vmatprep.subr.mxu0 0.0
      %1677 = vmatpush1.msra.mxu0 0.0
      %1678 = vmatprep.subr.mxu0 0.0
      %1679 = vmatpush1.msra.mxu0 0.0
      %1680 = vmatprep.subr.mxu0 0.0
      %1681 = vmatpush1.msra.mxu0 0.0
      %1682 = vmatprep.subr.mxu0 0.0
      %1683 = vmatpush1.msra.mxu0 0.0
      %1684 = vmatprep.subr.mxu0 0.0
      %1685 = vmatpush1.msra.mxu0 0.0
      %1686 = vmatprep.subr.mxu0 0.0
      %1687 = vmatpush1.msra.mxu0 0.0
      %1688 = vmatprep.subr.mxu0 0.0
      %1689 = vmatpush1.msra.mxu0 0.0
      %1690 = vmatprep.subr.mxu0 0.0
      %1691 = vmatpush1.msra.mxu0 0.0
      %1692 = vmatprep.subr.mxu0 0.0
      %1693 = vmatpush1.msra.mxu0 0.0
      %1694 = vmatprep.subr.mxu0 0.0
      %1695 = vmatpush1.msra.mxu0 0.0
      %1696 = vmatprep.subr.mxu0 0.0
      %1697 = vmatpush1.msra.mxu0 0.0
      %1698 = vmatprep.subr.mxu0 0.0
      %1699 = vmatpush1.msra.mxu0 0.0
      %1700 = vmatprep.subr.mxu0 0.0
      %1701 = vmatpush1.msra.mxu0 0.0
      %1702 = vmatprep.subr.mxu0 0.0
      %1703 = vmatpush1.msra.mxu0 0.0
      %1704 = vmatprep.subr.mxu0 0.0
      %1705 = vmatpush1.msra.mxu0 0.0
      %1706 = vmatprep.subr.mxu0 0.0
      %1707 = vmatpush1.msra.mxu0 0.0
      %1708 = vmatprep.mubr.f32.mxu0 0.0
      %1709 = vmatmul.mubr.f32.gmra.mrb[0].mxu0 %v1604
      %v1710 = vpop.f32.mrb[0].mxu0
      %v1711 = vadd.f32 0.0, %v1710
      %v1712 = vpop.f32.mrb[0].mxu0
      %1713 = vmatprep.mubr.f32.mxu0 0.0
      %1714 = vmatmul.mubr.f32.gmra.mrb[0].mxu0 %v1607
      %v1715 = vpop.f32.mrb[0].mxu0
      %v1716 = vadd.f32 0.0, %v1715
      %v1717 = vpop.f32.mrb[0].mxu0
      %1718 = vmatprep.mubr.f32.mxu0 0.0
      %1719 = vmatmul.mubr.f32.gmra.mrb[0].mxu0 %v1610
      %v1720 = vpop.f32.mrb[0].mxu0
      %v1721 = vadd.f32 0.0, %v1720
      %v1722 = vpop.f32.mrb[0].mxu0
      %1723 = vmatprep.mubr.f32.mxu0 0.0
      %1724 = vmatmul.mubr.f32.gmra.mrb[0].mxu0 %v1613
      %v1725 = vpop.f32.mrb[0].mxu0
      %v1726 = vadd.f32 0.0, %v1725
      %v1727 = vpop.f32.mrb[0].mxu0
      %1728 = vmatprep.mubr.f32.mxu0 0.0
      %1729 = vmatmul.mubr.f32.gmra.mrb[0].mxu0 %v1616
      %v1730 = vpop.f32.mrb[0].mxu0
      %v1731 = vadd.f32 0.0, %v1730
      %v1732 = vpop.f32.mrb[0].mxu0
      %1733 = vmatprep.mubr.f32.mxu0 0.0
      %1734 = vmatmul.mubr.f32.gmra.mrb[0].mxu0 %v1619
      %v1735 = vpop.f32.mrb[0].mxu0
      %v1736 = vadd.f32 0.0, %v1735
      %v1737 = vpop.f32.mrb[0].mxu0
      %1738 = vmatprep.mubr.f32.mxu0 0.0
      %1739 = vmatmul.mubr.f32.gmra.mrb[0].mxu0 %v1622
      %v1740 = vpop.f32.mrb[0].mxu0
      %v1741 = vadd.f32 0.0, %v1740
      %v1742 = vpop.f32.mrb[0].mxu0
      %1743 = vmatprep.mubr.f32.mxu0 0.0
      %1744 = vmatmul.mubr.f32.gmra.mrb[0].mxu0 %v1625
      %v1745 = vpop.f32.mrb[0].mxu0
      %v1746 = vadd.f32 0.0, %v1745
      %v1747 = vpop.f32.mrb[0].mxu0
      %1748 = vmatprep.mubr.f32.mxu0 0.0
      %1749 = vmatmul.mubr.f32.gmra.mrb[0].mxu0 %v1628
      %v1750 = vpop.f32.mrb[0].mxu0
      %v1751 = vadd.f32 0.0, %v1750
      %v1752 = vpop.f32.mrb[0].mxu0
      %1753 = vmatprep.mubr.f32.mxu0 0.0
      %1754 = vmatmul.mubr.f32.gmra.mrb[0].mxu0 %v1631
      %v1755 = vpop.f32.mrb[0].mxu0
      %v1756 = vadd.f32 0.0, %v1755
      %v1757 = vpop.f32.mrb[0].mxu0
      %1758 = vmatprep.mubr.f32.mxu0 0.0
      %1759 = vmatmul.mubr.f32.gmra.mrb[0].mxu0 %v1634
      %v1760 = vpop.f32.mrb[0].mxu0
      %v1761 = vadd.f32 0.0, %v1760
      %v1762 = vpop.f32.mrb[0].mxu0
      %1763 = vmatprep.mubr.f32.mxu0 0.0
      %1764 = vmatmul.mubr.f32.gmra.mrb[0].mxu0 %v1637
      %v1765 = vpop.f32.mrb[0].mxu0
      %v1766 = vadd.f32 0.0, %v1765
      %v1767 = vpop.f32.mrb[0].mxu0
      %1768 = vmatprep.mubr.f32.mxu0 0.0
      %1769 = vmatmul.mubr.f32.gmra.mrb[0].mxu0 %v1640
      %v1770 = vpop.f32.mrb[0].mxu0
      %v1771 = vadd.f32 0.0, %v1770
      %v1772 = vpop.f32.mrb[0].mxu0
      %1773 = vdwg.mxu0
      %1774 = vrot.lane.b32.xlu0 %v343, 126
      %v1775 = vpop.permute.xlu0 %1774
      %1776 = vrot.lane.b32.xlu0 %v344, 126
      %v1777 = vpop.permute.xlu0 %1776
      %1778 = vrot.lane.b32.xlu0 %v345, 126
      %v1779 = vpop.permute.xlu0 %1778
      %1780 = vrot.lane.b32.xlu0 %v346, 126
      %v1781 = vpop.permute.xlu0 %1780
      %v1785 = vsel %vm437, %v1781, 0
      %1787 = vmatprep.subr.mxu0 0.0
      %1788 = vmatpush1.msra.mxu0 %v1775
      %1789 = vmatprep.subr.mxu0 0.0
      %1790 = vmatpush1.msra.mxu0 %v1777
      %1791 = vmatprep.subr.mxu0 0.0
      %1792 = vmatpush1.msra.mxu0 %v1779
      %1793 = vmatprep.subr.mxu0 0.0
      %1794 = vmatpush1.msra.mxu0 %v1785
      %1795 = vmatprep.subr.mxu0 0.0
      %1796 = vmatpush1.msra.mxu0 0.0
      %1797 = vmatprep.subr.mxu0 0.0
      %1798 = vmatpush1.msra.mxu0 0.0
      %1799 = vmatprep.subr.mxu0 0.0
      %1800 = vmatpush1.msra.mxu0 0.0
      %1801 = vmatprep.subr.mxu0 0.0
      %1802 = vmatpush1.msra.mxu0 0.0
      %1803 = vmatprep.subr.mxu0 0.0
      %1804 = vmatpush1.msra.mxu0 0.0
      %1805 = vmatprep.subr.mxu0 0.0
      %1806 = vmatpush1.msra.mxu0 0.0
      %1807 = vmatprep.subr.mxu0 0.0
      %1808 = vmatpush1.msra.mxu0 0.0
      %1809 = vmatprep.subr.mxu0 0.0
      %1810 = vmatpush1.msra.mxu0 0.0
      %1811 = vmatprep.subr.mxu0 0.0
      %1812 = vmatpush1.msra.mxu0 0.0
      %1813 = vmatprep.subr.mxu0 0.0
      %1814 = vmatpush1.msra.mxu0 0.0
      %1815 = vmatprep.subr.mxu0 0.0
      %1816 = vmatpush1.msra.mxu0 0.0
      %1817 = vmatprep.subr.mxu0 0.0
      %1818 = vmatpush1.msra.mxu0 0.0
      %1819 = vmatprep.subr.mxu0 0.0
      %1820 = vmatpush1.msra.mxu0 0.0
      %1821 = vmatprep.subr.mxu0 0.0
      %1822 = vmatpush1.msra.mxu0 0.0
      %1823 = vmatprep.subr.mxu0 0.0
      %1824 = vmatpush1.msra.mxu0 0.0
      %1825 = vmatprep.subr.mxu0 0.0
      %1826 = vmatpush1.msra.mxu0 0.0
      %1827 = vmatprep.subr.mxu0 0.0
      %1828 = vmatpush1.msra.mxu0 0.0
      %1829 = vmatprep.subr.mxu0 0.0
      %1830 = vmatpush1.msra.mxu0 0.0
      %1831 = vmatprep.subr.mxu0 0.0
      %1832 = vmatpush1.msra.mxu0 0.0
      %1833 = vmatprep.subr.mxu0 0.0
      %1834 = vmatpush1.msra.mxu0 0.0
      %1835 = vmatprep.subr.mxu0 0.0
      %1836 = vmatpush1.msra.mxu0 0.0
      %1837 = vmatprep.subr.mxu0 0.0
      %1838 = vmatpush1.msra.mxu0 0.0
      %1839 = vmatprep.subr.mxu0 0.0
      %1840 = vmatpush1.msra.mxu0 0.0
      %1841 = vmatprep.subr.mxu0 0.0
      %1842 = vmatpush1.msra.mxu0 0.0
      %1843 = vmatprep.subr.mxu0 0.0
      %1844 = vmatpush1.msra.mxu0 0.0
      %1845 = vmatprep.subr.mxu0 0.0
      %1846 = vmatpush1.msra.mxu0 0.0
      %1847 = vmatprep.subr.mxu0 0.0
      %1848 = vmatpush1.msra.mxu0 0.0
      %1849 = vmatprep.subr.mxu0 0.0
      %1850 = vmatpush1.msra.mxu0 0.0
      %1851 = vmatprep.mubr.f32.mxu0 0.0
      %1852 = vmatmul.mubr.f32.gmra.mrb[0].mxu0 %v1604
      %v1853 = vpop.f32.mrb[0].mxu0
      %v1854 = vadd.f32 0.0, %v1853
      %v1855 = vpop.f32.mrb[0].mxu0
      %1856 = vmatprep.mubr.f32.mxu0 0.0
      %1857 = vmatmul.mubr.f32.gmra.mrb[0].mxu0 %v1607
      %v1858 = vpop.f32.mrb[0].mxu0
      %v1859 = vadd.f32 0.0, %v1858
      %v1860 = vpop.f32.mrb[0].mxu0
      %1861 = vmatprep.mubr.f32.mxu0 0.0
      %1862 = vmatmul.mubr.f32.gmra.mrb[0].mxu0 %v1610
      %v1863 = vpop.f32.mrb[0].mxu0
      %v1864 = vadd.f32 0.0, %v1863
      %v1865 = vpop.f32.mrb[0].mxu0
      %1866 = vmatprep.mubr.f32.mxu0 0.0
      %1867 = vmatmul.mubr.f32.gmra.mrb[0].mxu0 %v1613
      %v1868 = vpop.f32.mrb[0].mxu0
      %v1869 = vadd.f32 0.0, %v1868
      %v1870 = vpop.f32.mrb[0].mxu0
      %1871 = vmatprep.mubr.f32.mxu0 0.0
      %1872 = vmatmul.mubr.f32.gmra.mrb[0].mxu0 %v1616
      %v1873 = vpop.f32.mrb[0].mxu0
      %v1874 = vadd.f32 0.0, %v1873
      %v1875 = vpop.f32.mrb[0].mxu0
      %1876 = vmatprep.mubr.f32.mxu0 0.0
      %1877 = vmatmul.mubr.f32.gmra.mrb[0].mxu0 %v1619
      %v1878 = vpop.f32.mrb[0].mxu0
      %v1879 = vadd.f32 0.0, %v1878
      %v1880 = vpop.f32.mrb[0].mxu0
      %1881 = vmatprep.mubr.f32.mxu0 0.0
      %1882 = vmatmul.mubr.f32.gmra.mrb[0].mxu0 %v1622
      %v1883 = vpop.f32.mrb[0].mxu0
      %v1884 = vadd.f32 0.0, %v1883
      %v1885 = vpop.f32.mrb[0].mxu0
      %1886 = vmatprep.mubr.f32.mxu0 0.0
      %1887 = vmatmul.mubr.f32.gmra.mrb[0].mxu0 %v1625
      %v1888 = vpop.f32.mrb[0].mxu0
      %v1889 = vadd.f32 0.0, %v1888
      %v1890 = vpop.f32.mrb[0].mxu0
      %1891 = vmatprep.mubr.f32.mxu0 0.0
      %1892 = vmatmul.mubr.f32.gmra.mrb[0].mxu0 %v1628
      %v1893 = vpop.f32.mrb[0].mxu0
      %v1894 = vadd.f32 0.0, %v1893
      %v1895 = vpop.f32.mrb[0].mxu0
      %1896 = vmatprep.mubr.f32.mxu0 0.0
      %1897 = vmatmul.mubr.f32.gmra.mrb[0].mxu0 %v1631
      %v1898 = vpop.f32.mrb[0].mxu0
      %v1899 = vadd.f32 0.0, %v1898
      %v1900 = vpop.f32.mrb[0].mxu0
      %1901 = vmatprep.mubr.f32.mxu0 0.0
      %1902 = vmatmul.mubr.f32.gmra.mrb[0].mxu0 %v1634
      %v1903 = vpop.f32.mrb[0].mxu0
      %v1904 = vadd.f32 0.0, %v1903
      %v1905 = vpop.f32.mrb[0].mxu0
      %1906 = vmatprep.mubr.f32.mxu0 0.0
      %1907 = vmatmul.mubr.f32.gmra.mrb[0].mxu0 %v1637
      %v1908 = vpop.f32.mrb[0].mxu0
      %v1909 = vadd.f32 0.0, %v1908
      %v1910 = vpop.f32.mrb[0].mxu0
      %1911 = vmatprep.mubr.f32.mxu0 0.0
      %1912 = vmatmul.mubr.f32.gmra.mrb[0].mxu0 %v1640
      %v1913 = vpop.f32.mrb[0].mxu0
      %v1914 = vadd.f32 0.0, %v1913
      %v1915 = vpop.f32.mrb[0].mxu0
      %1916 = vdwg.mxu0
      %1917 = vrot.lane.b32.xlu0 %v347, 126
      %v1918 = vpop.permute.xlu0 %1917
      %1919 = vrot.lane.b32.xlu0 %v348, 126
      %v1920 = vpop.permute.xlu0 %1919
      %1921 = vrot.lane.b32.xlu0 %v349, 126
      %v1922 = vpop.permute.xlu0 %1921
      %1923 = vrot.lane.b32.xlu0 %v350, 126
      %v1924 = vpop.permute.xlu0 %1923
      %v1928 = vsel %vm437, %v1924, 0
      %1930 = vmatprep.subr.mxu0 0.0
      %1931 = vmatpush1.msra.mxu0 %v1918
      %1932 = vmatprep.subr.mxu0 0.0
      %1933 = vmatpush1.msra.mxu0 %v1920
      %1934 = vmatprep.subr.mxu0 0.0
      %1935 = vmatpush1.msra.mxu0 %v1922
      %1936 = vmatprep.subr.mxu0 0.0
      %1937 = vmatpush1.msra.mxu0 %v1928
      %1938 = vmatprep.subr.mxu0 0.0
      %1939 = vmatpush1.msra.mxu0 0.0
      %1940 = vmatprep.subr.mxu0 0.0
      %1941 = vmatpush1.msra.mxu0 0.0
      %1942 = vmatprep.subr.mxu0 0.0
      %1943 = vmatpush1.msra.mxu0 0.0
      %1944 = vmatprep.subr.mxu0 0.0
      %1945 = vmatpush1.msra.mxu0 0.0
      %1946 = vmatprep.subr.mxu0 0.0
      %1947 = vmatpush1.msra.mxu0 0.0
      %1948 = vmatprep.subr.mxu0 0.0
      %1949 = vmatpush1.msra.mxu0 0.0
      %1950 = vmatprep.subr.mxu0 0.0
      %1951 = vmatpush1.msra.mxu0 0.0
      %1952 = vmatprep.subr.mxu0 0.0
      %1953 = vmatpush1.msra.mxu0 0.0
      %1954 = vmatprep.subr.mxu0 0.0
      %1955 = vmatpush1.msra.mxu0 0.0
      %1956 = vmatprep.subr.mxu0 0.0
      %1957 = vmatpush1.msra.mxu0 0.0
      %1958 = vmatprep.subr.mxu0 0.0
      %1959 = vmatpush1.msra.mxu0 0.0
      %1960 = vmatprep.subr.mxu0 0.0
      %1961 = vmatpush1.msra.mxu0 0.0
      %1962 = vmatprep.subr.mxu0 0.0
      %1963 = vmatpush1.msra.mxu0 0.0
      %1964 = vmatprep.subr.mxu0 0.0
      %1965 = vmatpush1.msra.mxu0 0.0
      %1966 = vmatprep.subr.mxu0 0.0
      %1967 = vmatpush1.msra.mxu0 0.0
      %1968 = vmatprep.subr.mxu0 0.0
      %1969 = vmatpush1.msra.mxu0 0.0
      %1970 = vmatprep.subr.mxu0 0.0
      %1971 = vmatpush1.msra.mxu0 0.0
      %1972 = vmatprep.subr.mxu0 0.0
      %1973 = vmatpush1.msra.mxu0 0.0
      %1974 = vmatprep.subr.mxu0 0.0
      %1975 = vmatpush1.msra.mxu0 0.0
      %1976 = vmatprep.subr.mxu0 0.0
      %1977 = vmatpush1.msra.mxu0 0.0
      %1978 = vmatprep.subr.mxu0 0.0
      %1979 = vmatpush1.msra.mxu0 0.0
      %1980 = vmatprep.subr.mxu0 0.0
      %1981 = vmatpush1.msra.mxu0 0.0
      %1982 = vmatprep.subr.mxu0 0.0
      %1983 = vmatpush1.msra.mxu0 0.0
      %1984 = vmatprep.subr.mxu0 0.0
      %1985 = vmatpush1.msra.mxu0 0.0
      %1986 = vmatprep.subr.mxu0 0.0
      %1987 = vmatpush1.msra.mxu0 0.0
      %1988 = vmatprep.subr.mxu0 0.0
      %1989 = vmatpush1.msra.mxu0 0.0
      %1990 = vmatprep.subr.mxu0 0.0
      %1991 = vmatpush1.msra.mxu0 0.0
      %1992 = vmatprep.subr.mxu0 0.0
      %1993 = vmatpush1.msra.mxu0 0.0
      %1994 = vmatprep.mubr.f32.mxu0 0.0
      %1995 = vmatmul.mubr.f32.gmra.mrb[0].mxu0 %v1604
      %v1996 = vpop.f32.mrb[0].mxu0
      %v1997 = vadd.f32 0.0, %v1996
      %v1998 = vpop.f32.mrb[0].mxu0
      %1999 = vmatprep.mubr.f32.mxu0 0.0
      %2000 = vmatmul.mubr.f32.gmra.mrb[0].mxu0 %v1607
      %v2001 = vpop.f32.mrb[0].mxu0
      %v2002 = vadd.f32 0.0, %v2001
      %v2003 = vpop.f32.mrb[0].mxu0
      %2004 = vmatprep.mubr.f32.mxu0 0.0
      %2005 = vmatmul.mubr.f32.gmra.mrb[0].mxu0 %v1610
      %v2006 = vpop.f32.mrb[0].mxu0
      %v2007 = vadd.f32 0.0, %v2006
      %v2008 = vpop.f32.mrb[0].mxu0
      %2009 = vmatprep.mubr.f32.mxu0 0.0
      %2010 = vmatmul.mubr.f32.gmra.mrb[0].mxu0 %v1613
      %v2011 = vpop.f32.mrb[0].mxu0
      %v2012 = vadd.f32 0.0, %v2011
      %v2013 = vpop.f32.mrb[0].mxu0
      %2014 = vmatprep.mubr.f32.mxu0 0.0
      %2015 = vmatmul.mubr.f32.gmra.mrb[0].mxu0 %v1616
      %v2016 = vpop.f32.mrb[0].mxu0
      %v2017 = vadd.f32 0.0, %v2016
      %v2018 = vpop.f32.mrb[0].mxu0
      %2019 = vmatprep.mubr.f32.mxu0 0.0
      %2020 = vmatmul.mubr.f32.gmra.mrb[0].mxu0 %v1619
      %v2021 = vpop.f32.mrb[0].mxu0
      %v2022 = vadd.f32 0.0, %v2021
      %v2023 = vpop.f32.mrb[0].mxu0
      %2024 = vmatprep.mubr.f32.mxu0 0.0
      %2025 = vmatmul.mubr.f32.gmra.mrb[0].mxu0 %v1622
      %v2026 = vpop.f32.mrb[0].mxu0
      %v2027 = vadd.f32 0.0, %v2026
      %v2028 = vpop.f32.mrb[0].mxu0
      %2029 = vmatprep.mubr.f32.mxu0 0.0
      %2030 = vmatmul.mubr.f32.gmra.mrb[0].mxu0 %v1625
      %v2031 = vpop.f32.mrb[0].mxu0
      %v2032 = vadd.f32 0.0, %v2031
      %v2033 = vpop.f32.mrb[0].mxu0
      %2034 = vmatprep.mubr.f32.mxu0 0.0
      %2035 = vmatmul.mubr.f32.gmra.mrb[0].mxu0 %v1628
      %v2036 = vpop.f32.mrb[0].mxu0
      %v2037 = vadd.f32 0.0, %v2036
      %v2038 = vpop.f32.mrb[0].mxu0
      %2039 = vmatprep.mubr.f32.mxu0 0.0
      %2040 = vmatmul.mubr.f32.gmra.mrb[0].mxu0 %v1631
      %v2041 = vpop.f32.mrb[0].mxu0
      %v2042 = vadd.f32 0.0, %v2041
      %v2043 = vpop.f32.mrb[0].mxu0
      %2044 = vmatprep.mubr.f32.mxu0 0.0
      %2045 = vmatmul.mubr.f32.gmra.mrb[0].mxu0 %v1634
      %v2046 = vpop.f32.mrb[0].mxu0
      %v2047 = vadd.f32 0.0, %v2046
      %v2048 = vpop.f32.mrb[0].mxu0
      %2049 = vmatprep.mubr.f32.mxu0 0.0
      %2050 = vmatmul.mubr.f32.gmra.mrb[0].mxu0 %v1637
      %v2051 = vpop.f32.mrb[0].mxu0
      %v2052 = vadd.f32 0.0, %v2051
      %v2053 = vpop.f32.mrb[0].mxu0
      %2054 = vmatprep.mubr.f32.mxu0 0.0
      %2055 = vmatmul.mubr.f32.gmra.mrb[0].mxu0 %v1640
      %v2056 = vpop.f32.mrb[0].mxu0
      %v2057 = vadd.f32 0.0, %v2056
      %v2058 = vpop.f32.mrb[0].mxu0
      %2059 = vdwg.mxu0
      %2060 = vrot.lane.b32.xlu0 %v351, 126
      %v2061 = vpop.permute.xlu0 %2060
      %2062 = vrot.lane.b32.xlu0 %v352, 126
      %v2063 = vpop.permute.xlu0 %2062
      %2064 = vrot.lane.b32.xlu0 %v353, 126
      %v2065 = vpop.permute.xlu0 %2064
      %2066 = vrot.lane.b32.xlu0 %v354, 126
      %v2067 = vpop.permute.xlu0 %2066
      %v2071 = vsel %vm437, %v2067, 0
      %2073 = vmatprep.subr.mxu0 0.0
      %2074 = vmatpush1.msra.mxu0 %v2061
      %2075 = vmatprep.subr.mxu0 0.0
      %2076 = vmatpush1.msra.mxu0 %v2063
      %2077 = vmatprep.subr.mxu0 0.0
      %2078 = vmatpush1.msra.mxu0 %v2065
      %2079 = vmatprep.subr.mxu0 0.0
      %2080 = vmatpush1.msra.mxu0 %v2071
      %2081 = vmatprep.subr.mxu0 0.0
      %2082 = vmatpush1.msra.mxu0 0.0
      %2083 = vmatprep.subr.mxu0 0.0
      %2084 = vmatpush1.msra.mxu0 0.0
      %2085 = vmatprep.subr.mxu0 0.0
      %2086 = vmatpush1.msra.mxu0 0.0
      %2087 = vmatprep.subr.mxu0 0.0
      %2088 = vmatpush1.msra.mxu0 0.0
      %2089 = vmatprep.subr.mxu0 0.0
      %2090 = vmatpush1.msra.mxu0 0.0
      %2091 = vmatprep.subr.mxu0 0.0
      %2092 = vmatpush1.msra.mxu0 0.0
      %2093 = vmatprep.subr.mxu0 0.0
      %2094 = vmatpush1.msra.mxu0 0.0
      %2095 = vmatprep.subr.mxu0 0.0
      %2096 = vmatpush1.msra.mxu0 0.0
      %2097 = vmatprep.subr.mxu0 0.0
      %2098 = vmatpush1.msra.mxu0 0.0
      %2099 = vmatprep.subr.mxu0 0.0
      %2100 = vmatpush1.msra.mxu0 0.0
      %2101 = vmatprep.subr.mxu0 0.0
      %2102 = vmatpush1.msra.mxu0 0.0
      %2103 = vmatprep.subr.mxu0 0.0
      %2104 = vmatpush1.msra.mxu0 0.0
      %2105 = vmatprep.subr.mxu0 0.0
      %2106 = vmatpush1.msra.mxu0 0.0
      %2107 = vmatprep.subr.mxu0 0.0
      %2108 = vmatpush1.msra.mxu0 0.0
      %2109 = vmatprep.subr.mxu0 0.0
      %2110 = vmatpush1.msra.mxu0 0.0
      %2111 = vmatprep.subr.mxu0 0.0
      %2112 = vmatpush1.msra.mxu0 0.0
      %2113 = vmatprep.subr.mxu0 0.0
      %2114 = vmatpush1.msra.mxu0 0.0
      %2115 = vmatprep.subr.mxu0 0.0
      %2116 = vmatpush1.msra.mxu0 0.0
      %2117 = vmatprep.subr.mxu0 0.0
      %2118 = vmatpush1.msra.mxu0 0.0
      %2119 = vmatprep.subr.mxu0 0.0
      %2120 = vmatpush1.msra.mxu0 0.0
      %2121 = vmatprep.subr.mxu0 0.0
      %2122 = vmatpush1.msra.mxu0 0.0
      %2123 = vmatprep.subr.mxu0 0.0
      %2124 = vmatpush1.msra.mxu0 0.0
      %2125 = vmatprep.subr.mxu0 0.0
      %2126 = vmatpush1.msra.mxu0 0.0
      %2127 = vmatprep.subr.mxu0 0.0
      %2128 = vmatpush1.msra.mxu0 0.0
      %2129 = vmatprep.subr.mxu0 0.0
      %2130 = vmatpush1.msra.mxu0 0.0
      %2131 = vmatprep.subr.mxu0 0.0
      %2132 = vmatpush1.msra.mxu0 0.0
      %2133 = vmatprep.subr.mxu0 0.0
      %2134 = vmatpush1.msra.mxu0 0.0
      %2135 = vmatprep.subr.mxu0 0.0
      %2136 = vmatpush1.msra.mxu0 0.0
      %2137 = vmatprep.mubr.f32.mxu0 0.0
      %2138 = vmatmul.mubr.f32.gmra.mrb[0].mxu0 %v1604
      %v2139 = vpop.f32.mrb[0].mxu0
      %v2140 = vadd.f32 0.0, %v2139
      %v2141 = vpop.f32.mrb[0].mxu0
      %2142 = vmatprep.mubr.f32.mxu0 0.0
      %2143 = vmatmul.mubr.f32.gmra.mrb[0].mxu0 %v1607
      %v2144 = vpop.f32.mrb[0].mxu0
      %v2145 = vadd.f32 0.0, %v2144
      %v2146 = vpop.f32.mrb[0].mxu0
      %2147 = vmatprep.mubr.f32.mxu0 0.0
      %2148 = vmatmul.mubr.f32.gmra.mrb[0].mxu0 %v1610
      %v2149 = vpop.f32.mrb[0].mxu0
      %v2150 = vadd.f32 0.0, %v2149
      %v2151 = vpop.f32.mrb[0].mxu0
      %2152 = vmatprep.mubr.f32.mxu0 0.0
      %2153 = vmatmul.mubr.f32.gmra.mrb[0].mxu0 %v1613
      %v2154 = vpop.f32.mrb[0].mxu0
      %v2155 = vadd.f32 0.0, %v2154
      %v2156 = vpop.f32.mrb[0].mxu0
      %2157 = vmatprep.mubr.f32.mxu0 0.0
      %2158 = vmatmul.mubr.f32.gmra.mrb[0].mxu0 %v1616
      %v2159 = vpop.f32.mrb[0].mxu0
      %v2160 = vadd.f32 0.0, %v2159
      %v2161 = vpop.f32.mrb[0].mxu0
      %2162 = vmatprep.mubr.f32.mxu0 0.0
      %2163 = vmatmul.mubr.f32.gmra.mrb[0].mxu0 %v1619
      %v2164 = vpop.f32.mrb[0].mxu0
      %v2165 = vadd.f32 0.0, %v2164
      %v2166 = vpop.f32.mrb[0].mxu0
      %2167 = vmatprep.mubr.f32.mxu0 0.0
      %2168 = vmatmul.mubr.f32.gmra.mrb[0].mxu0 %v1622
      %v2169 = vpop.f32.mrb[0].mxu0
      %v2170 = vadd.f32 0.0, %v2169
      %v2171 = vpop.f32.mrb[0].mxu0
      %2172 = vmatprep.mubr.f32.mxu0 0.0
      %2173 = vmatmul.mubr.f32.gmra.mrb[0].mxu0 %v1625
      %v2174 = vpop.f32.mrb[0].mxu0
      %v2175 = vadd.f32 0.0, %v2174
      %v2176 = vpop.f32.mrb[0].mxu0
      %2177 = vmatprep.mubr.f32.mxu0 0.0
      %2178 = vmatmul.mubr.f32.gmra.mrb[0].mxu0 %v1628
      %v2179 = vpop.f32.mrb[0].mxu0
      %v2180 = vadd.f32 0.0, %v2179
      %v2181 = vpop.f32.mrb[0].mxu0
      %2182 = vmatprep.mubr.f32.mxu0 0.0
      %2183 = vmatmul.mubr.f32.gmra.mrb[0].mxu0 %v1631
      %v2184 = vpop.f32.mrb[0].mxu0
      %v2185 = vadd.f32 0.0, %v2184
      %v2186 = vpop.f32.mrb[0].mxu0
      %2187 = vmatprep.mubr.f32.mxu0 0.0
      %2188 = vmatmul.mubr.f32.gmra.mrb[0].mxu0 %v1634
      %v2189 = vpop.f32.mrb[0].mxu0
      %v2190 = vadd.f32 0.0, %v2189
      %v2191 = vpop.f32.mrb[0].mxu0
      %2192 = vmatprep.mubr.f32.mxu0 0.0
      %2193 = vmatmul.mubr.f32.gmra.mrb[0].mxu0 %v1637
      %v2194 = vpop.f32.mrb[0].mxu0
      %v2195 = vadd.f32 0.0, %v2194
      %v2196 = vpop.f32.mrb[0].mxu0
      %2197 = vmatprep.mubr.f32.mxu0 0.0
      %2198 = vmatmul.mubr.f32.gmra.mrb[0].mxu0 %v1640
      %v2199 = vpop.f32.mrb[0].mxu0
      %v2200 = vadd.f32 0.0, %v2199
      %v2201 = vpop.f32.mrb[0].mxu0
      %2202 = vdwg.mxu0
      %v2203 = vadd.f32 %v1119, %v1711
      %v2204 = vadd.f32 %v1124, %v1716
      %v2205 = vadd.f32 %v1129, %v1721
      %v2206 = vadd.f32 %v1134, %v1726
      %v2207 = vadd.f32 %v1139, %v1731
      %v2208 = vadd.f32 %v1144, %v1736
      %v2209 = vadd.f32 %v1149, %v1741
      %v2210 = vadd.f32 %v1154, %v1746
      %v2211 = vadd.f32 %v1159, %v1751
      %v2212 = vadd.f32 %v1164, %v1756
      %v2213 = vadd.f32 %v1169, %v1761
      %v2214 = vadd.f32 %v1174, %v1766
      %v2215 = vadd.f32 %v1179, %v1771
      %v2216 = vadd.f32 %v1251, %v1854
      %v2217 = vadd.f32 %v1256, %v1859
      %v2218 = vadd.f32 %v1261, %v1864
      %v2219 = vadd.f32 %v1266, %v1869
      %v2220 = vadd.f32 %v1271, %v1874
      %v2221 = vadd.f32 %v1276, %v1879
      %v2222 = vadd.f32 %v1281, %v1884
      %v2223 = vadd.f32 %v1286, %v1889
      %v2224 = vadd.f32 %v1291, %v1894
      %v2225 = vadd.f32 %v1296, %v1899
      %v2226 = vadd.f32 %v1301, %v1904
      %v2227 = vadd.f32 %v1306, %v1909
      %v2228 = vadd.f32 %v1311, %v1914
      %v2229 = vadd.f32 %v1383, %v1997
      %v2230 = vadd.f32 %v1388, %v2002
      %v2231 = vadd.f32 %v1393, %v2007
      %v2232 = vadd.f32 %v1398, %v2012
      %v2233 = vadd.f32 %v1403, %v2017
      %v2234 = vadd.f32 %v1408, %v2022
      %v2235 = vadd.f32 %v1413, %v2027
      %v2236 = vadd.f32 %v1418, %v2032
      %v2237 = vadd.f32 %v1423, %v2037
      %v2238 = vadd.f32 %v1428, %v2042
      %v2239 = vadd.f32 %v1433, %v2047
      %v2240 = vadd.f32 %v1438, %v2052
      %v2241 = vadd.f32 %v1443, %v2057
      %v2242 = vadd.f32 %v1515, %v2140
      %v2243 = vadd.f32 %v1520, %v2145
      %v2244 = vadd.f32 %v1525, %v2150
      %v2245 = vadd.f32 %v1530, %v2155
      %v2246 = vadd.f32 %v1535, %v2160
      %v2247 = vadd.f32 %v1540, %v2165
      %v2248 = vadd.f32 %v1545, %v2170
      %v2249 = vadd.f32 %v1550, %v2175
      %v2250 = vadd.f32 %v1555, %v2180
      %v2251 = vadd.f32 %v1560, %v2185
      %v2252 = vadd.f32 %v1565, %v2190
      %v2253 = vadd.f32 %v1570, %v2195
      %v2254 = vadd.f32 %v1575, %v2200
      %v2255 = vld [vmem:[%s2] sm:$0xff]
      %v2256 = vld [vmem:[%s2 + $0x8] sm:$0xff]
      %v2257 = vld [vmem:[%s2 + $0x10] sm:$0xff]
      %v2258 = vld [vmem:[%s2 + $0x18] sm:$0xff]
      %v2259 = vld [vmem:[%s2 + $0x20] sm:$0xff]
      %v2260 = vld [vmem:[%s2 + $0x28] sm:$0xff]
      %v2261 = vld [vmem:[%s2 + $0x30] sm:$0xff]
      %v2262 = vld [vmem:[%s2 + $0x38] sm:$0xff]
      %v2263 = vld [vmem:[%s2 + $0x40] sm:$0xff]
      %v2264 = vld [vmem:[%s2 + $0x48] sm:$0xff]
      %v2265 = vld [vmem:[%s2 + $0x50] sm:$0xff]
      %v2266 = vld [vmem:[%s2 + $0x58] sm:$0xff]
      %v2267 = vld [vmem:[%s2 + $0x60] sm:$0xff]
      %2269 = vset.pattern.permute.xlu0 0
      %2270 = vperm.xlu0 %2269, %v2255
      %v2271 = vpop.permute.xlu0 %2270
      %2274 = vset.pattern.permute.xlu0 0
      %2275 = vperm.xlu0 %2274, %v2256
      %v2276 = vpop.permute.xlu0 %2275
      %2279 = vset.pattern.permute.xlu0 0
      %2280 = vperm.xlu0 %2279, %v2257
      %v2281 = vpop.permute.xlu0 %2280
      %2284 = vset.pattern.permute.xlu0 0
      %2285 = vperm.xlu0 %2284, %v2258
      %v2286 = vpop.permute.xlu0 %2285
      %2289 = vset.pattern.permute.xlu0 0
      %2290 = vperm.xlu0 %2289, %v2259
      %v2291 = vpop.permute.xlu0 %2290
      %2294 = vset.pattern.permute.xlu0 0
      %2295 = vperm.xlu0 %2294, %v2260
      %v2296 = vpop.permute.xlu0 %2295
      %2299 = vset.pattern.permute.xlu0 0
      %2300 = vperm.xlu0 %2299, %v2261
      %v2301 = vpop.permute.xlu0 %2300
      %2304 = vset.pattern.permute.xlu0 0
      %2305 = vperm.xlu0 %2304, %v2262
      %v2306 = vpop.permute.xlu0 %2305
      %2309 = vset.pattern.permute.xlu0 0
      %2310 = vperm.xlu0 %2309, %v2263
      %v2311 = vpop.permute.xlu0 %2310
      %2314 = vset.pattern.permute.xlu0 0
      %2315 = vperm.xlu0 %2314, %v2264
      %v2316 = vpop.permute.xlu0 %2315
      %2319 = vset.pattern.permute.xlu0 0
      %2320 = vperm.xlu0 %2319, %v2265
      %v2321 = vpop.permute.xlu0 %2320
      %2324 = vset.pattern.permute.xlu0 0
      %2325 = vperm.xlu0 %2324, %v2266
      %v2326 = vpop.permute.xlu0 %2325
      %2329 = vset.pattern.permute.xlu0 0
      %2330 = vperm.xlu0 %2329, %v2267
      %v2331 = vpop.permute.xlu0 %2330
      %v2333 = vadd.f32 %v2203, %v2271
      %v2334 = vadd.f32 %v2204, %v2276
      %v2335 = vadd.f32 %v2205, %v2281
      %v2336 = vadd.f32 %v2206, %v2286
      %v2337 = vadd.f32 %v2207, %v2291
      %v2338 = vadd.f32 %v2208, %v2296
      %v2339 = vadd.f32 %v2209, %v2301
      %v2340 = vadd.f32 %v2210, %v2306
      %v2341 = vadd.f32 %v2211, %v2311
      %v2342 = vadd.f32 %v2212, %v2316
      %v2343 = vadd.f32 %v2213, %v2321
      %v2344 = vadd.f32 %v2214, %v2326
      %v2345 = vadd.f32 %v2215, %v2331
      %v2346 = vadd.f32 %v2216, %v2271
      %v2347 = vadd.f32 %v2217, %v2276
      %v2348 = vadd.f32 %v2218, %v2281
      %v2349 = vadd.f32 %v2219, %v2286
      %v2350 = vadd.f32 %v2220, %v2291
      %v2351 = vadd.f32 %v2221, %v2296
      %v2352 = vadd.f32 %v2222, %v2301
      %v2353 = vadd.f32 %v2223, %v2306
      %v2354 = vadd.f32 %v2224, %v2311
      %v2355 = vadd.f32 %v2225, %v2316
      %v2356 = vadd.f32 %v2226, %v2321
      %v2357 = vadd.f32 %v2227, %v2326
      %v2358 = vadd.f32 %v2228, %v2331
      %v2359 = vadd.f32 %v2229, %v2271
      %v2360 = vadd.f32 %v2230, %v2276
      %v2361 = vadd.f32 %v2231, %v2281
      %v2362 = vadd.f32 %v2232, %v2286
      %v2363 = vadd.f32 %v2233, %v2291
      %v2364 = vadd.f32 %v2234, %v2296
      %v2365 = vadd.f32 %v2235, %v2301
      %v2366 = vadd.f32 %v2236, %v2306
      %v2367 = vadd.f32 %v2237, %v2311
      %v2368 = vadd.f32 %v2238, %v2316
      %v2369 = vadd.f32 %v2239, %v2321
      %v2370 = vadd.f32 %v2240, %v2326
      %v2371 = vadd.f32 %v2241, %v2331
      %v2372 = vadd.f32 %v2242, %v2271
      %v2373 = vadd.f32 %v2243, %v2276
      %v2374 = vadd.f32 %v2244, %v2281
      %v2375 = vadd.f32 %v2245, %v2286
      %v2376 = vadd.f32 %v2246, %v2291
      %v2377 = vadd.f32 %v2247, %v2296
      %v2378 = vadd.f32 %v2248, %v2301
      %v2379 = vadd.f32 %v2249, %v2306
      %v2380 = vadd.f32 %v2250, %v2311
      %v2381 = vadd.f32 %v2251, %v2316
      %v2382 = vadd.f32 %v2252, %v2321
      %v2383 = vadd.f32 %v2253, %v2326
      %v2384 = vadd.f32 %v2254, %v2331
      %v2385 = vmax.f32 %v2333, 0.0
      %v2386 = vmax.f32 %v2334, 0.0
      %v2387 = vmax.f32 %v2335, 0.0
      %v2388 = vmax.f32 %v2336, 0.0
      %v2389 = vmax.f32 %v2337, 0.0
      %v2390 = vmax.f32 %v2338, 0.0
      %v2391 = vmax.f32 %v2339, 0.0
      %v2392 = vmax.f32 %v2340, 0.0
      %v2393 = vmax.f32 %v2341, 0.0
      %v2394 = vmax.f32 %v2342, 0.0
      %v2395 = vmax.f32 %v2343, 0.0
      %v2396 = vmax.f32 %v2344, 0.0
      %v2397 = vmax.f32 %v2345, 0.0
      %v2398 = vmax.f32 %v2346, 0.0
      %v2399 = vmax.f32 %v2347, 0.0
      %v2400 = vmax.f32 %v2348, 0.0
      %v2401 = vmax.f32 %v2349, 0.0
      %v2402 = vmax.f32 %v2350, 0.0
      %v2403 = vmax.f32 %v2351, 0.0
      %v2404 = vmax.f32 %v2352, 0.0
      %v2405 = vmax.f32 %v2353, 0.0
      %v2406 = vmax.f32 %v2354, 0.0
      %v2407 = vmax.f32 %v2355, 0.0
      %v2408 = vmax.f32 %v2356, 0.0
      %v2409 = vmax.f32 %v2357, 0.0
      %v2410 = vmax.f32 %v2358, 0.0
      %v2411 = vmax.f32 %v2359, 0.0
      %v2412 = vmax.f32 %v2360, 0.0
      %v2413 = vmax.f32 %v2361, 0.0
      %v2414 = vmax.f32 %v2362, 0.0
      %v2415 = vmax.f32 %v2363, 0.0
      %v2416 = vmax.f32 %v2364, 0.0
      %v2417 = vmax.f32 %v2365, 0.0
      %v2418 = vmax.f32 %v2366, 0.0
      %v2419 = vmax.f32 %v2367, 0.0
      %v2420 = vmax.f32 %v2368, 0.0
      %v2421 = vmax.f32 %v2369, 0.0
      %v2422 = vmax.f32 %v2370, 0.0
      %v2423 = vmax.f32 %v2371, 0.0
      %v2424 = vmax.f32 %v2372, 0.0
      %v2425 = vmax.f32 %v2373, 0.0
      %v2426 = vmax.f32 %v2374, 0.0
      %v2427 = vmax.f32 %v2375, 0.0
      %v2428 = vmax.f32 %v2376, 0.0
      %v2429 = vmax.f32 %v2377, 0.0
      %v2430 = vmax.f32 %v2378, 0.0
      %v2431 = vmax.f32 %v2379, 0.0
      %v2432 = vmax.f32 %v2380, 0.0
      %v2433 = vmax.f32 %v2381, 0.0
      %v2434 = vmax.f32 %v2382, 0.0
      %v2435 = vmax.f32 %v2383, 0.0
      %v2436 = vmax.f32 %v2384, 0.0
      %s2437 = scalar_lea.vmem %s1, 312
      %v2438 = vld [vmem:[%s2437] sm:$0xff]
      %v2439 = vld [vmem:[%s2437 + $0x8] sm:$0xff]
      %v2440 = vld [vmem:[%s2437 + $0x10] sm:$0xff]
      %v2441 = vld [vmem:[%s2437 + $0x18] sm:$0xff]
      %v2442 = vld [vmem:[%s2437 + $0x20] sm:$0xff]
      %v2443 = vld [vmem:[%s2437 + $0x28] sm:$0xff]
      %v2444 = vld [vmem:[%s2437 + $0x30] sm:$0xff]
      %v2445 = vld [vmem:[%s2437 + $0x38] sm:$0xff]
      %v2446 = vld [vmem:[%s2437 + $0x40] sm:$0xff]
      %v2447 = vld [vmem:[%s2437 + $0x48] sm:$0xff]
      %v2448 = vld [vmem:[%s2437 + $0x50] sm:$0xff]
      %v2449 = vld [vmem:[%s2437 + $0x58] sm:$0xff]
      %v2450 = vld [vmem:[%s2437 + $0x60] sm:$0xff]
      %s2451 = scalar_lea.vmem %s1, 416
      %v2452 = vld [vmem:[%s2451] sm:$0xff]
      %v2453 = vld [vmem:[%s2451 + $0x8] sm:$0xff]
      %v2454 = vld [vmem:[%s2451 + $0x10] sm:$0xff]
      %v2455 = vld [vmem:[%s2451 + $0x18] sm:$0xff]
      %v2456 = vld [vmem:[%s2451 + $0x20] sm:$0xff]
      %v2457 = vld [vmem:[%s2451 + $0x28] sm:$0xff]
      %v2458 = vld [vmem:[%s2451 + $0x30] sm:$0xff]
      %v2459 = vld [vmem:[%s2451 + $0x38] sm:$0xff]
      %v2460 = vld [vmem:[%s2451 + $0x40] sm:$0xff]
      %v2461 = vld [vmem:[%s2451 + $0x48] sm:$0xff]
      %v2462 = vld [vmem:[%s2451 + $0x50] sm:$0xff]
      %v2463 = vld [vmem:[%s2451 + $0x58] sm:$0xff]
      %v2464 = vld [vmem:[%s2451 + $0x60] sm:$0xff]
      %v2466 = vsel %vm397, %v2452, 0
      %v2469 = vsel %vm397, %v2453, 0
      %v2472 = vsel %vm397, %v2454, 0
      %v2475 = vsel %vm397, %v2455, 0
      %v2478 = vsel %vm397, %v2456, 0
      %v2481 = vsel %vm397, %v2457, 0
      %v2484 = vsel %vm397, %v2458, 0
      %v2487 = vsel %vm397, %v2459, 0
      %v2490 = vsel %vm397, %v2460, 0
      %v2493 = vsel %vm397, %v2461, 0
      %v2496 = vsel %vm397, %v2462, 0
      %v2499 = vsel %vm397, %v2463, 0
      %v2502 = vsel %vm397, %v2464, 0
      %2504 = vmatprep.subr.mxu0 0.0
      %2505 = vmatpush1.msra.mxu0 %v387
      %2506 = vmatprep.subr.mxu0 0.0
      %2507 = vmatpush1.msra.mxu0 %v389
      %2508 = vmatprep.subr.mxu0 0.0
      %2509 = vmatpush1.msra.mxu0 %v391
      %2510 = vmatprep.subr.mxu0 0.0
      %2511 = vmatpush1.msra.mxu0 %v438
      %2512 = vmatprep.subr.mxu0 0.0
      %2513 = vmatpush1.msra.mxu0 0.0
      %2514 = vmatprep.subr.mxu0 0.0
      %2515 = vmatpush1.msra.mxu0 0.0
      %2516 = vmatprep.subr.mxu0 0.0
      %2517 = vmatpush1.msra.mxu0 0.0
      %2518 = vmatprep.subr.mxu0 0.0
      %2519 = vmatpush1.msra.mxu0 0.0
      %2520 = vmatprep.subr.mxu0 0.0
      %2521 = vmatpush1.msra.mxu0 0.0
      %2522 = vmatprep.subr.mxu0 0.0
      %2523 = vmatpush1.msra.mxu0 0.0
      %2524 = vmatprep.subr.mxu0 0.0
      %2525 = vmatpush1.msra.mxu0 0.0
      %2526 = vmatprep.subr.mxu0 0.0
      %2527 = vmatpush1.msra.mxu0 0.0
      %2528 = vmatprep.subr.mxu0 0.0
      %2529 = vmatpush1.msra.mxu0 0.0
      %2530 = vmatprep.subr.mxu0 0.0
      %2531 = vmatpush1.msra.mxu0 0.0
      %2532 = vmatprep.subr.mxu0 0.0
      %2533 = vmatpush1.msra.mxu0 0.0
      %2534 = vmatprep.subr.mxu0 0.0
      %2535 = vmatpush1.msra.mxu0 0.0
      %2536 = vmatprep.subr.mxu0 0.0
      %2537 = vmatpush1.msra.mxu0 0.0
      %2538 = vmatprep.subr.mxu0 0.0
      %2539 = vmatpush1.msra.mxu0 0.0
      %2540 = vmatprep.subr.mxu0 0.0
      %2541 = vmatpush1.msra.mxu0 0.0
      %2542 = vmatprep.subr.mxu0 0.0
      %2543 = vmatpush1.msra.mxu0 0.0
      %2544 = vmatprep.subr.mxu0 0.0
      %2545 = vmatpush1.msra.mxu0 0.0
      %2546 = vmatprep.subr.mxu0 0.0
      %2547 = vmatpush1.msra.mxu0 0.0
      %2548 = vmatprep.subr.mxu0 0.0
      %2549 = vmatpush1.msra.mxu0 0.0
      %2550 = vmatprep.subr.mxu0 0.0
      %2551 = vmatpush1.msra.mxu0 0.0
      %2552 = vmatprep.subr.mxu0 0.0
      %2553 = vmatpush1.msra.mxu0 0.0
      %2554 = vmatprep.subr.mxu0 0.0
      %2555 = vmatpush1.msra.mxu0 0.0
      %2556 = vmatprep.subr.mxu0 0.0
      %2557 = vmatpush1.msra.mxu0 0.0
      %2558 = vmatprep.subr.mxu0 0.0
      %2559 = vmatpush1.msra.mxu0 0.0
      %2560 = vmatprep.subr.mxu0 0.0
      %2561 = vmatpush1.msra.mxu0 0.0
      %2562 = vmatprep.subr.mxu0 0.0
      %2563 = vmatpush1.msra.mxu0 0.0
      %2564 = vmatprep.subr.mxu0 0.0
      %2565 = vmatpush1.msra.mxu0 0.0
      %2566 = vmatprep.subr.mxu0 0.0
      %2567 = vmatpush1.msra.mxu0 0.0
      %2568 = vmatprep.mubr.f32.mxu0 0.0
      %2569 = vmatmul.mubr.f32.gmra.mrb[0].mxu0 %v2466
      %v2570 = vpop.f32.mrb[0].mxu0
      %v2571 = vadd.f32 0.0, %v2570
      %v2572 = vpop.f32.mrb[0].mxu0
      %2573 = vmatprep.mubr.f32.mxu0 0.0
      %2574 = vmatmul.mubr.f32.gmra.mrb[0].mxu0 %v2469
      %v2575 = vpop.f32.mrb[0].mxu0
      %v2576 = vadd.f32 0.0, %v2575
      %v2577 = vpop.f32.mrb[0].mxu0
      %2578 = vmatprep.mubr.f32.mxu0 0.0
      %2579 = vmatmul.mubr.f32.gmra.mrb[0].mxu0 %v2472
      %v2580 = vpop.f32.mrb[0].mxu0
      %v2581 = vadd.f32 0.0, %v2580
      %v2582 = vpop.f32.mrb[0].mxu0
      %2583 = vmatprep.mubr.f32.mxu0 0.0
      %2584 = vmatmul.mubr.f32.gmra.mrb[0].mxu0 %v2475
      %v2585 = vpop.f32.mrb[0].mxu0
      %v2586 = vadd.f32 0.0, %v2585
      %v2587 = vpop.f32.mrb[0].mxu0
      %2588 = vmatprep.mubr.f32.mxu0 0.0
      %2589 = vmatmul.mubr.f32.gmra.mrb[0].mxu0 %v2478
      %v2590 = vpop.f32.mrb[0].mxu0
      %v2591 = vadd.f32 0.0, %v2590
      %v2592 = vpop.f32.mrb[0].mxu0
      %2593 = vmatprep.mubr.f32.mxu0 0.0
      %2594 = vmatmul.mubr.f32.gmra.mrb[0].mxu0 %v2481
      %v2595 = vpop.f32.mrb[0].mxu0
      %v2596 = vadd.f32 0.0, %v2595
      %v2597 = vpop.f32.mrb[0].mxu0
      %2598 = vmatprep.mubr.f32.mxu0 0.0
      %2599 = vmatmul.mubr.f32.gmra.mrb[0].mxu0 %v2484
      %v2600 = vpop.f32.mrb[0].mxu0
      %v2601 = vadd.f32 0.0, %v2600
      %v2602 = vpop.f32.mrb[0].mxu0
      %2603 = vmatprep.mubr.f32.mxu0 0.0
      %2604 = vmatmul.mubr.f32.gmra.mrb[0].mxu0 %v2487
      %v2605 = vpop.f32.mrb[0].mxu0
      %v2606 = vadd.f32 0.0, %v2605
      %v2607 = vpop.f32.mrb[0].mxu0
      %2608 = vmatprep.mubr.f32.mxu0 0.0
      %2609 = vmatmul.mubr.f32.gmra.mrb[0].mxu0 %v2490
      %v2610 = vpop.f32.mrb[0].mxu0
      %v2611 = vadd.f32 0.0, %v2610
      %v2612 = vpop.f32.mrb[0].mxu0
      %2613 = vmatprep.mubr.f32.mxu0 0.0
      %2614 = vmatmul.mubr.f32.gmra.mrb[0].mxu0 %v2493
      %v2615 = vpop.f32.mrb[0].mxu0
      %v2616 = vadd.f32 0.0, %v2615
      %v2617 = vpop.f32.mrb[0].mxu0
      %2618 = vmatprep.mubr.f32.mxu0 0.0
      %2619 = vmatmul.mubr.f32.gmra.mrb[0].mxu0 %v2496
      %v2620 = vpop.f32.mrb[0].mxu0
      %v2621 = vadd.f32 0.0, %v2620
      %v2622 = vpop.f32.mrb[0].mxu0
      %2623 = vmatprep.mubr.f32.mxu0 0.0
      %2624 = vmatmul.mubr.f32.gmra.mrb[0].mxu0 %v2499
      %v2625 = vpop.f32.mrb[0].mxu0
      %v2626 = vadd.f32 0.0, %v2625
      %v2627 = vpop.f32.mrb[0].mxu0
      %2628 = vmatprep.mubr.f32.mxu0 0.0
      %2629 = vmatmul.mubr.f32.gmra.mrb[0].mxu0 %v2502
      %v2630 = vpop.f32.mrb[0].mxu0
      %v2631 = vadd.f32 0.0, %v2630
      %v2632 = vpop.f32.mrb[0].mxu0
      %2633 = vdwg.mxu0
      %2634 = vmatprep.subr.mxu0 0.0
      %2635 = vmatpush1.msra.mxu0 %v575
      %2636 = vmatprep.subr.mxu0 0.0
      %2637 = vmatpush1.msra.mxu0 %v577
      %2638 = vmatprep.subr.mxu0 0.0
      %2639 = vmatpush1.msra.mxu0 %v579
      %2640 = vmatprep.subr.mxu0 0.0
      %2641 = vmatpush1.msra.mxu0 %v585
      %2642 = vmatprep.subr.mxu0 0.0
      %2643 = vmatpush1.msra.mxu0 0.0
      %2644 = vmatprep.subr.mxu0 0.0
      %2645 = vmatpush1.msra.mxu0 0.0
      %2646 = vmatprep.subr.mxu0 0.0
      %2647 = vmatpush1.msra.mxu0 0.0
      %2648 = vmatprep.subr.mxu0 0.0
      %2649 = vmatpush1.msra.mxu0 0.0
      %2650 = vmatprep.subr.mxu0 0.0
      %2651 = vmatpush1.msra.mxu0 0.0
      %2652 = vmatprep.subr.mxu0 0.0
      %2653 = vmatpush1.msra.mxu0 0.0
      %2654 = vmatprep.subr.mxu0 0.0
      %2655 = vmatpush1.msra.mxu0 0.0
      %2656 = vmatprep.subr.mxu0 0.0
      %2657 = vmatpush1.msra.mxu0 0.0
      %2658 = vmatprep.subr.mxu0 0.0
      %2659 = vmatpush1.msra.mxu0 0.0
      %2660 = vmatprep.subr.mxu0 0.0
      %2661 = vmatpush1.msra.mxu0 0.0
      %2662 = vmatprep.subr.mxu0 0.0
      %2663 = vmatpush1.msra.mxu0 0.0
      %2664 = vmatprep.subr.mxu0 0.0
      %2665 = vmatpush1.msra.mxu0 0.0
      %2666 = vmatprep.subr.mxu0 0.0
      %2667 = vmatpush1.msra.mxu0 0.0
      %2668 = vmatprep.subr.mxu0 0.0
      %2669 = vmatpush1.msra.mxu0 0.0
      %2670 = vmatprep.subr.mxu0 0.0
      %2671 = vmatpush1.msra.mxu0 0.0
      %2672 = vmatprep.subr.mxu0 0.0
      %2673 = vmatpush1.msra.mxu0 0.0
      %2674 = vmatprep.subr.mxu0 0.0
      %2675 = vmatpush1.msra.mxu0 0.0
      %2676 = vmatprep.subr.mxu0 0.0
      %2677 = vmatpush1.msra.mxu0 0.0
      %2678 = vmatprep.subr.mxu0 0.0
      %2679 = vmatpush1.msra.mxu0 0.0
      %2680 = vmatprep.subr.mxu0 0.0
      %2681 = vmatpush1.msra.mxu0 0.0
      %2682 = vmatprep.subr.mxu0 0.0
      %2683 = vmatpush1.msra.mxu0 0.0
      %2684 = vmatprep.subr.mxu0 0.0
      %2685 = vmatpush1.msra.mxu0 0.0
      %2686 = vmatprep.subr.mxu0 0.0
      %2687 = vmatpush1.msra.mxu0 0.0
      %2688 = vmatprep.subr.mxu0 0.0
      %2689 = vmatpush1.msra.mxu0 0.0
      %2690 = vmatprep.subr.mxu0 0.0
      %2691 = vmatpush1.msra.mxu0 0.0
      %2692 = vmatprep.subr.mxu0 0.0
      %2693 = vmatpush1.msra.mxu0 0.0
      %2694 = vmatprep.subr.mxu0 0.0
      %2695 = vmatpush1.msra.mxu0 0.0
      %2696 = vmatprep.subr.mxu0 0.0
      %2697 = vmatpush1.msra.mxu0 0.0
      %2698 = vmatprep.mubr.f32.mxu0 0.0
      %2699 = vmatmul.mubr.f32.gmra.mrb[0].mxu0 %v2466
      %v2700 = vpop.f32.mrb[0].mxu0
      %v2701 = vadd.f32 0.0, %v2700
      %v2702 = vpop.f32.mrb[0].mxu0
      %2703 = vmatprep.mubr.f32.mxu0 0.0
      %2704 = vmatmul.mubr.f32.gmra.mrb[0].mxu0 %v2469
      %v2705 = vpop.f32.mrb[0].mxu0
      %v2706 = vadd.f32 0.0, %v2705
      %v2707 = vpop.f32.mrb[0].mxu0
      %2708 = vmatprep.mubr.f32.mxu0 0.0
      %2709 = vmatmul.mubr.f32.gmra.mrb[0].mxu0 %v2472
      %v2710 = vpop.f32.mrb[0].mxu0
      %v2711 = vadd.f32 0.0, %v2710
      %v2712 = vpop.f32.mrb[0].mxu0
      %2713 = vmatprep.mubr.f32.mxu0 0.0
      %2714 = vmatmul.mubr.f32.gmra.mrb[0].mxu0 %v2475
      %v2715 = vpop.f32.mrb[0].mxu0
      %v2716 = vadd.f32 0.0, %v2715
      %v2717 = vpop.f32.mrb[0].mxu0
      %2718 = vmatprep.mubr.f32.mxu0 0.0
      %2719 = vmatmul.mubr.f32.gmra.mrb[0].mxu0 %v2478
      %v2720 = vpop.f32.mrb[0].mxu0
      %v2721 = vadd.f32 0.0, %v2720
      %v2722 = vpop.f32.mrb[0].mxu0
      %2723 = vmatprep.mubr.f32.mxu0 0.0
      %2724 = vmatmul.mubr.f32.gmra.mrb[0].mxu0 %v2481
      %v2725 = vpop.f32.mrb[0].mxu0
      %v2726 = vadd.f32 0.0, %v2725
      %v2727 = vpop.f32.mrb[0].mxu0
      %2728 = vmatprep.mubr.f32.mxu0 0.0
      %2729 = vmatmul.mubr.f32.gmra.mrb[0].mxu0 %v2484
      %v2730 = vpop.f32.mrb[0].mxu0
      %v2731 = vadd.f32 0.0, %v2730
      %v2732 = vpop.f32.mrb[0].mxu0
      %2733 = vmatprep.mubr.f32.mxu0 0.0
      %2734 = vmatmul.mubr.f32.gmra.mrb[0].mxu0 %v2487
      %v2735 = vpop.f32.mrb[0].mxu0
      %v2736 = vadd.f32 0.0, %v2735
      %v2737 = vpop.f32.mrb[0].mxu0
      %2738 = vmatprep.mubr.f32.mxu0 0.0
      %2739 = vmatmul.mubr.f32.gmra.mrb[0].mxu0 %v2490
      %v2740 = vpop.f32.mrb[0].mxu0
      %v2741 = vadd.f32 0.0, %v2740
      %v2742 = vpop.f32.mrb[0].mxu0
      %2743 = vmatprep.mubr.f32.mxu0 0.0
      %2744 = vmatmul.mubr.f32.gmra.mrb[0].mxu0 %v2493
      %v2745 = vpop.f32.mrb[0].mxu0
      %v2746 = vadd.f32 0.0, %v2745
      %v2747 = vpop.f32.mrb[0].mxu0
      %2748 = vmatprep.mubr.f32.mxu0 0.0
      %2749 = vmatmul.mubr.f32.gmra.mrb[0].mxu0 %v2496
      %v2750 = vpop.f32.mrb[0].mxu0
      %v2751 = vadd.f32 0.0, %v2750
      %v2752 = vpop.f32.mrb[0].mxu0
      %2753 = vmatprep.mubr.f32.mxu0 0.0
      %2754 = vmatmul.mubr.f32.gmra.mrb[0].mxu0 %v2499
      %v2755 = vpop.f32.mrb[0].mxu0
      %v2756 = vadd.f32 0.0, %v2755
      %v2757 = vpop.f32.mrb[0].mxu0
      %2758 = vmatprep.mubr.f32.mxu0 0.0
      %2759 = vmatmul.mubr.f32.gmra.mrb[0].mxu0 %v2502
      %v2760 = vpop.f32.mrb[0].mxu0
      %v2761 = vadd.f32 0.0, %v2760
      %v2762 = vpop.f32.mrb[0].mxu0
      %2763 = vdwg.mxu0
      %2764 = vmatprep.subr.mxu0 0.0
      %2765 = vmatpush1.msra.mxu0 %v722
      %2766 = vmatprep.subr.mxu0 0.0
      %2767 = vmatpush1.msra.mxu0 %v724
      %2768 = vmatprep.subr.mxu0 0.0
      %2769 = vmatpush1.msra.mxu0 %v726
      %2770 = vmatprep.subr.mxu0 0.0
      %2771 = vmatpush1.msra.mxu0 %v732
      %2772 = vmatprep.subr.mxu0 0.0
      %2773 = vmatpush1.msra.mxu0 0.0
      %2774 = vmatprep.subr.mxu0 0.0
      %2775 = vmatpush1.msra.mxu0 0.0
      %2776 = vmatprep.subr.mxu0 0.0
      %2777 = vmatpush1.msra.mxu0 0.0
      %2778 = vmatprep.subr.mxu0 0.0
      %2779 = vmatpush1.msra.mxu0 0.0
      %2780 = vmatprep.subr.mxu0 0.0
      %2781 = vmatpush1.msra.mxu0 0.0
      %2782 = vmatprep.subr.mxu0 0.0
      %2783 = vmatpush1.msra.mxu0 0.0
      %2784 = vmatprep.subr.mxu0 0.0
      %2785 = vmatpush1.msra.mxu0 0.0
      %2786 = vmatprep.subr.mxu0 0.0
      %2787 = vmatpush1.msra.mxu0 0.0
      %2788 = vmatprep.subr.mxu0 0.0
      %2789 = vmatpush1.msra.mxu0 0.0
      %2790 = vmatprep.subr.mxu0 0.0
      %2791 = vmatpush1.msra.mxu0 0.0
      %2792 = vmatprep.subr.mxu0 0.0
      %2793 = vmatpush1.msra.mxu0 0.0
      %2794 = vmatprep.subr.mxu0 0.0
      %2795 = vmatpush1.msra.mxu0 0.0
      %2796 = vmatprep.subr.mxu0 0.0
      %2797 = vmatpush1.msra.mxu0 0.0
      %2798 = vmatprep.subr.mxu0 0.0
      %2799 = vmatpush1.msra.mxu0 0.0
      %2800 = vmatprep.subr.mxu0 0.0
      %2801 = vmatpush1.msra.mxu0 0.0
      %2802 = vmatprep.subr.mxu0 0.0
      %2803 = vmatpush1.msra.mxu0 0.0
      %2804 = vmatprep.subr.mxu0 0.0
      %2805 = vmatpush1.msra.mxu0 0.0
      %2806 = vmatprep.subr.mxu0 0.0
      %2807 = vmatpush1.msra.mxu0 0.0
      %2808 = vmatprep.subr.mxu0 0.0
      %2809 = vmatpush1.msra.mxu0 0.0
      %2810 = vmatprep.subr.mxu0 0.0
      %2811 = vmatpush1.msra.mxu0 0.0
      %2812 = vmatprep.subr.mxu0 0.0
      %2813 = vmatpush1.msra.mxu0 0.0
      %2814 = vmatprep.subr.mxu0 0.0
      %2815 = vmatpush1.msra.mxu0 0.0
      %2816 = vmatprep.subr.mxu0 0.0
      %2817 = vmatpush1.msra.mxu0 0.0
      %2818 = vmatprep.subr.mxu0 0.0
      %2819 = vmatpush1.msra.mxu0 0.0
      %2820 = vmatprep.subr.mxu0 0.0
      %2821 = vmatpush1.msra.mxu0 0.0
      %2822 = vmatprep.subr.mxu0 0.0
      %2823 = vmatpush1.msra.mxu0 0.0
      %2824 = vmatprep.subr.mxu0 0.0
      %2825 = vmatpush1.msra.mxu0 0.0
      %2826 = vmatprep.subr.mxu0 0.0
      %2827 = vmatpush1.msra.mxu0 0.0
      %2828 = vmatprep.mubr.f32.mxu0 0.0
      %2829 = vmatmul.mubr.f32.gmra.mrb[0].mxu0 %v2466
      %v2830 = vpop.f32.mrb[0].mxu0
      %v2831 = vadd.f32 0.0, %v2830
      %v2832 = vpop.f32.mrb[0].mxu0
      %2833 = vmatprep.mubr.f32.mxu0 0.0
      %2834 = vmatmul.mubr.f32.gmra.mrb[0].mxu0 %v2469
      %v2835 = vpop.f32.mrb[0].mxu0
      %v2836 = vadd.f32 0.0, %v2835
      %v2837 = vpop.f32.mrb[0].mxu0
      %2838 = vmatprep.mubr.f32.mxu0 0.0
      %2839 = vmatmul.mubr.f32.gmra.mrb[0].mxu0 %v2472
      %v2840 = vpop.f32.mrb[0].mxu0
      %v2841 = vadd.f32 0.0, %v2840
      %v2842 = vpop.f32.mrb[0].mxu0
      %2843 = vmatprep.mubr.f32.mxu0 0.0
      %2844 = vmatmul.mubr.f32.gmra.mrb[0].mxu0 %v2475
      %v2845 = vpop.f32.mrb[0].mxu0
      %v2846 = vadd.f32 0.0, %v2845
      %v2847 = vpop.f32.mrb[0].mxu0
      %2848 = vmatprep.mubr.f32.mxu0 0.0
      %2849 = vmatmul.mubr.f32.gmra.mrb[0].mxu0 %v2478
      %v2850 = vpop.f32.mrb[0].mxu0
      %v2851 = vadd.f32 0.0, %v2850
      %v2852 = vpop.f32.mrb[0].mxu0
      %2853 = vmatprep.mubr.f32.mxu0 0.0
      %2854 = vmatmul.mubr.f32.gmra.mrb[0].mxu0 %v2481
      %v2855 = vpop.f32.mrb[0].mxu0
      %v2856 = vadd.f32 0.0, %v2855
      %v2857 = vpop.f32.mrb[0].mxu0
      %2858 = vmatprep.mubr.f32.mxu0 0.0
      %2859 = vmatmul.mubr.f32.gmra.mrb[0].mxu0 %v2484
      %v2860 = vpop.f32.mrb[0].mxu0
      %v2861 = vadd.f32 0.0, %v2860
      %v2862 = vpop.f32.mrb[0].mxu0
      %2863 = vmatprep.mubr.f32.mxu0 0.0
      %2864 = vmatmul.mubr.f32.gmra.mrb[0].mxu0 %v2487
      %v2865 = vpop.f32.mrb[0].mxu0
      %v2866 = vadd.f32 0.0, %v2865
      %v2867 = vpop.f32.mrb[0].mxu0
      %2868 = vmatprep.mubr.f32.mxu0 0.0
      %2869 = vmatmul.mubr.f32.gmra.mrb[0].mxu0 %v2490
      %v2870 = vpop.f32.mrb[0].mxu0
      %v2871 = vadd.f32 0.0, %v2870
      %v2872 = vpop.f32.mrb[0].mxu0
      %2873 = vmatprep.mubr.f32.mxu0 0.0
      %2874 = vmatmul.mubr.f32.gmra.mrb[0].mxu0 %v2493
      %v2875 = vpop.f32.mrb[0].mxu0
      %v2876 = vadd.f32 0.0, %v2875
      %v2877 = vpop.f32.mrb[0].mxu0
      %2878 = vmatprep.mubr.f32.mxu0 0.0
      %2879 = vmatmul.mubr.f32.gmra.mrb[0].mxu0 %v2496
      %v2880 = vpop.f32.mrb[0].mxu0
      %v2881 = vadd.f32 0.0, %v2880
      %v2882 = vpop.f32.mrb[0].mxu0
      %2883 = vmatprep.mubr.f32.mxu0 0.0
      %2884 = vmatmul.mubr.f32.gmra.mrb[0].mxu0 %v2499
      %v2885 = vpop.f32.mrb[0].mxu0
      %v2886 = vadd.f32 0.0, %v2885
      %v2887 = vpop.f32.mrb[0].mxu0
      %2888 = vmatprep.mubr.f32.mxu0 0.0
      %2889 = vmatmul.mubr.f32.gmra.mrb[0].mxu0 %v2502
      %v2890 = vpop.f32.mrb[0].mxu0
      %v2891 = vadd.f32 0.0, %v2890
      %v2892 = vpop.f32.mrb[0].mxu0
      %2893 = vdwg.mxu0
      %2894 = vmatprep.subr.mxu0 0.0
      %2895 = vmatpush1.msra.mxu0 %v869
      %2896 = vmatprep.subr.mxu0 0.0
      %2897 = vmatpush1.msra.mxu0 %v871
      %2898 = vmatprep.subr.mxu0 0.0
      %2899 = vmatpush1.msra.mxu0 %v873
      %2900 = vmatprep.subr.mxu0 0.0
      %2901 = vmatpush1.msra.mxu0 %v879
      %2902 = vmatprep.subr.mxu0 0.0
      %2903 = vmatpush1.msra.mxu0 0.0
      %2904 = vmatprep.subr.mxu0 0.0
      %2905 = vmatpush1.msra.mxu0 0.0
      %2906 = vmatprep.subr.mxu0 0.0
      %2907 = vmatpush1.msra.mxu0 0.0
      %2908 = vmatprep.subr.mxu0 0.0
      %2909 = vmatpush1.msra.mxu0 0.0
      %2910 = vmatprep.subr.mxu0 0.0
      %2911 = vmatpush1.msra.mxu0 0.0
      %2912 = vmatprep.subr.mxu0 0.0
      %2913 = vmatpush1.msra.mxu0 0.0
      %2914 = vmatprep.subr.mxu0 0.0
      %2915 = vmatpush1.msra.mxu0 0.0
      %2916 = vmatprep.subr.mxu0 0.0
      %2917 = vmatpush1.msra.mxu0 0.0
      %2918 = vmatprep.subr.mxu0 0.0
      %2919 = vmatpush1.msra.mxu0 0.0
      %2920 = vmatprep.subr.mxu0 0.0
      %2921 = vmatpush1.msra.mxu0 0.0
      %2922 = vmatprep.subr.mxu0 0.0
      %2923 = vmatpush1.msra.mxu0 0.0
      %2924 = vmatprep.subr.mxu0 0.0
      %2925 = vmatpush1.msra.mxu0 0.0
      %2926 = vmatprep.subr.mxu0 0.0
      %2927 = vmatpush1.msra.mxu0 0.0
      %2928 = vmatprep.subr.mxu0 0.0
      %2929 = vmatpush1.msra.mxu0 0.0
      %2930 = vmatprep.subr.mxu0 0.0
      %2931 = vmatpush1.msra.mxu0 0.0
      %2932 = vmatprep.subr.mxu0 0.0
      %2933 = vmatpush1.msra.mxu0 0.0
      %2934 = vmatprep.subr.mxu0 0.0
      %2935 = vmatpush1.msra.mxu0 0.0
      %2936 = vmatprep.subr.mxu0 0.0
      %2937 = vmatpush1.msra.mxu0 0.0
      %2938 = vmatprep.subr.mxu0 0.0
      %2939 = vmatpush1.msra.mxu0 0.0
      %2940 = vmatprep.subr.mxu0 0.0
      %2941 = vmatpush1.msra.mxu0 0.0
      %2942 = vmatprep.subr.mxu0 0.0
      %2943 = vmatpush1.msra.mxu0 0.0
      %2944 = vmatprep.subr.mxu0 0.0
      %2945 = vmatpush1.msra.mxu0 0.0
      %2946 = vmatprep.subr.mxu0 0.0
      %2947 = vmatpush1.msra.mxu0 0.0
      %2948 = vmatprep.subr.mxu0 0.0
      %2949 = vmatpush1.msra.mxu0 0.0
      %2950 = vmatprep.subr.mxu0 0.0
      %2951 = vmatpush1.msra.mxu0 0.0
      %2952 = vmatprep.subr.mxu0 0.0
      %2953 = vmatpush1.msra.mxu0 0.0
      %2954 = vmatprep.subr.mxu0 0.0
      %2955 = vmatpush1.msra.mxu0 0.0
      %2956 = vmatprep.subr.mxu0 0.0
      %2957 = vmatpush1.msra.mxu0 0.0
      %2958 = vmatprep.mubr.f32.mxu0 0.0
      %2959 = vmatmul.mubr.f32.gmra.mrb[0].mxu0 %v2466
      %v2960 = vpop.f32.mrb[0].mxu0
      %v2961 = vadd.f32 0.0, %v2960
      %v2962 = vpop.f32.mrb[0].mxu0
      %2963 = vmatprep.mubr.f32.mxu0 0.0
      %2964 = vmatmul.mubr.f32.gmra.mrb[0].mxu0 %v2469
      %v2965 = vpop.f32.mrb[0].mxu0
      %v2966 = vadd.f32 0.0, %v2965
      %v2967 = vpop.f32.mrb[0].mxu0
      %2968 = vmatprep.mubr.f32.mxu0 0.0
      %2969 = vmatmul.mubr.f32.gmra.mrb[0].mxu0 %v2472
      %v2970 = vpop.f32.mrb[0].mxu0
      %v2971 = vadd.f32 0.0, %v2970
      %v2972 = vpop.f32.mrb[0].mxu0
      %2973 = vmatprep.mubr.f32.mxu0 0.0
      %2974 = vmatmul.mubr.f32.gmra.mrb[0].mxu0 %v2475
      %v2975 = vpop.f32.mrb[0].mxu0
      %v2976 = vadd.f32 0.0, %v2975
      %v2977 = vpop.f32.mrb[0].mxu0
      %2978 = vmatprep.mubr.f32.mxu0 0.0
      %2979 = vmatmul.mubr.f32.gmra.mrb[0].mxu0 %v2478
      %v2980 = vpop.f32.mrb[0].mxu0
      %v2981 = vadd.f32 0.0, %v2980
      %v2982 = vpop.f32.mrb[0].mxu0
      %2983 = vmatprep.mubr.f32.mxu0 0.0
      %2984 = vmatmul.mubr.f32.gmra.mrb[0].mxu0 %v2481
      %v2985 = vpop.f32.mrb[0].mxu0
      %v2986 = vadd.f32 0.0, %v2985
      %v2987 = vpop.f32.mrb[0].mxu0
      %2988 = vmatprep.mubr.f32.mxu0 0.0
      %2989 = vmatmul.mubr.f32.gmra.mrb[0].mxu0 %v2484
      %v2990 = vpop.f32.mrb[0].mxu0
      %v2991 = vadd.f32 0.0, %v2990
      %v2992 = vpop.f32.mrb[0].mxu0
      %2993 = vmatprep.mubr.f32.mxu0 0.0
      %2994 = vmatmul.mubr.f32.gmra.mrb[0].mxu0 %v2487
      %v2995 = vpop.f32.mrb[0].mxu0
      %v2996 = vadd.f32 0.0, %v2995
      %v2997 = vpop.f32.mrb[0].mxu0
      %2998 = vmatprep.mubr.f32.mxu0 0.0
      %2999 = vmatmul.mubr.f32.gmra.mrb[0].mxu0 %v2490
      %v3000 = vpop.f32.mrb[0].mxu0
      %v3001 = vadd.f32 0.0, %v3000
      %v3002 = vpop.f32.mrb[0].mxu0
      %3003 = vmatprep.mubr.f32.mxu0 0.0
      %3004 = vmatmul.mubr.f32.gmra.mrb[0].mxu0 %v2493
      %v3005 = vpop.f32.mrb[0].mxu0
      %v3006 = vadd.f32 0.0, %v3005
      %v3007 = vpop.f32.mrb[0].mxu0
      %3008 = vmatprep.mubr.f32.mxu0 0.0
      %3009 = vmatmul.mubr.f32.gmra.mrb[0].mxu0 %v2496
      %v3010 = vpop.f32.mrb[0].mxu0
      %v3011 = vadd.f32 0.0, %v3010
      %v3012 = vpop.f32.mrb[0].mxu0
      %3013 = vmatprep.mubr.f32.mxu0 0.0
      %3014 = vmatmul.mubr.f32.gmra.mrb[0].mxu0 %v2499
      %v3015 = vpop.f32.mrb[0].mxu0
      %v3016 = vadd.f32 0.0, %v3015
      %v3017 = vpop.f32.mrb[0].mxu0
      %3018 = vmatprep.mubr.f32.mxu0 0.0
      %3019 = vmatmul.mubr.f32.gmra.mrb[0].mxu0 %v2502
      %v3020 = vpop.f32.mrb[0].mxu0
      %v3021 = vadd.f32 0.0, %v3020
      %v3022 = vpop.f32.mrb[0].mxu0
      %3023 = vdwg.mxu0
      %v3025 = vsel %vm397, %v2438, 0
      %v3028 = vsel %vm397, %v2439, 0
      %v3031 = vsel %vm397, %v2440, 0
      %v3034 = vsel %vm397, %v2441, 0
      %v3037 = vsel %vm397, %v2442, 0
      %v3040 = vsel %vm397, %v2443, 0
      %v3043 = vsel %vm397, %v2444, 0
      %v3046 = vsel %vm397, %v2445, 0
      %v3049 = vsel %vm397, %v2446, 0
      %v3052 = vsel %vm397, %v2447, 0
      %v3055 = vsel %vm397, %v2448, 0
      %v3058 = vsel %vm397, %v2449, 0
      %v3061 = vsel %vm397, %v2450, 0
      %3063 = vmatprep.subr.mxu0 0.0
      %3064 = vmatpush1.msra.mxu0 %v339
      %3065 = vmatprep.subr.mxu0 0.0
      %3066 = vmatpush1.msra.mxu0 %v340
      %3067 = vmatprep.subr.mxu0 0.0
      %3068 = vmatpush1.msra.mxu0 %v341
      %3069 = vmatprep.subr.mxu0 0.0
      %3070 = vmatpush1.msra.mxu0 %v1050
      %3071 = vmatprep.subr.mxu0 0.0
      %3072 = vmatpush1.msra.mxu0 0.0
      %3073 = vmatprep.subr.mxu0 0.0
      %3074 = vmatpush1.msra.mxu0 0.0
      %3075 = vmatprep.subr.mxu0 0.0
      %3076 = vmatpush1.msra.mxu0 0.0
      %3077 = vmatprep.subr.mxu0 0.0
      %3078 = vmatpush1.msra.mxu0 0.0
      %3079 = vmatprep.subr.mxu0 0.0
      %3080 = vmatpush1.msra.mxu0 0.0
      %3081 = vmatprep.subr.mxu0 0.0
      %3082 = vmatpush1.msra.mxu0 0.0
      %3083 = vmatprep.subr.mxu0 0.0
      %3084 = vmatpush1.msra.mxu0 0.0
      %3085 = vmatprep.subr.mxu0 0.0
      %3086 = vmatpush1.msra.mxu0 0.0
      %3087 = vmatprep.subr.mxu0 0.0
      %3088 = vmatpush1.msra.mxu0 0.0
      %3089 = vmatprep.subr.mxu0 0.0
      %3090 = vmatpush1.msra.mxu0 0.0
      %3091 = vmatprep.subr.mxu0 0.0
      %3092 = vmatpush1.msra.mxu0 0.0
      %3093 = vmatprep.subr.mxu0 0.0
      %3094 = vmatpush1.msra.mxu0 0.0
      %3095 = vmatprep.subr.mxu0 0.0
      %3096 = vmatpush1.msra.mxu0 0.0
      %3097 = vmatprep.subr.mxu0 0.0
      %3098 = vmatpush1.msra.mxu0 0.0
      %3099 = vmatprep.subr.mxu0 0.0
      %3100 = vmatpush1.msra.mxu0 0.0
      %3101 = vmatprep.subr.mxu0 0.0
      %3102 = vmatpush1.msra.mxu0 0.0
      %3103 = vmatprep.subr.mxu0 0.0
      %3104 = vmatpush1.msra.mxu0 0.0
      %3105 = vmatprep.subr.mxu0 0.0
      %3106 = vmatpush1.msra.mxu0 0.0
      %3107 = vmatprep.subr.mxu0 0.0
      %3108 = vmatpush1.msra.mxu0 0.0
      %3109 = vmatprep.subr.mxu0 0.0
      %3110 = vmatpush1.msra.mxu0 0.0
      %3111 = vmatprep.subr.mxu0 0.0
      %3112 = vmatpush1.msra.mxu0 0.0
      %3113 = vmatprep.subr.mxu0 0.0
      %3114 = vmatpush1.msra.mxu0 0.0
      %3115 = vmatprep.subr.mxu0 0.0
      %3116 = vmatpush1.msra.mxu0 0.0
      %3117 = vmatprep.subr.mxu0 0.0
      %3118 = vmatpush1.msra.mxu0 0.0
      %3119 = vmatprep.subr.mxu0 0.0
      %3120 = vmatpush1.msra.mxu0 0.0
      %3121 = vmatprep.subr.mxu0 0.0
      %3122 = vmatpush1.msra.mxu0 0.0
      %3123 = vmatprep.subr.mxu0 0.0
      %3124 = vmatpush1.msra.mxu0 0.0
      %3125 = vmatprep.subr.mxu0 0.0
      %3126 = vmatpush1.msra.mxu0 0.0
      %3127 = vmatprep.mubr.f32.mxu0 0.0
      %3128 = vmatmul.mubr.f32.gmra.mrb[0].mxu0 %v3025
      %v3129 = vpop.f32.mrb[0].mxu0
      %v3130 = vadd.f32 %v2571, %v3129
      %v3131 = vpop.f32.mrb[0].mxu0
      %3132 = vmatprep.mubr.f32.mxu0 0.0
      %3133 = vmatmul.mubr.f32.gmra.mrb[0].mxu0 %v3028
      %v3134 = vpop.f32.mrb[0].mxu0
      %v3135 = vadd.f32 %v2576, %v3134
      %v3136 = vpop.f32.mrb[0].mxu0
      %3137 = vmatprep.mubr.f32.mxu0 0.0
      %3138 = vmatmul.mubr.f32.gmra.mrb[0].mxu0 %v3031
      %v3139 = vpop.f32.mrb[0].mxu0
      %v3140 = vadd.f32 %v2581, %v3139
      %v3141 = vpop.f32.mrb[0].mxu0
      %3142 = vmatprep.mubr.f32.mxu0 0.0
      %3143 = vmatmul.mubr.f32.gmra.mrb[0].mxu0 %v3034
      %v3144 = vpop.f32.mrb[0].mxu0
      %v3145 = vadd.f32 %v2586, %v3144
      %v3146 = vpop.f32.mrb[0].mxu0
      %3147 = vmatprep.mubr.f32.mxu0 0.0
      %3148 = vmatmul.mubr.f32.gmra.mrb[0].mxu0 %v3037
      %v3149 = vpop.f32.mrb[0].mxu0
      %v3150 = vadd.f32 %v2591, %v3149
      %v3151 = vpop.f32.mrb[0].mxu0
      %3152 = vmatprep.mubr.f32.mxu0 0.0
      %3153 = vmatmul.mubr.f32.gmra.mrb[0].mxu0 %v3040
      %v3154 = vpop.f32.mrb[0].mxu0
      %v3155 = vadd.f32 %v2596, %v3154
      %v3156 = vpop.f32.mrb[0].mxu0
      %3157 = vmatprep.mubr.f32.mxu0 0.0
      %3158 = vmatmul.mubr.f32.gmra.mrb[0].mxu0 %v3043
      %v3159 = vpop.f32.mrb[0].mxu0
      %v3160 = vadd.f32 %v2601, %v3159
      %v3161 = vpop.f32.mrb[0].mxu0
      %3162 = vmatprep.mubr.f32.mxu0 0.0
      %3163 = vmatmul.mubr.f32.gmra.mrb[0].mxu0 %v3046
      %v3164 = vpop.f32.mrb[0].mxu0
      %v3165 = vadd.f32 %v2606, %v3164
      %v3166 = vpop.f32.mrb[0].mxu0
      %3167 = vmatprep.mubr.f32.mxu0 0.0
      %3168 = vmatmul.mubr.f32.gmra.mrb[0].mxu0 %v3049
      %v3169 = vpop.f32.mrb[0].mxu0
      %v3170 = vadd.f32 %v2611, %v3169
      %v3171 = vpop.f32.mrb[0].mxu0
      %3172 = vmatprep.mubr.f32.mxu0 0.0
      %3173 = vmatmul.mubr.f32.gmra.mrb[0].mxu0 %v3052
      %v3174 = vpop.f32.mrb[0].mxu0
      %v3175 = vadd.f32 %v2616, %v3174
      %v3176 = vpop.f32.mrb[0].mxu0
      %3177 = vmatprep.mubr.f32.mxu0 0.0
      %3178 = vmatmul.mubr.f32.gmra.mrb[0].mxu0 %v3055
      %v3179 = vpop.f32.mrb[0].mxu0
      %v3180 = vadd.f32 %v2621, %v3179
      %v3181 = vpop.f32.mrb[0].mxu0
      %3182 = vmatprep.mubr.f32.mxu0 0.0
      %3183 = vmatmul.mubr.f32.gmra.mrb[0].mxu0 %v3058
      %v3184 = vpop.f32.mrb[0].mxu0
      %v3185 = vadd.f32 %v2626, %v3184
      %v3186 = vpop.f32.mrb[0].mxu0
      %3187 = vmatprep.mubr.f32.mxu0 0.0
      %3188 = vmatmul.mubr.f32.gmra.mrb[0].mxu0 %v3061
      %v3189 = vpop.f32.mrb[0].mxu0
      %v3190 = vadd.f32 %v2631, %v3189
      %v3191 = vpop.f32.mrb[0].mxu0
      %3192 = vdwg.mxu0
      %3193 = vmatprep.subr.mxu0 0.0
      %3194 = vmatpush1.msra.mxu0 %v343
      %3195 = vmatprep.subr.mxu0 0.0
      %3196 = vmatpush1.msra.mxu0 %v344
      %3197 = vmatprep.subr.mxu0 0.0
      %3198 = vmatpush1.msra.mxu0 %v345
      %3199 = vmatprep.subr.mxu0 0.0
      %3200 = vmatpush1.msra.mxu0 %v1182
      %3201 = vmatprep.subr.mxu0 0.0
      %3202 = vmatpush1.msra.mxu0 0.0
      %3203 = vmatprep.subr.mxu0 0.0
      %3204 = vmatpush1.msra.mxu0 0.0
      %3205 = vmatprep.subr.mxu0 0.0
      %3206 = vmatpush1.msra.mxu0 0.0
      %3207 = vmatprep.subr.mxu0 0.0
      %3208 = vmatpush1.msra.mxu0 0.0
      %3209 = vmatprep.subr.mxu0 0.0
      %3210 = vmatpush1.msra.mxu0 0.0
      %3211 = vmatprep.subr.mxu0 0.0
      %3212 = vmatpush1.msra.mxu0 0.0
      %3213 = vmatprep.subr.mxu0 0.0
      %3214 = vmatpush1.msra.mxu0 0.0
      %3215 = vmatprep.subr.mxu0 0.0
      %3216 = vmatpush1.msra.mxu0 0.0
      %3217 = vmatprep.subr.mxu0 0.0
      %3218 = vmatpush1.msra.mxu0 0.0
      %3219 = vmatprep.subr.mxu0 0.0
      %3220 = vmatpush1.msra.mxu0 0.0
      %3221 = vmatprep.subr.mxu0 0.0
      %3222 = vmatpush1.msra.mxu0 0.0
      %3223 = vmatprep.subr.mxu0 0.0
      %3224 = vmatpush1.msra.mxu0 0.0
      %3225 = vmatprep.subr.mxu0 0.0
      %3226 = vmatpush1.msra.mxu0 0.0
      %3227 = vmatprep.subr.mxu0 0.0
      %3228 = vmatpush1.msra.mxu0 0.0
      %3229 = vmatprep.subr.mxu0 0.0
      %3230 = vmatpush1.msra.mxu0 0.0
      %3231 = vmatprep.subr.mxu0 0.0
      %3232 = vmatpush1.msra.mxu0 0.0
      %3233 = vmatprep.subr.mxu0 0.0
      %3234 = vmatpush1.msra.mxu0 0.0
      %3235 = vmatprep.subr.mxu0 0.0
      %3236 = vmatpush1.msra.mxu0 0.0
      %3237 = vmatprep.subr.mxu0 0.0
      %3238 = vmatpush1.msra.mxu0 0.0
      %3239 = vmatprep.subr.mxu0 0.0
      %3240 = vmatpush1.msra.mxu0 0.0
      %3241 = vmatprep.subr.mxu0 0.0
      %3242 = vmatpush1.msra.mxu0 0.0
      %3243 = vmatprep.subr.mxu0 0.0
      %3244 = vmatpush1.msra.mxu0 0.0
      %3245 = vmatprep.subr.mxu0 0.0
      %3246 = vmatpush1.msra.mxu0 0.0
      %3247 = vmatprep.subr.mxu0 0.0
      %3248 = vmatpush1.msra.mxu0 0.0
      %3249 = vmatprep.subr.mxu0 0.0
      %3250 = vmatpush1.msra.mxu0 0.0
      %3251 = vmatprep.subr.mxu0 0.0
      %3252 = vmatpush1.msra.mxu0 0.0
      %3253 = vmatprep.subr.mxu0 0.0
      %3254 = vmatpush1.msra.mxu0 0.0
      %3255 = vmatprep.subr.mxu0 0.0
      %3256 = vmatpush1.msra.mxu0 0.0
      %3257 = vmatprep.mubr.f32.mxu0 0.0
      %3258 = vmatmul.mubr.f32.gmra.mrb[0].mxu0 %v3025
      %v3259 = vpop.f32.mrb[0].mxu0
      %v3260 = vadd.f32 %v2701, %v3259
      %v3261 = vpop.f32.mrb[0].mxu0
      %3262 = vmatprep.mubr.f32.mxu0 0.0
      %3263 = vmatmul.mubr.f32.gmra.mrb[0].mxu0 %v3028
      %v3264 = vpop.f32.mrb[0].mxu0
      %v3265 = vadd.f32 %v2706, %v3264
      %v3266 = vpop.f32.mrb[0].mxu0
      %3267 = vmatprep.mubr.f32.mxu0 0.0
      %3268 = vmatmul.mubr.f32.gmra.mrb[0].mxu0 %v3031
      %v3269 = vpop.f32.mrb[0].mxu0
      %v3270 = vadd.f32 %v2711, %v3269
      %v3271 = vpop.f32.mrb[0].mxu0
      %3272 = vmatprep.mubr.f32.mxu0 0.0
      %3273 = vmatmul.mubr.f32.gmra.mrb[0].mxu0 %v3034
      %v3274 = vpop.f32.mrb[0].mxu0
      %v3275 = vadd.f32 %v2716, %v3274
      %v3276 = vpop.f32.mrb[0].mxu0
      %3277 = vmatprep.mubr.f32.mxu0 0.0
      %3278 = vmatmul.mubr.f32.gmra.mrb[0].mxu0 %v3037
      %v3279 = vpop.f32.mrb[0].mxu0
      %v3280 = vadd.f32 %v2721, %v3279
      %v3281 = vpop.f32.mrb[0].mxu0
      %3282 = vmatprep.mubr.f32.mxu0 0.0
      %3283 = vmatmul.mubr.f32.gmra.mrb[0].mxu0 %v3040
      %v3284 = vpop.f32.mrb[0].mxu0
      %v3285 = vadd.f32 %v2726, %v3284
      %v3286 = vpop.f32.mrb[0].mxu0
      %3287 = vmatprep.mubr.f32.mxu0 0.0
      %3288 = vmatmul.mubr.f32.gmra.mrb[0].mxu0 %v3043
      %v3289 = vpop.f32.mrb[0].mxu0
      %v3290 = vadd.f32 %v2731, %v3289
      %v3291 = vpop.f32.mrb[0].mxu0
      %3292 = vmatprep.mubr.f32.mxu0 0.0
      %3293 = vmatmul.mubr.f32.gmra.mrb[0].mxu0 %v3046
      %v3294 = vpop.f32.mrb[0].mxu0
      %v3295 = vadd.f32 %v2736, %v3294
      %v3296 = vpop.f32.mrb[0].mxu0
      %3297 = vmatprep.mubr.f32.mxu0 0.0
      %3298 = vmatmul.mubr.f32.gmra.mrb[0].mxu0 %v3049
      %v3299 = vpop.f32.mrb[0].mxu0
      %v3300 = vadd.f32 %v2741, %v3299
      %v3301 = vpop.f32.mrb[0].mxu0
      %3302 = vmatprep.mubr.f32.mxu0 0.0
      %3303 = vmatmul.mubr.f32.gmra.mrb[0].mxu0 %v3052
      %v3304 = vpop.f32.mrb[0].mxu0
      %v3305 = vadd.f32 %v2746, %v3304
      %v3306 = vpop.f32.mrb[0].mxu0
      %3307 = vmatprep.mubr.f32.mxu0 0.0
      %3308 = vmatmul.mubr.f32.gmra.mrb[0].mxu0 %v3055
      %v3309 = vpop.f32.mrb[0].mxu0
      %v3310 = vadd.f32 %v2751, %v3309
      %v3311 = vpop.f32.mrb[0].mxu0
      %3312 = vmatprep.mubr.f32.mxu0 0.0
      %3313 = vmatmul.mubr.f32.gmra.mrb[0].mxu0 %v3058
      %v3314 = vpop.f32.mrb[0].mxu0
      %v3315 = vadd.f32 %v2756, %v3314
      %v3316 = vpop.f32.mrb[0].mxu0
      %3317 = vmatprep.mubr.f32.mxu0 0.0
      %3318 = vmatmul.mubr.f32.gmra.mrb[0].mxu0 %v3061
      %v3319 = vpop.f32.mrb[0].mxu0
      %v3320 = vadd.f32 %v2761, %v3319
      %v3321 = vpop.f32.mrb[0].mxu0
      %3322 = vdwg.mxu0
      %3323 = vmatprep.subr.mxu0 0.0
      %3324 = vmatpush1.msra.mxu0 %v347
      %3325 = vmatprep.subr.mxu0 0.0
      %3326 = vmatpush1.msra.mxu0 %v348
      %3327 = vmatprep.subr.mxu0 0.0
      %3328 = vmatpush1.msra.mxu0 %v349
      %3329 = vmatprep.subr.mxu0 0.0
      %3330 = vmatpush1.msra.mxu0 %v1314
      %3331 = vmatprep.subr.mxu0 0.0
      %3332 = vmatpush1.msra.mxu0 0.0
      %3333 = vmatprep.subr.mxu0 0.0
      %3334 = vmatpush1.msra.mxu0 0.0
      %3335 = vmatprep.subr.mxu0 0.0
      %3336 = vmatpush1.msra.mxu0 0.0
      %3337 = vmatprep.subr.mxu0 0.0
      %3338 = vmatpush1.msra.mxu0 0.0
      %3339 = vmatprep.subr.mxu0 0.0
      %3340 = vmatpush1.msra.mxu0 0.0
      %3341 = vmatprep.subr.mxu0 0.0
      %3342 = vmatpush1.msra.mxu0 0.0
      %3343 = vmatprep.subr.mxu0 0.0
      %3344 = vmatpush1.msra.mxu0 0.0
      %3345 = vmatprep.subr.mxu0 0.0
      %3346 = vmatpush1.msra.mxu0 0.0
      %3347 = vmatprep.subr.mxu0 0.0
      %3348 = vmatpush1.msra.mxu0 0.0
      %3349 = vmatprep.subr.mxu0 0.0
      %3350 = vmatpush1.msra.mxu0 0.0
      %3351 = vmatprep.subr.mxu0 0.0
      %3352 = vmatpush1.msra.mxu0 0.0
      %3353 = vmatprep.subr.mxu0 0.0
      %3354 = vmatpush1.msra.mxu0 0.0
      %3355 = vmatprep.subr.mxu0 0.0
      %3356 = vmatpush1.msra.mxu0 0.0
      %3357 = vmatprep.subr.mxu0 0.0
      %3358 = vmatpush1.msra.mxu0 0.0
      %3359 = vmatprep.subr.mxu0 0.0
      %3360 = vmatpush1.msra.mxu0 0.0
      %3361 = vmatprep.subr.mxu0 0.0
      %3362 = vmatpush1.msra.mxu0 0.0
      %3363 = vmatprep.subr.mxu0 0.0
      %3364 = vmatpush1.msra.mxu0 0.0
      %3365 = vmatprep.subr.mxu0 0.0
      %3366 = vmatpush1.msra.mxu0 0.0
      %3367 = vmatprep.subr.mxu0 0.0
      %3368 = vmatpush1.msra.mxu0 0.0
      %3369 = vmatprep.subr.mxu0 0.0
      %3370 = vmatpush1.msra.mxu0 0.0
      %3371 = vmatprep.subr.mxu0 0.0
      %3372 = vmatpush1.msra.mxu0 0.0
      %3373 = vmatprep.subr.mxu0 0.0
      %3374 = vmatpush1.msra.mxu0 0.0
      %3375 = vmatprep.subr.mxu0 0.0
      %3376 = vmatpush1.msra.mxu0 0.0
      %3377 = vmatprep.subr.mxu0 0.0
      %3378 = vmatpush1.msra.mxu0 0.0
      %3379 = vmatprep.subr.mxu0 0.0
      %3380 = vmatpush1.msra.mxu0 0.0
      %3381 = vmatprep.subr.mxu0 0.0
      %3382 = vmatpush1.msra.mxu0 0.0
      %3383 = vmatprep.subr.mxu0 0.0
      %3384 = vmatpush1.msra.mxu0 0.0
      %3385 = vmatprep.subr.mxu0 0.0
      %3386 = vmatpush1.msra.mxu0 0.0
      %3387 = vmatprep.mubr.f32.mxu0 0.0
      %3388 = vmatmul.mubr.f32.gmra.mrb[0].mxu0 %v3025
      %v3389 = vpop.f32.mrb[0].mxu0
      %v3390 = vadd.f32 %v2831, %v3389
      %v3391 = vpop.f32.mrb[0].mxu0
      %3392 = vmatprep.mubr.f32.mxu0 0.0
      %3393 = vmatmul.mubr.f32.gmra.mrb[0].mxu0 %v3028
      %v3394 = vpop.f32.mrb[0].mxu0
      %v3395 = vadd.f32 %v2836, %v3394
      %v3396 = vpop.f32.mrb[0].mxu0
      %3397 = vmatprep.mubr.f32.mxu0 0.0
      %3398 = vmatmul.mubr.f32.gmra.mrb[0].mxu0 %v3031
      %v3399 = vpop.f32.mrb[0].mxu0
      %v3400 = vadd.f32 %v2841, %v3399
      %v3401 = vpop.f32.mrb[0].mxu0
      %3402 = vmatprep.mubr.f32.mxu0 0.0
      %3403 = vmatmul.mubr.f32.gmra.mrb[0].mxu0 %v3034
      %v3404 = vpop.f32.mrb[0].mxu0
      %v3405 = vadd.f32 %v2846, %v3404
      %v3406 = vpop.f32.mrb[0].mxu0
      %3407 = vmatprep.mubr.f32.mxu0 0.0
      %3408 = vmatmul.mubr.f32.gmra.mrb[0].mxu0 %v3037
      %v3409 = vpop.f32.mrb[0].mxu0
      %v3410 = vadd.f32 %v2851, %v3409
      %v3411 = vpop.f32.mrb[0].mxu0
      %3412 = vmatprep.mubr.f32.mxu0 0.0
      %3413 = vmatmul.mubr.f32.gmra.mrb[0].mxu0 %v3040
      %v3414 = vpop.f32.mrb[0].mxu0
      %v3415 = vadd.f32 %v2856, %v3414
      %v3416 = vpop.f32.mrb[0].mxu0
      %3417 = vmatprep.mubr.f32.mxu0 0.0
      %3418 = vmatmul.mubr.f32.gmra.mrb[0].mxu0 %v3043
      %v3419 = vpop.f32.mrb[0].mxu0
      %v3420 = vadd.f32 %v2861, %v3419
      %v3421 = vpop.f32.mrb[0].mxu0
      %3422 = vmatprep.mubr.f32.mxu0 0.0
      %3423 = vmatmul.mubr.f32.gmra.mrb[0].mxu0 %v3046
      %v3424 = vpop.f32.mrb[0].mxu0
      %v3425 = vadd.f32 %v2866, %v3424
      %v3426 = vpop.f32.mrb[0].mxu0
      %3427 = vmatprep.mubr.f32.mxu0 0.0
      %3428 = vmatmul.mubr.f32.gmra.mrb[0].mxu0 %v3049
      %v3429 = vpop.f32.mrb[0].mxu0
      %v3430 = vadd.f32 %v2871, %v3429
      %v3431 = vpop.f32.mrb[0].mxu0
      %3432 = vmatprep.mubr.f32.mxu0 0.0
      %3433 = vmatmul.mubr.f32.gmra.mrb[0].mxu0 %v3052
      %v3434 = vpop.f32.mrb[0].mxu0
      %v3435 = vadd.f32 %v2876, %v3434
      %v3436 = vpop.f32.mrb[0].mxu0
      %3437 = vmatprep.mubr.f32.mxu0 0.0
      %3438 = vmatmul.mubr.f32.gmra.mrb[0].mxu0 %v3055
      %v3439 = vpop.f32.mrb[0].mxu0
      %v3440 = vadd.f32 %v2881, %v3439
      %v3441 = vpop.f32.mrb[0].mxu0
      %3442 = vmatprep.mubr.f32.mxu0 0.0
      %3443 = vmatmul.mubr.f32.gmra.mrb[0].mxu0 %v3058
      %v3444 = vpop.f32.mrb[0].mxu0
      %v3445 = vadd.f32 %v2886, %v3444
      %v3446 = vpop.f32.mrb[0].mxu0
      %3447 = vmatprep.mubr.f32.mxu0 0.0
      %3448 = vmatmul.mubr.f32.gmra.mrb[0].mxu0 %v3061
      %v3449 = vpop.f32.mrb[0].mxu0
      %v3450 = vadd.f32 %v2891, %v3449
      %v3451 = vpop.f32.mrb[0].mxu0
      %3452 = vdwg.mxu0
      %3453 = vmatprep.subr.mxu0 0.0
      %3454 = vmatpush1.msra.mxu0 %v351
      %3455 = vmatprep.subr.mxu0 0.0
      %3456 = vmatpush1.msra.mxu0 %v352
      %3457 = vmatprep.subr.mxu0 0.0
      %3458 = vmatpush1.msra.mxu0 %v353
      %3459 = vmatprep.subr.mxu0 0.0
      %3460 = vmatpush1.msra.mxu0 %v1446
      %3461 = vmatprep.subr.mxu0 0.0
      %3462 = vmatpush1.msra.mxu0 0.0
      %3463 = vmatprep.subr.mxu0 0.0
      %3464 = vmatpush1.msra.mxu0 0.0
      %3465 = vmatprep.subr.mxu0 0.0
      %3466 = vmatpush1.msra.mxu0 0.0
      %3467 = vmatprep.subr.mxu0 0.0
      %3468 = vmatpush1.msra.mxu0 0.0
      %3469 = vmatprep.subr.mxu0 0.0
      %3470 = vmatpush1.msra.mxu0 0.0
      %3471 = vmatprep.subr.mxu0 0.0
      %3472 = vmatpush1.msra.mxu0 0.0
      %3473 = vmatprep.subr.mxu0 0.0
      %3474 = vmatpush1.msra.mxu0 0.0
      %3475 = vmatprep.subr.mxu0 0.0
      %3476 = vmatpush1.msra.mxu0 0.0
      %3477 = vmatprep.subr.mxu0 0.0
      %3478 = vmatpush1.msra.mxu0 0.0
      %3479 = vmatprep.subr.mxu0 0.0
      %3480 = vmatpush1.msra.mxu0 0.0
      %3481 = vmatprep.subr.mxu0 0.0
      %3482 = vmatpush1.msra.mxu0 0.0
      %3483 = vmatprep.subr.mxu0 0.0
      %3484 = vmatpush1.msra.mxu0 0.0
      %3485 = vmatprep.subr.mxu0 0.0
      %3486 = vmatpush1.msra.mxu0 0.0
      %3487 = vmatprep.subr.mxu0 0.0
      %3488 = vmatpush1.msra.mxu0 0.0
      %3489 = vmatprep.subr.mxu0 0.0
      %3490 = vmatpush1.msra.mxu0 0.0
      %3491 = vmatprep.subr.mxu0 0.0
      %3492 = vmatpush1.msra.mxu0 0.0
      %3493 = vmatprep.subr.mxu0 0.0
      %3494 = vmatpush1.msra.mxu0 0.0
      %3495 = vmatprep.subr.mxu0 0.0
      %3496 = vmatpush1.msra.mxu0 0.0
      %3497 = vmatprep.subr.mxu0 0.0
      %3498 = vmatpush1.msra.mxu0 0.0
      %3499 = vmatprep.subr.mxu0 0.0
      %3500 = vmatpush1.msra.mxu0 0.0
      %3501 = vmatprep.subr.mxu0 0.0
      %3502 = vmatpush1.msra.mxu0 0.0
      %3503 = vmatprep.subr.mxu0 0.0
      %3504 = vmatpush1.msra.mxu0 0.0
      %3505 = vmatprep.subr.mxu0 0.0
      %3506 = vmatpush1.msra.mxu0 0.0
      %3507 = vmatprep.subr.mxu0 0.0
      %3508 = vmatpush1.msra.mxu0 0.0
      %3509 = vmatprep.subr.mxu0 0.0
      %3510 = vmatpush1.msra.mxu0 0.0
      %3511 = vmatprep.subr.mxu0 0.0
      %3512 = vmatpush1.msra.mxu0 0.0
      %3513 = vmatprep.subr.mxu0 0.0
      %3514 = vmatpush1.msra.mxu0 0.0
      %3515 = vmatprep.subr.mxu0 0.0
      %3516 = vmatpush1.msra.mxu0 0.0
      %3517 = vmatprep.mubr.f32.mxu0 0.0
      %3518 = vmatmul.mubr.f32.gmra.mrb[0].mxu0 %v3025
      %v3519 = vpop.f32.mrb[0].mxu0
      %v3520 = vadd.f32 %v2961, %v3519
      %v3521 = vpop.f32.mrb[0].mxu0
      %3522 = vmatprep.mubr.f32.mxu0 0.0
      %3523 = vmatmul.mubr.f32.gmra.mrb[0].mxu0 %v3028
      %v3524 = vpop.f32.mrb[0].mxu0
      %v3525 = vadd.f32 %v2966, %v3524
      %v3526 = vpop.f32.mrb[0].mxu0
      %3527 = vmatprep.mubr.f32.mxu0 0.0
      %3528 = vmatmul.mubr.f32.gmra.mrb[0].mxu0 %v3031
      %v3529 = vpop.f32.mrb[0].mxu0
      %v3530 = vadd.f32 %v2971, %v3529
      %v3531 = vpop.f32.mrb[0].mxu0
      %3532 = vmatprep.mubr.f32.mxu0 0.0
      %3533 = vmatmul.mubr.f32.gmra.mrb[0].mxu0 %v3034
      %v3534 = vpop.f32.mrb[0].mxu0
      %v3535 = vadd.f32 %v2976, %v3534
      %v3536 = vpop.f32.mrb[0].mxu0
      %3537 = vmatprep.mubr.f32.mxu0 0.0
      %3538 = vmatmul.mubr.f32.gmra.mrb[0].mxu0 %v3037
      %v3539 = vpop.f32.mrb[0].mxu0
      %v3540 = vadd.f32 %v2981, %v3539
      %v3541 = vpop.f32.mrb[0].mxu0
      %3542 = vmatprep.mubr.f32.mxu0 0.0
      %3543 = vmatmul.mubr.f32.gmra.mrb[0].mxu0 %v3040
      %v3544 = vpop.f32.mrb[0].mxu0
      %v3545 = vadd.f32 %v2986, %v3544
      %v3546 = vpop.f32.mrb[0].mxu0
      %3547 = vmatprep.mubr.f32.mxu0 0.0
      %3548 = vmatmul.mubr.f32.gmra.mrb[0].mxu0 %v3043
      %v3549 = vpop.f32.mrb[0].mxu0
      %v3550 = vadd.f32 %v2991, %v3549
      %v3551 = vpop.f32.mrb[0].mxu0
      %3552 = vmatprep.mubr.f32.mxu0 0.0
      %3553 = vmatmul.mubr.f32.gmra.mrb[0].mxu0 %v3046
      %v3554 = vpop.f32.mrb[0].mxu0
      %v3555 = vadd.f32 %v2996, %v3554
      %v3556 = vpop.f32.mrb[0].mxu0
      %3557 = vmatprep.mubr.f32.mxu0 0.0
      %3558 = vmatmul.mubr.f32.gmra.mrb[0].mxu0 %v3049
      %v3559 = vpop.f32.mrb[0].mxu0
      %v3560 = vadd.f32 %v3001, %v3559
      %v3561 = vpop.f32.mrb[0].mxu0
      %3562 = vmatprep.mubr.f32.mxu0 0.0
      %3563 = vmatmul.mubr.f32.gmra.mrb[0].mxu0 %v3052
      %v3564 = vpop.f32.mrb[0].mxu0
      %v3565 = vadd.f32 %v3006, %v3564
      %v3566 = vpop.f32.mrb[0].mxu0
      %3567 = vmatprep.mubr.f32.mxu0 0.0
      %3568 = vmatmul.mubr.f32.gmra.mrb[0].mxu0 %v3055
      %v3569 = vpop.f32.mrb[0].mxu0
      %v3570 = vadd.f32 %v3011, %v3569
      %v3571 = vpop.f32.mrb[0].mxu0
      %3572 = vmatprep.mubr.f32.mxu0 0.0
      %3573 = vmatmul.mubr.f32.gmra.mrb[0].mxu0 %v3058
      %v3574 = vpop.f32.mrb[0].mxu0
      %v3575 = vadd.f32 %v3016, %v3574
      %v3576 = vpop.f32.mrb[0].mxu0
      %3577 = vmatprep.mubr.f32.mxu0 0.0
      %3578 = vmatmul.mubr.f32.gmra.mrb[0].mxu0 %v3061
      %v3579 = vpop.f32.mrb[0].mxu0
      %v3580 = vadd.f32 %v3021, %v3579
      %v3581 = vpop.f32.mrb[0].mxu0
      %3582 = vdwg.mxu0
      %s3583 = scalar_lea.vmem %s1, 520
      %v3584 = vld [vmem:[%s3583] sm:$0xff]
      %v3585 = vld [vmem:[%s3583 + $0x8] sm:$0xff]
      %v3586 = vld [vmem:[%s3583 + $0x10] sm:$0xff]
      %v3587 = vld [vmem:[%s3583 + $0x18] sm:$0xff]
      %v3588 = vld [vmem:[%s3583 + $0x20] sm:$0xff]
      %v3589 = vld [vmem:[%s3583 + $0x28] sm:$0xff]
      %v3590 = vld [vmem:[%s3583 + $0x30] sm:$0xff]
      %v3591 = vld [vmem:[%s3583 + $0x38] sm:$0xff]
      %v3592 = vld [vmem:[%s3583 + $0x40] sm:$0xff]
      %v3593 = vld [vmem:[%s3583 + $0x48] sm:$0xff]
      %v3594 = vld [vmem:[%s3583 + $0x50] sm:$0xff]
      %v3595 = vld [vmem:[%s3583 + $0x58] sm:$0xff]
      %v3596 = vld [vmem:[%s3583 + $0x60] sm:$0xff]
      %v3598 = vsel %vm397, %v3584, 0
      %v3601 = vsel %vm397, %v3585, 0
      %v3604 = vsel %vm397, %v3586, 0
      %v3607 = vsel %vm397, %v3587, 0
      %v3610 = vsel %vm397, %v3588, 0
      %v3613 = vsel %vm397, %v3589, 0
      %v3616 = vsel %vm397, %v3590, 0
      %v3619 = vsel %vm397, %v3591, 0
      %v3622 = vsel %vm397, %v3592, 0
      %v3625 = vsel %vm397, %v3593, 0
      %v3628 = vsel %vm397, %v3594, 0
      %v3631 = vsel %vm397, %v3595, 0
      %v3634 = vsel %vm397, %v3596, 0
      %3636 = vmatprep.subr.mxu0 0.0
      %3637 = vmatpush1.msra.mxu0 %v1593
      %3638 = vmatprep.subr.mxu0 0.0
      %3639 = vmatpush1.msra.mxu0 %v1595
      %3640 = vmatprep.subr.mxu0 0.0
      %3641 = vmatpush1.msra.mxu0 %v1597
      %3642 = vmatprep.subr.mxu0 0.0
      %3643 = vmatpush1.msra.mxu0 %v1642
      %3644 = vmatprep.subr.mxu0 0.0
      %3645 = vmatpush1.msra.mxu0 0.0
      %3646 = vmatprep.subr.mxu0 0.0
      %3647 = vmatpush1.msra.mxu0 0.0
      %3648 = vmatprep.subr.mxu0 0.0
      %3649 = vmatpush1.msra.mxu0 0.0
      %3650 = vmatprep.subr.mxu0 0.0
      %3651 = vmatpush1.msra.mxu0 0.0
      %3652 = vmatprep.subr.mxu0 0.0
      %3653 = vmatpush1.msra.mxu0 0.0
      %3654 = vmatprep.subr.mxu0 0.0
      %3655 = vmatpush1.msra.mxu0 0.0
      %3656 = vmatprep.subr.mxu0 0.0
      %3657 = vmatpush1.msra.mxu0 0.0
      %3658 = vmatprep.subr.mxu0 0.0
      %3659 = vmatpush1.msra.mxu0 0.0
      %3660 = vmatprep.subr.mxu0 0.0
      %3661 = vmatpush1.msra.mxu0 0.0
      %3662 = vmatprep.subr.mxu0 0.0
      %3663 = vmatpush1.msra.mxu0 0.0
      %3664 = vmatprep.subr.mxu0 0.0
      %3665 = vmatpush1.msra.mxu0 0.0
      %3666 = vmatprep.subr.mxu0 0.0
      %3667 = vmatpush1.msra.mxu0 0.0
      %3668 = vmatprep.subr.mxu0 0.0
      %3669 = vmatpush1.msra.mxu0 0.0
      %3670 = vmatprep.subr.mxu0 0.0
      %3671 = vmatpush1.msra.mxu0 0.0
      %3672 = vmatprep.subr.mxu0 0.0
      %3673 = vmatpush1.msra.mxu0 0.0
      %3674 = vmatprep.subr.mxu0 0.0
      %3675 = vmatpush1.msra.mxu0 0.0
      %3676 = vmatprep.subr.mxu0 0.0
      %3677 = vmatpush1.msra.mxu0 0.0
      %3678 = vmatprep.subr.mxu0 0.0
      %3679 = vmatpush1.msra.mxu0 0.0
      %3680 = vmatprep.subr.mxu0 0.0
      %3681 = vmatpush1.msra.mxu0 0.0
      %3682 = vmatprep.subr.mxu0 0.0
      %3683 = vmatpush1.msra.mxu0 0.0
      %3684 = vmatprep.subr.mxu0 0.0
      %3685 = vmatpush1.msra.mxu0 0.0
      %3686 = vmatprep.subr.mxu0 0.0
      %3687 = vmatpush1.msra.mxu0 0.0
      %3688 = vmatprep.subr.mxu0 0.0
      %3689 = vmatpush1.msra.mxu0 0.0
      %3690 = vmatprep.subr.mxu0 0.0
      %3691 = vmatpush1.msra.mxu0 0.0
      %3692 = vmatprep.subr.mxu0 0.0
      %3693 = vmatpush1.msra.mxu0 0.0
      %3694 = vmatprep.subr.mxu0 0.0
      %3695 = vmatpush1.msra.mxu0 0.0
      %3696 = vmatprep.subr.mxu0 0.0
      %3697 = vmatpush1.msra.mxu0 0.0
      %3698 = vmatprep.subr.mxu0 0.0
      %3699 = vmatpush1.msra.mxu0 0.0
      %3700 = vmatprep.mubr.f32.mxu0 0.0
      %3701 = vmatmul.mubr.f32.gmra.mrb[0].mxu0 %v3598
      %v3702 = vpop.f32.mrb[0].mxu0
      %v3703 = vadd.f32 0.0, %v3702
      %v3704 = vpop.f32.mrb[0].mxu0
      %3705 = vmatprep.mubr.f32.mxu0 0.0
      %3706 = vmatmul.mubr.f32.gmra.mrb[0].mxu0 %v3601
      %v3707 = vpop.f32.mrb[0].mxu0
      %v3708 = vadd.f32 0.0, %v3707
      %v3709 = vpop.f32.mrb[0].mxu0
      %3710 = vmatprep.mubr.f32.mxu0 0.0
      %3711 = vmatmul.mubr.f32.gmra.mrb[0].mxu0 %v3604
      %v3712 = vpop.f32.mrb[0].mxu0
      %v3713 = vadd.f32 0.0, %v3712
      %v3714 = vpop.f32.mrb[0].mxu0
      %3715 = vmatprep.mubr.f32.mxu0 0.0
      %3716 = vmatmul.mubr.f32.gmra.mrb[0].mxu0 %v3607
      %v3717 = vpop.f32.mrb[0].mxu0
      %v3718 = vadd.f32 0.0, %v3717
      %v3719 = vpop.f32.mrb[0].mxu0
      %3720 = vmatprep.mubr.f32.mxu0 0.0
      %3721 = vmatmul.mubr.f32.gmra.mrb[0].mxu0 %v3610
      %v3722 = vpop.f32.mrb[0].mxu0
      %v3723 = vadd.f32 0.0, %v3722
      %v3724 = vpop.f32.mrb[0].mxu0
      %3725 = vmatprep.mubr.f32.mxu0 0.0
      %3726 = vmatmul.mubr.f32.gmra.mrb[0].mxu0 %v3613
      %v3727 = vpop.f32.mrb[0].mxu0
      %v3728 = vadd.f32 0.0, %v3727
      %v3729 = vpop.f32.mrb[0].mxu0
      %3730 = vmatprep.mubr.f32.mxu0 0.0
      %3731 = vmatmul.mubr.f32.gmra.mrb[0].mxu0 %v3616
      %v3732 = vpop.f32.mrb[0].mxu0
      %v3733 = vadd.f32 0.0, %v3732
      %v3734 = vpop.f32.mrb[0].mxu0
      %3735 = vmatprep.mubr.f32.mxu0 0.0
      %3736 = vmatmul.mubr.f32.gmra.mrb[0].mxu0 %v3619
      %v3737 = vpop.f32.mrb[0].mxu0
      %v3738 = vadd.f32 0.0, %v3737
      %v3739 = vpop.f32.mrb[0].mxu0
      %3740 = vmatprep.mubr.f32.mxu0 0.0
      %3741 = vmatmul.mubr.f32.gmra.mrb[0].mxu0 %v3622
      %v3742 = vpop.f32.mrb[0].mxu0
      %v3743 = vadd.f32 0.0, %v3742
      %v3744 = vpop.f32.mrb[0].mxu0
      %3745 = vmatprep.mubr.f32.mxu0 0.0
      %3746 = vmatmul.mubr.f32.gmra.mrb[0].mxu0 %v3625
      %v3747 = vpop.f32.mrb[0].mxu0
      %v3748 = vadd.f32 0.0, %v3747
      %v3749 = vpop.f32.mrb[0].mxu0
      %3750 = vmatprep.mubr.f32.mxu0 0.0
      %3751 = vmatmul.mubr.f32.gmra.mrb[0].mxu0 %v3628
      %v3752 = vpop.f32.mrb[0].mxu0
      %v3753 = vadd.f32 0.0, %v3752
      %v3754 = vpop.f32.mrb[0].mxu0
      %3755 = vmatprep.mubr.f32.mxu0 0.0
      %3756 = vmatmul.mubr.f32.gmra.mrb[0].mxu0 %v3631
      %v3757 = vpop.f32.mrb[0].mxu0
      %v3758 = vadd.f32 0.0, %v3757
      %v3759 = vpop.f32.mrb[0].mxu0
      %3760 = vmatprep.mubr.f32.mxu0 0.0
      %3761 = vmatmul.mubr.f32.gmra.mrb[0].mxu0 %v3634
      %v3762 = vpop.f32.mrb[0].mxu0
      %v3763 = vadd.f32 0.0, %v3762
      %v3764 = vpop.f32.mrb[0].mxu0
      %3765 = vdwg.mxu0
      %3766 = vmatprep.subr.mxu0 0.0
      %3767 = vmatpush1.msra.mxu0 %v1775
      %3768 = vmatprep.subr.mxu0 0.0
      %3769 = vmatpush1.msra.mxu0 %v1777
      %3770 = vmatprep.subr.mxu0 0.0
      %3771 = vmatpush1.msra.mxu0 %v1779
      %3772 = vmatprep.subr.mxu0 0.0
      %3773 = vmatpush1.msra.mxu0 %v1785
      %3774 = vmatprep.subr.mxu0 0.0
      %3775 = vmatpush1.msra.mxu0 0.0
      %3776 = vmatprep.subr.mxu0 0.0
      %3777 = vmatpush1.msra.mxu0 0.0
      %3778 = vmatprep.subr.mxu0 0.0
      %3779 = vmatpush1.msra.mxu0 0.0
      %3780 = vmatprep.subr.mxu0 0.0
      %3781 = vmatpush1.msra.mxu0 0.0
      %3782 = vmatprep.subr.mxu0 0.0
      %3783 = vmatpush1.msra.mxu0 0.0
      %3784 = vmatprep.subr.mxu0 0.0
      %3785 = vmatpush1.msra.mxu0 0.0
      %3786 = vmatprep.subr.mxu0 0.0
      %3787 = vmatpush1.msra.mxu0 0.0
      %3788 = vmatprep.subr.mxu0 0.0
      %3789 = vmatpush1.msra.mxu0 0.0
      %3790 = vmatprep.subr.mxu0 0.0
      %3791 = vmatpush1.msra.mxu0 0.0
      %3792 = vmatprep.subr.mxu0 0.0
      %3793 = vmatpush1.msra.mxu0 0.0
      %3794 = vmatprep.subr.mxu0 0.0
      %3795 = vmatpush1.msra.mxu0 0.0
      %3796 = vmatprep.subr.mxu0 0.0
      %3797 = vmatpush1.msra.mxu0 0.0
      %3798 = vmatprep.subr.mxu0 0.0
      %3799 = vmatpush1.msra.mxu0 0.0
      %3800 = vmatprep.subr.mxu0 0.0
      %3801 = vmatpush1.msra.mxu0 0.0
      %3802 = vmatprep.subr.mxu0 0.0
      %3803 = vmatpush1.msra.mxu0 0.0
      %3804 = vmatprep.subr.mxu0 0.0
      %3805 = vmatpush1.msra.mxu0 0.0
      %3806 = vmatprep.subr.mxu0 0.0
      %3807 = vmatpush1.msra.mxu0 0.0
      %3808 = vmatprep.subr.mxu0 0.0
      %3809 = vmatpush1.msra.mxu0 0.0
      %3810 = vmatprep.subr.mxu0 0.0
      %3811 = vmatpush1.msra.mxu0 0.0
      %3812 = vmatprep.subr.mxu0 0.0
      %3813 = vmatpush1.msra.mxu0 0.0
      %3814 = vmatprep.subr.mxu0 0.0
      %3815 = vmatpush1.msra.mxu0 0.0
      %3816 = vmatprep.subr.mxu0 0.0
      %3817 = vmatpush1.msra.mxu0 0.0
      %3818 = vmatprep.subr.mxu0 0.0
      %3819 = vmatpush1.msra.mxu0 0.0
      %3820 = vmatprep.subr.mxu0 0.0
      %3821 = vmatpush1.msra.mxu0 0.0
      %3822 = vmatprep.subr.mxu0 0.0
      %3823 = vmatpush1.msra.mxu0 0.0
      %3824 = vmatprep.subr.mxu0 0.0
      %3825 = vmatpush1.msra.mxu0 0.0
      %3826 = vmatprep.subr.mxu0 0.0
      %3827 = vmatpush1.msra.mxu0 0.0
      %3828 = vmatprep.subr.mxu0 0.0
      %3829 = vmatpush1.msra.mxu0 0.0
      %3830 = vmatprep.mubr.f32.mxu0 0.0
      %3831 = vmatmul.mubr.f32.gmra.mrb[0].mxu0 %v3598
      %v3832 = vpop.f32.mrb[0].mxu0
      %v3833 = vadd.f32 0.0, %v3832
      %v3834 = vpop.f32.mrb[0].mxu0
      %3835 = vmatprep.mubr.f32.mxu0 0.0
      %3836 = vmatmul.mubr.f32.gmra.mrb[0].mxu0 %v3601
      %v3837 = vpop.f32.mrb[0].mxu0
      %v3838 = vadd.f32 0.0, %v3837
      %v3839 = vpop.f32.mrb[0].mxu0
      %3840 = vmatprep.mubr.f32.mxu0 0.0
      %3841 = vmatmul.mubr.f32.gmra.mrb[0].mxu0 %v3604
      %v3842 = vpop.f32.mrb[0].mxu0
      %v3843 = vadd.f32 0.0, %v3842
      %v3844 = vpop.f32.mrb[0].mxu0
      %3845 = vmatprep.mubr.f32.mxu0 0.0
      %3846 = vmatmul.mubr.f32.gmra.mrb[0].mxu0 %v3607
      %v3847 = vpop.f32.mrb[0].mxu0
      %v3848 = vadd.f32 0.0, %v3847
      %v3849 = vpop.f32.mrb[0].mxu0
      %3850 = vmatprep.mubr.f32.mxu0 0.0
      %3851 = vmatmul.mubr.f32.gmra.mrb[0].mxu0 %v3610
      %v3852 = vpop.f32.mrb[0].mxu0
      %v3853 = vadd.f32 0.0, %v3852
      %v3854 = vpop.f32.mrb[0].mxu0
      %3855 = vmatprep.mubr.f32.mxu0 0.0
      %3856 = vmatmul.mubr.f32.gmra.mrb[0].mxu0 %v3613
      %v3857 = vpop.f32.mrb[0].mxu0
      %v3858 = vadd.f32 0.0, %v3857
      %v3859 = vpop.f32.mrb[0].mxu0
      %3860 = vmatprep.mubr.f32.mxu0 0.0
      %3861 = vmatmul.mubr.f32.gmra.mrb[0].mxu0 %v3616
      %v3862 = vpop.f32.mrb[0].mxu0
      %v3863 = vadd.f32 0.0, %v3862
      %v3864 = vpop.f32.mrb[0].mxu0
      %3865 = vmatprep.mubr.f32.mxu0 0.0
      %3866 = vmatmul.mubr.f32.gmra.mrb[0].mxu0 %v3619
      %v3867 = vpop.f32.mrb[0].mxu0
      %v3868 = vadd.f32 0.0, %v3867
      %v3869 = vpop.f32.mrb[0].mxu0
      %3870 = vmatprep.mubr.f32.mxu0 0.0
      %3871 = vmatmul.mubr.f32.gmra.mrb[0].mxu0 %v3622
      %v3872 = vpop.f32.mrb[0].mxu0
      %v3873 = vadd.f32 0.0, %v3872
      %v3874 = vpop.f32.mrb[0].mxu0
      %3875 = vmatprep.mubr.f32.mxu0 0.0
      %3876 = vmatmul.mubr.f32.gmra.mrb[0].mxu0 %v3625
      %v3877 = vpop.f32.mrb[0].mxu0
      %v3878 = vadd.f32 0.0, %v3877
      %v3879 = vpop.f32.mrb[0].mxu0
      %3880 = vmatprep.mubr.f32.mxu0 0.0
      %3881 = vmatmul.mubr.f32.gmra.mrb[0].mxu0 %v3628
      %v3882 = vpop.f32.mrb[0].mxu0
      %v3883 = vadd.f32 0.0, %v3882
      %v3884 = vpop.f32.mrb[0].mxu0
      %3885 = vmatprep.mubr.f32.mxu0 0.0
      %3886 = vmatmul.mubr.f32.gmra.mrb[0].mxu0 %v3631
      %v3887 = vpop.f32.mrb[0].mxu0
      %v3888 = vadd.f32 0.0, %v3887
      %v3889 = vpop.f32.mrb[0].mxu0
      %3890 = vmatprep.mubr.f32.mxu0 0.0
      %3891 = vmatmul.mubr.f32.gmra.mrb[0].mxu0 %v3634
      %v3892 = vpop.f32.mrb[0].mxu0
      %v3893 = vadd.f32 0.0, %v3892
      %v3894 = vpop.f32.mrb[0].mxu0
      %3895 = vdwg.mxu0
      %3896 = vmatprep.subr.mxu0 0.0
      %3897 = vmatpush1.msra.mxu0 %v1918
      %3898 = vmatprep.subr.mxu0 0.0
      %3899 = vmatpush1.msra.mxu0 %v1920
      %3900 = vmatprep.subr.mxu0 0.0
      %3901 = vmatpush1.msra.mxu0 %v1922
      %3902 = vmatprep.subr.mxu0 0.0
      %3903 = vmatpush1.msra.mxu0 %v1928
      %3904 = vmatprep.subr.mxu0 0.0
      %3905 = vmatpush1.msra.mxu0 0.0
      %3906 = vmatprep.subr.mxu0 0.0
      %3907 = vmatpush1.msra.mxu0 0.0
      %3908 = vmatprep.subr.mxu0 0.0
      %3909 = vmatpush1.msra.mxu0 0.0
      %3910 = vmatprep.subr.mxu0 0.0
      %3911 = vmatpush1.msra.mxu0 0.0
      %3912 = vmatprep.subr.mxu0 0.0
      %3913 = vmatpush1.msra.mxu0 0.0
      %3914 = vmatprep.subr.mxu0 0.0
      %3915 = vmatpush1.msra.mxu0 0.0
      %3916 = vmatprep.subr.mxu0 0.0
      %3917 = vmatpush1.msra.mxu0 0.0
      %3918 = vmatprep.subr.mxu0 0.0
      %3919 = vmatpush1.msra.mxu0 0.0
      %3920 = vmatprep.subr.mxu0 0.0
      %3921 = vmatpush1.msra.mxu0 0.0
      %3922 = vmatprep.subr.mxu0 0.0
      %3923 = vmatpush1.msra.mxu0 0.0
      %3924 = vmatprep.subr.mxu0 0.0
      %3925 = vmatpush1.msra.mxu0 0.0
      %3926 = vmatprep.subr.mxu0 0.0
      %3927 = vmatpush1.msra.mxu0 0.0
      %3928 = vmatprep.subr.mxu0 0.0
      %3929 = vmatpush1.msra.mxu0 0.0
      %3930 = vmatprep.subr.mxu0 0.0
      %3931 = vmatpush1.msra.mxu0 0.0
      %3932 = vmatprep.subr.mxu0 0.0
      %3933 = vmatpush1.msra.mxu0 0.0
      %3934 = vmatprep.subr.mxu0 0.0
      %3935 = vmatpush1.msra.mxu0 0.0
      %3936 = vmatprep.subr.mxu0 0.0
      %3937 = vmatpush1.msra.mxu0 0.0
      %3938 = vmatprep.subr.mxu0 0.0
      %3939 = vmatpush1.msra.mxu0 0.0
      %3940 = vmatprep.subr.mxu0 0.0
      %3941 = vmatpush1.msra.mxu0 0.0
      %3942 = vmatprep.subr.mxu0 0.0
      %3943 = vmatpush1.msra.mxu0 0.0
      %3944 = vmatprep.subr.mxu0 0.0
      %3945 = vmatpush1.msra.mxu0 0.0
      %3946 = vmatprep.subr.mxu0 0.0
      %3947 = vmatpush1.msra.mxu0 0.0
      %3948 = vmatprep.subr.mxu0 0.0
      %3949 = vmatpush1.msra.mxu0 0.0
      %3950 = vmatprep.subr.mxu0 0.0
      %3951 = vmatpush1.msra.mxu0 0.0
      %3952 = vmatprep.subr.mxu0 0.0
      %3953 = vmatpush1.msra.mxu0 0.0
      %3954 = vmatprep.subr.mxu0 0.0
      %3955 = vmatpush1.msra.mxu0 0.0
      %3956 = vmatprep.subr.mxu0 0.0
      %3957 = vmatpush1.msra.mxu0 0.0
      %3958 = vmatprep.subr.mxu0 0.0
      %3959 = vmatpush1.msra.mxu0 0.0
      %3960 = vmatprep.mubr.f32.mxu0 0.0
      %3961 = vmatmul.mubr.f32.gmra.mrb[0].mxu0 %v3598
      %v3962 = vpop.f32.mrb[0].mxu0
      %v3963 = vadd.f32 0.0, %v3962
      %v3964 = vpop.f32.mrb[0].mxu0
      %3965 = vmatprep.mubr.f32.mxu0 0.0
      %3966 = vmatmul.mubr.f32.gmra.mrb[0].mxu0 %v3601
      %v3967 = vpop.f32.mrb[0].mxu0
      %v3968 = vadd.f32 0.0, %v3967
      %v3969 = vpop.f32.mrb[0].mxu0
      %3970 = vmatprep.mubr.f32.mxu0 0.0
      %3971 = vmatmul.mubr.f32.gmra.mrb[0].mxu0 %v3604
      %v3972 = vpop.f32.mrb[0].mxu0
      %v3973 = vadd.f32 0.0, %v3972
      %v3974 = vpop.f32.mrb[0].mxu0
      %3975 = vmatprep.mubr.f32.mxu0 0.0
      %3976 = vmatmul.mubr.f32.gmra.mrb[0].mxu0 %v3607
      %v3977 = vpop.f32.mrb[0].mxu0
      %v3978 = vadd.f32 0.0, %v3977
      %v3979 = vpop.f32.mrb[0].mxu0
      %3980 = vmatprep.mubr.f32.mxu0 0.0
      %3981 = vmatmul.mubr.f32.gmra.mrb[0].mxu0 %v3610
      %v3982 = vpop.f32.mrb[0].mxu0
      %v3983 = vadd.f32 0.0, %v3982
      %v3984 = vpop.f32.mrb[0].mxu0
      %3985 = vmatprep.mubr.f32.mxu0 0.0
      %3986 = vmatmul.mubr.f32.gmra.mrb[0].mxu0 %v3613
      %v3987 = vpop.f32.mrb[0].mxu0
      %v3988 = vadd.f32 0.0, %v3987
      %v3989 = vpop.f32.mrb[0].mxu0
      %3990 = vmatprep.mubr.f32.mxu0 0.0
      %3991 = vmatmul.mubr.f32.gmra.mrb[0].mxu0 %v3616
      %v3992 = vpop.f32.mrb[0].mxu0
      %v3993 = vadd.f32 0.0, %v3992
      %v3994 = vpop.f32.mrb[0].mxu0
      %3995 = vmatprep.mubr.f32.mxu0 0.0
      %3996 = vmatmul.mubr.f32.gmra.mrb[0].mxu0 %v3619
      %v3997 = vpop.f32.mrb[0].mxu0
      %v3998 = vadd.f32 0.0, %v3997
      %v3999 = vpop.f32.mrb[0].mxu0
      %4000 = vmatprep.mubr.f32.mxu0 0.0
      %4001 = vmatmul.mubr.f32.gmra.mrb[0].mxu0 %v3622
      %v4002 = vpop.f32.mrb[0].mxu0
      %v4003 = vadd.f32 0.0, %v4002
      %v4004 = vpop.f32.mrb[0].mxu0
      %4005 = vmatprep.mubr.f32.mxu0 0.0
      %4006 = vmatmul.mubr.f32.gmra.mrb[0].mxu0 %v3625
      %v4007 = vpop.f32.mrb[0].mxu0
      %v4008 = vadd.f32 0.0, %v4007
      %v4009 = vpop.f32.mrb[0].mxu0
      %4010 = vmatprep.mubr.f32.mxu0 0.0
      %4011 = vmatmul.mubr.f32.gmra.mrb[0].mxu0 %v3628
      %v4012 = vpop.f32.mrb[0].mxu0
      %v4013 = vadd.f32 0.0, %v4012
      %v4014 = vpop.f32.mrb[0].mxu0
      %4015 = vmatprep.mubr.f32.mxu0 0.0
      %4016 = vmatmul.mubr.f32.gmra.mrb[0].mxu0 %v3631
      %v4017 = vpop.f32.mrb[0].mxu0
      %v4018 = vadd.f32 0.0, %v4017
      %v4019 = vpop.f32.mrb[0].mxu0
      %4020 = vmatprep.mubr.f32.mxu0 0.0
      %4021 = vmatmul.mubr.f32.gmra.mrb[0].mxu0 %v3634
      %v4022 = vpop.f32.mrb[0].mxu0
      %v4023 = vadd.f32 0.0, %v4022
      %v4024 = vpop.f32.mrb[0].mxu0
      %4025 = vdwg.mxu0
      %4026 = vmatprep.subr.mxu0 0.0
      %4027 = vmatpush1.msra.mxu0 %v2061
      %4028 = vmatprep.subr.mxu0 0.0
      %4029 = vmatpush1.msra.mxu0 %v2063
      %4030 = vmatprep.subr.mxu0 0.0
      %4031 = vmatpush1.msra.mxu0 %v2065
      %4032 = vmatprep.subr.mxu0 0.0
      %4033 = vmatpush1.msra.mxu0 %v2071
      %4034 = vmatprep.subr.mxu0 0.0
      %4035 = vmatpush1.msra.mxu0 0.0
      %4036 = vmatprep.subr.mxu0 0.0
      %4037 = vmatpush1.msra.mxu0 0.0
      %4038 = vmatprep.subr.mxu0 0.0
      %4039 = vmatpush1.msra.mxu0 0.0
      %4040 = vmatprep.subr.mxu0 0.0
      %4041 = vmatpush1.msra.mxu0 0.0
      %4042 = vmatprep.subr.mxu0 0.0
      %4043 = vmatpush1.msra.mxu0 0.0
      %4044 = vmatprep.subr.mxu0 0.0
      %4045 = vmatpush1.msra.mxu0 0.0
      %4046 = vmatprep.subr.mxu0 0.0
      %4047 = vmatpush1.msra.mxu0 0.0
      %4048 = vmatprep.subr.mxu0 0.0
      %4049 = vmatpush1.msra.mxu0 0.0
      %4050 = vmatprep.subr.mxu0 0.0
      %4051 = vmatpush1.msra.mxu0 0.0
      %4052 = vmatprep.subr.mxu0 0.0
      %4053 = vmatpush1.msra.mxu0 0.0
      %4054 = vmatprep.subr.mxu0 0.0
      %4055 = vmatpush1.msra.mxu0 0.0
      %4056 = vmatprep.subr.mxu0 0.0
      %4057 = vmatpush1.msra.mxu0 0.0
      %4058 = vmatprep.subr.mxu0 0.0
      %4059 = vmatpush1.msra.mxu0 0.0
      %4060 = vmatprep.subr.mxu0 0.0
      %4061 = vmatpush1.msra.mxu0 0.0
      %4062 = vmatprep.subr.mxu0 0.0
      %4063 = vmatpush1.msra.mxu0 0.0
      %4064 = vmatprep.subr.mxu0 0.0
      %4065 = vmatpush1.msra.mxu0 0.0
      %4066 = vmatprep.subr.mxu0 0.0
      %4067 = vmatpush1.msra.mxu0 0.0
      %4068 = vmatprep.subr.mxu0 0.0
      %4069 = vmatpush1.msra.mxu0 0.0
      %4070 = vmatprep.subr.mxu0 0.0
      %4071 = vmatpush1.msra.mxu0 0.0
      %4072 = vmatprep.subr.mxu0 0.0
      %4073 = vmatpush1.msra.mxu0 0.0
      %4074 = vmatprep.subr.mxu0 0.0
      %4075 = vmatpush1.msra.mxu0 0.0
      %4076 = vmatprep.subr.mxu0 0.0
      %4077 = vmatpush1.msra.mxu0 0.0
      %4078 = vmatprep.subr.mxu0 0.0
      %4079 = vmatpush1.msra.mxu0 0.0
      %4080 = vmatprep.subr.mxu0 0.0
      %4081 = vmatpush1.msra.mxu0 0.0
      %4082 = vmatprep.subr.mxu0 0.0
      %4083 = vmatpush1.msra.mxu0 0.0
      %4084 = vmatprep.subr.mxu0 0.0
      %4085 = vmatpush1.msra.mxu0 0.0
      %4086 = vmatprep.subr.mxu0 0.0
      %4087 = vmatpush1.msra.mxu0 0.0
      %4088 = vmatprep.subr.mxu0 0.0
      %4089 = vmatpush1.msra.mxu0 0.0
      %4090 = vmatprep.mubr.f32.mxu0 0.0
      %4091 = vmatmul.mubr.f32.gmra.mrb[0].mxu0 %v3598
      %v4092 = vpop.f32.mrb[0].mxu0
      %v4093 = vadd.f32 0.0, %v4092
      %v4094 = vpop.f32.mrb[0].mxu0
      %4095 = vmatprep.mubr.f32.mxu0 0.0
      %4096 = vmatmul.mubr.f32.gmra.mrb[0].mxu0 %v3601
      %v4097 = vpop.f32.mrb[0].mxu0
      %v4098 = vadd.f32 0.0, %v4097
      %v4099 = vpop.f32.mrb[0].mxu0
      %4100 = vmatprep.mubr.f32.mxu0 0.0
      %4101 = vmatmul.mubr.f32.gmra.mrb[0].mxu0 %v3604
      %v4102 = vpop.f32.mrb[0].mxu0
      %v4103 = vadd.f32 0.0, %v4102
      %v4104 = vpop.f32.mrb[0].mxu0
      %4105 = vmatprep.mubr.f32.mxu0 0.0
      %4106 = vmatmul.mubr.f32.gmra.mrb[0].mxu0 %v3607
      %v4107 = vpop.f32.mrb[0].mxu0
      %v4108 = vadd.f32 0.0, %v4107
      %v4109 = vpop.f32.mrb[0].mxu0
      %4110 = vmatprep.mubr.f32.mxu0 0.0
      %4111 = vmatmul.mubr.f32.gmra.mrb[0].mxu0 %v3610
      %v4112 = vpop.f32.mrb[0].mxu0
      %v4113 = vadd.f32 0.0, %v4112
      %v4114 = vpop.f32.mrb[0].mxu0
      %4115 = vmatprep.mubr.f32.mxu0 0.0
      %4116 = vmatmul.mubr.f32.gmra.mrb[0].mxu0 %v3613
      %v4117 = vpop.f32.mrb[0].mxu0
      %v4118 = vadd.f32 0.0, %v4117
      %v4119 = vpop.f32.mrb[0].mxu0
      %4120 = vmatprep.mubr.f32.mxu0 0.0
      %4121 = vmatmul.mubr.f32.gmra.mrb[0].mxu0 %v3616
      %v4122 = vpop.f32.mrb[0].mxu0
      %v4123 = vadd.f32 0.0, %v4122
      %v4124 = vpop.f32.mrb[0].mxu0
      %4125 = vmatprep.mubr.f32.mxu0 0.0
      %4126 = vmatmul.mubr.f32.gmra.mrb[0].mxu0 %v3619
      %v4127 = vpop.f32.mrb[0].mxu0
      %v4128 = vadd.f32 0.0, %v4127
      %v4129 = vpop.f32.mrb[0].mxu0
      %4130 = vmatprep.mubr.f32.mxu0 0.0
      %4131 = vmatmul.mubr.f32.gmra.mrb[0].mxu0 %v3622
      %v4132 = vpop.f32.mrb[0].mxu0
      %v4133 = vadd.f32 0.0, %v4132
      %v4134 = vpop.f32.mrb[0].mxu0
      %4135 = vmatprep.mubr.f32.mxu0 0.0
      %4136 = vmatmul.mubr.f32.gmra.mrb[0].mxu0 %v3625
      %v4137 = vpop.f32.mrb[0].mxu0
      %v4138 = vadd.f32 0.0, %v4137
      %v4139 = vpop.f32.mrb[0].mxu0
      %4140 = vmatprep.mubr.f32.mxu0 0.0
      %4141 = vmatmul.mubr.f32.gmra.mrb[0].mxu0 %v3628
      %v4142 = vpop.f32.mrb[0].mxu0
      %v4143 = vadd.f32 0.0, %v4142
      %v4144 = vpop.f32.mrb[0].mxu0
      %4145 = vmatprep.mubr.f32.mxu0 0.0
      %4146 = vmatmul.mubr.f32.gmra.mrb[0].mxu0 %v3631
      %v4147 = vpop.f32.mrb[0].mxu0
      %v4148 = vadd.f32 0.0, %v4147
      %v4149 = vpop.f32.mrb[0].mxu0
      %4150 = vmatprep.mubr.f32.mxu0 0.0
      %4151 = vmatmul.mubr.f32.gmra.mrb[0].mxu0 %v3634
      %v4152 = vpop.f32.mrb[0].mxu0
      %v4153 = vadd.f32 0.0, %v4152
      %v4154 = vpop.f32.mrb[0].mxu0
      %4155 = vdwg.mxu0
      %v4156 = vadd.f32 %v3130, %v3703
      %v4157 = vadd.f32 %v3135, %v3708
      %v4158 = vadd.f32 %v3140, %v3713
      %v4159 = vadd.f32 %v3145, %v3718
      %v4160 = vadd.f32 %v3150, %v3723
      %v4161 = vadd.f32 %v3155, %v3728
      %v4162 = vadd.f32 %v3160, %v3733
      %v4163 = vadd.f32 %v3165, %v3738
      %v4164 = vadd.f32 %v3170, %v3743
      %v4165 = vadd.f32 %v3175, %v3748
      %v4166 = vadd.f32 %v3180, %v3753
      %v4167 = vadd.f32 %v3185, %v3758
      %v4168 = vadd.f32 %v3190, %v3763
      %v4169 = vadd.f32 %v3260, %v3833
      %v4170 = vadd.f32 %v3265, %v3838
      %v4171 = vadd.f32 %v3270, %v3843
      %v4172 = vadd.f32 %v3275, %v3848
      %v4173 = vadd.f32 %v3280, %v3853
      %v4174 = vadd.f32 %v3285, %v3858
      %v4175 = vadd.f32 %v3290, %v3863
      %v4176 = vadd.f32 %v3295, %v3868
      %v4177 = vadd.f32 %v3300, %v3873
      %v4178 = vadd.f32 %v3305, %v3878
      %v4179 = vadd.f32 %v3310, %v3883
      %v4180 = vadd.f32 %v3315, %v3888
      %v4181 = vadd.f32 %v3320, %v3893
      %v4182 = vadd.f32 %v3390, %v3963
      %v4183 = vadd.f32 %v3395, %v3968
      %v4184 = vadd.f32 %v3400, %v3973
      %v4185 = vadd.f32 %v3405, %v3978
      %v4186 = vadd.f32 %v3410, %v3983
      %v4187 = vadd.f32 %v3415, %v3988
      %v4188 = vadd.f32 %v3420, %v3993
      %v4189 = vadd.f32 %v3425, %v3998
      %v4190 = vadd.f32 %v3430, %v4003
      %v4191 = vadd.f32 %v3435, %v4008
      %v4192 = vadd.f32 %v3440, %v4013
      %v4193 = vadd.f32 %v3445, %v4018
      %v4194 = vadd.f32 %v3450, %v4023
      %v4195 = vadd.f32 %v3520, %v4093
      %v4196 = vadd.f32 %v3525, %v4098
      %v4197 = vadd.f32 %v3530, %v4103
      %v4198 = vadd.f32 %v3535, %v4108
      %v4199 = vadd.f32 %v3540, %v4113
      %v4200 = vadd.f32 %v3545, %v4118
      %v4201 = vadd.f32 %v3550, %v4123
      %v4202 = vadd.f32 %v3555, %v4128
      %v4203 = vadd.f32 %v3560, %v4133
      %v4204 = vadd.f32 %v3565, %v4138
      %v4205 = vadd.f32 %v3570, %v4143
      %v4206 = vadd.f32 %v3575, %v4148
      %v4207 = vadd.f32 %v3580, %v4153
      %v4208 = vld [vmem:[%s2] sm:$0xff]
      %v4209 = vld [vmem:[%s2 + $0x8] sm:$0xff]
      %v4210 = vld [vmem:[%s2 + $0x10] sm:$0xff]
      %v4211 = vld [vmem:[%s2 + $0x18] sm:$0xff]
      %v4212 = vld [vmem:[%s2 + $0x20] sm:$0xff]
      %v4213 = vld [vmem:[%s2 + $0x28] sm:$0xff]
      %v4214 = vld [vmem:[%s2 + $0x30] sm:$0xff]
      %v4215 = vld [vmem:[%s2 + $0x38] sm:$0xff]
      %v4216 = vld [vmem:[%s2 + $0x40] sm:$0xff]
      %v4217 = vld [vmem:[%s2 + $0x48] sm:$0xff]
      %v4218 = vld [vmem:[%s2 + $0x50] sm:$0xff]
      %v4219 = vld [vmem:[%s2 + $0x58] sm:$0xff]
      %v4220 = vld [vmem:[%s2 + $0x60] sm:$0xff]
      %4222 = vset.pattern.permute.xlu0 0
      %4223 = vperm.xlu0 %4222, %v4208
      %v4224 = vpop.permute.xlu0 %4223
      %4227 = vset.pattern.permute.xlu0 0
      %4228 = vperm.xlu0 %4227, %v4209
      %v4229 = vpop.permute.xlu0 %4228
      %4232 = vset.pattern.permute.xlu0 0
      %4233 = vperm.xlu0 %4232, %v4210
      %v4234 = vpop.permute.xlu0 %4233
      %4237 = vset.pattern.permute.xlu0 0
      %4238 = vperm.xlu0 %4237, %v4211
      %v4239 = vpop.permute.xlu0 %4238
      %4242 = vset.pattern.permute.xlu0 0
      %4243 = vperm.xlu0 %4242, %v4212
      %v4244 = vpop.permute.xlu0 %4243
      %4247 = vset.pattern.permute.xlu0 0
      %4248 = vperm.xlu0 %4247, %v4213
      %v4249 = vpop.permute.xlu0 %4248
      %4252 = vset.pattern.permute.xlu0 0
      %4253 = vperm.xlu0 %4252, %v4214
      %v4254 = vpop.permute.xlu0 %4253
      %4257 = vset.pattern.permute.xlu0 0
      %4258 = vperm.xlu0 %4257, %v4215
      %v4259 = vpop.permute.xlu0 %4258
      %4262 = vset.pattern.permute.xlu0 0
      %4263 = vperm.xlu0 %4262, %v4216
      %v4264 = vpop.permute.xlu0 %4263
      %4267 = vset.pattern.permute.xlu0 0
      %4268 = vperm.xlu0 %4267, %v4217
      %v4269 = vpop.permute.xlu0 %4268
      %4272 = vset.pattern.permute.xlu0 0
      %4273 = vperm.xlu0 %4272, %v4218
      %v4274 = vpop.permute.xlu0 %4273
      %4277 = vset.pattern.permute.xlu0 0
      %4278 = vperm.xlu0 %4277, %v4219
      %v4279 = vpop.permute.xlu0 %4278
      %4282 = vset.pattern.permute.xlu0 0
      %4283 = vperm.xlu0 %4282, %v4220
      %v4284 = vpop.permute.xlu0 %4283
      %v4286 = vadd.f32 %v4156, %v4224
      %v4287 = vadd.f32 %v4157, %v4229
      %v4288 = vadd.f32 %v4158, %v4234
      %v4289 = vadd.f32 %v4159, %v4239
      %v4290 = vadd.f32 %v4160, %v4244
      %v4291 = vadd.f32 %v4161, %v4249
      %v4292 = vadd.f32 %v4162, %v4254
      %v4293 = vadd.f32 %v4163, %v4259
      %v4294 = vadd.f32 %v4164, %v4264
      %v4295 = vadd.f32 %v4165, %v4269
      %v4296 = vadd.f32 %v4166, %v4274
      %v4297 = vadd.f32 %v4167, %v4279
      %v4298 = vadd.f32 %v4168, %v4284
      %v4299 = vadd.f32 %v4169, %v4224
      %v4300 = vadd.f32 %v4170, %v4229
      %v4301 = vadd.f32 %v4171, %v4234
      %v4302 = vadd.f32 %v4172, %v4239
      %v4303 = vadd.f32 %v4173, %v4244
      %v4304 = vadd.f32 %v4174, %v4249
      %v4305 = vadd.f32 %v4175, %v4254
      %v4306 = vadd.f32 %v4176, %v4259
      %v4307 = vadd.f32 %v4177, %v4264
      %v4308 = vadd.f32 %v4178, %v4269
      %v4309 = vadd.f32 %v4179, %v4274
      %v4310 = vadd.f32 %v4180, %v4279
      %v4311 = vadd.f32 %v4181, %v4284
      %v4312 = vadd.f32 %v4182, %v4224
      %v4313 = vadd.f32 %v4183, %v4229
      %v4314 = vadd.f32 %v4184, %v4234
      %v4315 = vadd.f32 %v4185, %v4239
      %v4316 = vadd.f32 %v4186, %v4244
      %v4317 = vadd.f32 %v4187, %v4249
      %v4318 = vadd.f32 %v4188, %v4254
      %v4319 = vadd.f32 %v4189, %v4259
      %v4320 = vadd.f32 %v4190, %v4264
      %v4321 = vadd.f32 %v4191, %v4269
      %v4322 = vadd.f32 %v4192, %v4274
      %v4323 = vadd.f32 %v4193, %v4279
      %v4324 = vadd.f32 %v4194, %v4284
      %v4325 = vadd.f32 %v4195, %v4224
      %v4326 = vadd.f32 %v4196, %v4229
      %v4327 = vadd.f32 %v4197, %v4234
      %v4328 = vadd.f32 %v4198, %v4239
      %v4329 = vadd.f32 %v4199, %v4244
      %v4330 = vadd.f32 %v4200, %v4249
      %v4331 = vadd.f32 %v4201, %v4254
      %v4332 = vadd.f32 %v4202, %v4259
      %v4333 = vadd.f32 %v4203, %v4264
      %v4334 = vadd.f32 %v4204, %v4269
      %v4335 = vadd.f32 %v4205, %v4274
      %v4336 = vadd.f32 %v4206, %v4279
      %v4337 = vadd.f32 %v4207, %v4284
      %v4338 = vmax.f32 %v4286, 0.0
      %v4339 = vmax.f32 %v4287, 0.0
      %v4340 = vmax.f32 %v4288, 0.0
      %v4341 = vmax.f32 %v4289, 0.0
      %v4342 = vmax.f32 %v4290, 0.0
      %v4343 = vmax.f32 %v4291, 0.0
      %v4344 = vmax.f32 %v4292, 0.0
      %v4345 = vmax.f32 %v4293, 0.0
      %v4346 = vmax.f32 %v4294, 0.0
      %v4347 = vmax.f32 %v4295, 0.0
      %v4348 = vmax.f32 %v4296, 0.0
      %v4349 = vmax.f32 %v4297, 0.0
      %v4350 = vmax.f32 %v4298, 0.0
      %v4351 = vmax.f32 %v4299, 0.0
      %v4352 = vmax.f32 %v4300, 0.0
      %v4353 = vmax.f32 %v4301, 0.0
      %v4354 = vmax.f32 %v4302, 0.0
      %v4355 = vmax.f32 %v4303, 0.0
      %v4356 = vmax.f32 %v4304, 0.0
      %v4357 = vmax.f32 %v4305, 0.0
      %v4358 = vmax.f32 %v4306, 0.0
      %v4359 = vmax.f32 %v4307, 0.0
      %v4360 = vmax.f32 %v4308, 0.0
      %v4361 = vmax.f32 %v4309, 0.0
      %v4362 = vmax.f32 %v4310, 0.0
      %v4363 = vmax.f32 %v4311, 0.0
      %v4364 = vmax.f32 %v4312, 0.0
      %v4365 = vmax.f32 %v4313, 0.0
      %v4366 = vmax.f32 %v4314, 0.0
      %v4367 = vmax.f32 %v4315, 0.0
      %v4368 = vmax.f32 %v4316, 0.0
      %v4369 = vmax.f32 %v4317, 0.0
      %v4370 = vmax.f32 %v4318, 0.0
      %v4371 = vmax.f32 %v4319, 0.0
      %v4372 = vmax.f32 %v4320, 0.0
      %v4373 = vmax.f32 %v4321, 0.0
      %v4374 = vmax.f32 %v4322, 0.0
      %v4375 = vmax.f32 %v4323, 0.0
      %v4376 = vmax.f32 %v4324, 0.0
      %v4377 = vmax.f32 %v4325, 0.0
      %v4378 = vmax.f32 %v4326, 0.0
      %v4379 = vmax.f32 %v4327, 0.0
      %v4380 = vmax.f32 %v4328, 0.0
      %v4381 = vmax.f32 %v4329, 0.0
      %v4382 = vmax.f32 %v4330, 0.0
      %v4383 = vmax.f32 %v4331, 0.0
      %v4384 = vmax.f32 %v4332, 0.0
      %v4385 = vmax.f32 %v4333, 0.0
      %v4386 = vmax.f32 %v4334, 0.0
      %v4387 = vmax.f32 %v4335, 0.0
      %v4388 = vmax.f32 %v4336, 0.0
      %v4389 = vmax.f32 %v4337, 0.0
      %v4390 = vmax.f32 %v2385, %v4338
      %v4391 = vmax.f32 %v2386, %v4339
      %v4392 = vmax.f32 %v2387, %v4340
      %v4393 = vmax.f32 %v2388, %v4341
      %v4394 = vmax.f32 %v2389, %v4342
      %v4395 = vmax.f32 %v2390, %v4343
      %v4396 = vmax.f32 %v2391, %v4344
      %v4397 = vmax.f32 %v2392, %v4345
      %v4398 = vmax.f32 %v2393, %v4346
      %v4399 = vmax.f32 %v2394, %v4347
      %v4400 = vmax.f32 %v2395, %v4348
      %v4401 = vmax.f32 %v2396, %v4349
      %v4402 = vmax.f32 %v2397, %v4350
      %v4403 = vmax.f32 %v2398, %v4351
      %v4404 = vmax.f32 %v2399, %v4352
      %v4405 = vmax.f32 %v2400, %v4353
      %v4406 = vmax.f32 %v2401, %v4354
      %v4407 = vmax.f32 %v2402, %v4355
      %v4408 = vmax.f32 %v2403, %v4356
      %v4409 = vmax.f32 %v2404, %v4357
      %v4410 = vmax.f32 %v2405, %v4358
      %v4411 = vmax.f32 %v2406, %v4359
      %v4412 = vmax.f32 %v2407, %v4360
      %v4413 = vmax.f32 %v2408, %v4361
      %v4414 = vmax.f32 %v2409, %v4362
      %v4415 = vmax.f32 %v2410, %v4363
      %v4416 = vmax.f32 %v2411, %v4364
      %v4417 = vmax.f32 %v2412, %v4365
      %v4418 = vmax.f32 %v2413, %v4366
      %v4419 = vmax.f32 %v2414, %v4367
      %v4420 = vmax.f32 %v2415, %v4368
      %v4421 = vmax.f32 %v2416, %v4369
      %v4422 = vmax.f32 %v2417, %v4370
      %v4423 = vmax.f32 %v2418, %v4371
      %v4424 = vmax.f32 %v2419, %v4372
      %v4425 = vmax.f32 %v2420, %v4373
      %v4426 = vmax.f32 %v2421, %v4374
      %v4427 = vmax.f32 %v2422, %v4375
      %v4428 = vmax.f32 %v2423, %v4376
      %v4429 = vmax.f32 %v2424, %v4377
      %v4430 = vmax.f32 %v2425, %v4378
      %v4431 = vmax.f32 %v2426, %v4379
      %v4432 = vmax.f32 %v2427, %v4380
      %v4433 = vmax.f32 %v2428, %v4381
      %v4434 = vmax.f32 %v2429, %v4382
      %v4435 = vmax.f32 %v2430, %v4383
      %v4436 = vmax.f32 %v2431, %v4384
      %v4437 = vmax.f32 %v2432, %v4385
      %v4438 = vmax.f32 %v2433, %v4386
      %v4439 = vmax.f32 %v2434, %v4387
      %v4440 = vmax.f32 %v2435, %v4388
      %v4441 = vmax.f32 %v2436, %v4389
      %v4442 = vld [vmem:[%s5] sm:$0xff]
      %v4443 = vld [vmem:[%s5 + $0x8] sm:$0xff]
      %v4444 = vld [vmem:[%s5 + $0x10] sm:$0xff]
      %v4445 = vld [vmem:[%s5 + $0x18] sm:$0x3]
      %vm4446 = vcmask 211968
      %v4448 = vsel %vm4446, %v4390, 0
      %v4451 = vsel %vm4446, %v4391, 0
      %v4454 = vsel %vm4446, %v4392, 0
      %v4457 = vsel %vm4446, %v4393, 0
      %v4460 = vsel %vm4446, %v4394, 0
      %v4463 = vsel %vm4446, %v4395, 0
      %v4466 = vsel %vm4446, %v4396, 0
      %v4469 = vsel %vm4446, %v4397, 0
      %v4472 = vsel %vm4446, %v4398, 0
      %v4475 = vsel %vm4446, %v4399, 0
      %v4478 = vsel %vm4446, %v4400, 0
      %v4481 = vsel %vm4446, %v4401, 0
      %v4484 = vsel %vm4446, %v4402, 0
      %vm4486 = vcmask 1041408
      %v4488 = vsel %vm4486, %v4445, 0
      %4490 = vmatprep.subr.mxu0 0.0
      %4491 = vmatpush1.msra.mxu0 %v4442
      %4492 = vmatprep.subr.mxu0 0.0
      %4493 = vmatpush1.msra.mxu0 %v4443
      %4494 = vmatprep.subr.mxu0 0.0
      %4495 = vmatpush1.msra.mxu0 %v4444
      %4496 = vmatprep.subr.mxu0 0.0
      %4497 = vmatpush1.msra.mxu0 %v4488
      %4498 = vmatprep.subr.mxu0 0.0
      %4499 = vmatpush1.msra.mxu0 0.0
      %4500 = vmatprep.subr.mxu0 0.0
      %4501 = vmatpush1.msra.mxu0 0.0
      %4502 = vmatprep.subr.mxu0 0.0
      %4503 = vmatpush1.msra.mxu0 0.0
      %4504 = vmatprep.subr.mxu0 0.0
      %4505 = vmatpush1.msra.mxu0 0.0
      %4506 = vmatprep.subr.mxu0 0.0
      %4507 = vmatpush1.msra.mxu0 0.0
      %4508 = vmatprep.subr.mxu0 0.0
      %4509 = vmatpush1.msra.mxu0 0.0
      %4510 = vmatprep.subr.mxu0 0.0
      %4511 = vmatpush1.msra.mxu0 0.0
      %4512 = vmatprep.subr.mxu0 0.0
      %4513 = vmatpush1.msra.mxu0 0.0
      %4514 = vmatprep.subr.mxu0 0.0
      %4515 = vmatpush1.msra.mxu0 0.0
      %4516 = vmatprep.subr.mxu0 0.0
      %4517 = vmatpush1.msra.mxu0 0.0
      %4518 = vmatprep.subr.mxu0 0.0
      %4519 = vmatpush1.msra.mxu0 0.0
      %4520 = vmatprep.subr.mxu0 0.0
      %4521 = vmatpush1.msra.mxu0 0.0
      %4522 = vmatprep.subr.mxu0 0.0
      %4523 = vmatpush1.msra.mxu0 0.0
      %4524 = vmatprep.subr.mxu0 0.0
      %4525 = vmatpush1.msra.mxu0 0.0
      %4526 = vmatprep.subr.mxu0 0.0
      %4527 = vmatpush1.msra.mxu0 0.0
      %4528 = vmatprep.subr.mxu0 0.0
      %4529 = vmatpush1.msra.mxu0 0.0
      %4530 = vmatprep.subr.mxu0 0.0
      %4531 = vmatpush1.msra.mxu0 0.0
      %4532 = vmatprep.subr.mxu0 0.0
      %4533 = vmatpush1.msra.mxu0 0.0
      %4534 = vmatprep.subr.mxu0 0.0
      %4535 = vmatpush1.msra.mxu0 0.0
      %4536 = vmatprep.subr.mxu0 0.0
      %4537 = vmatpush1.msra.mxu0 0.0
      %4538 = vmatprep.subr.mxu0 0.0
      %4539 = vmatpush1.msra.mxu0 0.0
      %4540 = vmatprep.subr.mxu0 0.0
      %4541 = vmatpush1.msra.mxu0 0.0
      %4542 = vmatprep.subr.mxu0 0.0
      %4543 = vmatpush1.msra.mxu0 0.0
      %4544 = vmatprep.subr.mxu0 0.0
      %4545 = vmatpush1.msra.mxu0 0.0
      %4546 = vmatprep.subr.mxu0 0.0
      %4547 = vmatpush1.msra.mxu0 0.0
      %4548 = vmatprep.subr.mxu0 0.0
      %4549 = vmatpush1.msra.mxu0 0.0
      %4550 = vmatprep.subr.mxu0 0.0
      %4551 = vmatpush1.msra.mxu0 0.0
      %4552 = vmatprep.subr.mxu0 0.0
      %4553 = vmatpush1.msra.mxu0 0.0
      %4554 = vmatprep.mubr.f32.mxu0 0.0
      %4555 = vmatmul.mubr.f32.gmra.mrb[0].mxu0 %v4448
      %v4556 = vpop.f32.mrb[0].mxu0
      %v4557 = vadd.f32 0.0, %v4556
      %v4558 = vpop.f32.mrb[0].mxu0
      %4559 = vmatprep.mubr.f32.mxu0 0.0
      %4560 = vmatmul.mubr.f32.gmra.mrb[0].mxu0 %v4451
      %v4561 = vpop.f32.mrb[0].mxu0
      %v4562 = vadd.f32 0.0, %v4561
      %v4563 = vpop.f32.mrb[0].mxu0
      %4564 = vmatprep.mubr.f32.mxu0 0.0
      %4565 = vmatmul.mubr.f32.gmra.mrb[0].mxu0 %v4454
      %v4566 = vpop.f32.mrb[0].mxu0
      %v4567 = vadd.f32 0.0, %v4566
      %v4568 = vpop.f32.mrb[0].mxu0
      %4569 = vmatprep.mubr.f32.mxu0 0.0
      %4570 = vmatmul.mubr.f32.gmra.mrb[0].mxu0 %v4457
      %v4571 = vpop.f32.mrb[0].mxu0
      %v4572 = vadd.f32 0.0, %v4571
      %v4573 = vpop.f32.mrb[0].mxu0
      %4574 = vmatprep.mubr.f32.mxu0 0.0
      %4575 = vmatmul.mubr.f32.gmra.mrb[0].mxu0 %v4460
      %v4576 = vpop.f32.mrb[0].mxu0
      %v4577 = vadd.f32 0.0, %v4576
      %v4578 = vpop.f32.mrb[0].mxu0
      %4579 = vmatprep.mubr.f32.mxu0 0.0
      %4580 = vmatmul.mubr.f32.gmra.mrb[0].mxu0 %v4463
      %v4581 = vpop.f32.mrb[0].mxu0
      %v4582 = vadd.f32 0.0, %v4581
      %v4583 = vpop.f32.mrb[0].mxu0
      %4584 = vmatprep.mubr.f32.mxu0 0.0
      %4585 = vmatmul.mubr.f32.gmra.mrb[0].mxu0 %v4466
      %v4586 = vpop.f32.mrb[0].mxu0
      %v4587 = vadd.f32 0.0, %v4586
      %v4588 = vpop.f32.mrb[0].mxu0
      %4589 = vmatprep.mubr.f32.mxu0 0.0
      %4590 = vmatmul.mubr.f32.gmra.mrb[0].mxu0 %v4469
      %v4591 = vpop.f32.mrb[0].mxu0
      %v4592 = vadd.f32 0.0, %v4591
      %v4593 = vpop.f32.mrb[0].mxu0
      %4594 = vmatprep.mubr.f32.mxu0 0.0
      %4595 = vmatmul.mubr.f32.gmra.mrb[0].mxu0 %v4472
      %v4596 = vpop.f32.mrb[0].mxu0
      %v4597 = vadd.f32 0.0, %v4596
      %v4598 = vpop.f32.mrb[0].mxu0
      %4599 = vmatprep.mubr.f32.mxu0 0.0
      %4600 = vmatmul.mubr.f32.gmra.mrb[0].mxu0 %v4475
      %v4601 = vpop.f32.mrb[0].mxu0
      %v4602 = vadd.f32 0.0, %v4601
      %v4603 = vpop.f32.mrb[0].mxu0
      %4604 = vmatprep.mubr.f32.mxu0 0.0
      %4605 = vmatmul.mubr.f32.gmra.mrb[0].mxu0 %v4478
      %v4606 = vpop.f32.mrb[0].mxu0
      %v4607 = vadd.f32 0.0, %v4606
      %v4608 = vpop.f32.mrb[0].mxu0
      %4609 = vmatprep.mubr.f32.mxu0 0.0
      %4610 = vmatmul.mubr.f32.gmra.mrb[0].mxu0 %v4481
      %v4611 = vpop.f32.mrb[0].mxu0
      %v4612 = vadd.f32 0.0, %v4611
      %v4613 = vpop.f32.mrb[0].mxu0
      %4614 = vmatprep.mubr.f32.mxu0 0.0
      %4615 = vmatmul.mubr.f32.gmra.mrb[0].mxu0 %v4484
      %v4616 = vpop.f32.mrb[0].mxu0
      %v4617 = vadd.f32 0.0, %v4616
      %v4618 = vpop.f32.mrb[0].mxu0
      %4619 = vdwg.mxu0
      %v4621 = vsel %vm4446, %v4403, 0
      %v4624 = vsel %vm4446, %v4404, 0
      %v4627 = vsel %vm4446, %v4405, 0
      %v4630 = vsel %vm4446, %v4406, 0
      %v4633 = vsel %vm4446, %v4407, 0
      %v4636 = vsel %vm4446, %v4408, 0
      %v4639 = vsel %vm4446, %v4409, 0
      %v4642 = vsel %vm4446, %v4410, 0
      %v4645 = vsel %vm4446, %v4411, 0
      %v4648 = vsel %vm4446, %v4412, 0
      %v4651 = vsel %vm4446, %v4413, 0
      %v4654 = vsel %vm4446, %v4414, 0
      %v4657 = vsel %vm4446, %v4415, 0
      %4659 = vmatprep.subr.mxu0 0.0
      %4660 = vmatpush1.msra.mxu0 %v4442
      %4661 = vmatprep.subr.mxu0 0.0
      %4662 = vmatpush1.msra.mxu0 %v4443
      %4663 = vmatprep.subr.mxu0 0.0
      %4664 = vmatpush1.msra.mxu0 %v4444
      %4665 = vmatprep.subr.mxu0 0.0
      %4666 = vmatpush1.msra.mxu0 %v4488
      %4667 = vmatprep.subr.mxu0 0.0
      %4668 = vmatpush1.msra.mxu0 0.0
      %4669 = vmatprep.subr.mxu0 0.0
      %4670 = vmatpush1.msra.mxu0 0.0
      %4671 = vmatprep.subr.mxu0 0.0
      %4672 = vmatpush1.msra.mxu0 0.0
      %4673 = vmatprep.subr.mxu0 0.0
      %4674 = vmatpush1.msra.mxu0 0.0
      %4675 = vmatprep.subr.mxu0 0.0
      %4676 = vmatpush1.msra.mxu0 0.0
      %4677 = vmatprep.subr.mxu0 0.0
      %4678 = vmatpush1.msra.mxu0 0.0
      %4679 = vmatprep.subr.mxu0 0.0
      %4680 = vmatpush1.msra.mxu0 0.0
      %4681 = vmatprep.subr.mxu0 0.0
      %4682 = vmatpush1.msra.mxu0 0.0
      %4683 = vmatprep.subr.mxu0 0.0
      %4684 = vmatpush1.msra.mxu0 0.0
      %4685 = vmatprep.subr.mxu0 0.0
      %4686 = vmatpush1.msra.mxu0 0.0
      %4687 = vmatprep.subr.mxu0 0.0
      %4688 = vmatpush1.msra.mxu0 0.0
      %4689 = vmatprep.subr.mxu0 0.0
      %4690 = vmatpush1.msra.mxu0 0.0
      %4691 = vmatprep.subr.mxu0 0.0
      %4692 = vmatpush1.msra.mxu0 0.0
      %4693 = vmatprep.subr.mxu0 0.0
      %4694 = vmatpush1.msra.mxu0 0.0
      %4695 = vmatprep.subr.mxu0 0.0
      %4696 = vmatpush1.msra.mxu0 0.0
      %4697 = vmatprep.subr.mxu0 0.0
      %4698 = vmatpush1.msra.mxu0 0.0
      %4699 = vmatprep.subr.mxu0 0.0
      %4700 = vmatpush1.msra.mxu0 0.0
      %4701 = vmatprep.subr.mxu0 0.0
      %4702 = vmatpush1.msra.mxu0 0.0
      %4703 = vmatprep.subr.mxu0 0.0
      %4704 = vmatpush1.msra.mxu0 0.0
      %4705 = vmatprep.subr.mxu0 0.0
      %4706 = vmatpush1.msra.mxu0 0.0
      %4707 = vmatprep.subr.mxu0 0.0
      %4708 = vmatpush1.msra.mxu0 0.0
      %4709 = vmatprep.subr.mxu0 0.0
      %4710 = vmatpush1.msra.mxu0 0.0
      %4711 = vmatprep.subr.mxu0 0.0
      %4712 = vmatpush1.msra.mxu0 0.0
      %4713 = vmatprep.subr.mxu0 0.0
      %4714 = vmatpush1.msra.mxu0 0.0
      %4715 = vmatprep.subr.mxu0 0.0
      %4716 = vmatpush1.msra.mxu0 0.0
      %4717 = vmatprep.subr.mxu0 0.0
      %4718 = vmatpush1.msra.mxu0 0.0
      %4719 = vmatprep.subr.mxu0 0.0
      %4720 = vmatpush1.msra.mxu0 0.0
      %4721 = vmatprep.subr.mxu0 0.0
      %4722 = vmatpush1.msra.mxu0 0.0
      %4723 = vmatprep.mubr.f32.mxu0 0.0
      %4724 = vmatmul.mubr.f32.gmra.mrb[0].mxu0 %v4621
      %v4725 = vpop.f32.mrb[0].mxu0
      %v4726 = vadd.f32 0.0, %v4725
      %v4727 = vpop.f32.mrb[0].mxu0
      %4728 = vmatprep.mubr.f32.mxu0 0.0
      %4729 = vmatmul.mubr.f32.gmra.mrb[0].mxu0 %v4624
      %v4730 = vpop.f32.mrb[0].mxu0
      %v4731 = vadd.f32 0.0, %v4730
      %v4732 = vpop.f32.mrb[0].mxu0
      %4733 = vmatprep.mubr.f32.mxu0 0.0
      %4734 = vmatmul.mubr.f32.gmra.mrb[0].mxu0 %v4627
      %v4735 = vpop.f32.mrb[0].mxu0
      %v4736 = vadd.f32 0.0, %v4735
      %v4737 = vpop.f32.mrb[0].mxu0
      %4738 = vmatprep.mubr.f32.mxu0 0.0
      %4739 = vmatmul.mubr.f32.gmra.mrb[0].mxu0 %v4630
      %v4740 = vpop.f32.mrb[0].mxu0
      %v4741 = vadd.f32 0.0, %v4740
      %v4742 = vpop.f32.mrb[0].mxu0
      %4743 = vmatprep.mubr.f32.mxu0 0.0
      %4744 = vmatmul.mubr.f32.gmra.mrb[0].mxu0 %v4633
      %v4745 = vpop.f32.mrb[0].mxu0
      %v4746 = vadd.f32 0.0, %v4745
      %v4747 = vpop.f32.mrb[0].mxu0
      %4748 = vmatprep.mubr.f32.mxu0 0.0
      %4749 = vmatmul.mubr.f32.gmra.mrb[0].mxu0 %v4636
      %v4750 = vpop.f32.mrb[0].mxu0
      %v4751 = vadd.f32 0.0, %v4750
      %v4752 = vpop.f32.mrb[0].mxu0
      %4753 = vmatprep.mubr.f32.mxu0 0.0
      %4754 = vmatmul.mubr.f32.gmra.mrb[0].mxu0 %v4639
      %v4755 = vpop.f32.mrb[0].mxu0
      %v4756 = vadd.f32 0.0, %v4755
      %v4757 = vpop.f32.mrb[0].mxu0
      %4758 = vmatprep.mubr.f32.mxu0 0.0
      %4759 = vmatmul.mubr.f32.gmra.mrb[0].mxu0 %v4642
      %v4760 = vpop.f32.mrb[0].mxu0
      %v4761 = vadd.f32 0.0, %v4760
      %v4762 = vpop.f32.mrb[0].mxu0
      %4763 = vmatprep.mubr.f32.mxu0 0.0
      %4764 = vmatmul.mubr.f32.gmra.mrb[0].mxu0 %v4645
      %v4765 = vpop.f32.mrb[0].mxu0
      %v4766 = vadd.f32 0.0, %v4765
      %v4767 = vpop.f32.mrb[0].mxu0
      %4768 = vmatprep.mubr.f32.mxu0 0.0
      %4769 = vmatmul.mubr.f32.gmra.mrb[0].mxu0 %v4648
      %v4770 = vpop.f32.mrb[0].mxu0
      %v4771 = vadd.f32 0.0, %v4770
      %v4772 = vpop.f32.mrb[0].mxu0
      %4773 = vmatprep.mubr.f32.mxu0 0.0
      %4774 = vmatmul.mubr.f32.gmra.mrb[0].mxu0 %v4651
      %v4775 = vpop.f32.mrb[0].mxu0
      %v4776 = vadd.f32 0.0, %v4775
      %v4777 = vpop.f32.mrb[0].mxu0
      %4778 = vmatprep.mubr.f32.mxu0 0.0
      %4779 = vmatmul.mubr.f32.gmra.mrb[0].mxu0 %v4654
      %v4780 = vpop.f32.mrb[0].mxu0
      %v4781 = vadd.f32 0.0, %v4780
      %v4782 = vpop.f32.mrb[0].mxu0
      %4783 = vmatprep.mubr.f32.mxu0 0.0
      %4784 = vmatmul.mubr.f32.gmra.mrb[0].mxu0 %v4657
      %v4785 = vpop.f32.mrb[0].mxu0
      %v4786 = vadd.f32 0.0, %v4785
      %v4787 = vpop.f32.mrb[0].mxu0
      %4788 = vdwg.mxu0
      %v4790 = vsel %vm4446, %v4416, 0
      %v4793 = vsel %vm4446, %v4417, 0
      %v4796 = vsel %vm4446, %v4418, 0
      %v4799 = vsel %vm4446, %v4419, 0
      %v4802 = vsel %vm4446, %v4420, 0
      %v4805 = vsel %vm4446, %v4421, 0
      %v4808 = vsel %vm4446, %v4422, 0
      %v4811 = vsel %vm4446, %v4423, 0
      %v4814 = vsel %vm4446, %v4424, 0
      %v4817 = vsel %vm4446, %v4425, 0
      %v4820 = vsel %vm4446, %v4426, 0
      %v4823 = vsel %vm4446, %v4427, 0
      %v4826 = vsel %vm4446, %v4428, 0
      %4828 = vmatprep.subr.mxu0 0.0
      %4829 = vmatpush1.msra.mxu0 %v4442
      %4830 = vmatprep.subr.mxu0 0.0
      %4831 = vmatpush1.msra.mxu0 %v4443
      %4832 = vmatprep.subr.mxu0 0.0
      %4833 = vmatpush1.msra.mxu0 %v4444
      %4834 = vmatprep.subr.mxu0 0.0
      %4835 = vmatpush1.msra.mxu0 %v4488
      %4836 = vmatprep.subr.mxu0 0.0
      %4837 = vmatpush1.msra.mxu0 0.0
      %4838 = vmatprep.subr.mxu0 0.0
      %4839 = vmatpush1.msra.mxu0 0.0
      %4840 = vmatprep.subr.mxu0 0.0
      %4841 = vmatpush1.msra.mxu0 0.0
      %4842 = vmatprep.subr.mxu0 0.0
      %4843 = vmatpush1.msra.mxu0 0.0
      %4844 = vmatprep.subr.mxu0 0.0
      %4845 = vmatpush1.msra.mxu0 0.0
      %4846 = vmatprep.subr.mxu0 0.0
      %4847 = vmatpush1.msra.mxu0 0.0
      %4848 = vmatprep.subr.mxu0 0.0
      %4849 = vmatpush1.msra.mxu0 0.0
      %4850 = vmatprep.subr.mxu0 0.0
      %4851 = vmatpush1.msra.mxu0 0.0
      %4852 = vmatprep.subr.mxu0 0.0
      %4853 = vmatpush1.msra.mxu0 0.0
      %4854 = vmatprep.subr.mxu0 0.0
      %4855 = vmatpush1.msra.mxu0 0.0
      %4856 = vmatprep.subr.mxu0 0.0
      %4857 = vmatpush1.msra.mxu0 0.0
      %4858 = vmatprep.subr.mxu0 0.0
      %4859 = vmatpush1.msra.mxu0 0.0
      %4860 = vmatprep.subr.mxu0 0.0
      %4861 = vmatpush1.msra.mxu0 0.0
      %4862 = vmatprep.subr.mxu0 0.0
      %4863 = vmatpush1.msra.mxu0 0.0
      %4864 = vmatprep.subr.mxu0 0.0
      %4865 = vmatpush1.msra.mxu0 0.0
      %4866 = vmatprep.subr.mxu0 0.0
      %4867 = vmatpush1.msra.mxu0 0.0
      %4868 = vmatprep.subr.mxu0 0.0
      %4869 = vmatpush1.msra.mxu0 0.0
      %4870 = vmatprep.subr.mxu0 0.0
      %4871 = vmatpush1.msra.mxu0 0.0
      %4872 = vmatprep.subr.mxu0 0.0
      %4873 = vmatpush1.msra.mxu0 0.0
      %4874 = vmatprep.subr.mxu0 0.0
      %4875 = vmatpush1.msra.mxu0 0.0
      %4876 = vmatprep.subr.mxu0 0.0
      %4877 = vmatpush1.msra.mxu0 0.0
      %4878 = vmatprep.subr.mxu0 0.0
      %4879 = vmatpush1.msra.mxu0 0.0
      %4880 = vmatprep.subr.mxu0 0.0
      %4881 = vmatpush1.msra.mxu0 0.0
      %4882 = vmatprep.subr.mxu0 0.0
      %4883 = vmatpush1.msra.mxu0 0.0
      %4884 = vmatprep.subr.mxu0 0.0
      %4885 = vmatpush1.msra.mxu0 0.0
      %4886 = vmatprep.subr.mxu0 0.0
      %4887 = vmatpush1.msra.mxu0 0.0
      %4888 = vmatprep.subr.mxu0 0.0
      %4889 = vmatpush1.msra.mxu0 0.0
      %4890 = vmatprep.subr.mxu0 0.0
      %4891 = vmatpush1.msra.mxu0 0.0
      %4892 = vmatprep.mubr.f32.mxu0 0.0
      %4893 = vmatmul.mubr.f32.gmra.mrb[0].mxu0 %v4790
      %v4894 = vpop.f32.mrb[0].mxu0
      %v4895 = vadd.f32 0.0, %v4894
      %v4896 = vpop.f32.mrb[0].mxu0
      %4897 = vmatprep.mubr.f32.mxu0 0.0
      %4898 = vmatmul.mubr.f32.gmra.mrb[0].mxu0 %v4793
      %v4899 = vpop.f32.mrb[0].mxu0
      %v4900 = vadd.f32 0.0, %v4899
      %v4901 = vpop.f32.mrb[0].mxu0
      %4902 = vmatprep.mubr.f32.mxu0 0.0
      %4903 = vmatmul.mubr.f32.gmra.mrb[0].mxu0 %v4796
      %v4904 = vpop.f32.mrb[0].mxu0
      %v4905 = vadd.f32 0.0, %v4904
      %v4906 = vpop.f32.mrb[0].mxu0
      %4907 = vmatprep.mubr.f32.mxu0 0.0
      %4908 = vmatmul.mubr.f32.gmra.mrb[0].mxu0 %v4799
      %v4909 = vpop.f32.mrb[0].mxu0
      %v4910 = vadd.f32 0.0, %v4909
      %v4911 = vpop.f32.mrb[0].mxu0
      %4912 = vmatprep.mubr.f32.mxu0 0.0
      %4913 = vmatmul.mubr.f32.gmra.mrb[0].mxu0 %v4802
      %v4914 = vpop.f32.mrb[0].mxu0
      %v4915 = vadd.f32 0.0, %v4914
      %v4916 = vpop.f32.mrb[0].mxu0
      %4917 = vmatprep.mubr.f32.mxu0 0.0
      %4918 = vmatmul.mubr.f32.gmra.mrb[0].mxu0 %v4805
      %v4919 = vpop.f32.mrb[0].mxu0
      %v4920 = vadd.f32 0.0, %v4919
      %v4921 = vpop.f32.mrb[0].mxu0
      %4922 = vmatprep.mubr.f32.mxu0 0.0
      %4923 = vmatmul.mubr.f32.gmra.mrb[0].mxu0 %v4808
      %v4924 = vpop.f32.mrb[0].mxu0
      %v4925 = vadd.f32 0.0, %v4924
      %v4926 = vpop.f32.mrb[0].mxu0
      %4927 = vmatprep.mubr.f32.mxu0 0.0
      %4928 = vmatmul.mubr.f32.gmra.mrb[0].mxu0 %v4811
      %v4929 = vpop.f32.mrb[0].mxu0
      %v4930 = vadd.f32 0.0, %v4929
      %v4931 = vpop.f32.mrb[0].mxu0
      %4932 = vmatprep.mubr.f32.mxu0 0.0
      %4933 = vmatmul.mubr.f32.gmra.mrb[0].mxu0 %v4814
      %v4934 = vpop.f32.mrb[0].mxu0
      %v4935 = vadd.f32 0.0, %v4934
      %v4936 = vpop.f32.mrb[0].mxu0
      %4937 = vmatprep.mubr.f32.mxu0 0.0
      %4938 = vmatmul.mubr.f32.gmra.mrb[0].mxu0 %v4817
      %v4939 = vpop.f32.mrb[0].mxu0
      %v4940 = vadd.f32 0.0, %v4939
      %v4941 = vpop.f32.mrb[0].mxu0
      %4942 = vmatprep.mubr.f32.mxu0 0.0
      %4943 = vmatmul.mubr.f32.gmra.mrb[0].mxu0 %v4820
      %v4944 = vpop.f32.mrb[0].mxu0
      %v4945 = vadd.f32 0.0, %v4944
      %v4946 = vpop.f32.mrb[0].mxu0
      %4947 = vmatprep.mubr.f32.mxu0 0.0
      %4948 = vmatmul.mubr.f32.gmra.mrb[0].mxu0 %v4823
      %v4949 = vpop.f32.mrb[0].mxu0
      %v4950 = vadd.f32 0.0, %v4949
      %v4951 = vpop.f32.mrb[0].mxu0
      %4952 = vmatprep.mubr.f32.mxu0 0.0
      %4953 = vmatmul.mubr.f32.gmra.mrb[0].mxu0 %v4826
      %v4954 = vpop.f32.mrb[0].mxu0
      %v4955 = vadd.f32 0.0, %v4954
      %v4956 = vpop.f32.mrb[0].mxu0
      %4957 = vdwg.mxu0
      %v4959 = vsel %vm4446, %v4429, 0
      %v4962 = vsel %vm4446, %v4430, 0
      %v4965 = vsel %vm4446, %v4431, 0
      %v4968 = vsel %vm4446, %v4432, 0
      %v4971 = vsel %vm4446, %v4433, 0
      %v4974 = vsel %vm4446, %v4434, 0
      %v4977 = vsel %vm4446, %v4435, 0
      %v4980 = vsel %vm4446, %v4436, 0
      %v4983 = vsel %vm4446, %v4437, 0
      %v4986 = vsel %vm4446, %v4438, 0
      %v4989 = vsel %vm4446, %v4439, 0
      %v4992 = vsel %vm4446, %v4440, 0
      %v4995 = vsel %vm4446, %v4441, 0
      %4997 = vmatprep.subr.mxu0 0.0
      %4998 = vmatpush1.msra.mxu0 %v4442
      %4999 = vmatprep.subr.mxu0 0.0
      %5000 = vmatpush1.msra.mxu0 %v4443
      %5001 = vmatprep.subr.mxu0 0.0
      %5002 = vmatpush1.msra.mxu0 %v4444
      %5003 = vmatprep.subr.mxu0 0.0
      %5004 = vmatpush1.msra.mxu0 %v4488
      %5005 = vmatprep.subr.mxu0 0.0
      %5006 = vmatpush1.msra.mxu0 0.0
      %5007 = vmatprep.subr.mxu0 0.0
      %5008 = vmatpush1.msra.mxu0 0.0
      %5009 = vmatprep.subr.mxu0 0.0
      %5010 = vmatpush1.msra.mxu0 0.0
      %5011 = vmatprep.subr.mxu0 0.0
      %5012 = vmatpush1.msra.mxu0 0.0
      %5013 = vmatprep.subr.mxu0 0.0
      %5014 = vmatpush1.msra.mxu0 0.0
      %5015 = vmatprep.subr.mxu0 0.0
      %5016 = vmatpush1.msra.mxu0 0.0
      %5017 = vmatprep.subr.mxu0 0.0
      %5018 = vmatpush1.msra.mxu0 0.0
      %5019 = vmatprep.subr.mxu0 0.0
      %5020 = vmatpush1.msra.mxu0 0.0
      %5021 = vmatprep.subr.mxu0 0.0
      %5022 = vmatpush1.msra.mxu0 0.0
      %5023 = vmatprep.subr.mxu0 0.0
      %5024 = vmatpush1.msra.mxu0 0.0
      %5025 = vmatprep.subr.mxu0 0.0
      %5026 = vmatpush1.msra.mxu0 0.0
      %5027 = vmatprep.subr.mxu0 0.0
      %5028 = vmatpush1.msra.mxu0 0.0
      %5029 = vmatprep.subr.mxu0 0.0
      %5030 = vmatpush1.msra.mxu0 0.0
      %5031 = vmatprep.subr.mxu0 0.0
      %5032 = vmatpush1.msra.mxu0 0.0
      %5033 = vmatprep.subr.mxu0 0.0
      %5034 = vmatpush1.msra.mxu0 0.0
      %5035 = vmatprep.subr.mxu0 0.0
      %5036 = vmatpush1.msra.mxu0 0.0
      %5037 = vmatprep.subr.mxu0 0.0
      %5038 = vmatpush1.msra.mxu0 0.0
      %5039 = vmatprep.subr.mxu0 0.0
      %5040 = vmatpush1.msra.mxu0 0.0
      %5041 = vmatprep.subr.mxu0 0.0
      %5042 = vmatpush1.msra.mxu0 0.0
      %5043 = vmatprep.subr.mxu0 0.0
      %5044 = vmatpush1.msra.mxu0 0.0
      %5045 = vmatprep.subr.mxu0 0.0
      %5046 = vmatpush1.msra.mxu0 0.0
      %5047 = vmatprep.subr.mxu0 0.0
      %5048 = vmatpush1.msra.mxu0 0.0
      %5049 = vmatprep.subr.mxu0 0.0
      %5050 = vmatpush1.msra.mxu0 0.0
      %5051 = vmatprep.subr.mxu0 0.0
      %5052 = vmatpush1.msra.mxu0 0.0
      %5053 = vmatprep.subr.mxu0 0.0
      %5054 = vmatpush1.msra.mxu0 0.0
      %5055 = vmatprep.subr.mxu0 0.0
      %5056 = vmatpush1.msra.mxu0 0.0
      %5057 = vmatprep.subr.mxu0 0.0
      %5058 = vmatpush1.msra.mxu0 0.0
      %5059 = vmatprep.subr.mxu0 0.0
      %5060 = vmatpush1.msra.mxu0 0.0
      %5061 = vmatprep.mubr.f32.mxu0 0.0
      %5062 = vmatmul.mubr.f32.gmra.mrb[0].mxu0 %v4959
      %v5063 = vpop.f32.mrb[0].mxu0
      %v5064 = vadd.f32 0.0, %v5063
      %v5065 = vpop.f32.mrb[0].mxu0
      %5066 = vmatprep.mubr.f32.mxu0 0.0
      %5067 = vmatmul.mubr.f32.gmra.mrb[0].mxu0 %v4962
      %v5068 = vpop.f32.mrb[0].mxu0
      %v5069 = vadd.f32 0.0, %v5068
      %v5070 = vpop.f32.mrb[0].mxu0
      %5071 = vmatprep.mubr.f32.mxu0 0.0
      %5072 = vmatmul.mubr.f32.gmra.mrb[0].mxu0 %v4965
      %v5073 = vpop.f32.mrb[0].mxu0
      %v5074 = vadd.f32 0.0, %v5073
      %v5075 = vpop.f32.mrb[0].mxu0
      %5076 = vmatprep.mubr.f32.mxu0 0.0
      %5077 = vmatmul.mubr.f32.gmra.mrb[0].mxu0 %v4968
      %v5078 = vpop.f32.mrb[0].mxu0
      %v5079 = vadd.f32 0.0, %v5078
      %v5080 = vpop.f32.mrb[0].mxu0
      %5081 = vmatprep.mubr.f32.mxu0 0.0
      %5082 = vmatmul.mubr.f32.gmra.mrb[0].mxu0 %v4971
      %v5083 = vpop.f32.mrb[0].mxu0
      %v5084 = vadd.f32 0.0, %v5083
      %v5085 = vpop.f32.mrb[0].mxu0
      %5086 = vmatprep.mubr.f32.mxu0 0.0
      %5087 = vmatmul.mubr.f32.gmra.mrb[0].mxu0 %v4974
      %v5088 = vpop.f32.mrb[0].mxu0
      %v5089 = vadd.f32 0.0, %v5088
      %v5090 = vpop.f32.mrb[0].mxu0
      %5091 = vmatprep.mubr.f32.mxu0 0.0
      %5092 = vmatmul.mubr.f32.gmra.mrb[0].mxu0 %v4977
      %v5093 = vpop.f32.mrb[0].mxu0
      %v5094 = vadd.f32 0.0, %v5093
      %v5095 = vpop.f32.mrb[0].mxu0
      %5096 = vmatprep.mubr.f32.mxu0 0.0
      %5097 = vmatmul.mubr.f32.gmra.mrb[0].mxu0 %v4980
      %v5098 = vpop.f32.mrb[0].mxu0
      %v5099 = vadd.f32 0.0, %v5098
      %v5100 = vpop.f32.mrb[0].mxu0
      %5101 = vmatprep.mubr.f32.mxu0 0.0
      %5102 = vmatmul.mubr.f32.gmra.mrb[0].mxu0 %v4983
      %v5103 = vpop.f32.mrb[0].mxu0
      %v5104 = vadd.f32 0.0, %v5103
      %v5105 = vpop.f32.mrb[0].mxu0
      %5106 = vmatprep.mubr.f32.mxu0 0.0
      %5107 = vmatmul.mubr.f32.gmra.mrb[0].mxu0 %v4986
      %v5108 = vpop.f32.mrb[0].mxu0
      %v5109 = vadd.f32 0.0, %v5108
      %v5110 = vpop.f32.mrb[0].mxu0
      %5111 = vmatprep.mubr.f32.mxu0 0.0
      %5112 = vmatmul.mubr.f32.gmra.mrb[0].mxu0 %v4989
      %v5113 = vpop.f32.mrb[0].mxu0
      %v5114 = vadd.f32 0.0, %v5113
      %v5115 = vpop.f32.mrb[0].mxu0
      %5116 = vmatprep.mubr.f32.mxu0 0.0
      %5117 = vmatmul.mubr.f32.gmra.mrb[0].mxu0 %v4992
      %v5118 = vpop.f32.mrb[0].mxu0
      %v5119 = vadd.f32 0.0, %v5118
      %v5120 = vpop.f32.mrb[0].mxu0
      %5121 = vmatprep.mubr.f32.mxu0 0.0
      %5122 = vmatmul.mubr.f32.gmra.mrb[0].mxu0 %v4995
      %v5123 = vpop.f32.mrb[0].mxu0
      %v5124 = vadd.f32 0.0, %v5123
      %v5125 = vpop.f32.mrb[0].mxu0
      %5126 = vdwg.mxu0
      %v5127 = vld [vmem:[%s6] sm:$0xff]
      %v5128 = vld [vmem:[%s6 + $0x8] sm:$0xff]
      %v5129 = vld [vmem:[%s6 + $0x10] sm:$0xff]
      %v5130 = vld [vmem:[%s6 + $0x18] sm:$0x3]
      %v5132 = vsel %vm4486, %v5130, 0
      %5134 = vmatprep.subr.mxu0 0.0
      %5135 = vmatpush1.msra.mxu0 %v5127
      %5136 = vmatprep.subr.mxu0 0.0
      %5137 = vmatpush1.msra.mxu0 %v5128
      %5138 = vmatprep.subr.mxu0 0.0
      %5139 = vmatpush1.msra.mxu0 %v5129
      %5140 = vmatprep.subr.mxu0 0.0
      %5141 = vmatpush1.msra.mxu0 %v5132
      %5142 = vmatprep.subr.mxu0 0.0
      %5143 = vmatpush1.msra.mxu0 0.0
      %5144 = vmatprep.subr.mxu0 0.0
      %5145 = vmatpush1.msra.mxu0 0.0
      %5146 = vmatprep.subr.mxu0 0.0
      %5147 = vmatpush1.msra.mxu0 0.0
      %5148 = vmatprep.subr.mxu0 0.0
      %5149 = vmatpush1.msra.mxu0 0.0
      %5150 = vmatprep.subr.mxu0 0.0
      %5151 = vmatpush1.msra.mxu0 0.0
      %5152 = vmatprep.subr.mxu0 0.0
      %5153 = vmatpush1.msra.mxu0 0.0
      %5154 = vmatprep.subr.mxu0 0.0
      %5155 = vmatpush1.msra.mxu0 0.0
      %5156 = vmatprep.subr.mxu0 0.0
      %5157 = vmatpush1.msra.mxu0 0.0
      %5158 = vmatprep.subr.mxu0 0.0
      %5159 = vmatpush1.msra.mxu0 0.0
      %5160 = vmatprep.subr.mxu0 0.0
      %5161 = vmatpush1.msra.mxu0 0.0
      %5162 = vmatprep.subr.mxu0 0.0
      %5163 = vmatpush1.msra.mxu0 0.0
      %5164 = vmatprep.subr.mxu0 0.0
      %5165 = vmatpush1.msra.mxu0 0.0
      %5166 = vmatprep.subr.mxu0 0.0
      %5167 = vmatpush1.msra.mxu0 0.0
      %5168 = vmatprep.subr.mxu0 0.0
      %5169 = vmatpush1.msra.mxu0 0.0
      %5170 = vmatprep.subr.mxu0 0.0
      %5171 = vmatpush1.msra.mxu0 0.0
      %5172 = vmatprep.subr.mxu0 0.0
      %5173 = vmatpush1.msra.mxu0 0.0
      %5174 = vmatprep.subr.mxu0 0.0
      %5175 = vmatpush1.msra.mxu0 0.0
      %5176 = vmatprep.subr.mxu0 0.0
      %5177 = vmatpush1.msra.mxu0 0.0
      %5178 = vmatprep.subr.mxu0 0.0
      %5179 = vmatpush1.msra.mxu0 0.0
      %5180 = vmatprep.subr.mxu0 0.0
      %5181 = vmatpush1.msra.mxu0 0.0
      %5182 = vmatprep.subr.mxu0 0.0
      %5183 = vmatpush1.msra.mxu0 0.0
      %5184 = vmatprep.subr.mxu0 0.0
      %5185 = vmatpush1.msra.mxu0 0.0
      %5186 = vmatprep.subr.mxu0 0.0
      %5187 = vmatpush1.msra.mxu0 0.0
      %5188 = vmatprep.subr.mxu0 0.0
      %5189 = vmatpush1.msra.mxu0 0.0
      %5190 = vmatprep.subr.mxu0 0.0
      %5191 = vmatpush1.msra.mxu0 0.0
      %5192 = vmatprep.subr.mxu0 0.0
      %5193 = vmatpush1.msra.mxu0 0.0
      %5194 = vmatprep.subr.mxu0 0.0
      %5195 = vmatpush1.msra.mxu0 0.0
      %5196 = vmatprep.subr.mxu0 0.0
      %5197 = vmatpush1.msra.mxu0 0.0
      %5198 = vmatprep.mubr.f32.mxu0 0.0
      %5199 = vmatmul.mubr.f32.gmra.mrb[0].mxu0 %v4448
      %v5200 = vpop.f32.mrb[0].mxu0
      %v5201 = vadd.f32 0.0, %v5200
      %v5202 = vpop.f32.mrb[0].mxu0
      %5203 = vmatprep.mubr.f32.mxu0 0.0
      %5204 = vmatmul.mubr.f32.gmra.mrb[0].mxu0 %v4451
      %v5205 = vpop.f32.mrb[0].mxu0
      %v5206 = vadd.f32 0.0, %v5205
      %v5207 = vpop.f32.mrb[0].mxu0
      %5208 = vmatprep.mubr.f32.mxu0 0.0
      %5209 = vmatmul.mubr.f32.gmra.mrb[0].mxu0 %v4454
      %v5210 = vpop.f32.mrb[0].mxu0
      %v5211 = vadd.f32 0.0, %v5210
      %v5212 = vpop.f32.mrb[0].mxu0
      %5213 = vmatprep.mubr.f32.mxu0 0.0
      %5214 = vmatmul.mubr.f32.gmra.mrb[0].mxu0 %v4457
      %v5215 = vpop.f32.mrb[0].mxu0
      %v5216 = vadd.f32 0.0, %v5215
      %v5217 = vpop.f32.mrb[0].mxu0
      %5218 = vmatprep.mubr.f32.mxu0 0.0
      %5219 = vmatmul.mubr.f32.gmra.mrb[0].mxu0 %v4460
      %v5220 = vpop.f32.mrb[0].mxu0
      %v5221 = vadd.f32 0.0, %v5220
      %v5222 = vpop.f32.mrb[0].mxu0
      %5223 = vmatprep.mubr.f32.mxu0 0.0
      %5224 = vmatmul.mubr.f32.gmra.mrb[0].mxu0 %v4463
      %v5225 = vpop.f32.mrb[0].mxu0
      %v5226 = vadd.f32 0.0, %v5225
      %v5227 = vpop.f32.mrb[0].mxu0
      %5228 = vmatprep.mubr.f32.mxu0 0.0
      %5229 = vmatmul.mubr.f32.gmra.mrb[0].mxu0 %v4466
      %v5230 = vpop.f32.mrb[0].mxu0
      %v5231 = vadd.f32 0.0, %v5230
      %v5232 = vpop.f32.mrb[0].mxu0
      %5233 = vmatprep.mubr.f32.mxu0 0.0
      %5234 = vmatmul.mubr.f32.gmra.mrb[0].mxu0 %v4469
      %v5235 = vpop.f32.mrb[0].mxu0
      %v5236 = vadd.f32 0.0, %v5235
      %v5237 = vpop.f32.mrb[0].mxu0
      %5238 = vmatprep.mubr.f32.mxu0 0.0
      %5239 = vmatmul.mubr.f32.gmra.mrb[0].mxu0 %v4472
      %v5240 = vpop.f32.mrb[0].mxu0
      %v5241 = vadd.f32 0.0, %v5240
      %v5242 = vpop.f32.mrb[0].mxu0
      %5243 = vmatprep.mubr.f32.mxu0 0.0
      %5244 = vmatmul.mubr.f32.gmra.mrb[0].mxu0 %v4475
      %v5245 = vpop.f32.mrb[0].mxu0
      %v5246 = vadd.f32 0.0, %v5245
      %v5247 = vpop.f32.mrb[0].mxu0
      %5248 = vmatprep.mubr.f32.mxu0 0.0
      %5249 = vmatmul.mubr.f32.gmra.mrb[0].mxu0 %v4478
      %v5250 = vpop.f32.mrb[0].mxu0
      %v5251 = vadd.f32 0.0, %v5250
      %v5252 = vpop.f32.mrb[0].mxu0
      %5253 = vmatprep.mubr.f32.mxu0 0.0
      %5254 = vmatmul.mubr.f32.gmra.mrb[0].mxu0 %v4481
      %v5255 = vpop.f32.mrb[0].mxu0
      %v5256 = vadd.f32 0.0, %v5255
      %v5257 = vpop.f32.mrb[0].mxu0
      %5258 = vmatprep.mubr.f32.mxu0 0.0
      %5259 = vmatmul.mubr.f32.gmra.mrb[0].mxu0 %v4484
      %v5260 = vpop.f32.mrb[0].mxu0
      %v5261 = vadd.f32 0.0, %v5260
      %v5262 = vpop.f32.mrb[0].mxu0
      %5263 = vdwg.mxu0
      %5264 = vmatprep.subr.mxu0 0.0
      %5265 = vmatpush1.msra.mxu0 %v5127
      %5266 = vmatprep.subr.mxu0 0.0
      %5267 = vmatpush1.msra.mxu0 %v5128
      %5268 = vmatprep.subr.mxu0 0.0
      %5269 = vmatpush1.msra.mxu0 %v5129
      %5270 = vmatprep.subr.mxu0 0.0
      %5271 = vmatpush1.msra.mxu0 %v5132
      %5272 = vmatprep.subr.mxu0 0.0
      %5273 = vmatpush1.msra.mxu0 0.0
      %5274 = vmatprep.subr.mxu0 0.0
      %5275 = vmatpush1.msra.mxu0 0.0
      %5276 = vmatprep.subr.mxu0 0.0
      %5277 = vmatpush1.msra.mxu0 0.0
      %5278 = vmatprep.subr.mxu0 0.0
      %5279 = vmatpush1.msra.mxu0 0.0
      %5280 = vmatprep.subr.mxu0 0.0
      %5281 = vmatpush1.msra.mxu0 0.0
      %5282 = vmatprep.subr.mxu0 0.0
      %5283 = vmatpush1.msra.mxu0 0.0
      %5284 = vmatprep.subr.mxu0 0.0
      %5285 = vmatpush1.msra.mxu0 0.0
      %5286 = vmatprep.subr.mxu0 0.0
      %5287 = vmatpush1.msra.mxu0 0.0
      %5288 = vmatprep.subr.mxu0 0.0
      %5289 = vmatpush1.msra.mxu0 0.0
      %5290 = vmatprep.subr.mxu0 0.0
      %5291 = vmatpush1.msra.mxu0 0.0
      %5292 = vmatprep.subr.mxu0 0.0
      %5293 = vmatpush1.msra.mxu0 0.0
      %5294 = vmatprep.subr.mxu0 0.0
      %5295 = vmatpush1.msra.mxu0 0.0
      %5296 = vmatprep.subr.mxu0 0.0
      %5297 = vmatpush1.msra.mxu0 0.0
      %5298 = vmatprep.subr.mxu0 0.0
      %5299 = vmatpush1.msra.mxu0 0.0
      %5300 = vmatprep.subr.mxu0 0.0
      %5301 = vmatpush1.msra.mxu0 0.0
      %5302 = vmatprep.subr.mxu0 0.0
      %5303 = vmatpush1.msra.mxu0 0.0
      %5304 = vmatprep.subr.mxu0 0.0
      %5305 = vmatpush1.msra.mxu0 0.0
      %5306 = vmatprep.subr.mxu0 0.0
      %5307 = vmatpush1.msra.mxu0 0.0
      %5308 = vmatprep.subr.mxu0 0.0
      %5309 = vmatpush1.msra.mxu0 0.0
      %5310 = vmatprep.subr.mxu0 0.0
      %5311 = vmatpush1.msra.mxu0 0.0
      %5312 = vmatprep.subr.mxu0 0.0
      %5313 = vmatpush1.msra.mxu0 0.0
      %5314 = vmatprep.subr.mxu0 0.0
      %5315 = vmatpush1.msra.mxu0 0.0
      %5316 = vmatprep.subr.mxu0 0.0
      %5317 = vmatpush1.msra.mxu0 0.0
      %5318 = vmatprep.subr.mxu0 0.0
      %5319 = vmatpush1.msra.mxu0 0.0
      %5320 = vmatprep.subr.mxu0 0.0
      %5321 = vmatpush1.msra.mxu0 0.0
      %5322 = vmatprep.subr.mxu0 0.0
      %5323 = vmatpush1.msra.mxu0 0.0
      %5324 = vmatprep.subr.mxu0 0.0
      %5325 = vmatpush1.msra.mxu0 0.0
      %5326 = vmatprep.subr.mxu0 0.0
      %5327 = vmatpush1.msra.mxu0 0.0
      %5328 = vmatprep.mubr.f32.mxu0 0.0
      %5329 = vmatmul.mubr.f32.gmra.mrb[0].mxu0 %v4621
      %v5330 = vpop.f32.mrb[0].mxu0
      %v5331 = vadd.f32 0.0, %v5330
      %v5332 = vpop.f32.mrb[0].mxu0
      %5333 = vmatprep.mubr.f32.mxu0 0.0
      %5334 = vmatmul.mubr.f32.gmra.mrb[0].mxu0 %v4624
      %v5335 = vpop.f32.mrb[0].mxu0
      %v5336 = vadd.f32 0.0, %v5335
      %v5337 = vpop.f32.mrb[0].mxu0
      %5338 = vmatprep.mubr.f32.mxu0 0.0
      %5339 = vmatmul.mubr.f32.gmra.mrb[0].mxu0 %v4627
      %v5340 = vpop.f32.mrb[0].mxu0
      %v5341 = vadd.f32 0.0, %v5340
      %v5342 = vpop.f32.mrb[0].mxu0
      %5343 = vmatprep.mubr.f32.mxu0 0.0
      %5344 = vmatmul.mubr.f32.gmra.mrb[0].mxu0 %v4630
      %v5345 = vpop.f32.mrb[0].mxu0
      %v5346 = vadd.f32 0.0, %v5345
      %v5347 = vpop.f32.mrb[0].mxu0
      %5348 = vmatprep.mubr.f32.mxu0 0.0
      %5349 = vmatmul.mubr.f32.gmra.mrb[0].mxu0 %v4633
      %v5350 = vpop.f32.mrb[0].mxu0
      %v5351 = vadd.f32 0.0, %v5350
      %v5352 = vpop.f32.mrb[0].mxu0
      %5353 = vmatprep.mubr.f32.mxu0 0.0
      %5354 = vmatmul.mubr.f32.gmra.mrb[0].mxu0 %v4636
      %v5355 = vpop.f32.mrb[0].mxu0
      %v5356 = vadd.f32 0.0, %v5355
      %v5357 = vpop.f32.mrb[0].mxu0
      %5358 = vmatprep.mubr.f32.mxu0 0.0
      %5359 = vmatmul.mubr.f32.gmra.mrb[0].mxu0 %v4639
      %v5360 = vpop.f32.mrb[0].mxu0
      %v5361 = vadd.f32 0.0, %v5360
      %v5362 = vpop.f32.mrb[0].mxu0
      %5363 = vmatprep.mubr.f32.mxu0 0.0
      %5364 = vmatmul.mubr.f32.gmra.mrb[0].mxu0 %v4642
      %v5365 = vpop.f32.mrb[0].mxu0
      %v5366 = vadd.f32 0.0, %v5365
      %v5367 = vpop.f32.mrb[0].mxu0
      %5368 = vmatprep.mubr.f32.mxu0 0.0
      %5369 = vmatmul.mubr.f32.gmra.mrb[0].mxu0 %v4645
      %v5370 = vpop.f32.mrb[0].mxu0
      %v5371 = vadd.f32 0.0, %v5370
      %v5372 = vpop.f32.mrb[0].mxu0
      %5373 = vmatprep.mubr.f32.mxu0 0.0
      %5374 = vmatmul.mubr.f32.gmra.mrb[0].mxu0 %v4648
      %v5375 = vpop.f32.mrb[0].mxu0
      %v5376 = vadd.f32 0.0, %v5375
      %v5377 = vpop.f32.mrb[0].mxu0
      %5378 = vmatprep.mubr.f32.mxu0 0.0
      %5379 = vmatmul.mubr.f32.gmra.mrb[0].mxu0 %v4651
      %v5380 = vpop.f32.mrb[0].mxu0
      %v5381 = vadd.f32 0.0, %v5380
      %v5382 = vpop.f32.mrb[0].mxu0
      %5383 = vmatprep.mubr.f32.mxu0 0.0
      %5384 = vmatmul.mubr.f32.gmra.mrb[0].mxu0 %v4654
      %v5385 = vpop.f32.mrb[0].mxu0
      %v5386 = vadd.f32 0.0, %v5385
      %v5387 = vpop.f32.mrb[0].mxu0
      %5388 = vmatprep.mubr.f32.mxu0 0.0
      %5389 = vmatmul.mubr.f32.gmra.mrb[0].mxu0 %v4657
      %v5390 = vpop.f32.mrb[0].mxu0
      %v5391 = vadd.f32 0.0, %v5390
      %v5392 = vpop.f32.mrb[0].mxu0
      %5393 = vdwg.mxu0
      %5394 = vmatprep.subr.mxu0 0.0
      %5395 = vmatpush1.msra.mxu0 %v5127
      %5396 = vmatprep.subr.mxu0 0.0
      %5397 = vmatpush1.msra.mxu0 %v5128
      %5398 = vmatprep.subr.mxu0 0.0
      %5399 = vmatpush1.msra.mxu0 %v5129
      %5400 = vmatprep.subr.mxu0 0.0
      %5401 = vmatpush1.msra.mxu0 %v5132
      %5402 = vmatprep.subr.mxu0 0.0
      %5403 = vmatpush1.msra.mxu0 0.0
      %5404 = vmatprep.subr.mxu0 0.0
      %5405 = vmatpush1.msra.mxu0 0.0
      %5406 = vmatprep.subr.mxu0 0.0
      %5407 = vmatpush1.msra.mxu0 0.0
      %5408 = vmatprep.subr.mxu0 0.0
      %5409 = vmatpush1.msra.mxu0 0.0
      %5410 = vmatprep.subr.mxu0 0.0
      %5411 = vmatpush1.msra.mxu0 0.0
      %5412 = vmatprep.subr.mxu0 0.0
      %5413 = vmatpush1.msra.mxu0 0.0
      %5414 = vmatprep.subr.mxu0 0.0
      %5415 = vmatpush1.msra.mxu0 0.0
      %5416 = vmatprep.subr.mxu0 0.0
      %5417 = vmatpush1.msra.mxu0 0.0
      %5418 = vmatprep.subr.mxu0 0.0
      %5419 = vmatpush1.msra.mxu0 0.0
      %5420 = vmatprep.subr.mxu0 0.0
      %5421 = vmatpush1.msra.mxu0 0.0
      %5422 = vmatprep.subr.mxu0 0.0
      %5423 = vmatpush1.msra.mxu0 0.0
      %5424 = vmatprep.subr.mxu0 0.0
      %5425 = vmatpush1.msra.mxu0 0.0
      %5426 = vmatprep.subr.mxu0 0.0
      %5427 = vmatpush1.msra.mxu0 0.0
      %5428 = vmatprep.subr.mxu0 0.0
      %5429 = vmatpush1.msra.mxu0 0.0
      %5430 = vmatprep.subr.mxu0 0.0
      %5431 = vmatpush1.msra.mxu0 0.0
      %5432 = vmatprep.subr.mxu0 0.0
      %5433 = vmatpush1.msra.mxu0 0.0
      %5434 = vmatprep.subr.mxu0 0.0
      %5435 = vmatpush1.msra.mxu0 0.0
      %5436 = vmatprep.subr.mxu0 0.0
      %5437 = vmatpush1.msra.mxu0 0.0
      %5438 = vmatprep.subr.mxu0 0.0
      %5439 = vmatpush1.msra.mxu0 0.0
      %5440 = vmatprep.subr.mxu0 0.0
      %5441 = vmatpush1.msra.mxu0 0.0
      %5442 = vmatprep.subr.mxu0 0.0
      %5443 = vmatpush1.msra.mxu0 0.0
      %5444 = vmatprep.subr.mxu0 0.0
      %5445 = vmatpush1.msra.mxu0 0.0
      %5446 = vmatprep.subr.mxu0 0.0
      %5447 = vmatpush1.msra.mxu0 0.0
      %5448 = vmatprep.subr.mxu0 0.0
      %5449 = vmatpush1.msra.mxu0 0.0
      %5450 = vmatprep.subr.mxu0 0.0
      %5451 = vmatpush1.msra.mxu0 0.0
      %5452 = vmatprep.subr.mxu0 0.0
      %5453 = vmatpush1.msra.mxu0 0.0
      %5454 = vmatprep.subr.mxu0 0.0
      %5455 = vmatpush1.msra.mxu0 0.0
      %5456 = vmatprep.subr.mxu0 0.0
      %5457 = vmatpush1.msra.mxu0 0.0
      %5458 = vmatprep.mubr.f32.mxu0 0.0
      %5459 = vmatmul.mubr.f32.gmra.mrb[0].mxu0 %v4790
      %v5460 = vpop.f32.mrb[0].mxu0
      %v5461 = vadd.f32 0.0, %v5460
      %v5462 = vpop.f32.mrb[0].mxu0
      %5463 = vmatprep.mubr.f32.mxu0 0.0
      %5464 = vmatmul.mubr.f32.gmra.mrb[0].mxu0 %v4793
      %v5465 = vpop.f32.mrb[0].mxu0
      %v5466 = vadd.f32 0.0, %v5465
      %v5467 = vpop.f32.mrb[0].mxu0
      %5468 = vmatprep.mubr.f32.mxu0 0.0
      %5469 = vmatmul.mubr.f32.gmra.mrb[0].mxu0 %v4796
      %v5470 = vpop.f32.mrb[0].mxu0
      %v5471 = vadd.f32 0.0, %v5470
      %v5472 = vpop.f32.mrb[0].mxu0
      %5473 = vmatprep.mubr.f32.mxu0 0.0
      %5474 = vmatmul.mubr.f32.gmra.mrb[0].mxu0 %v4799
      %v5475 = vpop.f32.mrb[0].mxu0
      %v5476 = vadd.f32 0.0, %v5475
      %v5477 = vpop.f32.mrb[0].mxu0
      %5478 = vmatprep.mubr.f32.mxu0 0.0
      %5479 = vmatmul.mubr.f32.gmra.mrb[0].mxu0 %v4802
      %v5480 = vpop.f32.mrb[0].mxu0
      %v5481 = vadd.f32 0.0, %v5480
      %v5482 = vpop.f32.mrb[0].mxu0
      %5483 = vmatprep.mubr.f32.mxu0 0.0
      %5484 = vmatmul.mubr.f32.gmra.mrb[0].mxu0 %v4805
      %v5485 = vpop.f32.mrb[0].mxu0
      %v5486 = vadd.f32 0.0, %v5485
      %v5487 = vpop.f32.mrb[0].mxu0
      %5488 = vmatprep.mubr.f32.mxu0 0.0
      %5489 = vmatmul.mubr.f32.gmra.mrb[0].mxu0 %v4808
      %v5490 = vpop.f32.mrb[0].mxu0
      %v5491 = vadd.f32 0.0, %v5490
      %v5492 = vpop.f32.mrb[0].mxu0
      %5493 = vmatprep.mubr.f32.mxu0 0.0
      %5494 = vmatmul.mubr.f32.gmra.mrb[0].mxu0 %v4811
      %v5495 = vpop.f32.mrb[0].mxu0
      %v5496 = vadd.f32 0.0, %v5495
      %v5497 = vpop.f32.mrb[0].mxu0
      %5498 = vmatprep.mubr.f32.mxu0 0.0
      %5499 = vmatmul.mubr.f32.gmra.mrb[0].mxu0 %v4814
      %v5500 = vpop.f32.mrb[0].mxu0
      %v5501 = vadd.f32 0.0, %v5500
      %v5502 = vpop.f32.mrb[0].mxu0
      %5503 = vmatprep.mubr.f32.mxu0 0.0
      %5504 = vmatmul.mubr.f32.gmra.mrb[0].mxu0 %v4817
      %v5505 = vpop.f32.mrb[0].mxu0
      %v5506 = vadd.f32 0.0, %v5505
      %v5507 = vpop.f32.mrb[0].mxu0
      %5508 = vmatprep.mubr.f32.mxu0 0.0
      %5509 = vmatmul.mubr.f32.gmra.mrb[0].mxu0 %v4820
      %v5510 = vpop.f32.mrb[0].mxu0
      %v5511 = vadd.f32 0.0, %v5510
      %v5512 = vpop.f32.mrb[0].mxu0
      %5513 = vmatprep.mubr.f32.mxu0 0.0
      %5514 = vmatmul.mubr.f32.gmra.mrb[0].mxu0 %v4823
      %v5515 = vpop.f32.mrb[0].mxu0
      %v5516 = vadd.f32 0.0, %v5515
      %v5517 = vpop.f32.mrb[0].mxu0
      %5518 = vmatprep.mubr.f32.mxu0 0.0
      %5519 = vmatmul.mubr.f32.gmra.mrb[0].mxu0 %v4826
      %v5520 = vpop.f32.mrb[0].mxu0
      %v5521 = vadd.f32 0.0, %v5520
      %v5522 = vpop.f32.mrb[0].mxu0
      %5523 = vdwg.mxu0
      %5524 = vmatprep.subr.mxu0 0.0
      %5525 = vmatpush1.msra.mxu0 %v5127
      %5526 = vmatprep.subr.mxu0 0.0
      %5527 = vmatpush1.msra.mxu0 %v5128
      %5528 = vmatprep.subr.mxu0 0.0
      %5529 = vmatpush1.msra.mxu0 %v5129
      %5530 = vmatprep.subr.mxu0 0.0
      %5531 = vmatpush1.msra.mxu0 %v5132
      %5532 = vmatprep.subr.mxu0 0.0
      %5533 = vmatpush1.msra.mxu0 0.0
      %5534 = vmatprep.subr.mxu0 0.0
      %5535 = vmatpush1.msra.mxu0 0.0
      %5536 = vmatprep.subr.mxu0 0.0
      %5537 = vmatpush1.msra.mxu0 0.0
      %5538 = vmatprep.subr.mxu0 0.0
      %5539 = vmatpush1.msra.mxu0 0.0
      %5540 = vmatprep.subr.mxu0 0.0
      %5541 = vmatpush1.msra.mxu0 0.0
      %5542 = vmatprep.subr.mxu0 0.0
      %5543 = vmatpush1.msra.mxu0 0.0
      %5544 = vmatprep.subr.mxu0 0.0
      %5545 = vmatpush1.msra.mxu0 0.0
      %5546 = vmatprep.subr.mxu0 0.0
      %5547 = vmatpush1.msra.mxu0 0.0
      %5548 = vmatprep.subr.mxu0 0.0
      %5549 = vmatpush1.msra.mxu0 0.0
      %5550 = vmatprep.subr.mxu0 0.0
      %5551 = vmatpush1.msra.mxu0 0.0
      %5552 = vmatprep.subr.mxu0 0.0
      %5553 = vmatpush1.msra.mxu0 0.0
      %5554 = vmatprep.subr.mxu0 0.0
      %5555 = vmatpush1.msra.mxu0 0.0
      %5556 = vmatprep.subr.mxu0 0.0
      %5557 = vmatpush1.msra.mxu0 0.0
      %5558 = vmatprep.subr.mxu0 0.0
      %5559 = vmatpush1.msra.mxu0 0.0
      %5560 = vmatprep.subr.mxu0 0.0
      %5561 = vmatpush1.msra.mxu0 0.0
      %5562 = vmatprep.subr.mxu0 0.0
      %5563 = vmatpush1.msra.mxu0 0.0
      %5564 = vmatprep.subr.mxu0 0.0
      %5565 = vmatpush1.msra.mxu0 0.0
      %5566 = vmatprep.subr.mxu0 0.0
      %5567 = vmatpush1.msra.mxu0 0.0
      %5568 = vmatprep.subr.mxu0 0.0
      %5569 = vmatpush1.msra.mxu0 0.0
      %5570 = vmatprep.subr.mxu0 0.0
      %5571 = vmatpush1.msra.mxu0 0.0
      %5572 = vmatprep.subr.mxu0 0.0
      %5573 = vmatpush1.msra.mxu0 0.0
      %5574 = vmatprep.subr.mxu0 0.0
      %5575 = vmatpush1.msra.mxu0 0.0
      %5576 = vmatprep.subr.mxu0 0.0
      %5577 = vmatpush1.msra.mxu0 0.0
      %5578 = vmatprep.subr.mxu0 0.0
      %5579 = vmatpush1.msra.mxu0 0.0
      %5580 = vmatprep.subr.mxu0 0.0
      %5581 = vmatpush1.msra.mxu0 0.0
      %5582 = vmatprep.subr.mxu0 0.0
      %5583 = vmatpush1.msra.mxu0 0.0
      %5584 = vmatprep.subr.mxu0 0.0
      %5585 = vmatpush1.msra.mxu0 0.0
      %5586 = vmatprep.subr.mxu0 0.0
      %5587 = vmatpush1.msra.mxu0 0.0
      %5588 = vmatprep.mubr.f32.mxu0 0.0
      %5589 = vmatmul.mubr.f32.gmra.mrb[0].mxu0 %v4959
      %v5590 = vpop.f32.mrb[0].mxu0
      %v5591 = vadd.f32 0.0, %v5590
      %v5592 = vpop.f32.mrb[0].mxu0
      %5593 = vmatprep.mubr.f32.mxu0 0.0
      %5594 = vmatmul.mubr.f32.gmra.mrb[0].mxu0 %v4962
      %v5595 = vpop.f32.mrb[0].mxu0
      %v5596 = vadd.f32 0.0, %v5595
      %v5597 = vpop.f32.mrb[0].mxu0
      %5598 = vmatprep.mubr.f32.mxu0 0.0
      %5599 = vmatmul.mubr.f32.gmra.mrb[0].mxu0 %v4965
      %v5600 = vpop.f32.mrb[0].mxu0
      %v5601 = vadd.f32 0.0, %v5600
      %v5602 = vpop.f32.mrb[0].mxu0
      %5603 = vmatprep.mubr.f32.mxu0 0.0
      %5604 = vmatmul.mubr.f32.gmra.mrb[0].mxu0 %v4968
      %v5605 = vpop.f32.mrb[0].mxu0
      %v5606 = vadd.f32 0.0, %v5605
      %v5607 = vpop.f32.mrb[0].mxu0
      %5608 = vmatprep.mubr.f32.mxu0 0.0
      %5609 = vmatmul.mubr.f32.gmra.mrb[0].mxu0 %v4971
      %v5610 = vpop.f32.mrb[0].mxu0
      %v5611 = vadd.f32 0.0, %v5610
      %v5612 = vpop.f32.mrb[0].mxu0
      %5613 = vmatprep.mubr.f32.mxu0 0.0
      %5614 = vmatmul.mubr.f32.gmra.mrb[0].mxu0 %v4974
      %v5615 = vpop.f32.mrb[0].mxu0
      %v5616 = vadd.f32 0.0, %v5615
      %v5617 = vpop.f32.mrb[0].mxu0
      %5618 = vmatprep.mubr.f32.mxu0 0.0
      %5619 = vmatmul.mubr.f32.gmra.mrb[0].mxu0 %v4977
      %v5620 = vpop.f32.mrb[0].mxu0
      %v5621 = vadd.f32 0.0, %v5620
      %v5622 = vpop.f32.mrb[0].mxu0
      %5623 = vmatprep.mubr.f32.mxu0 0.0
      %5624 = vmatmul.mubr.f32.gmra.mrb[0].mxu0 %v4980
      %v5625 = vpop.f32.mrb[0].mxu0
      %v5626 = vadd.f32 0.0, %v5625
      %v5627 = vpop.f32.mrb[0].mxu0
      %5628 = vmatprep.mubr.f32.mxu0 0.0
      %5629 = vmatmul.mubr.f32.gmra.mrb[0].mxu0 %v4983
      %v5630 = vpop.f32.mrb[0].mxu0
      %v5631 = vadd.f32 0.0, %v5630
      %v5632 = vpop.f32.mrb[0].mxu0
      %5633 = vmatprep.mubr.f32.mxu0 0.0
      %5634 = vmatmul.mubr.f32.gmra.mrb[0].mxu0 %v4986
      %v5635 = vpop.f32.mrb[0].mxu0
      %v5636 = vadd.f32 0.0, %v5635
      %v5637 = vpop.f32.mrb[0].mxu0
      %5638 = vmatprep.mubr.f32.mxu0 0.0
      %5639 = vmatmul.mubr.f32.gmra.mrb[0].mxu0 %v4989
      %v5640 = vpop.f32.mrb[0].mxu0
      %v5641 = vadd.f32 0.0, %v5640
      %v5642 = vpop.f32.mrb[0].mxu0
      %5643 = vmatprep.mubr.f32.mxu0 0.0
      %5644 = vmatmul.mubr.f32.gmra.mrb[0].mxu0 %v4992
      %v5645 = vpop.f32.mrb[0].mxu0
      %v5646 = vadd.f32 0.0, %v5645
      %v5647 = vpop.f32.mrb[0].mxu0
      %5648 = vmatprep.mubr.f32.mxu0 0.0
      %5649 = vmatmul.mubr.f32.gmra.mrb[0].mxu0 %v4995
      %v5650 = vpop.f32.mrb[0].mxu0
      %v5651 = vadd.f32 0.0, %v5650
      %v5652 = vpop.f32.mrb[0].mxu0
      %5653 = vdwg.mxu0
      %v5654 = vmax.f32 %v4557, %v5201
      %v5655 = vmax.f32 %v4562, %v5206
      %v5656 = vmax.f32 %v4567, %v5211
      %v5657 = vmax.f32 %v4572, %v5216
      %v5658 = vmax.f32 %v4577, %v5221
      %v5659 = vmax.f32 %v4582, %v5226
      %v5660 = vmax.f32 %v4587, %v5231
      %v5661 = vmax.f32 %v4592, %v5236
      %v5662 = vmax.f32 %v4597, %v5241
      %v5663 = vmax.f32 %v4602, %v5246
      %v5664 = vmax.f32 %v4607, %v5251
      %v5665 = vmax.f32 %v4612, %v5256
      %v5666 = vmax.f32 %v4617, %v5261
      %v5667 = vmax.f32 %v4726, %v5331
      %v5668 = vmax.f32 %v4731, %v5336
      %v5669 = vmax.f32 %v4736, %v5341
      %v5670 = vmax.f32 %v4741, %v5346
      %v5671 = vmax.f32 %v4746, %v5351
      %v5672 = vmax.f32 %v4751, %v5356
      %v5673 = vmax.f32 %v4756, %v5361
      %v5674 = vmax.f32 %v4761, %v5366
      %v5675 = vmax.f32 %v4766, %v5371
      %v5676 = vmax.f32 %v4771, %v5376
      %v5677 = vmax.f32 %v4776, %v5381
      %v5678 = vmax.f32 %v4781, %v5386
      %v5679 = vmax.f32 %v4786, %v5391
      %v5680 = vmax.f32 %v4895, %v5461
      %v5681 = vmax.f32 %v4900, %v5466
      %v5682 = vmax.f32 %v4905, %v5471
      %v5683 = vmax.f32 %v4910, %v5476
      %v5684 = vmax.f32 %v4915, %v5481
      %v5685 = vmax.f32 %v4920, %v5486
      %v5686 = vmax.f32 %v4925, %v5491
      %v5687 = vmax.f32 %v4930, %v5496
      %v5688 = vmax.f32 %v4935, %v5501
      %v5689 = vmax.f32 %v4940, %v5506
      %v5690 = vmax.f32 %v4945, %v5511
      %v5691 = vmax.f32 %v4950, %v5516
      %v5692 = vmax.f32 %v4955, %v5521
      %v5693 = vmax.f32 %v5064, %v5591
      %v5694 = vmax.f32 %v5069, %v5596
      %v5695 = vmax.f32 %v5074, %v5601
      %v5696 = vmax.f32 %v5079, %v5606
      %v5697 = vmax.f32 %v5084, %v5611
      %v5698 = vmax.f32 %v5089, %v5616
      %v5699 = vmax.f32 %v5094, %v5621
      %v5700 = vmax.f32 %v5099, %v5626
      %v5701 = vmax.f32 %v5104, %v5631
      %v5702 = vmax.f32 %v5109, %v5636
      %v5703 = vmax.f32 %v5114, %v5641
      %v5704 = vmax.f32 %v5119, %v5646
      %v5705 = vmax.f32 %v5124, %v5651
      %v5706 = vld [vmem:[%s3] sm:$0xff]
      %v5707 = vld [vmem:[%s3 + $0x8] sm:$0xff]
      %v5708 = vld [vmem:[%s3 + $0x10] sm:$0xff]
      %v5709 = vld [vmem:[%s3 + $0x18] sm:$0xff]
      %v5710 = vld [vmem:[%s3 + $0x20] sm:$0xff]
      %v5711 = vld [vmem:[%s3 + $0x28] sm:$0xff]
      %v5712 = vld [vmem:[%s3 + $0x30] sm:$0xff]
      %v5713 = vld [vmem:[%s3 + $0x38] sm:$0xff]
      %v5714 = vld [vmem:[%s3 + $0x40] sm:$0xff]
      %v5715 = vld [vmem:[%s3 + $0x48] sm:$0xff]
      %s5716 = scalar_lea.vmem %s3, 80
      %v5717 = vld [vmem:[%s5716] sm:$0xff]
      %v5718 = vld [vmem:[%s5716 + $0x8] sm:$0xff]
      %v5719 = vld [vmem:[%s5716 + $0x10] sm:$0xff]
      %v5720 = vld [vmem:[%s5716 + $0x18] sm:$0xff]
      %v5721 = vld [vmem:[%s5716 + $0x20] sm:$0xff]
      %v5722 = vld [vmem:[%s5716 + $0x28] sm:$0xff]
      %v5723 = vld [vmem:[%s5716 + $0x30] sm:$0xff]
      %v5724 = vld [vmem:[%s5716 + $0x38] sm:$0xff]
      %v5725 = vld [vmem:[%s5716 + $0x40] sm:$0xff]
      %v5726 = vld [vmem:[%s5716 + $0x48] sm:$0xff]
      %5740 = vrot.lane.b32.xlu0 %v5654, 127
      %v5741 = vpop.permute.xlu0 %5740
      %5742 = vrot.lane.b32.xlu0 %v5655, 127
      %v5743 = vpop.permute.xlu0 %5742
      %5744 = vrot.lane.b32.xlu0 %v5656, 127
      %v5745 = vpop.permute.xlu0 %5744
      %5746 = vrot.lane.b32.xlu0 %v5657, 127
      %v5747 = vpop.permute.xlu0 %5746
      %5748 = vrot.lane.b32.xlu0 %v5658, 127
      %v5749 = vpop.permute.xlu0 %5748
      %5750 = vrot.lane.b32.xlu0 %v5659, 127
      %v5751 = vpop.permute.xlu0 %5750
      %5752 = vrot.lane.b32.xlu0 %v5660, 127
      %v5753 = vpop.permute.xlu0 %5752
      %5754 = vrot.lane.b32.xlu0 %v5661, 127
      %v5755 = vpop.permute.xlu0 %5754
      %5756 = vrot.lane.b32.xlu0 %v5662, 127
      %v5757 = vpop.permute.xlu0 %5756
      %5758 = vrot.lane.b32.xlu0 %v5663, 127
      %v5759 = vpop.permute.xlu0 %5758
      %5760 = vrot.lane.b32.xlu0 %v5664, 127
      %v5761 = vpop.permute.xlu0 %5760
      %5762 = vrot.lane.b32.xlu0 %v5665, 127
      %v5763 = vpop.permute.xlu0 %5762
      %5764 = vrot.lane.b32.xlu0 %v5666, 127
      %v5765 = vpop.permute.xlu0 %5764
      %vm5779 = vcmask 850944
      %v5781 = vsel %vm5779, %v5717, 0
      %v5784 = vsel %vm5779, %v5718, 0
      %v5787 = vsel %vm5779, %v5719, 0
      %v5790 = vsel %vm5779, %v5720, 0
      %v5793 = vsel %vm5779, %v5721, 0
      %v5796 = vsel %vm5779, %v5722, 0
      %v5799 = vsel %vm5779, %v5723, 0
      %v5802 = vsel %vm5779, %v5724, 0
      %v5805 = vsel %vm5779, %v5725, 0
      %v5808 = vsel %vm5779, %v5726, 0
      %5810 = vmatprep.subr.mxu0 0.0
      %5811 = vmatpush1.msra.mxu0 %v5741
      %5812 = vmatprep.subr.mxu0 0.0
      %5813 = vmatpush1.msra.mxu0 %v5743
      %5814 = vmatprep.subr.mxu0 0.0
      %5815 = vmatpush1.msra.mxu0 %v5745
      %5816 = vmatprep.subr.mxu0 0.0
      %5817 = vmatpush1.msra.mxu0 %v5747
      %5818 = vmatprep.subr.mxu0 0.0
      %5819 = vmatpush1.msra.mxu0 %v5749
      %5820 = vmatprep.subr.mxu0 0.0
      %5821 = vmatpush1.msra.mxu0 %v5751
      %5822 = vmatprep.subr.mxu0 0.0
      %5823 = vmatpush1.msra.mxu0 %v5753
      %5824 = vmatprep.subr.mxu0 0.0
      %5825 = vmatpush1.msra.mxu0 %v5755
      %5826 = vmatprep.subr.mxu0 0.0
      %5827 = vmatpush1.msra.mxu0 %v5757
      %5828 = vmatprep.subr.mxu0 0.0
      %5829 = vmatpush1.msra.mxu0 %v5759
      %5830 = vmatprep.subr.mxu0 0.0
      %5831 = vmatpush1.msra.mxu0 %v5761
      %5832 = vmatprep.subr.mxu0 0.0
      %5833 = vmatpush1.msra.mxu0 %v5763
      %5834 = vmatprep.subr.mxu0 0.0
      %5835 = vmatpush1.msra.mxu0 %v5765
      %5836 = vmatprep.subr.mxu0 0.0
      %5837 = vmatpush1.msra.mxu0 0.0
      %5838 = vmatprep.subr.mxu0 0.0
      %5839 = vmatpush1.msra.mxu0 0.0
      %5840 = vmatprep.subr.mxu0 0.0
      %5841 = vmatpush1.msra.mxu0 0.0
      %5842 = vmatprep.subr.mxu0 0.0
      %5843 = vmatpush1.msra.mxu0 0.0
      %5844 = vmatprep.subr.mxu0 0.0
      %5845 = vmatpush1.msra.mxu0 0.0
      %5846 = vmatprep.subr.mxu0 0.0
      %5847 = vmatpush1.msra.mxu0 0.0
      %5848 = vmatprep.subr.mxu0 0.0
      %5849 = vmatpush1.msra.mxu0 0.0
      %5850 = vmatprep.subr.mxu0 0.0
      %5851 = vmatpush1.msra.mxu0 0.0
      %5852 = vmatprep.subr.mxu0 0.0
      %5853 = vmatpush1.msra.mxu0 0.0
      %5854 = vmatprep.subr.mxu0 0.0
      %5855 = vmatpush1.msra.mxu0 0.0
      %5856 = vmatprep.subr.mxu0 0.0
      %5857 = vmatpush1.msra.mxu0 0.0
      %5858 = vmatprep.subr.mxu0 0.0
      %5859 = vmatpush1.msra.mxu0 0.0
      %5860 = vmatprep.subr.mxu0 0.0
      %5861 = vmatpush1.msra.mxu0 0.0
      %5862 = vmatprep.subr.mxu0 0.0
      %5863 = vmatpush1.msra.mxu0 0.0
      %5864 = vmatprep.subr.mxu0 0.0
      %5865 = vmatpush1.msra.mxu0 0.0
      %5866 = vmatprep.subr.mxu0 0.0
      %5867 = vmatpush1.msra.mxu0 0.0
      %5868 = vmatprep.subr.mxu0 0.0
      %5869 = vmatpush1.msra.mxu0 0.0
      %5870 = vmatprep.subr.mxu0 0.0
      %5871 = vmatpush1.msra.mxu0 0.0
      %5872 = vmatprep.subr.mxu0 0.0
      %5873 = vmatpush1.msra.mxu0 0.0
      %5874 = vmatprep.mubr.f32.mxu0 0.0
      %5875 = vmatmul.mubr.f32.gmra.mrb[0].mxu0 %v5781
      %v5876 = vpop.f32.mrb[0].mxu0
      %v5877 = vadd.f32 0.0, %v5876
      %v5878 = vpop.f32.mrb[0].mxu0
      %5879 = vmatprep.mubr.f32.mxu0 0.0
      %5880 = vmatmul.mubr.f32.gmra.mrb[0].mxu0 %v5784
      %v5881 = vpop.f32.mrb[0].mxu0
      %v5882 = vadd.f32 0.0, %v5881
      %v5883 = vpop.f32.mrb[0].mxu0
      %5884 = vmatprep.mubr.f32.mxu0 0.0
      %5885 = vmatmul.mubr.f32.gmra.mrb[0].mxu0 %v5787
      %v5886 = vpop.f32.mrb[0].mxu0
      %v5887 = vadd.f32 0.0, %v5886
      %v5888 = vpop.f32.mrb[0].mxu0
      %5889 = vmatprep.mubr.f32.mxu0 0.0
      %5890 = vmatmul.mubr.f32.gmra.mrb[0].mxu0 %v5790
      %v5891 = vpop.f32.mrb[0].mxu0
      %v5892 = vadd.f32 0.0, %v5891
      %v5893 = vpop.f32.mrb[0].mxu0
      %5894 = vmatprep.mubr.f32.mxu0 0.0
      %5895 = vmatmul.mubr.f32.gmra.mrb[0].mxu0 %v5793
      %v5896 = vpop.f32.mrb[0].mxu0
      %v5897 = vadd.f32 0.0, %v5896
      %v5898 = vpop.f32.mrb[0].mxu0
      %5899 = vmatprep.mubr.f32.mxu0 0.0
      %5900 = vmatmul.mubr.f32.gmra.mrb[0].mxu0 %v5796
      %v5901 = vpop.f32.mrb[0].mxu0
      %v5902 = vadd.f32 0.0, %v5901
      %v5903 = vpop.f32.mrb[0].mxu0
      %5904 = vmatprep.mubr.f32.mxu0 0.0
      %5905 = vmatmul.mubr.f32.gmra.mrb[0].mxu0 %v5799
      %v5906 = vpop.f32.mrb[0].mxu0
      %v5907 = vadd.f32 0.0, %v5906
      %v5908 = vpop.f32.mrb[0].mxu0
      %5909 = vmatprep.mubr.f32.mxu0 0.0
      %5910 = vmatmul.mubr.f32.gmra.mrb[0].mxu0 %v5802
      %v5911 = vpop.f32.mrb[0].mxu0
      %v5912 = vadd.f32 0.0, %v5911
      %v5913 = vpop.f32.mrb[0].mxu0
      %5914 = vmatprep.mubr.f32.mxu0 0.0
      %5915 = vmatmul.mubr.f32.gmra.mrb[0].mxu0 %v5805
      %v5916 = vpop.f32.mrb[0].mxu0
      %v5917 = vadd.f32 0.0, %v5916
      %v5918 = vpop.f32.mrb[0].mxu0
      %5919 = vmatprep.mubr.f32.mxu0 0.0
      %5920 = vmatmul.mubr.f32.gmra.mrb[0].mxu0 %v5808
      %v5921 = vpop.f32.mrb[0].mxu0
      %v5922 = vadd.f32 0.0, %v5921
      %v5923 = vpop.f32.mrb[0].mxu0
      %5924 = vdwg.mxu0
      %5938 = vrot.lane.b32.xlu0 %v5667, 127
      %v5939 = vpop.permute.xlu0 %5938
      %5940 = vrot.lane.b32.xlu0 %v5668, 127
      %v5941 = vpop.permute.xlu0 %5940
      %5942 = vrot.lane.b32.xlu0 %v5669, 127
      %v5943 = vpop.permute.xlu0 %5942
      %5944 = vrot.lane.b32.xlu0 %v5670, 127
      %v5945 = vpop.permute.xlu0 %5944
      %5946 = vrot.lane.b32.xlu0 %v5671, 127
      %v5947 = vpop.permute.xlu0 %5946
      %5948 = vrot.lane.b32.xlu0 %v5672, 127
      %v5949 = vpop.permute.xlu0 %5948
      %5950 = vrot.lane.b32.xlu0 %v5673, 127
      %v5951 = vpop.permute.xlu0 %5950
      %5952 = vrot.lane.b32.xlu0 %v5674, 127
      %v5953 = vpop.permute.xlu0 %5952
      %5954 = vrot.lane.b32.xlu0 %v5675, 127
      %v5955 = vpop.permute.xlu0 %5954
      %5956 = vrot.lane.b32.xlu0 %v5676, 127
      %v5957 = vpop.permute.xlu0 %5956
      %5958 = vrot.lane.b32.xlu0 %v5677, 127
      %v5959 = vpop.permute.xlu0 %5958
      %5960 = vrot.lane.b32.xlu0 %v5678, 127
      %v5961 = vpop.permute.xlu0 %5960
      %5962 = vrot.lane.b32.xlu0 %v5679, 127
      %v5963 = vpop.permute.xlu0 %5962
      %5977 = vmatprep.subr.mxu0 0.0
      %5978 = vmatpush1.msra.mxu0 %v5939
      %5979 = vmatprep.subr.mxu0 0.0
      %5980 = vmatpush1.msra.mxu0 %v5941
      %5981 = vmatprep.subr.mxu0 0.0
      %5982 = vmatpush1.msra.mxu0 %v5943
      %5983 = vmatprep.subr.mxu0 0.0
      %5984 = vmatpush1.msra.mxu0 %v5945
      %5985 = vmatprep.subr.mxu0 0.0
      %5986 = vmatpush1.msra.mxu0 %v5947
      %5987 = vmatprep.subr.mxu0 0.0
      %5988 = vmatpush1.msra.mxu0 %v5949
      %5989 = vmatprep.subr.mxu0 0.0
      %5990 = vmatpush1.msra.mxu0 %v5951
      %5991 = vmatprep.subr.mxu0 0.0
      %5992 = vmatpush1.msra.mxu0 %v5953
      %5993 = vmatprep.subr.mxu0 0.0
      %5994 = vmatpush1.msra.mxu0 %v5955
      %5995 = vmatprep.subr.mxu0 0.0
      %5996 = vmatpush1.msra.mxu0 %v5957
      %5997 = vmatprep.subr.mxu0 0.0
      %5998 = vmatpush1.msra.mxu0 %v5959
      %5999 = vmatprep.subr.mxu0 0.0
      %6000 = vmatpush1.msra.mxu0 %v5961
      %6001 = vmatprep.subr.mxu0 0.0
      %6002 = vmatpush1.msra.mxu0 %v5963
      %6003 = vmatprep.subr.mxu0 0.0
      %6004 = vmatpush1.msra.mxu0 0.0
      %6005 = vmatprep.subr.mxu0 0.0
      %6006 = vmatpush1.msra.mxu0 0.0
      %6007 = vmatprep.subr.mxu0 0.0
      %6008 = vmatpush1.msra.mxu0 0.0
      %6009 = vmatprep.subr.mxu0 0.0
      %6010 = vmatpush1.msra.mxu0 0.0
      %6011 = vmatprep.subr.mxu0 0.0
      %6012 = vmatpush1.msra.mxu0 0.0
      %6013 = vmatprep.subr.mxu0 0.0
      %6014 = vmatpush1.msra.mxu0 0.0
      %6015 = vmatprep.subr.mxu0 0.0
      %6016 = vmatpush1.msra.mxu0 0.0
      %6017 = vmatprep.subr.mxu0 0.0
      %6018 = vmatpush1.msra.mxu0 0.0
      %6019 = vmatprep.subr.mxu0 0.0
      %6020 = vmatpush1.msra.mxu0 0.0
      %6021 = vmatprep.subr.mxu0 0.0
      %6022 = vmatpush1.msra.mxu0 0.0
      %6023 = vmatprep.subr.mxu0 0.0
      %6024 = vmatpush1.msra.mxu0 0.0
      %6025 = vmatprep.subr.mxu0 0.0
      %6026 = vmatpush1.msra.mxu0 0.0
      %6027 = vmatprep.subr.mxu0 0.0
      %6028 = vmatpush1.msra.mxu0 0.0
      %6029 = vmatprep.subr.mxu0 0.0
      %6030 = vmatpush1.msra.mxu0 0.0
      %6031 = vmatprep.subr.mxu0 0.0
      %6032 = vmatpush1.msra.mxu0 0.0
      %6033 = vmatprep.subr.mxu0 0.0
      %6034 = vmatpush1.msra.mxu0 0.0
      %6035 = vmatprep.subr.mxu0 0.0
      %6036 = vmatpush1.msra.mxu0 0.0
      %6037 = vmatprep.subr.mxu0 0.0
      %6038 = vmatpush1.msra.mxu0 0.0
      %6039 = vmatprep.subr.mxu0 0.0
      %6040 = vmatpush1.msra.mxu0 0.0
      %6041 = vmatprep.mubr.f32.mxu0 0.0
      %6042 = vmatmul.mubr.f32.gmra.mrb[0].mxu0 %v5781
      %v6043 = vpop.f32.mrb[0].mxu0
      %v6044 = vadd.f32 0.0, %v6043
      %v6045 = vpop.f32.mrb[0].mxu0
      %6046 = vmatprep.mubr.f32.mxu0 0.0
      %6047 = vmatmul.mubr.f32.gmra.mrb[0].mxu0 %v5784
      %v6048 = vpop.f32.mrb[0].mxu0
      %v6049 = vadd.f32 0.0, %v6048
      %v6050 = vpop.f32.mrb[0].mxu0
      %6051 = vmatprep.mubr.f32.mxu0 0.0
      %6052 = vmatmul.mubr.f32.gmra.mrb[0].mxu0 %v5787
      %v6053 = vpop.f32.mrb[0].mxu0
      %v6054 = vadd.f32 0.0, %v6053
      %v6055 = vpop.f32.mrb[0].mxu0
      %6056 = vmatprep.mubr.f32.mxu0 0.0
      %6057 = vmatmul.mubr.f32.gmra.mrb[0].mxu0 %v5790
      %v6058 = vpop.f32.mrb[0].mxu0
      %v6059 = vadd.f32 0.0, %v6058
      %v6060 = vpop.f32.mrb[0].mxu0
      %6061 = vmatprep.mubr.f32.mxu0 0.0
      %6062 = vmatmul.mubr.f32.gmra.mrb[0].mxu0 %v5793
      %v6063 = vpop.f32.mrb[0].mxu0
      %v6064 = vadd.f32 0.0, %v6063
      %v6065 = vpop.f32.mrb[0].mxu0
      %6066 = vmatprep.mubr.f32.mxu0 0.0
      %6067 = vmatmul.mubr.f32.gmra.mrb[0].mxu0 %v5796
      %v6068 = vpop.f32.mrb[0].mxu0
      %v6069 = vadd.f32 0.0, %v6068
      %v6070 = vpop.f32.mrb[0].mxu0
      %6071 = vmatprep.mubr.f32.mxu0 0.0
      %6072 = vmatmul.mubr.f32.gmra.mrb[0].mxu0 %v5799
      %v6073 = vpop.f32.mrb[0].mxu0
      %v6074 = vadd.f32 0.0, %v6073
      %v6075 = vpop.f32.mrb[0].mxu0
      %6076 = vmatprep.mubr.f32.mxu0 0.0
      %6077 = vmatmul.mubr.f32.gmra.mrb[0].mxu0 %v5802
      %v6078 = vpop.f32.mrb[0].mxu0
      %v6079 = vadd.f32 0.0, %v6078
      %v6080 = vpop.f32.mrb[0].mxu0
      %6081 = vmatprep.mubr.f32.mxu0 0.0
      %6082 = vmatmul.mubr.f32.gmra.mrb[0].mxu0 %v5805
      %v6083 = vpop.f32.mrb[0].mxu0
      %v6084 = vadd.f32 0.0, %v6083
      %v6085 = vpop.f32.mrb[0].mxu0
      %6086 = vmatprep.mubr.f32.mxu0 0.0
      %6087 = vmatmul.mubr.f32.gmra.mrb[0].mxu0 %v5808
      %v6088 = vpop.f32.mrb[0].mxu0
      %v6089 = vadd.f32 0.0, %v6088
      %v6090 = vpop.f32.mrb[0].mxu0
      %6091 = vdwg.mxu0
      %6105 = vrot.lane.b32.xlu0 %v5680, 127
      %v6106 = vpop.permute.xlu0 %6105
      %6107 = vrot.lane.b32.xlu0 %v5681, 127
      %v6108 = vpop.permute.xlu0 %6107
      %6109 = vrot.lane.b32.xlu0 %v5682, 127
      %v6110 = vpop.permute.xlu0 %6109
      %6111 = vrot.lane.b32.xlu0 %v5683, 127
      %v6112 = vpop.permute.xlu0 %6111
      %6113 = vrot.lane.b32.xlu0 %v5684, 127
      %v6114 = vpop.permute.xlu0 %6113
      %6115 = vrot.lane.b32.xlu0 %v5685, 127
      %v6116 = vpop.permute.xlu0 %6115
      %6117 = vrot.lane.b32.xlu0 %v5686, 127
      %v6118 = vpop.permute.xlu0 %6117
      %6119 = vrot.lane.b32.xlu0 %v5687, 127
      %v6120 = vpop.permute.xlu0 %6119
      %6121 = vrot.lane.b32.xlu0 %v5688, 127
      %v6122 = vpop.permute.xlu0 %6121
      %6123 = vrot.lane.b32.xlu0 %v5689, 127
      %v6124 = vpop.permute.xlu0 %6123
      %6125 = vrot.lane.b32.xlu0 %v5690, 127
      %v6126 = vpop.permute.xlu0 %6125
      %6127 = vrot.lane.b32.xlu0 %v5691, 127
      %v6128 = vpop.permute.xlu0 %6127
      %6129 = vrot.lane.b32.xlu0 %v5692, 127
      %v6130 = vpop.permute.xlu0 %6129
      %6144 = vmatprep.subr.mxu0 0.0
      %6145 = vmatpush1.msra.mxu0 %v6106
      %6146 = vmatprep.subr.mxu0 0.0
      %6147 = vmatpush1.msra.mxu0 %v6108
      %6148 = vmatprep.subr.mxu0 0.0
      %6149 = vmatpush1.msra.mxu0 %v6110
      %6150 = vmatprep.subr.mxu0 0.0
      %6151 = vmatpush1.msra.mxu0 %v6112
      %6152 = vmatprep.subr.mxu0 0.0
      %6153 = vmatpush1.msra.mxu0 %v6114
      %6154 = vmatprep.subr.mxu0 0.0
      %6155 = vmatpush1.msra.mxu0 %v6116
      %6156 = vmatprep.subr.mxu0 0.0
      %6157 = vmatpush1.msra.mxu0 %v6118
      %6158 = vmatprep.subr.mxu0 0.0
      %6159 = vmatpush1.msra.mxu0 %v6120
      %6160 = vmatprep.subr.mxu0 0.0
      %6161 = vmatpush1.msra.mxu0 %v6122
      %6162 = vmatprep.subr.mxu0 0.0
      %6163 = vmatpush1.msra.mxu0 %v6124
      %6164 = vmatprep.subr.mxu0 0.0
      %6165 = vmatpush1.msra.mxu0 %v6126
      %6166 = vmatprep.subr.mxu0 0.0
      %6167 = vmatpush1.msra.mxu0 %v6128
      %6168 = vmatprep.subr.mxu0 0.0
      %6169 = vmatpush1.msra.mxu0 %v6130
      %6170 = vmatprep.subr.mxu0 0.0
      %6171 = vmatpush1.msra.mxu0 0.0
      %6172 = vmatprep.subr.mxu0 0.0
      %6173 = vmatpush1.msra.mxu0 0.0
      %6174 = vmatprep.subr.mxu0 0.0
      %6175 = vmatpush1.msra.mxu0 0.0
      %6176 = vmatprep.subr.mxu0 0.0
      %6177 = vmatpush1.msra.mxu0 0.0
      %6178 = vmatprep.subr.mxu0 0.0
      %6179 = vmatpush1.msra.mxu0 0.0
      %6180 = vmatprep.subr.mxu0 0.0
      %6181 = vmatpush1.msra.mxu0 0.0
      %6182 = vmatprep.subr.mxu0 0.0
      %6183 = vmatpush1.msra.mxu0 0.0
      %6184 = vmatprep.subr.mxu0 0.0
      %6185 = vmatpush1.msra.mxu0 0.0
      %6186 = vmatprep.subr.mxu0 0.0
      %6187 = vmatpush1.msra.mxu0 0.0
      %6188 = vmatprep.subr.mxu0 0.0
      %6189 = vmatpush1.msra.mxu0 0.0
      %6190 = vmatprep.subr.mxu0 0.0
      %6191 = vmatpush1.msra.mxu0 0.0
      %6192 = vmatprep.subr.mxu0 0.0
      %6193 = vmatpush1.msra.mxu0 0.0
      %6194 = vmatprep.subr.mxu0 0.0
      %6195 = vmatpush1.msra.mxu0 0.0
      %6196 = vmatprep.subr.mxu0 0.0
      %6197 = vmatpush1.msra.mxu0 0.0
      %6198 = vmatprep.subr.mxu0 0.0
      %6199 = vmatpush1.msra.mxu0 0.0
      %6200 = vmatprep.subr.mxu0 0.0
      %6201 = vmatpush1.msra.mxu0 0.0
      %6202 = vmatprep.subr.mxu0 0.0
      %6203 = vmatpush1.msra.mxu0 0.0
      %6204 = vmatprep.subr.mxu0 0.0
      %6205 = vmatpush1.msra.mxu0 0.0
      %6206 = vmatprep.subr.mxu0 0.0
      %6207 = vmatpush1.msra.mxu0 0.0
      %6208 = vmatprep.mubr.f32.mxu0 0.0
      %6209 = vmatmul.mubr.f32.gmra.mrb[0].mxu0 %v5781
      %v6210 = vpop.f32.mrb[0].mxu0
      %v6211 = vadd.f32 0.0, %v6210
      %v6212 = vpop.f32.mrb[0].mxu0
      %6213 = vmatprep.mubr.f32.mxu0 0.0
      %6214 = vmatmul.mubr.f32.gmra.mrb[0].mxu0 %v5784
      %v6215 = vpop.f32.mrb[0].mxu0
      %v6216 = vadd.f32 0.0, %v6215
      %v6217 = vpop.f32.mrb[0].mxu0
      %6218 = vmatprep.mubr.f32.mxu0 0.0
      %6219 = vmatmul.mubr.f32.gmra.mrb[0].mxu0 %v5787
      %v6220 = vpop.f32.mrb[0].mxu0
      %v6221 = vadd.f32 0.0, %v6220
      %v6222 = vpop.f32.mrb[0].mxu0
      %6223 = vmatprep.mubr.f32.mxu0 0.0
      %6224 = vmatmul.mubr.f32.gmra.mrb[0].mxu0 %v5790
      %v6225 = vpop.f32.mrb[0].mxu0
      %v6226 = vadd.f32 0.0, %v6225
      %v6227 = vpop.f32.mrb[0].mxu0
      %6228 = vmatprep.mubr.f32.mxu0 0.0
      %6229 = vmatmul.mubr.f32.gmra.mrb[0].mxu0 %v5793
      %v6230 = vpop.f32.mrb[0].mxu0
      %v6231 = vadd.f32 0.0, %v6230
      %v6232 = vpop.f32.mrb[0].mxu0
      %6233 = vmatprep.mubr.f32.mxu0 0.0
      %6234 = vmatmul.mubr.f32.gmra.mrb[0].mxu0 %v5796
      %v6235 = vpop.f32.mrb[0].mxu0
      %v6236 = vadd.f32 0.0, %v6235
      %v6237 = vpop.f32.mrb[0].mxu0
      %6238 = vmatprep.mubr.f32.mxu0 0.0
      %6239 = vmatmul.mubr.f32.gmra.mrb[0].mxu0 %v5799
      %v6240 = vpop.f32.mrb[0].mxu0
      %v6241 = vadd.f32 0.0, %v6240
      %v6242 = vpop.f32.mrb[0].mxu0
      %6243 = vmatprep.mubr.f32.mxu0 0.0
      %6244 = vmatmul.mubr.f32.gmra.mrb[0].mxu0 %v5802
      %v6245 = vpop.f32.mrb[0].mxu0
      %v6246 = vadd.f32 0.0, %v6245
      %v6247 = vpop.f32.mrb[0].mxu0
      %6248 = vmatprep.mubr.f32.mxu0 0.0
      %6249 = vmatmul.mubr.f32.gmra.mrb[0].mxu0 %v5805
      %v6250 = vpop.f32.mrb[0].mxu0
      %v6251 = vadd.f32 0.0, %v6250
      %v6252 = vpop.f32.mrb[0].mxu0
      %6253 = vmatprep.mubr.f32.mxu0 0.0
      %6254 = vmatmul.mubr.f32.gmra.mrb[0].mxu0 %v5808
      %v6255 = vpop.f32.mrb[0].mxu0
      %v6256 = vadd.f32 0.0, %v6255
      %v6257 = vpop.f32.mrb[0].mxu0
      %6258 = vdwg.mxu0
      %6272 = vrot.lane.b32.xlu0 %v5693, 127
      %v6273 = vpop.permute.xlu0 %6272
      %6274 = vrot.lane.b32.xlu0 %v5694, 127
      %v6275 = vpop.permute.xlu0 %6274
      %6276 = vrot.lane.b32.xlu0 %v5695, 127
      %v6277 = vpop.permute.xlu0 %6276
      %6278 = vrot.lane.b32.xlu0 %v5696, 127
      %v6279 = vpop.permute.xlu0 %6278
      %6280 = vrot.lane.b32.xlu0 %v5697, 127
      %v6281 = vpop.permute.xlu0 %6280
      %6282 = vrot.lane.b32.xlu0 %v5698, 127
      %v6283 = vpop.permute.xlu0 %6282
      %6284 = vrot.lane.b32.xlu0 %v5699, 127
      %v6285 = vpop.permute.xlu0 %6284
      %6286 = vrot.lane.b32.xlu0 %v5700, 127
      %v6287 = vpop.permute.xlu0 %6286
      %6288 = vrot.lane.b32.xlu0 %v5701, 127
      %v6289 = vpop.permute.xlu0 %6288
      %6290 = vrot.lane.b32.xlu0 %v5702, 127
      %v6291 = vpop.permute.xlu0 %6290
      %6292 = vrot.lane.b32.xlu0 %v5703, 127
      %v6293 = vpop.permute.xlu0 %6292
      %6294 = vrot.lane.b32.xlu0 %v5704, 127
      %v6295 = vpop.permute.xlu0 %6294
      %6296 = vrot.lane.b32.xlu0 %v5705, 127
      %v6297 = vpop.permute.xlu0 %6296
      %6311 = vmatprep.subr.mxu0 0.0
      %6312 = vmatpush1.msra.mxu0 %v6273
      %6313 = vmatprep.subr.mxu0 0.0
      %6314 = vmatpush1.msra.mxu0 %v6275
      %6315 = vmatprep.subr.mxu0 0.0
      %6316 = vmatpush1.msra.mxu0 %v6277
      %6317 = vmatprep.subr.mxu0 0.0
      %6318 = vmatpush1.msra.mxu0 %v6279
      %6319 = vmatprep.subr.mxu0 0.0
      %6320 = vmatpush1.msra.mxu0 %v6281
      %6321 = vmatprep.subr.mxu0 0.0
      %6322 = vmatpush1.msra.mxu0 %v6283
      %6323 = vmatprep.subr.mxu0 0.0
      %6324 = vmatpush1.msra.mxu0 %v6285
      %6325 = vmatprep.subr.mxu0 0.0
      %6326 = vmatpush1.msra.mxu0 %v6287
      %6327 = vmatprep.subr.mxu0 0.0
      %6328 = vmatpush1.msra.mxu0 %v6289
      %6329 = vmatprep.subr.mxu0 0.0
      %6330 = vmatpush1.msra.mxu0 %v6291
      %6331 = vmatprep.subr.mxu0 0.0
      %6332 = vmatpush1.msra.mxu0 %v6293
      %6333 = vmatprep.subr.mxu0 0.0
      %6334 = vmatpush1.msra.mxu0 %v6295
      %6335 = vmatprep.subr.mxu0 0.0
      %6336 = vmatpush1.msra.mxu0 %v6297
      %6337 = vmatprep.subr.mxu0 0.0
      %6338 = vmatpush1.msra.mxu0 0.0
      %6339 = vmatprep.subr.mxu0 0.0
      %6340 = vmatpush1.msra.mxu0 0.0
      %6341 = vmatprep.subr.mxu0 0.0
      %6342 = vmatpush1.msra.mxu0 0.0
      %6343 = vmatprep.subr.mxu0 0.0
      %6344 = vmatpush1.msra.mxu0 0.0
      %6345 = vmatprep.subr.mxu0 0.0
      %6346 = vmatpush1.msra.mxu0 0.0
      %6347 = vmatprep.subr.mxu0 0.0
      %6348 = vmatpush1.msra.mxu0 0.0
      %6349 = vmatprep.subr.mxu0 0.0
      %6350 = vmatpush1.msra.mxu0 0.0
      %6351 = vmatprep.subr.mxu0 0.0
      %6352 = vmatpush1.msra.mxu0 0.0
      %6353 = vmatprep.subr.mxu0 0.0
      %6354 = vmatpush1.msra.mxu0 0.0
      %6355 = vmatprep.subr.mxu0 0.0
      %6356 = vmatpush1.msra.mxu0 0.0
      %6357 = vmatprep.subr.mxu0 0.0
      %6358 = vmatpush1.msra.mxu0 0.0
      %6359 = vmatprep.subr.mxu0 0.0
      %6360 = vmatpush1.msra.mxu0 0.0
      %6361 = vmatprep.subr.mxu0 0.0
      %6362 = vmatpush1.msra.mxu0 0.0
      %6363 = vmatprep.subr.mxu0 0.0
      %6364 = vmatpush1.msra.mxu0 0.0
      %6365 = vmatprep.subr.mxu0 0.0
      %6366 = vmatpush1.msra.mxu0 0.0
      %6367 = vmatprep.subr.mxu0 0.0
      %6368 = vmatpush1.msra.mxu0 0.0
      %6369 = vmatprep.subr.mxu0 0.0
      %6370 = vmatpush1.msra.mxu0 0.0
      %6371 = vmatprep.subr.mxu0 0.0
      %6372 = vmatpush1.msra.mxu0 0.0
      %6373 = vmatprep.subr.mxu0 0.0
      %6374 = vmatpush1.msra.mxu0 0.0
      %6375 = vmatprep.mubr.f32.mxu0 0.0
      %6376 = vmatmul.mubr.f32.gmra.mrb[0].mxu0 %v5781
      %v6377 = vpop.f32.mrb[0].mxu0
      %v6378 = vadd.f32 0.0, %v6377
      %v6379 = vpop.f32.mrb[0].mxu0
      %6380 = vmatprep.mubr.f32.mxu0 0.0
      %6381 = vmatmul.mubr.f32.gmra.mrb[0].mxu0 %v5784
      %v6382 = vpop.f32.mrb[0].mxu0
      %v6383 = vadd.f32 0.0, %v6382
      %v6384 = vpop.f32.mrb[0].mxu0
      %6385 = vmatprep.mubr.f32.mxu0 0.0
      %6386 = vmatmul.mubr.f32.gmra.mrb[0].mxu0 %v5787
      %v6387 = vpop.f32.mrb[0].mxu0
      %v6388 = vadd.f32 0.0, %v6387
      %v6389 = vpop.f32.mrb[0].mxu0
      %6390 = vmatprep.mubr.f32.mxu0 0.0
      %6391 = vmatmul.mubr.f32.gmra.mrb[0].mxu0 %v5790
      %v6392 = vpop.f32.mrb[0].mxu0
      %v6393 = vadd.f32 0.0, %v6392
      %v6394 = vpop.f32.mrb[0].mxu0
      %6395 = vmatprep.mubr.f32.mxu0 0.0
      %6396 = vmatmul.mubr.f32.gmra.mrb[0].mxu0 %v5793
      %v6397 = vpop.f32.mrb[0].mxu0
      %v6398 = vadd.f32 0.0, %v6397
      %v6399 = vpop.f32.mrb[0].mxu0
      %6400 = vmatprep.mubr.f32.mxu0 0.0
      %6401 = vmatmul.mubr.f32.gmra.mrb[0].mxu0 %v5796
      %v6402 = vpop.f32.mrb[0].mxu0
      %v6403 = vadd.f32 0.0, %v6402
      %v6404 = vpop.f32.mrb[0].mxu0
      %6405 = vmatprep.mubr.f32.mxu0 0.0
      %6406 = vmatmul.mubr.f32.gmra.mrb[0].mxu0 %v5799
      %v6407 = vpop.f32.mrb[0].mxu0
      %v6408 = vadd.f32 0.0, %v6407
      %v6409 = vpop.f32.mrb[0].mxu0
      %6410 = vmatprep.mubr.f32.mxu0 0.0
      %6411 = vmatmul.mubr.f32.gmra.mrb[0].mxu0 %v5802
      %v6412 = vpop.f32.mrb[0].mxu0
      %v6413 = vadd.f32 0.0, %v6412
      %v6414 = vpop.f32.mrb[0].mxu0
      %6415 = vmatprep.mubr.f32.mxu0 0.0
      %6416 = vmatmul.mubr.f32.gmra.mrb[0].mxu0 %v5805
      %v6417 = vpop.f32.mrb[0].mxu0
      %v6418 = vadd.f32 0.0, %v6417
      %v6419 = vpop.f32.mrb[0].mxu0
      %6420 = vmatprep.mubr.f32.mxu0 0.0
      %6421 = vmatmul.mubr.f32.gmra.mrb[0].mxu0 %v5808
      %v6422 = vpop.f32.mrb[0].mxu0
      %v6423 = vadd.f32 0.0, %v6422
      %v6424 = vpop.f32.mrb[0].mxu0
      %6425 = vdwg.mxu0
      %v6427 = vsel %vm5779, %v5706, 0
      %v6430 = vsel %vm5779, %v5707, 0
      %v6433 = vsel %vm5779, %v5708, 0
      %v6436 = vsel %vm5779, %v5709, 0
      %v6439 = vsel %vm5779, %v5710, 0
      %v6442 = vsel %vm5779, %v5711, 0
      %v6445 = vsel %vm5779, %v5712, 0
      %v6448 = vsel %vm5779, %v5713, 0
      %v6451 = vsel %vm5779, %v5714, 0
      %v6454 = vsel %vm5779, %v5715, 0
      %6456 = vmatprep.subr.mxu0 0.0
      %6457 = vmatpush1.msra.mxu0 %v5654
      %6458 = vmatprep.subr.mxu0 0.0
      %6459 = vmatpush1.msra.mxu0 %v5655
      %6460 = vmatprep.subr.mxu0 0.0
      %6461 = vmatpush1.msra.mxu0 %v5656
      %6462 = vmatprep.subr.mxu0 0.0
      %6463 = vmatpush1.msra.mxu0 %v5657
      %6464 = vmatprep.subr.mxu0 0.0
      %6465 = vmatpush1.msra.mxu0 %v5658
      %6466 = vmatprep.subr.mxu0 0.0
      %6467 = vmatpush1.msra.mxu0 %v5659
      %6468 = vmatprep.subr.mxu0 0.0
      %6469 = vmatpush1.msra.mxu0 %v5660
      %6470 = vmatprep.subr.mxu0 0.0
      %6471 = vmatpush1.msra.mxu0 %v5661
      %6472 = vmatprep.subr.mxu0 0.0
      %6473 = vmatpush1.msra.mxu0 %v5662
      %6474 = vmatprep.subr.mxu0 0.0
      %6475 = vmatpush1.msra.mxu0 %v5663
      %6476 = vmatprep.subr.mxu0 0.0
      %6477 = vmatpush1.msra.mxu0 %v5664
      %6478 = vmatprep.subr.mxu0 0.0
      %6479 = vmatpush1.msra.mxu0 %v5665
      %6480 = vmatprep.subr.mxu0 0.0
      %6481 = vmatpush1.msra.mxu0 %v5666
      %6482 = vmatprep.subr.mxu0 0.0
      %6483 = vmatpush1.msra.mxu0 0.0
      %6484 = vmatprep.subr.mxu0 0.0
      %6485 = vmatpush1.msra.mxu0 0.0
      %6486 = vmatprep.subr.mxu0 0.0
      %6487 = vmatpush1.msra.mxu0 0.0
      %6488 = vmatprep.subr.mxu0 0.0
      %6489 = vmatpush1.msra.mxu0 0.0
      %6490 = vmatprep.subr.mxu0 0.0
      %6491 = vmatpush1.msra.mxu0 0.0
      %6492 = vmatprep.subr.mxu0 0.0
      %6493 = vmatpush1.msra.mxu0 0.0
      %6494 = vmatprep.subr.mxu0 0.0
      %6495 = vmatpush1.msra.mxu0 0.0
      %6496 = vmatprep.subr.mxu0 0.0
      %6497 = vmatpush1.msra.mxu0 0.0
      %6498 = vmatprep.subr.mxu0 0.0
      %6499 = vmatpush1.msra.mxu0 0.0
      %6500 = vmatprep.subr.mxu0 0.0
      %6501 = vmatpush1.msra.mxu0 0.0
      %6502 = vmatprep.subr.mxu0 0.0
      %6503 = vmatpush1.msra.mxu0 0.0
      %6504 = vmatprep.subr.mxu0 0.0
      %6505 = vmatpush1.msra.mxu0 0.0
      %6506 = vmatprep.subr.mxu0 0.0
      %6507 = vmatpush1.msra.mxu0 0.0
      %6508 = vmatprep.subr.mxu0 0.0
      %6509 = vmatpush1.msra.mxu0 0.0
      %6510 = vmatprep.subr.mxu0 0.0
      %6511 = vmatpush1.msra.mxu0 0.0
      %6512 = vmatprep.subr.mxu0 0.0
      %6513 = vmatpush1.msra.mxu0 0.0
      %6514 = vmatprep.subr.mxu0 0.0
      %6515 = vmatpush1.msra.mxu0 0.0
      %6516 = vmatprep.subr.mxu0 0.0
      %6517 = vmatpush1.msra.mxu0 0.0
      %6518 = vmatprep.subr.mxu0 0.0
      %6519 = vmatpush1.msra.mxu0 0.0
      %6520 = vmatprep.mubr.f32.mxu0 0.0
      %6521 = vmatmul.mubr.f32.gmra.mrb[0].mxu0 %v6427
      %v6522 = vpop.f32.mrb[0].mxu0
      %v6523 = vadd.f32 %v5877, %v6522
      %v6524 = vpop.f32.mrb[0].mxu0
      %6525 = vmatprep.mubr.f32.mxu0 0.0
      %6526 = vmatmul.mubr.f32.gmra.mrb[0].mxu0 %v6430
      %v6527 = vpop.f32.mrb[0].mxu0
      %v6528 = vadd.f32 %v5882, %v6527
      %v6529 = vpop.f32.mrb[0].mxu0
      %6530 = vmatprep.mubr.f32.mxu0 0.0
      %6531 = vmatmul.mubr.f32.gmra.mrb[0].mxu0 %v6433
      %v6532 = vpop.f32.mrb[0].mxu0
      %v6533 = vadd.f32 %v5887, %v6532
      %v6534 = vpop.f32.mrb[0].mxu0
      %6535 = vmatprep.mubr.f32.mxu0 0.0
      %6536 = vmatmul.mubr.f32.gmra.mrb[0].mxu0 %v6436
      %v6537 = vpop.f32.mrb[0].mxu0
      %v6538 = vadd.f32 %v5892, %v6537
      %v6539 = vpop.f32.mrb[0].mxu0
      %6540 = vmatprep.mubr.f32.mxu0 0.0
      %6541 = vmatmul.mubr.f32.gmra.mrb[0].mxu0 %v6439
      %v6542 = vpop.f32.mrb[0].mxu0
      %v6543 = vadd.f32 %v5897, %v6542
      %v6544 = vpop.f32.mrb[0].mxu0
      %6545 = vmatprep.mubr.f32.mxu0 0.0
      %6546 = vmatmul.mubr.f32.gmra.mrb[0].mxu0 %v6442
      %v6547 = vpop.f32.mrb[0].mxu0
      %v6548 = vadd.f32 %v5902, %v6547
      %v6549 = vpop.f32.mrb[0].mxu0
      %6550 = vmatprep.mubr.f32.mxu0 0.0
      %6551 = vmatmul.mubr.f32.gmra.mrb[0].mxu0 %v6445
      %v6552 = vpop.f32.mrb[0].mxu0
      %v6553 = vadd.f32 %v5907, %v6552
      %v6554 = vpop.f32.mrb[0].mxu0
      %6555 = vmatprep.mubr.f32.mxu0 0.0
      %6556 = vmatmul.mubr.f32.gmra.mrb[0].mxu0 %v6448
      %v6557 = vpop.f32.mrb[0].mxu0
      %v6558 = vadd.f32 %v5912, %v6557
      %v6559 = vpop.f32.mrb[0].mxu0
      %6560 = vmatprep.mubr.f32.mxu0 0.0
      %6561 = vmatmul.mubr.f32.gmra.mrb[0].mxu0 %v6451
      %v6562 = vpop.f32.mrb[0].mxu0
      %v6563 = vadd.f32 %v5917, %v6562
      %v6564 = vpop.f32.mrb[0].mxu0
      %6565 = vmatprep.mubr.f32.mxu0 0.0
      %6566 = vmatmul.mubr.f32.gmra.mrb[0].mxu0 %v6454
      %v6567 = vpop.f32.mrb[0].mxu0
      %v6568 = vadd.f32 %v5922, %v6567
      %v6569 = vpop.f32.mrb[0].mxu0
      %6570 = vdwg.mxu0
      %6571 = vmatprep.subr.mxu0 0.0
      %6572 = vmatpush1.msra.mxu0 %v5667
      %6573 = vmatprep.subr.mxu0 0.0
      %6574 = vmatpush1.msra.mxu0 %v5668
      %6575 = vmatprep.subr.mxu0 0.0
      %6576 = vmatpush1.msra.mxu0 %v5669
      %6577 = vmatprep.subr.mxu0 0.0
      %6578 = vmatpush1.msra.mxu0 %v5670
      %6579 = vmatprep.subr.mxu0 0.0
      %6580 = vmatpush1.msra.mxu0 %v5671
      %6581 = vmatprep.subr.mxu0 0.0
      %6582 = vmatpush1.msra.mxu0 %v5672
      %6583 = vmatprep.subr.mxu0 0.0
      %6584 = vmatpush1.msra.mxu0 %v5673
      %6585 = vmatprep.subr.mxu0 0.0
      %6586 = vmatpush1.msra.mxu0 %v5674
      %6587 = vmatprep.subr.mxu0 0.0
      %6588 = vmatpush1.msra.mxu0 %v5675
      %6589 = vmatprep.subr.mxu0 0.0
      %6590 = vmatpush1.msra.mxu0 %v5676
      %6591 = vmatprep.subr.mxu0 0.0
      %6592 = vmatpush1.msra.mxu0 %v5677
      %6593 = vmatprep.subr.mxu0 0.0
      %6594 = vmatpush1.msra.mxu0 %v5678
      %6595 = vmatprep.subr.mxu0 0.0
      %6596 = vmatpush1.msra.mxu0 %v5679
      %6597 = vmatprep.subr.mxu0 0.0
      %6598 = vmatpush1.msra.mxu0 0.0
      %6599 = vmatprep.subr.mxu0 0.0
      %6600 = vmatpush1.msra.mxu0 0.0
      %6601 = vmatprep.subr.mxu0 0.0
      %6602 = vmatpush1.msra.mxu0 0.0
      %6603 = vmatprep.subr.mxu0 0.0
      %6604 = vmatpush1.msra.mxu0 0.0
      %6605 = vmatprep.subr.mxu0 0.0
      %6606 = vmatpush1.msra.mxu0 0.0
      %6607 = vmatprep.subr.mxu0 0.0
      %6608 = vmatpush1.msra.mxu0 0.0
      %6609 = vmatprep.subr.mxu0 0.0
      %6610 = vmatpush1.msra.mxu0 0.0
      %6611 = vmatprep.subr.mxu0 0.0
      %6612 = vmatpush1.msra.mxu0 0.0
      %6613 = vmatprep.subr.mxu0 0.0
      %6614 = vmatpush1.msra.mxu0 0.0
      %6615 = vmatprep.subr.mxu0 0.0
      %6616 = vmatpush1.msra.mxu0 0.0
      %6617 = vmatprep.subr.mxu0 0.0
      %6618 = vmatpush1.msra.mxu0 0.0
      %6619 = vmatprep.subr.mxu0 0.0
      %6620 = vmatpush1.msra.mxu0 0.0
      %6621 = vmatprep.subr.mxu0 0.0
      %6622 = vmatpush1.msra.mxu0 0.0
      %6623 = vmatprep.subr.mxu0 0.0
      %6624 = vmatpush1.msra.mxu0 0.0
      %6625 = vmatprep.subr.mxu0 0.0
      %6626 = vmatpush1.msra.mxu0 0.0
      %6627 = vmatprep.subr.mxu0 0.0
      %6628 = vmatpush1.msra.mxu0 0.0
      %6629 = vmatprep.subr.mxu0 0.0
      %6630 = vmatpush1.msra.mxu0 0.0
      %6631 = vmatprep.subr.mxu0 0.0
      %6632 = vmatpush1.msra.mxu0 0.0
      %6633 = vmatprep.subr.mxu0 0.0
      %6634 = vmatpush1.msra.mxu0 0.0
      %6635 = vmatprep.mubr.f32.mxu0 0.0
      %6636 = vmatmul.mubr.f32.gmra.mrb[0].mxu0 %v6427
      %v6637 = vpop.f32.mrb[0].mxu0
      %v6638 = vadd.f32 %v6044, %v6637
      %v6639 = vpop.f32.mrb[0].mxu0
      %6640 = vmatprep.mubr.f32.mxu0 0.0
      %6641 = vmatmul.mubr.f32.gmra.mrb[0].mxu0 %v6430
      %v6642 = vpop.f32.mrb[0].mxu0
      %v6643 = vadd.f32 %v6049, %v6642
      %v6644 = vpop.f32.mrb[0].mxu0
      %6645 = vmatprep.mubr.f32.mxu0 0.0
      %6646 = vmatmul.mubr.f32.gmra.mrb[0].mxu0 %v6433
      %v6647 = vpop.f32.mrb[0].mxu0
      %v6648 = vadd.f32 %v6054, %v6647
      %v6649 = vpop.f32.mrb[0].mxu0
      %6650 = vmatprep.mubr.f32.mxu0 0.0
      %6651 = vmatmul.mubr.f32.gmra.mrb[0].mxu0 %v6436
      %v6652 = vpop.f32.mrb[0].mxu0
      %v6653 = vadd.f32 %v6059, %v6652
      %v6654 = vpop.f32.mrb[0].mxu0
      %6655 = vmatprep.mubr.f32.mxu0 0.0
      %6656 = vmatmul.mubr.f32.gmra.mrb[0].mxu0 %v6439
      %v6657 = vpop.f32.mrb[0].mxu0
      %v6658 = vadd.f32 %v6064, %v6657
      %v6659 = vpop.f32.mrb[0].mxu0
      %6660 = vmatprep.mubr.f32.mxu0 0.0
      %6661 = vmatmul.mubr.f32.gmra.mrb[0].mxu0 %v6442
      %v6662 = vpop.f32.mrb[0].mxu0
      %v6663 = vadd.f32 %v6069, %v6662
      %v6664 = vpop.f32.mrb[0].mxu0
      %6665 = vmatprep.mubr.f32.mxu0 0.0
      %6666 = vmatmul.mubr.f32.gmra.mrb[0].mxu0 %v6445
      %v6667 = vpop.f32.mrb[0].mxu0
      %v6668 = vadd.f32 %v6074, %v6667
      %v6669 = vpop.f32.mrb[0].mxu0
      %6670 = vmatprep.mubr.f32.mxu0 0.0
      %6671 = vmatmul.mubr.f32.gmra.mrb[0].mxu0 %v6448
      %v6672 = vpop.f32.mrb[0].mxu0
      %v6673 = vadd.f32 %v6079, %v6672
      %v6674 = vpop.f32.mrb[0].mxu0
      %6675 = vmatprep.mubr.f32.mxu0 0.0
      %6676 = vmatmul.mubr.f32.gmra.mrb[0].mxu0 %v6451
      %v6677 = vpop.f32.mrb[0].mxu0
      %v6678 = vadd.f32 %v6084, %v6677
      %v6679 = vpop.f32.mrb[0].mxu0
      %6680 = vmatprep.mubr.f32.mxu0 0.0
      %6681 = vmatmul.mubr.f32.gmra.mrb[0].mxu0 %v6454
      %v6682 = vpop.f32.mrb[0].mxu0
      %v6683 = vadd.f32 %v6089, %v6682
      %v6684 = vpop.f32.mrb[0].mxu0
      %6685 = vdwg.mxu0
      %6686 = vmatprep.subr.mxu0 0.0
      %6687 = vmatpush1.msra.mxu0 %v5680
      %6688 = vmatprep.subr.mxu0 0.0
      %6689 = vmatpush1.msra.mxu0 %v5681
      %6690 = vmatprep.subr.mxu0 0.0
      %6691 = vmatpush1.msra.mxu0 %v5682
      %6692 = vmatprep.subr.mxu0 0.0
      %6693 = vmatpush1.msra.mxu0 %v5683
      %6694 = vmatprep.subr.mxu0 0.0
      %6695 = vmatpush1.msra.mxu0 %v5684
      %6696 = vmatprep.subr.mxu0 0.0
      %6697 = vmatpush1.msra.mxu0 %v5685
      %6698 = vmatprep.subr.mxu0 0.0
      %6699 = vmatpush1.msra.mxu0 %v5686
      %6700 = vmatprep.subr.mxu0 0.0
      %6701 = vmatpush1.msra.mxu0 %v5687
      %6702 = vmatprep.subr.mxu0 0.0
      %6703 = vmatpush1.msra.mxu0 %v5688
      %6704 = vmatprep.subr.mxu0 0.0
      %6705 = vmatpush1.msra.mxu0 %v5689
      %6706 = vmatprep.subr.mxu0 0.0
      %6707 = vmatpush1.msra.mxu0 %v5690
      %6708 = vmatprep.subr.mxu0 0.0
      %6709 = vmatpush1.msra.mxu0 %v5691
      %6710 = vmatprep.subr.mxu0 0.0
      %6711 = vmatpush1.msra.mxu0 %v5692
      %6712 = vmatprep.subr.mxu0 0.0
      %6713 = vmatpush1.msra.mxu0 0.0
      %6714 = vmatprep.subr.mxu0 0.0
      %6715 = vmatpush1.msra.mxu0 0.0
      %6716 = vmatprep.subr.mxu0 0.0
      %6717 = vmatpush1.msra.mxu0 0.0
      %6718 = vmatprep.subr.mxu0 0.0
      %6719 = vmatpush1.msra.mxu0 0.0
      %6720 = vmatprep.subr.mxu0 0.0
      %6721 = vmatpush1.msra.mxu0 0.0
      %6722 = vmatprep.subr.mxu0 0.0
      %6723 = vmatpush1.msra.mxu0 0.0
      %6724 = vmatprep.subr.mxu0 0.0
      %6725 = vmatpush1.msra.mxu0 0.0
      %6726 = vmatprep.subr.mxu0 0.0
      %6727 = vmatpush1.msra.mxu0 0.0
      %6728 = vmatprep.subr.mxu0 0.0
      %6729 = vmatpush1.msra.mxu0 0.0
      %6730 = vmatprep.subr.mxu0 0.0
      %6731 = vmatpush1.msra.mxu0 0.0
      %6732 = vmatprep.subr.mxu0 0.0
      %6733 = vmatpush1.msra.mxu0 0.0
      %6734 = vmatprep.subr.mxu0 0.0
      %6735 = vmatpush1.msra.mxu0 0.0
      %6736 = vmatprep.subr.mxu0 0.0
      %6737 = vmatpush1.msra.mxu0 0.0
      %6738 = vmatprep.subr.mxu0 0.0
      %6739 = vmatpush1.msra.mxu0 0.0
      %6740 = vmatprep.subr.mxu0 0.0
      %6741 = vmatpush1.msra.mxu0 0.0
      %6742 = vmatprep.subr.mxu0 0.0
      %6743 = vmatpush1.msra.mxu0 0.0
      %6744 = vmatprep.subr.mxu0 0.0
      %6745 = vmatpush1.msra.mxu0 0.0
      %6746 = vmatprep.subr.mxu0 0.0
      %6747 = vmatpush1.msra.mxu0 0.0
      %6748 = vmatprep.subr.mxu0 0.0
      %6749 = vmatpush1.msra.mxu0 0.0
      %6750 = vmatprep.mubr.f32.mxu0 0.0
      %6751 = vmatmul.mubr.f32.gmra.mrb[0].mxu0 %v6427
      %v6752 = vpop.f32.mrb[0].mxu0
      %v6753 = vadd.f32 %v6211, %v6752
      %v6754 = vpop.f32.mrb[0].mxu0
      %6755 = vmatprep.mubr.f32.mxu0 0.0
      %6756 = vmatmul.mubr.f32.gmra.mrb[0].mxu0 %v6430
      %v6757 = vpop.f32.mrb[0].mxu0
      %v6758 = vadd.f32 %v6216, %v6757
      %v6759 = vpop.f32.mrb[0].mxu0
      %6760 = vmatprep.mubr.f32.mxu0 0.0
      %6761 = vmatmul.mubr.f32.gmra.mrb[0].mxu0 %v6433
      %v6762 = vpop.f32.mrb[0].mxu0
      %v6763 = vadd.f32 %v6221, %v6762
      %v6764 = vpop.f32.mrb[0].mxu0
      %6765 = vmatprep.mubr.f32.mxu0 0.0
      %6766 = vmatmul.mubr.f32.gmra.mrb[0].mxu0 %v6436
      %v6767 = vpop.f32.mrb[0].mxu0
      %v6768 = vadd.f32 %v6226, %v6767
      %v6769 = vpop.f32.mrb[0].mxu0
      %6770 = vmatprep.mubr.f32.mxu0 0.0
      %6771 = vmatmul.mubr.f32.gmra.mrb[0].mxu0 %v6439
      %v6772 = vpop.f32.mrb[0].mxu0
      %v6773 = vadd.f32 %v6231, %v6772
      %v6774 = vpop.f32.mrb[0].mxu0
      %6775 = vmatprep.mubr.f32.mxu0 0.0
      %6776 = vmatmul.mubr.f32.gmra.mrb[0].mxu0 %v6442
      %v6777 = vpop.f32.mrb[0].mxu0
      %v6778 = vadd.f32 %v6236, %v6777
      %v6779 = vpop.f32.mrb[0].mxu0
      %6780 = vmatprep.mubr.f32.mxu0 0.0
      %6781 = vmatmul.mubr.f32.gmra.mrb[0].mxu0 %v6445
      %v6782 = vpop.f32.mrb[0].mxu0
      %v6783 = vadd.f32 %v6241, %v6782
      %v6784 = vpop.f32.mrb[0].mxu0
      %6785 = vmatprep.mubr.f32.mxu0 0.0
      %6786 = vmatmul.mubr.f32.gmra.mrb[0].mxu0 %v6448
      %v6787 = vpop.f32.mrb[0].mxu0
      %v6788 = vadd.f32 %v6246, %v6787
      %v6789 = vpop.f32.mrb[0].mxu0
      %6790 = vmatprep.mubr.f32.mxu0 0.0
      %6791 = vmatmul.mubr.f32.gmra.mrb[0].mxu0 %v6451
      %v6792 = vpop.f32.mrb[0].mxu0
      %v6793 = vadd.f32 %v6251, %v6792
      %v6794 = vpop.f32.mrb[0].mxu0
      %6795 = vmatprep.mubr.f32.mxu0 0.0
      %6796 = vmatmul.mubr.f32.gmra.mrb[0].mxu0 %v6454
      %v6797 = vpop.f32.mrb[0].mxu0
      %v6798 = vadd.f32 %v6256, %v6797
      %v6799 = vpop.f32.mrb[0].mxu0
      %6800 = vdwg.mxu0
      %6801 = vmatprep.subr.mxu0 0.0
      %6802 = vmatpush1.msra.mxu0 %v5693
      %6803 = vmatprep.subr.mxu0 0.0
      %6804 = vmatpush1.msra.mxu0 %v5694
      %6805 = vmatprep.subr.mxu0 0.0
      %6806 = vmatpush1.msra.mxu0 %v5695
      %6807 = vmatprep.subr.mxu0 0.0
      %6808 = vmatpush1.msra.mxu0 %v5696
      %6809 = vmatprep.subr.mxu0 0.0
      %6810 = vmatpush1.msra.mxu0 %v5697
      %6811 = vmatprep.subr.mxu0 0.0
      %6812 = vmatpush1.msra.mxu0 %v5698
      %6813 = vmatprep.subr.mxu0 0.0
      %6814 = vmatpush1.msra.mxu0 %v5699
      %6815 = vmatprep.subr.mxu0 0.0
      %6816 = vmatpush1.msra.mxu0 %v5700
      %6817 = vmatprep.subr.mxu0 0.0
      %6818 = vmatpush1.msra.mxu0 %v5701
      %6819 = vmatprep.subr.mxu0 0.0
      %6820 = vmatpush1.msra.mxu0 %v5702
      %6821 = vmatprep.subr.mxu0 0.0
      %6822 = vmatpush1.msra.mxu0 %v5703
      %6823 = vmatprep.subr.mxu0 0.0
      %6824 = vmatpush1.msra.mxu0 %v5704
      %6825 = vmatprep.subr.mxu0 0.0
      %6826 = vmatpush1.msra.mxu0 %v5705
      %6827 = vmatprep.subr.mxu0 0.0
      %6828 = vmatpush1.msra.mxu0 0.0
      %6829 = vmatprep.subr.mxu0 0.0
      %6830 = vmatpush1.msra.mxu0 0.0
      %6831 = vmatprep.subr.mxu0 0.0
      %6832 = vmatpush1.msra.mxu0 0.0
      %6833 = vmatprep.subr.mxu0 0.0
      %6834 = vmatpush1.msra.mxu0 0.0
      %6835 = vmatprep.subr.mxu0 0.0
      %6836 = vmatpush1.msra.mxu0 0.0
      %6837 = vmatprep.subr.mxu0 0.0
      %6838 = vmatpush1.msra.mxu0 0.0
      %6839 = vmatprep.subr.mxu0 0.0
      %6840 = vmatpush1.msra.mxu0 0.0
      %6841 = vmatprep.subr.mxu0 0.0
      %6842 = vmatpush1.msra.mxu0 0.0
      %6843 = vmatprep.subr.mxu0 0.0
      %6844 = vmatpush1.msra.mxu0 0.0
      %6845 = vmatprep.subr.mxu0 0.0
      %6846 = vmatpush1.msra.mxu0 0.0
      %6847 = vmatprep.subr.mxu0 0.0
      %6848 = vmatpush1.msra.mxu0 0.0
      %6849 = vmatprep.subr.mxu0 0.0
      %6850 = vmatpush1.msra.mxu0 0.0
      %6851 = vmatprep.subr.mxu0 0.0
      %6852 = vmatpush1.msra.mxu0 0.0
      %6853 = vmatprep.subr.mxu0 0.0
      %6854 = vmatpush1.msra.mxu0 0.0
      %6855 = vmatprep.subr.mxu0 0.0
      %6856 = vmatpush1.msra.mxu0 0.0
      %6857 = vmatprep.subr.mxu0 0.0
      %6858 = vmatpush1.msra.mxu0 0.0
      %6859 = vmatprep.subr.mxu0 0.0
      %6860 = vmatpush1.msra.mxu0 0.0
      %6861 = vmatprep.subr.mxu0 0.0
      %6862 = vmatpush1.msra.mxu0 0.0
      %6863 = vmatprep.subr.mxu0 0.0
      %6864 = vmatpush1.msra.mxu0 0.0
      %6865 = vmatprep.mubr.f32.mxu0 0.0
      %6866 = vmatmul.mubr.f32.gmra.mrb[0].mxu0 %v6427
      %v6867 = vpop.f32.mrb[0].mxu0
      %v6868 = vadd.f32 %v6378, %v6867
      %v6869 = vpop.f32.mrb[0].mxu0
      %6870 = vmatprep.mubr.f32.mxu0 0.0
      %6871 = vmatmul.mubr.f32.gmra.mrb[0].mxu0 %v6430
      %v6872 = vpop.f32.mrb[0].mxu0
      %v6873 = vadd.f32 %v6383, %v6872
      %v6874 = vpop.f32.mrb[0].mxu0
      %6875 = vmatprep.mubr.f32.mxu0 0.0
      %6876 = vmatmul.mubr.f32.gmra.mrb[0].mxu0 %v6433
      %v6877 = vpop.f32.mrb[0].mxu0
      %v6878 = vadd.f32 %v6388, %v6877
      %v6879 = vpop.f32.mrb[0].mxu0
      %6880 = vmatprep.mubr.f32.mxu0 0.0
      %6881 = vmatmul.mubr.f32.gmra.mrb[0].mxu0 %v6436
      %v6882 = vpop.f32.mrb[0].mxu0
      %v6883 = vadd.f32 %v6393, %v6882
      %v6884 = vpop.f32.mrb[0].mxu0
      %6885 = vmatprep.mubr.f32.mxu0 0.0
      %6886 = vmatmul.mubr.f32.gmra.mrb[0].mxu0 %v6439
      %v6887 = vpop.f32.mrb[0].mxu0
      %v6888 = vadd.f32 %v6398, %v6887
      %v6889 = vpop.f32.mrb[0].mxu0
      %6890 = vmatprep.mubr.f32.mxu0 0.0
      %6891 = vmatmul.mubr.f32.gmra.mrb[0].mxu0 %v6442
      %v6892 = vpop.f32.mrb[0].mxu0
      %v6893 = vadd.f32 %v6403, %v6892
      %v6894 = vpop.f32.mrb[0].mxu0
      %6895 = vmatprep.mubr.f32.mxu0 0.0
      %6896 = vmatmul.mubr.f32.gmra.mrb[0].mxu0 %v6445
      %v6897 = vpop.f32.mrb[0].mxu0
      %v6898 = vadd.f32 %v6408, %v6897
      %v6899 = vpop.f32.mrb[0].mxu0
      %6900 = vmatprep.mubr.f32.mxu0 0.0
      %6901 = vmatmul.mubr.f32.gmra.mrb[0].mxu0 %v6448
      %v6902 = vpop.f32.mrb[0].mxu0
      %v6903 = vadd.f32 %v6413, %v6902
      %v6904 = vpop.f32.mrb[0].mxu0
      %6905 = vmatprep.mubr.f32.mxu0 0.0
      %6906 = vmatmul.mubr.f32.gmra.mrb[0].mxu0 %v6451
      %v6907 = vpop.f32.mrb[0].mxu0
      %v6908 = vadd.f32 %v6418, %v6907
      %v6909 = vpop.f32.mrb[0].mxu0
      %6910 = vmatprep.mubr.f32.mxu0 0.0
      %6911 = vmatmul.mubr.f32.gmra.mrb[0].mxu0 %v6454
      %v6912 = vpop.f32.mrb[0].mxu0
      %v6913 = vadd.f32 %v6423, %v6912
      %v6914 = vpop.f32.mrb[0].mxu0
      %6915 = vdwg.mxu0
      %s6916 = scalar_lea.vmem %s3, 160
      %v6917 = vld [vmem:[%s6916] sm:$0xff]
      %v6918 = vld [vmem:[%s6916 + $0x8] sm:$0xff]
      %v6919 = vld [vmem:[%s6916 + $0x10] sm:$0xff]
      %v6920 = vld [vmem:[%s6916 + $0x18] sm:$0xff]
      %v6921 = vld [vmem:[%s6916 + $0x20] sm:$0xff]
      %v6922 = vld [vmem:[%s6916 + $0x28] sm:$0xff]
      %v6923 = vld [vmem:[%s6916 + $0x30] sm:$0xff]
      %v6924 = vld [vmem:[%s6916 + $0x38] sm:$0xff]
      %v6925 = vld [vmem:[%s6916 + $0x40] sm:$0xff]
      %v6926 = vld [vmem:[%s6916 + $0x48] sm:$0xff]
      %6927 = vrot.lane.b32.xlu0 %v5654, 126
      %v6928 = vpop.permute.xlu0 %6927
      %6929 = vrot.lane.b32.xlu0 %v5655, 126
      %v6930 = vpop.permute.xlu0 %6929
      %6931 = vrot.lane.b32.xlu0 %v5656, 126
      %v6932 = vpop.permute.xlu0 %6931
      %6933 = vrot.lane.b32.xlu0 %v5657, 126
      %v6934 = vpop.permute.xlu0 %6933
      %6935 = vrot.lane.b32.xlu0 %v5658, 126
      %v6936 = vpop.permute.xlu0 %6935
      %6937 = vrot.lane.b32.xlu0 %v5659, 126
      %v6938 = vpop.permute.xlu0 %6937
      %6939 = vrot.lane.b32.xlu0 %v5660, 126
      %v6940 = vpop.permute.xlu0 %6939
      %6941 = vrot.lane.b32.xlu0 %v5661, 126
      %v6942 = vpop.permute.xlu0 %6941
      %6943 = vrot.lane.b32.xlu0 %v5662, 126
      %v6944 = vpop.permute.xlu0 %6943
      %6945 = vrot.lane.b32.xlu0 %v5663, 126
      %v6946 = vpop.permute.xlu0 %6945
      %6947 = vrot.lane.b32.xlu0 %v5664, 126
      %v6948 = vpop.permute.xlu0 %6947
      %6949 = vrot.lane.b32.xlu0 %v5665, 126
      %v6950 = vpop.permute.xlu0 %6949
      %6951 = vrot.lane.b32.xlu0 %v5666, 126
      %v6952 = vpop.permute.xlu0 %6951
      %v6967 = vsel %vm5779, %v6917, 0
      %v6970 = vsel %vm5779, %v6918, 0
      %v6973 = vsel %vm5779, %v6919, 0
      %v6976 = vsel %vm5779, %v6920, 0
      %v6979 = vsel %vm5779, %v6921, 0
      %v6982 = vsel %vm5779, %v6922, 0
      %v6985 = vsel %vm5779, %v6923, 0
      %v6988 = vsel %vm5779, %v6924, 0
      %v6991 = vsel %vm5779, %v6925, 0
      %v6994 = vsel %vm5779, %v6926, 0
      %6996 = vmatprep.subr.mxu0 0.0
      %6997 = vmatpush1.msra.mxu0 %v6928
      %6998 = vmatprep.subr.mxu0 0.0
      %6999 = vmatpush1.msra.mxu0 %v6930
      %7000 = vmatprep.subr.mxu0 0.0
      %7001 = vmatpush1.msra.mxu0 %v6932
      %7002 = vmatprep.subr.mxu0 0.0
      %7003 = vmatpush1.msra.mxu0 %v6934
      %7004 = vmatprep.subr.mxu0 0.0
      %7005 = vmatpush1.msra.mxu0 %v6936
      %7006 = vmatprep.subr.mxu0 0.0
      %7007 = vmatpush1.msra.mxu0 %v6938
      %7008 = vmatprep.subr.mxu0 0.0
      %7009 = vmatpush1.msra.mxu0 %v6940
      %7010 = vmatprep.subr.mxu0 0.0
      %7011 = vmatpush1.msra.mxu0 %v6942
      %7012 = vmatprep.subr.mxu0 0.0
      %7013 = vmatpush1.msra.mxu0 %v6944
      %7014 = vmatprep.subr.mxu0 0.0
      %7015 = vmatpush1.msra.mxu0 %v6946
      %7016 = vmatprep.subr.mxu0 0.0
      %7017 = vmatpush1.msra.mxu0 %v6948
      %7018 = vmatprep.subr.mxu0 0.0
      %7019 = vmatpush1.msra.mxu0 %v6950
      %7020 = vmatprep.subr.mxu0 0.0
      %7021 = vmatpush1.msra.mxu0 %v6952
      %7022 = vmatprep.subr.mxu0 0.0
      %7023 = vmatpush1.msra.mxu0 0.0
      %7024 = vmatprep.subr.mxu0 0.0
      %7025 = vmatpush1.msra.mxu0 0.0
      %7026 = vmatprep.subr.mxu0 0.0
      %7027 = vmatpush1.msra.mxu0 0.0
      %7028 = vmatprep.subr.mxu0 0.0
      %7029 = vmatpush1.msra.mxu0 0.0
      %7030 = vmatprep.subr.mxu0 0.0
      %7031 = vmatpush1.msra.mxu0 0.0
      %7032 = vmatprep.subr.mxu0 0.0
      %7033 = vmatpush1.msra.mxu0 0.0
      %7034 = vmatprep.subr.mxu0 0.0
      %7035 = vmatpush1.msra.mxu0 0.0
      %7036 = vmatprep.subr.mxu0 0.0
      %7037 = vmatpush1.msra.mxu0 0.0
      %7038 = vmatprep.subr.mxu0 0.0
      %7039 = vmatpush1.msra.mxu0 0.0
      %7040 = vmatprep.subr.mxu0 0.0
      %7041 = vmatpush1.msra.mxu0 0.0
      %7042 = vmatprep.subr.mxu0 0.0
      %7043 = vmatpush1.msra.mxu0 0.0
      %7044 = vmatprep.subr.mxu0 0.0
      %7045 = vmatpush1.msra.mxu0 0.0
      %7046 = vmatprep.subr.mxu0 0.0
      %7047 = vmatpush1.msra.mxu0 0.0
      %7048 = vmatprep.subr.mxu0 0.0
      %7049 = vmatpush1.msra.mxu0 0.0
      %7050 = vmatprep.subr.mxu0 0.0
      %7051 = vmatpush1.msra.mxu0 0.0
      %7052 = vmatprep.subr.mxu0 0.0
      %7053 = vmatpush1.msra.mxu0 0.0
      %7054 = vmatprep.subr.mxu0 0.0
      %7055 = vmatpush1.msra.mxu0 0.0
      %7056 = vmatprep.subr.mxu0 0.0
      %7057 = vmatpush1.msra.mxu0 0.0
      %7058 = vmatprep.subr.mxu0 0.0
      %7059 = vmatpush1.msra.mxu0 0.0
      %7060 = vmatprep.mubr.f32.mxu0 0.0
      %7061 = vmatmul.mubr.f32.gmra.mrb[0].mxu0 %v6967
      %v7062 = vpop.f32.mrb[0].mxu0
      %v7063 = vadd.f32 0.0, %v7062
      %v7064 = vpop.f32.mrb[0].mxu0
      %7065 = vmatprep.mubr.f32.mxu0 0.0
      %7066 = vmatmul.mubr.f32.gmra.mrb[0].mxu0 %v6970
      %v7067 = vpop.f32.mrb[0].mxu0
      %v7068 = vadd.f32 0.0, %v7067
      %v7069 = vpop.f32.mrb[0].mxu0
      %7070 = vmatprep.mubr.f32.mxu0 0.0
      %7071 = vmatmul.mubr.f32.gmra.mrb[0].mxu0 %v6973
      %v7072 = vpop.f32.mrb[0].mxu0
      %v7073 = vadd.f32 0.0, %v7072
      %v7074 = vpop.f32.mrb[0].mxu0
      %7075 = vmatprep.mubr.f32.mxu0 0.0
      %7076 = vmatmul.mubr.f32.gmra.mrb[0].mxu0 %v6976
      %v7077 = vpop.f32.mrb[0].mxu0
      %v7078 = vadd.f32 0.0, %v7077
      %v7079 = vpop.f32.mrb[0].mxu0
      %7080 = vmatprep.mubr.f32.mxu0 0.0
      %7081 = vmatmul.mubr.f32.gmra.mrb[0].mxu0 %v6979
      %v7082 = vpop.f32.mrb[0].mxu0
      %v7083 = vadd.f32 0.0, %v7082
      %v7084 = vpop.f32.mrb[0].mxu0
      %7085 = vmatprep.mubr.f32.mxu0 0.0
      %7086 = vmatmul.mubr.f32.gmra.mrb[0].mxu0 %v6982
      %v7087 = vpop.f32.mrb[0].mxu0
      %v7088 = vadd.f32 0.0, %v7087
      %v7089 = vpop.f32.mrb[0].mxu0
      %7090 = vmatprep.mubr.f32.mxu0 0.0
      %7091 = vmatmul.mubr.f32.gmra.mrb[0].mxu0 %v6985
      %v7092 = vpop.f32.mrb[0].mxu0
      %v7093 = vadd.f32 0.0, %v7092
      %v7094 = vpop.f32.mrb[0].mxu0
      %7095 = vmatprep.mubr.f32.mxu0 0.0
      %7096 = vmatmul.mubr.f32.gmra.mrb[0].mxu0 %v6988
      %v7097 = vpop.f32.mrb[0].mxu0
      %v7098 = vadd.f32 0.0, %v7097
      %v7099 = vpop.f32.mrb[0].mxu0
      %7100 = vmatprep.mubr.f32.mxu0 0.0
      %7101 = vmatmul.mubr.f32.gmra.mrb[0].mxu0 %v6991
      %v7102 = vpop.f32.mrb[0].mxu0
      %v7103 = vadd.f32 0.0, %v7102
      %v7104 = vpop.f32.mrb[0].mxu0
      %7105 = vmatprep.mubr.f32.mxu0 0.0
      %7106 = vmatmul.mubr.f32.gmra.mrb[0].mxu0 %v6994
      %v7107 = vpop.f32.mrb[0].mxu0
      %v7108 = vadd.f32 0.0, %v7107
      %v7109 = vpop.f32.mrb[0].mxu0
      %7110 = vdwg.mxu0
      %7111 = vrot.lane.b32.xlu0 %v5667, 126
      %v7112 = vpop.permute.xlu0 %7111
      %7113 = vrot.lane.b32.xlu0 %v5668, 126
      %v7114 = vpop.permute.xlu0 %7113
      %7115 = vrot.lane.b32.xlu0 %v5669, 126
      %v7116 = vpop.permute.xlu0 %7115
      %7117 = vrot.lane.b32.xlu0 %v5670, 126
      %v7118 = vpop.permute.xlu0 %7117
      %7119 = vrot.lane.b32.xlu0 %v5671, 126
      %v7120 = vpop.permute.xlu0 %7119
      %7121 = vrot.lane.b32.xlu0 %v5672, 126
      %v7122 = vpop.permute.xlu0 %7121
      %7123 = vrot.lane.b32.xlu0 %v5673, 126
      %v7124 = vpop.permute.xlu0 %7123
      %7125 = vrot.lane.b32.xlu0 %v5674, 126
      %v7126 = vpop.permute.xlu0 %7125
      %7127 = vrot.lane.b32.xlu0 %v5675, 126
      %v7128 = vpop.permute.xlu0 %7127
      %7129 = vrot.lane.b32.xlu0 %v5676, 126
      %v7130 = vpop.permute.xlu0 %7129
      %7131 = vrot.lane.b32.xlu0 %v5677, 126
      %v7132 = vpop.permute.xlu0 %7131
      %7133 = vrot.lane.b32.xlu0 %v5678, 126
      %v7134 = vpop.permute.xlu0 %7133
      %7135 = vrot.lane.b32.xlu0 %v5679, 126
      %v7136 = vpop.permute.xlu0 %7135
      %7150 = vmatprep.subr.mxu0 0.0
      %7151 = vmatpush1.msra.mxu0 %v7112
      %7152 = vmatprep.subr.mxu0 0.0
      %7153 = vmatpush1.msra.mxu0 %v7114
      %7154 = vmatprep.subr.mxu0 0.0
      %7155 = vmatpush1.msra.mxu0 %v7116
      %7156 = vmatprep.subr.mxu0 0.0
      %7157 = vmatpush1.msra.mxu0 %v7118
      %7158 = vmatprep.subr.mxu0 0.0
      %7159 = vmatpush1.msra.mxu0 %v7120
      %7160 = vmatprep.subr.mxu0 0.0
      %7161 = vmatpush1.msra.mxu0 %v7122
      %7162 = vmatprep.subr.mxu0 0.0
      %7163 = vmatpush1.msra.mxu0 %v7124
      %7164 = vmatprep.subr.mxu0 0.0
      %7165 = vmatpush1.msra.mxu0 %v7126
      %7166 = vmatprep.subr.mxu0 0.0
      %7167 = vmatpush1.msra.mxu0 %v7128
      %7168 = vmatprep.subr.mxu0 0.0
      %7169 = vmatpush1.msra.mxu0 %v7130
      %7170 = vmatprep.subr.mxu0 0.0
      %7171 = vmatpush1.msra.mxu0 %v7132
      %7172 = vmatprep.subr.mxu0 0.0
      %7173 = vmatpush1.msra.mxu0 %v7134
      %7174 = vmatprep.subr.mxu0 0.0
      %7175 = vmatpush1.msra.mxu0 %v7136
      %7176 = vmatprep.subr.mxu0 0.0
      %7177 = vmatpush1.msra.mxu0 0.0
      %7178 = vmatprep.subr.mxu0 0.0
      %7179 = vmatpush1.msra.mxu0 0.0
      %7180 = vmatprep.subr.mxu0 0.0
      %7181 = vmatpush1.msra.mxu0 0.0
      %7182 = vmatprep.subr.mxu0 0.0
      %7183 = vmatpush1.msra.mxu0 0.0
      %7184 = vmatprep.subr.mxu0 0.0
      %7185 = vmatpush1.msra.mxu0 0.0
      %7186 = vmatprep.subr.mxu0 0.0
      %7187 = vmatpush1.msra.mxu0 0.0
      %7188 = vmatprep.subr.mxu0 0.0
      %7189 = vmatpush1.msra.mxu0 0.0
      %7190 = vmatprep.subr.mxu0 0.0
      %7191 = vmatpush1.msra.mxu0 0.0
      %7192 = vmatprep.subr.mxu0 0.0
      %7193 = vmatpush1.msra.mxu0 0.0
      %7194 = vmatprep.subr.mxu0 0.0
      %7195 = vmatpush1.msra.mxu0 0.0
      %7196 = vmatprep.subr.mxu0 0.0
      %7197 = vmatpush1.msra.mxu0 0.0
      %7198 = vmatprep.subr.mxu0 0.0
      %7199 = vmatpush1.msra.mxu0 0.0
      %7200 = vmatprep.subr.mxu0 0.0
      %7201 = vmatpush1.msra.mxu0 0.0
      %7202 = vmatprep.subr.mxu0 0.0
      %7203 = vmatpush1.msra.mxu0 0.0
      %7204 = vmatprep.subr.mxu0 0.0
      %7205 = vmatpush1.msra.mxu0 0.0
      %7206 = vmatprep.subr.mxu0 0.0
      %7207 = vmatpush1.msra.mxu0 0.0
      %7208 = vmatprep.subr.mxu0 0.0
      %7209 = vmatpush1.msra.mxu0 0.0
      %7210 = vmatprep.subr.mxu0 0.0
      %7211 = vmatpush1.msra.mxu0 0.0
      %7212 = vmatprep.subr.mxu0 0.0
      %7213 = vmatpush1.msra.mxu0 0.0
      %7214 = vmatprep.mubr.f32.mxu0 0.0
      %7215 = vmatmul.mubr.f32.gmra.mrb[0].mxu0 %v6967
      %v7216 = vpop.f32.mrb[0].mxu0
      %v7217 = vadd.f32 0.0, %v7216
      %v7218 = vpop.f32.mrb[0].mxu0
      %7219 = vmatprep.mubr.f32.mxu0 0.0
      %7220 = vmatmul.mubr.f32.gmra.mrb[0].mxu0 %v6970
      %v7221 = vpop.f32.mrb[0].mxu0
      %v7222 = vadd.f32 0.0, %v7221
      %v7223 = vpop.f32.mrb[0].mxu0
      %7224 = vmatprep.mubr.f32.mxu0 0.0
      %7225 = vmatmul.mubr.f32.gmra.mrb[0].mxu0 %v6973
      %v7226 = vpop.f32.mrb[0].mxu0
      %v7227 = vadd.f32 0.0, %v7226
      %v7228 = vpop.f32.mrb[0].mxu0
      %7229 = vmatprep.mubr.f32.mxu0 0.0
      %7230 = vmatmul.mubr.f32.gmra.mrb[0].mxu0 %v6976
      %v7231 = vpop.f32.mrb[0].mxu0
      %v7232 = vadd.f32 0.0, %v7231
      %v7233 = vpop.f32.mrb[0].mxu0
      %7234 = vmatprep.mubr.f32.mxu0 0.0
      %7235 = vmatmul.mubr.f32.gmra.mrb[0].mxu0 %v6979
      %v7236 = vpop.f32.mrb[0].mxu0
      %v7237 = vadd.f32 0.0, %v7236
      %v7238 = vpop.f32.mrb[0].mxu0
      %7239 = vmatprep.mubr.f32.mxu0 0.0
      %7240 = vmatmul.mubr.f32.gmra.mrb[0].mxu0 %v6982
      %v7241 = vpop.f32.mrb[0].mxu0
      %v7242 = vadd.f32 0.0, %v7241
      %v7243 = vpop.f32.mrb[0].mxu0
      %7244 = vmatprep.mubr.f32.mxu0 0.0
      %7245 = vmatmul.mubr.f32.gmra.mrb[0].mxu0 %v6985
      %v7246 = vpop.f32.mrb[0].mxu0
      %v7247 = vadd.f32 0.0, %v7246
      %v7248 = vpop.f32.mrb[0].mxu0
      %7249 = vmatprep.mubr.f32.mxu0 0.0
      %7250 = vmatmul.mubr.f32.gmra.mrb[0].mxu0 %v6988
      %v7251 = vpop.f32.mrb[0].mxu0
      %v7252 = vadd.f32 0.0, %v7251
      %v7253 = vpop.f32.mrb[0].mxu0
      %7254 = vmatprep.mubr.f32.mxu0 0.0
      %7255 = vmatmul.mubr.f32.gmra.mrb[0].mxu0 %v6991
      %v7256 = vpop.f32.mrb[0].mxu0
      %v7257 = vadd.f32 0.0, %v7256
      %v7258 = vpop.f32.mrb[0].mxu0
      %7259 = vmatprep.mubr.f32.mxu0 0.0
      %7260 = vmatmul.mubr.f32.gmra.mrb[0].mxu0 %v6994
      %v7261 = vpop.f32.mrb[0].mxu0
      %v7262 = vadd.f32 0.0, %v7261
      %v7263 = vpop.f32.mrb[0].mxu0
      %7264 = vdwg.mxu0
      %7265 = vrot.lane.b32.xlu0 %v5680, 126
      %v7266 = vpop.permute.xlu0 %7265
      %7267 = vrot.lane.b32.xlu0 %v5681, 126
      %v7268 = vpop.permute.xlu0 %7267
      %7269 = vrot.lane.b32.xlu0 %v5682, 126
      %v7270 = vpop.permute.xlu0 %7269
      %7271 = vrot.lane.b32.xlu0 %v5683, 126
      %v7272 = vpop.permute.xlu0 %7271
      %7273 = vrot.lane.b32.xlu0 %v5684, 126
      %v7274 = vpop.permute.xlu0 %7273
      %7275 = vrot.lane.b32.xlu0 %v5685, 126
      %v7276 = vpop.permute.xlu0 %7275
      %7277 = vrot.lane.b32.xlu0 %v5686, 126
      %v7278 = vpop.permute.xlu0 %7277
      %7279 = vrot.lane.b32.xlu0 %v5687, 126
      %v7280 = vpop.permute.xlu0 %7279
      %7281 = vrot.lane.b32.xlu0 %v5688, 126
      %v7282 = vpop.permute.xlu0 %7281
      %7283 = vrot.lane.b32.xlu0 %v5689, 126
      %v7284 = vpop.permute.xlu0 %7283
      %7285 = vrot.lane.b32.xlu0 %v5690, 126
      %v7286 = vpop.permute.xlu0 %7285
      %7287 = vrot.lane.b32.xlu0 %v5691, 126
      %v7288 = vpop.permute.xlu0 %7287
      %7289 = vrot.lane.b32.xlu0 %v5692, 126
      %v7290 = vpop.permute.xlu0 %7289
      %7304 = vmatprep.subr.mxu0 0.0
      %7305 = vmatpush1.msra.mxu0 %v7266
      %7306 = vmatprep.subr.mxu0 0.0
      %7307 = vmatpush1.msra.mxu0 %v7268
      %7308 = vmatprep.subr.mxu0 0.0
      %7309 = vmatpush1.msra.mxu0 %v7270
      %7310 = vmatprep.subr.mxu0 0.0
      %7311 = vmatpush1.msra.mxu0 %v7272
      %7312 = vmatprep.subr.mxu0 0.0
      %7313 = vmatpush1.msra.mxu0 %v7274
      %7314 = vmatprep.subr.mxu0 0.0
      %7315 = vmatpush1.msra.mxu0 %v7276
      %7316 = vmatprep.subr.mxu0 0.0
      %7317 = vmatpush1.msra.mxu0 %v7278
      %7318 = vmatprep.subr.mxu0 0.0
      %7319 = vmatpush1.msra.mxu0 %v7280
      %7320 = vmatprep.subr.mxu0 0.0
      %7321 = vmatpush1.msra.mxu0 %v7282
      %7322 = vmatprep.subr.mxu0 0.0
      %7323 = vmatpush1.msra.mxu0 %v7284
      %7324 = vmatprep.subr.mxu0 0.0
      %7325 = vmatpush1.msra.mxu0 %v7286
      %7326 = vmatprep.subr.mxu0 0.0
      %7327 = vmatpush1.msra.mxu0 %v7288
      %7328 = vmatprep.subr.mxu0 0.0
      %7329 = vmatpush1.msra.mxu0 %v7290
      %7330 = vmatprep.subr.mxu0 0.0
      %7331 = vmatpush1.msra.mxu0 0.0
      %7332 = vmatprep.subr.mxu0 0.0
      %7333 = vmatpush1.msra.mxu0 0.0
      %7334 = vmatprep.subr.mxu0 0.0
      %7335 = vmatpush1.msra.mxu0 0.0
      %7336 = vmatprep.subr.mxu0 0.0
      %7337 = vmatpush1.msra.mxu0 0.0
      %7338 = vmatprep.subr.mxu0 0.0
      %7339 = vmatpush1.msra.mxu0 0.0
      %7340 = vmatprep.subr.mxu0 0.0
      %7341 = vmatpush1.msra.mxu0 0.0
      %7342 = vmatprep.subr.mxu0 0.0
      %7343 = vmatpush1.msra.mxu0 0.0
      %7344 = vmatprep.subr.mxu0 0.0
      %7345 = vmatpush1.msra.mxu0 0.0
      %7346 = vmatprep.subr.mxu0 0.0
      %7347 = vmatpush1.msra.mxu0 0.0
      %7348 = vmatprep.subr.mxu0 0.0
      %7349 = vmatpush1.msra.mxu0 0.0
      %7350 = vmatprep.subr.mxu0 0.0
      %7351 = vmatpush1.msra.mxu0 0.0
      %7352 = vmatprep.subr.mxu0 0.0
      %7353 = vmatpush1.msra.mxu0 0.0
      %7354 = vmatprep.subr.mxu0 0.0
      %7355 = vmatpush1.msra.mxu0 0.0
      %7356 = vmatprep.subr.mxu0 0.0
      %7357 = vmatpush1.msra.mxu0 0.0
      %7358 = vmatprep.subr.mxu0 0.0
      %7359 = vmatpush1.msra.mxu0 0.0
      %7360 = vmatprep.subr.mxu0 0.0
      %7361 = vmatpush1.msra.mxu0 0.0
      %7362 = vmatprep.subr.mxu0 0.0
      %7363 = vmatpush1.msra.mxu0 0.0
      %7364 = vmatprep.subr.mxu0 0.0
      %7365 = vmatpush1.msra.mxu0 0.0
      %7366 = vmatprep.subr.mxu0 0.0
      %7367 = vmatpush1.msra.mxu0 0.0
      %7368 = vmatprep.mubr.f32.mxu0 0.0
      %7369 = vmatmul.mubr.f32.gmra.mrb[0].mxu0 %v6967
      %v7370 = vpop.f32.mrb[0].mxu0
      %v7371 = vadd.f32 0.0, %v7370
      %v7372 = vpop.f32.mrb[0].mxu0
      %7373 = vmatprep.mubr.f32.mxu0 0.0
      %7374 = vmatmul.mubr.f32.gmra.mrb[0].mxu0 %v6970
      %v7375 = vpop.f32.mrb[0].mxu0
      %v7376 = vadd.f32 0.0, %v7375
      %v7377 = vpop.f32.mrb[0].mxu0
      %7378 = vmatprep.mubr.f32.mxu0 0.0
      %7379 = vmatmul.mubr.f32.gmra.mrb[0].mxu0 %v6973
      %v7380 = vpop.f32.mrb[0].mxu0
      %v7381 = vadd.f32 0.0, %v7380
      %v7382 = vpop.f32.mrb[0].mxu0
      %7383 = vmatprep.mubr.f32.mxu0 0.0
      %7384 = vmatmul.mubr.f32.gmra.mrb[0].mxu0 %v6976
      %v7385 = vpop.f32.mrb[0].mxu0
      %v7386 = vadd.f32 0.0, %v7385
      %v7387 = vpop.f32.mrb[0].mxu0
      %7388 = vmatprep.mubr.f32.mxu0 0.0
      %7389 = vmatmul.mubr.f32.gmra.mrb[0].mxu0 %v6979
      %v7390 = vpop.f32.mrb[0].mxu0
      %v7391 = vadd.f32 0.0, %v7390
      %v7392 = vpop.f32.mrb[0].mxu0
      %7393 = vmatprep.mubr.f32.mxu0 0.0
      %7394 = vmatmul.mubr.f32.gmra.mrb[0].mxu0 %v6982
      %v7395 = vpop.f32.mrb[0].mxu0
      %v7396 = vadd.f32 0.0, %v7395
      %v7397 = vpop.f32.mrb[0].mxu0
      %7398 = vmatprep.mubr.f32.mxu0 0.0
      %7399 = vmatmul.mubr.f32.gmra.mrb[0].mxu0 %v6985
      %v7400 = vpop.f32.mrb[0].mxu0
      %v7401 = vadd.f32 0.0, %v7400
      %v7402 = vpop.f32.mrb[0].mxu0
      %7403 = vmatprep.mubr.f32.mxu0 0.0
      %7404 = vmatmul.mubr.f32.gmra.mrb[0].mxu0 %v6988
      %v7405 = vpop.f32.mrb[0].mxu0
      %v7406 = vadd.f32 0.0, %v7405
      %v7407 = vpop.f32.mrb[0].mxu0
      %7408 = vmatprep.mubr.f32.mxu0 0.0
      %7409 = vmatmul.mubr.f32.gmra.mrb[0].mxu0 %v6991
      %v7410 = vpop.f32.mrb[0].mxu0
      %v7411 = vadd.f32 0.0, %v7410
      %v7412 = vpop.f32.mrb[0].mxu0
      %7413 = vmatprep.mubr.f32.mxu0 0.0
      %7414 = vmatmul.mubr.f32.gmra.mrb[0].mxu0 %v6994
      %v7415 = vpop.f32.mrb[0].mxu0
      %v7416 = vadd.f32 0.0, %v7415
      %v7417 = vpop.f32.mrb[0].mxu0
      %7418 = vdwg.mxu0
      %7419 = vrot.lane.b32.xlu0 %v5693, 126
      %v7420 = vpop.permute.xlu0 %7419
      %7421 = vrot.lane.b32.xlu0 %v5694, 126
      %v7422 = vpop.permute.xlu0 %7421
      %7423 = vrot.lane.b32.xlu0 %v5695, 126
      %v7424 = vpop.permute.xlu0 %7423
      %7425 = vrot.lane.b32.xlu0 %v5696, 126
      %v7426 = vpop.permute.xlu0 %7425
      %7427 = vrot.lane.b32.xlu0 %v5697, 126
      %v7428 = vpop.permute.xlu0 %7427
      %7429 = vrot.lane.b32.xlu0 %v5698, 126
      %v7430 = vpop.permute.xlu0 %7429
      %7431 = vrot.lane.b32.xlu0 %v5699, 126
      %v7432 = vpop.permute.xlu0 %7431
      %7433 = vrot.lane.b32.xlu0 %v5700, 126
      %v7434 = vpop.permute.xlu0 %7433
      %7435 = vrot.lane.b32.xlu0 %v5701, 126
      %v7436 = vpop.permute.xlu0 %7435
      %7437 = vrot.lane.b32.xlu0 %v5702, 126
      %v7438 = vpop.permute.xlu0 %7437
      %7439 = vrot.lane.b32.xlu0 %v5703, 126
      %v7440 = vpop.permute.xlu0 %7439
      %7441 = vrot.lane.b32.xlu0 %v5704, 126
      %v7442 = vpop.permute.xlu0 %7441
      %7443 = vrot.lane.b32.xlu0 %v5705, 126
      %v7444 = vpop.permute.xlu0 %7443
      %7458 = vmatprep.subr.mxu0 0.0
      %7459 = vmatpush1.msra.mxu0 %v7420
      %7460 = vmatprep.subr.mxu0 0.0
      %7461 = vmatpush1.msra.mxu0 %v7422
      %7462 = vmatprep.subr.mxu0 0.0
      %7463 = vmatpush1.msra.mxu0 %v7424
      %7464 = vmatprep.subr.mxu0 0.0
      %7465 = vmatpush1.msra.mxu0 %v7426
      %7466 = vmatprep.subr.mxu0 0.0
      %7467 = vmatpush1.msra.mxu0 %v7428
      %7468 = vmatprep.subr.mxu0 0.0
      %7469 = vmatpush1.msra.mxu0 %v7430
      %7470 = vmatprep.subr.mxu0 0.0
      %7471 = vmatpush1.msra.mxu0 %v7432
      %7472 = vmatprep.subr.mxu0 0.0
      %7473 = vmatpush1.msra.mxu0 %v7434
      %7474 = vmatprep.subr.mxu0 0.0
      %7475 = vmatpush1.msra.mxu0 %v7436
      %7476 = vmatprep.subr.mxu0 0.0
      %7477 = vmatpush1.msra.mxu0 %v7438
      %7478 = vmatprep.subr.mxu0 0.0
      %7479 = vmatpush1.msra.mxu0 %v7440
      %7480 = vmatprep.subr.mxu0 0.0
      %7481 = vmatpush1.msra.mxu0 %v7442
      %7482 = vmatprep.subr.mxu0 0.0
      %7483 = vmatpush1.msra.mxu0 %v7444
      %7484 = vmatprep.subr.mxu0 0.0
      %7485 = vmatpush1.msra.mxu0 0.0
      %7486 = vmatprep.subr.mxu0 0.0
      %7487 = vmatpush1.msra.mxu0 0.0
      %7488 = vmatprep.subr.mxu0 0.0
      %7489 = vmatpush1.msra.mxu0 0.0
      %7490 = vmatprep.subr.mxu0 0.0
      %7491 = vmatpush1.msra.mxu0 0.0
      %7492 = vmatprep.subr.mxu0 0.0
      %7493 = vmatpush1.msra.mxu0 0.0
      %7494 = vmatprep.subr.mxu0 0.0
      %7495 = vmatpush1.msra.mxu0 0.0
      %7496 = vmatprep.subr.mxu0 0.0
      %7497 = vmatpush1.msra.mxu0 0.0
      %7498 = vmatprep.subr.mxu0 0.0
      %7499 = vmatpush1.msra.mxu0 0.0
      %7500 = vmatprep.subr.mxu0 0.0
      %7501 = vmatpush1.msra.mxu0 0.0
      %7502 = vmatprep.subr.mxu0 0.0
      %7503 = vmatpush1.msra.mxu0 0.0
      %7504 = vmatprep.subr.mxu0 0.0
      %7505 = vmatpush1.msra.mxu0 0.0
      %7506 = vmatprep.subr.mxu0 0.0
      %7507 = vmatpush1.msra.mxu0 0.0
      %7508 = vmatprep.subr.mxu0 0.0
      %7509 = vmatpush1.msra.mxu0 0.0
      %7510 = vmatprep.subr.mxu0 0.0
      %7511 = vmatpush1.msra.mxu0 0.0
      %7512 = vmatprep.subr.mxu0 0.0
      %7513 = vmatpush1.msra.mxu0 0.0
      %7514 = vmatprep.subr.mxu0 0.0
      %7515 = vmatpush1.msra.mxu0 0.0
      %7516 = vmatprep.subr.mxu0 0.0
      %7517 = vmatpush1.msra.mxu0 0.0
      %7518 = vmatprep.subr.mxu0 0.0
      %7519 = vmatpush1.msra.mxu0 0.0
      %7520 = vmatprep.subr.mxu0 0.0
      %7521 = vmatpush1.msra.mxu0 0.0
      %7522 = vmatprep.mubr.f32.mxu0 0.0
      %7523 = vmatmul.mubr.f32.gmra.mrb[0].mxu0 %v6967
      %v7524 = vpop.f32.mrb[0].mxu0
      %v7525 = vadd.f32 0.0, %v7524
      %v7526 = vpop.f32.mrb[0].mxu0
      %7527 = vmatprep.mubr.f32.mxu0 0.0
      %7528 = vmatmul.mubr.f32.gmra.mrb[0].mxu0 %v6970
      %v7529 = vpop.f32.mrb[0].mxu0
      %v7530 = vadd.f32 0.0, %v7529
      %v7531 = vpop.f32.mrb[0].mxu0
      %7532 = vmatprep.mubr.f32.mxu0 0.0
      %7533 = vmatmul.mubr.f32.gmra.mrb[0].mxu0 %v6973
      %v7534 = vpop.f32.mrb[0].mxu0
      %v7535 = vadd.f32 0.0, %v7534
      %v7536 = vpop.f32.mrb[0].mxu0
      %7537 = vmatprep.mubr.f32.mxu0 0.0
      %7538 = vmatmul.mubr.f32.gmra.mrb[0].mxu0 %v6976
      %v7539 = vpop.f32.mrb[0].mxu0
      %v7540 = vadd.f32 0.0, %v7539
      %v7541 = vpop.f32.mrb[0].mxu0
      %7542 = vmatprep.mubr.f32.mxu0 0.0
      %7543 = vmatmul.mubr.f32.gmra.mrb[0].mxu0 %v6979
      %v7544 = vpop.f32.mrb[0].mxu0
      %v7545 = vadd.f32 0.0, %v7544
      %v7546 = vpop.f32.mrb[0].mxu0
      %7547 = vmatprep.mubr.f32.mxu0 0.0
      %7548 = vmatmul.mubr.f32.gmra.mrb[0].mxu0 %v6982
      %v7549 = vpop.f32.mrb[0].mxu0
      %v7550 = vadd.f32 0.0, %v7549
      %v7551 = vpop.f32.mrb[0].mxu0
      %7552 = vmatprep.mubr.f32.mxu0 0.0
      %7553 = vmatmul.mubr.f32.gmra.mrb[0].mxu0 %v6985
      %v7554 = vpop.f32.mrb[0].mxu0
      %v7555 = vadd.f32 0.0, %v7554
      %v7556 = vpop.f32.mrb[0].mxu0
      %7557 = vmatprep.mubr.f32.mxu0 0.0
      %7558 = vmatmul.mubr.f32.gmra.mrb[0].mxu0 %v6988
      %v7559 = vpop.f32.mrb[0].mxu0
      %v7560 = vadd.f32 0.0, %v7559
      %v7561 = vpop.f32.mrb[0].mxu0
      %7562 = vmatprep.mubr.f32.mxu0 0.0
      %7563 = vmatmul.mubr.f32.gmra.mrb[0].mxu0 %v6991
      %v7564 = vpop.f32.mrb[0].mxu0
      %v7565 = vadd.f32 0.0, %v7564
      %v7566 = vpop.f32.mrb[0].mxu0
      %7567 = vmatprep.mubr.f32.mxu0 0.0
      %7568 = vmatmul.mubr.f32.gmra.mrb[0].mxu0 %v6994
      %v7569 = vpop.f32.mrb[0].mxu0
      %v7570 = vadd.f32 0.0, %v7569
      %v7571 = vpop.f32.mrb[0].mxu0
      %7572 = vdwg.mxu0
      %v7573 = vadd.f32 %v6523, %v7063
      %v7574 = vadd.f32 %v6528, %v7068
      %v7575 = vadd.f32 %v6533, %v7073
      %v7576 = vadd.f32 %v6538, %v7078
      %v7577 = vadd.f32 %v6543, %v7083
      %v7578 = vadd.f32 %v6548, %v7088
      %v7579 = vadd.f32 %v6553, %v7093
      %v7580 = vadd.f32 %v6558, %v7098
      %v7581 = vadd.f32 %v6563, %v7103
      %v7582 = vadd.f32 %v6568, %v7108
      %v7583 = vadd.f32 %v6638, %v7217
      %v7584 = vadd.f32 %v6643, %v7222
      %v7585 = vadd.f32 %v6648, %v7227
      %v7586 = vadd.f32 %v6653, %v7232
      %v7587 = vadd.f32 %v6658, %v7237
      %v7588 = vadd.f32 %v6663, %v7242
      %v7589 = vadd.f32 %v6668, %v7247
      %v7590 = vadd.f32 %v6673, %v7252
      %v7591 = vadd.f32 %v6678, %v7257
      %v7592 = vadd.f32 %v6683, %v7262
      %v7593 = vadd.f32 %v6753, %v7371
      %v7594 = vadd.f32 %v6758, %v7376
      %v7595 = vadd.f32 %v6763, %v7381
      %v7596 = vadd.f32 %v6768, %v7386
      %v7597 = vadd.f32 %v6773, %v7391
      %v7598 = vadd.f32 %v6778, %v7396
      %v7599 = vadd.f32 %v6783, %v7401
      %v7600 = vadd.f32 %v6788, %v7406
      %v7601 = vadd.f32 %v6793, %v7411
      %v7602 = vadd.f32 %v6798, %v7416
      %v7603 = vadd.f32 %v6868, %v7525
      %v7604 = vadd.f32 %v6873, %v7530
      %v7605 = vadd.f32 %v6878, %v7535
      %v7606 = vadd.f32 %v6883, %v7540
      %v7607 = vadd.f32 %v6888, %v7545
      %v7608 = vadd.f32 %v6893, %v7550
      %v7609 = vadd.f32 %v6898, %v7555
      %v7610 = vadd.f32 %v6903, %v7560
      %v7611 = vadd.f32 %v6908, %v7565
      %v7612 = vadd.f32 %v6913, %v7570
      %v7613 = vld [vmem:[%s4] sm:$0xff]
      %v7614 = vld [vmem:[%s4 + $0x8] sm:$0xff]
      %v7615 = vld [vmem:[%s4 + $0x10] sm:$0xff]
      %v7616 = vld [vmem:[%s4 + $0x18] sm:$0xff]
      %v7617 = vld [vmem:[%s4 + $0x20] sm:$0xff]
      %v7618 = vld [vmem:[%s4 + $0x28] sm:$0xff]
      %v7619 = vld [vmem:[%s4 + $0x30] sm:$0xff]
      %v7620 = vld [vmem:[%s4 + $0x38] sm:$0xff]
      %v7621 = vld [vmem:[%s4 + $0x40] sm:$0xff]
      %v7622 = vld [vmem:[%s4 + $0x48] sm:$0xff]
      %7624 = vset.pattern.permute.xlu0 0
      %7625 = vperm.xlu0 %7624, %v7613
      %v7626 = vpop.permute.xlu0 %7625
      %7629 = vset.pattern.permute.xlu0 0
      %7630 = vperm.xlu0 %7629, %v7614
      %v7631 = vpop.permute.xlu0 %7630
      %7634 = vset.pattern.permute.xlu0 0
      %7635 = vperm.xlu0 %7634, %v7615
      %v7636 = vpop.permute.xlu0 %7635
      %7639 = vset.pattern.permute.xlu0 0
      %7640 = vperm.xlu0 %7639, %v7616
      %v7641 = vpop.permute.xlu0 %7640
      %7644 = vset.pattern.permute.xlu0 0
      %7645 = vperm.xlu0 %7644, %v7617
      %v7646 = vpop.permute.xlu0 %7645
      %7649 = vset.pattern.permute.xlu0 0
      %7650 = vperm.xlu0 %7649, %v7618
      %v7651 = vpop.permute.xlu0 %7650
      %7654 = vset.pattern.permute.xlu0 0
      %7655 = vperm.xlu0 %7654, %v7619
      %v7656 = vpop.permute.xlu0 %7655
      %7659 = vset.pattern.permute.xlu0 0
      %7660 = vperm.xlu0 %7659, %v7620
      %v7661 = vpop.permute.xlu0 %7660
      %7664 = vset.pattern.permute.xlu0 0
      %7665 = vperm.xlu0 %7664, %v7621
      %v7666 = vpop.permute.xlu0 %7665
      %7669 = vset.pattern.permute.xlu0 0
      %7670 = vperm.xlu0 %7669, %v7622
      %v7671 = vpop.permute.xlu0 %7670
      %v7673 = vadd.f32 %v7573, %v7626
      %v7674 = vadd.f32 %v7574, %v7631
      %v7675 = vadd.f32 %v7575, %v7636
      %v7676 = vadd.f32 %v7576, %v7641
      %v7677 = vadd.f32 %v7577, %v7646
      %v7678 = vadd.f32 %v7578, %v7651
      %v7679 = vadd.f32 %v7579, %v7656
      %v7680 = vadd.f32 %v7580, %v7661
      %v7681 = vadd.f32 %v7581, %v7666
      %v7682 = vadd.f32 %v7582, %v7671
      %v7683 = vadd.f32 %v7583, %v7626
      %v7684 = vadd.f32 %v7584, %v7631
      %v7685 = vadd.f32 %v7585, %v7636
      %v7686 = vadd.f32 %v7586, %v7641
      %v7687 = vadd.f32 %v7587, %v7646
      %v7688 = vadd.f32 %v7588, %v7651
      %v7689 = vadd.f32 %v7589, %v7656
      %v7690 = vadd.f32 %v7590, %v7661
      %v7691 = vadd.f32 %v7591, %v7666
      %v7692 = vadd.f32 %v7592, %v7671
      %v7693 = vadd.f32 %v7593, %v7626
      %v7694 = vadd.f32 %v7594, %v7631
      %v7695 = vadd.f32 %v7595, %v7636
      %v7696 = vadd.f32 %v7596, %v7641
      %v7697 = vadd.f32 %v7597, %v7646
      %v7698 = vadd.f32 %v7598, %v7651
      %v7699 = vadd.f32 %v7599, %v7656
      %v7700 = vadd.f32 %v7600, %v7661
      %v7701 = vadd.f32 %v7601, %v7666
      %v7702 = vadd.f32 %v7602, %v7671
      %v7703 = vadd.f32 %v7603, %v7626
      %v7704 = vadd.f32 %v7604, %v7631
      %v7705 = vadd.f32 %v7605, %v7636
      %v7706 = vadd.f32 %v7606, %v7641
      %v7707 = vadd.f32 %v7607, %v7646
      %v7708 = vadd.f32 %v7608, %v7651
      %v7709 = vadd.f32 %v7609, %v7656
      %v7710 = vadd.f32 %v7610, %v7661
      %v7711 = vadd.f32 %v7611, %v7666
      %v7712 = vadd.f32 %v7612, %v7671
      %v7713 = vmax.f32 %v7673, 0.0
      %v7714 = vmax.f32 %v7674, 0.0
      %v7715 = vmax.f32 %v7675, 0.0
      %v7716 = vmax.f32 %v7676, 0.0
      %v7717 = vmax.f32 %v7677, 0.0
      %v7718 = vmax.f32 %v7678, 0.0
      %v7719 = vmax.f32 %v7679, 0.0
      %v7720 = vmax.f32 %v7680, 0.0
      %v7721 = vmax.f32 %v7681, 0.0
      %v7722 = vmax.f32 %v7682, 0.0
      %v7723 = vmax.f32 %v7683, 0.0
      %v7724 = vmax.f32 %v7684, 0.0
      %v7725 = vmax.f32 %v7685, 0.0
      %v7726 = vmax.f32 %v7686, 0.0
      %v7727 = vmax.f32 %v7687, 0.0
      %v7728 = vmax.f32 %v7688, 0.0
      %v7729 = vmax.f32 %v7689, 0.0
      %v7730 = vmax.f32 %v7690, 0.0
      %v7731 = vmax.f32 %v7691, 0.0
      %v7732 = vmax.f32 %v7692, 0.0
      %v7733 = vmax.f32 %v7693, 0.0
      %v7734 = vmax.f32 %v7694, 0.0
      %v7735 = vmax.f32 %v7695, 0.0
      %v7736 = vmax.f32 %v7696, 0.0
      %v7737 = vmax.f32 %v7697, 0.0
      %v7738 = vmax.f32 %v7698, 0.0
      %v7739 = vmax.f32 %v7699, 0.0
      %v7740 = vmax.f32 %v7700, 0.0
      %v7741 = vmax.f32 %v7701, 0.0
      %v7742 = vmax.f32 %v7702, 0.0
      %v7743 = vmax.f32 %v7703, 0.0
      %v7744 = vmax.f32 %v7704, 0.0
      %v7745 = vmax.f32 %v7705, 0.0
      %v7746 = vmax.f32 %v7706, 0.0
      %v7747 = vmax.f32 %v7707, 0.0
      %v7748 = vmax.f32 %v7708, 0.0
      %v7749 = vmax.f32 %v7709, 0.0
      %v7750 = vmax.f32 %v7710, 0.0
      %v7751 = vmax.f32 %v7711, 0.0
      %v7752 = vmax.f32 %v7712, 0.0
      %s7753 = scalar_lea.vmem %s3, 240
      %v7754 = vld [vmem:[%s7753] sm:$0xff]
      %v7755 = vld [vmem:[%s7753 + $0x8] sm:$0xff]
      %v7756 = vld [vmem:[%s7753 + $0x10] sm:$0xff]
      %v7757 = vld [vmem:[%s7753 + $0x18] sm:$0xff]
      %v7758 = vld [vmem:[%s7753 + $0x20] sm:$0xff]
      %v7759 = vld [vmem:[%s7753 + $0x28] sm:$0xff]
      %v7760 = vld [vmem:[%s7753 + $0x30] sm:$0xff]
      %v7761 = vld [vmem:[%s7753 + $0x38] sm:$0xff]
      %v7762 = vld [vmem:[%s7753 + $0x40] sm:$0xff]
      %v7763 = vld [vmem:[%s7753 + $0x48] sm:$0xff]
      %s7764 = scalar_lea.vmem %s3, 320
      %v7765 = vld [vmem:[%s7764] sm:$0xff]
      %v7766 = vld [vmem:[%s7764 + $0x8] sm:$0xff]
      %v7767 = vld [vmem:[%s7764 + $0x10] sm:$0xff]
      %v7768 = vld [vmem:[%s7764 + $0x18] sm:$0xff]
      %v7769 = vld [vmem:[%s7764 + $0x20] sm:$0xff]
      %v7770 = vld [vmem:[%s7764 + $0x28] sm:$0xff]
      %v7771 = vld [vmem:[%s7764 + $0x30] sm:$0xff]
      %v7772 = vld [vmem:[%s7764 + $0x38] sm:$0xff]
      %v7773 = vld [vmem:[%s7764 + $0x40] sm:$0xff]
      %v7774 = vld [vmem:[%s7764 + $0x48] sm:$0xff]
      %v7776 = vsel %vm5779, %v7765, 0
      %v7779 = vsel %vm5779, %v7766, 0
      %v7782 = vsel %vm5779, %v7767, 0
      %v7785 = vsel %vm5779, %v7768, 0
      %v7788 = vsel %vm5779, %v7769, 0
      %v7791 = vsel %vm5779, %v7770, 0
      %v7794 = vsel %vm5779, %v7771, 0
      %v7797 = vsel %vm5779, %v7772, 0
      %v7800 = vsel %vm5779, %v7773, 0
      %v7803 = vsel %vm5779, %v7774, 0
      %7805 = vmatprep.subr.mxu0 0.0
      %7806 = vmatpush1.msra.mxu0 %v5741
      %7807 = vmatprep.subr.mxu0 0.0
      %7808 = vmatpush1.msra.mxu0 %v5743
      %7809 = vmatprep.subr.mxu0 0.0
      %7810 = vmatpush1.msra.mxu0 %v5745
      %7811 = vmatprep.subr.mxu0 0.0
      %7812 = vmatpush1.msra.mxu0 %v5747
      %7813 = vmatprep.subr.mxu0 0.0
      %7814 = vmatpush1.msra.mxu0 %v5749
      %7815 = vmatprep.subr.mxu0 0.0
      %7816 = vmatpush1.msra.mxu0 %v5751
      %7817 = vmatprep.subr.mxu0 0.0
      %7818 = vmatpush1.msra.mxu0 %v5753
      %7819 = vmatprep.subr.mxu0 0.0
      %7820 = vmatpush1.msra.mxu0 %v5755
      %7821 = vmatprep.subr.mxu0 0.0
      %7822 = vmatpush1.msra.mxu0 %v5757
      %7823 = vmatprep.subr.mxu0 0.0
      %7824 = vmatpush1.msra.mxu0 %v5759
      %7825 = vmatprep.subr.mxu0 0.0
      %7826 = vmatpush1.msra.mxu0 %v5761
      %7827 = vmatprep.subr.mxu0 0.0
      %7828 = vmatpush1.msra.mxu0 %v5763
      %7829 = vmatprep.subr.mxu0 0.0
      %7830 = vmatpush1.msra.mxu0 %v5765
      %7831 = vmatprep.subr.mxu0 0.0
      %7832 = vmatpush1.msra.mxu0 0.0
      %7833 = vmatprep.subr.mxu0 0.0
      %7834 = vmatpush1.msra.mxu0 0.0
      %7835 = vmatprep.subr.mxu0 0.0
      %7836 = vmatpush1.msra.mxu0 0.0
      %7837 = vmatprep.subr.mxu0 0.0
      %7838 = vmatpush1.msra.mxu0 0.0
      %7839 = vmatprep.subr.mxu0 0.0
      %7840 = vmatpush1.msra.mxu0 0.0
      %7841 = vmatprep.subr.mxu0 0.0
      %7842 = vmatpush1.msra.mxu0 0.0
      %7843 = vmatprep.subr.mxu0 0.0
      %7844 = vmatpush1.msra.mxu0 0.0
      %7845 = vmatprep.subr.mxu0 0.0
      %7846 = vmatpush1.msra.mxu0 0.0
      %7847 = vmatprep.subr.mxu0 0.0
      %7848 = vmatpush1.msra.mxu0 0.0
      %7849 = vmatprep.subr.mxu0 0.0
      %7850 = vmatpush1.msra.mxu0 0.0
      %7851 = vmatprep.subr.mxu0 0.0
      %7852 = vmatpush1.msra.mxu0 0.0
      %7853 = vmatprep.subr.mxu0 0.0
      %7854 = vmatpush1.msra.mxu0 0.0
      %7855 = vmatprep.subr.mxu0 0.0
      %7856 = vmatpush1.msra.mxu0 0.0
      %7857 = vmatprep.subr.mxu0 0.0
      %7858 = vmatpush1.msra.mxu0 0.0
      %7859 = vmatprep.subr.mxu0 0.0
      %7860 = vmatpush1.msra.mxu0 0.0
      %7861 = vmatprep.subr.mxu0 0.0
      %7862 = vmatpush1.msra.mxu0 0.0
      %7863 = vmatprep.subr.mxu0 0.0
      %7864 = vmatpush1.msra.mxu0 0.0
      %7865 = vmatprep.subr.mxu0 0.0
      %7866 = vmatpush1.msra.mxu0 0.0
      %7867 = vmatprep.subr.mxu0 0.0
      %7868 = vmatpush1.msra.mxu0 0.0
      %7869 = vmatprep.mubr.f32.mxu0 0.0
      %7870 = vmatmul.mubr.f32.gmra.mrb[0].mxu0 %v7776
      %v7871 = vpop.f32.mrb[0].mxu0
      %v7872 = vadd.f32 0.0, %v7871
      %v7873 = vpop.f32.mrb[0].mxu0
      %7874 = vmatprep.mubr.f32.mxu0 0.0
      %7875 = vmatmul.mubr.f32.gmra.mrb[0].mxu0 %v7779
      %v7876 = vpop.f32.mrb[0].mxu0
      %v7877 = vadd.f32 0.0, %v7876
      %v7878 = vpop.f32.mrb[0].mxu0
      %7879 = vmatprep.mubr.f32.mxu0 0.0
      %7880 = vmatmul.mubr.f32.gmra.mrb[0].mxu0 %v7782
      %v7881 = vpop.f32.mrb[0].mxu0
      %v7882 = vadd.f32 0.0, %v7881
      %v7883 = vpop.f32.mrb[0].mxu0
      %7884 = vmatprep.mubr.f32.mxu0 0.0
      %7885 = vmatmul.mubr.f32.gmra.mrb[0].mxu0 %v7785
      %v7886 = vpop.f32.mrb[0].mxu0
      %v7887 = vadd.f32 0.0, %v7886
      %v7888 = vpop.f32.mrb[0].mxu0
      %7889 = vmatprep.mubr.f32.mxu0 0.0
      %7890 = vmatmul.mubr.f32.gmra.mrb[0].mxu0 %v7788
      %v7891 = vpop.f32.mrb[0].mxu0
      %v7892 = vadd.f32 0.0, %v7891
      %v7893 = vpop.f32.mrb[0].mxu0
      %7894 = vmatprep.mubr.f32.mxu0 0.0
      %7895 = vmatmul.mubr.f32.gmra.mrb[0].mxu0 %v7791
      %v7896 = vpop.f32.mrb[0].mxu0
      %v7897 = vadd.f32 0.0, %v7896
      %v7898 = vpop.f32.mrb[0].mxu0
      %7899 = vmatprep.mubr.f32.mxu0 0.0
      %7900 = vmatmul.mubr.f32.gmra.mrb[0].mxu0 %v7794
      %v7901 = vpop.f32.mrb[0].mxu0
      %v7902 = vadd.f32 0.0, %v7901
      %v7903 = vpop.f32.mrb[0].mxu0
      %7904 = vmatprep.mubr.f32.mxu0 0.0
      %7905 = vmatmul.mubr.f32.gmra.mrb[0].mxu0 %v7797
      %v7906 = vpop.f32.mrb[0].mxu0
      %v7907 = vadd.f32 0.0, %v7906
      %v7908 = vpop.f32.mrb[0].mxu0
      %7909 = vmatprep.mubr.f32.mxu0 0.0
      %7910 = vmatmul.mubr.f32.gmra.mrb[0].mxu0 %v7800
      %v7911 = vpop.f32.mrb[0].mxu0
      %v7912 = vadd.f32 0.0, %v7911
      %v7913 = vpop.f32.mrb[0].mxu0
      %7914 = vmatprep.mubr.f32.mxu0 0.0
      %7915 = vmatmul.mubr.f32.gmra.mrb[0].mxu0 %v7803
      %v7916 = vpop.f32.mrb[0].mxu0
      %v7917 = vadd.f32 0.0, %v7916
      %v7918 = vpop.f32.mrb[0].mxu0
      %7919 = vdwg.mxu0
      %7920 = vmatprep.subr.mxu0 0.0
      %7921 = vmatpush1.msra.mxu0 %v5939
      %7922 = vmatprep.subr.mxu0 0.0
      %7923 = vmatpush1.msra.mxu0 %v5941
      %7924 = vmatprep.subr.mxu0 0.0
      %7925 = vmatpush1.msra.mxu0 %v5943
      %7926 = vmatprep.subr.mxu0 0.0
      %7927 = vmatpush1.msra.mxu0 %v5945
      %7928 = vmatprep.subr.mxu0 0.0
      %7929 = vmatpush1.msra.mxu0 %v5947
      %7930 = vmatprep.subr.mxu0 0.0
      %7931 = vmatpush1.msra.mxu0 %v5949
      %7932 = vmatprep.subr.mxu0 0.0
      %7933 = vmatpush1.msra.mxu0 %v5951
      %7934 = vmatprep.subr.mxu0 0.0
      %7935 = vmatpush1.msra.mxu0 %v5953
      %7936 = vmatprep.subr.mxu0 0.0
      %7937 = vmatpush1.msra.mxu0 %v5955
      %7938 = vmatprep.subr.mxu0 0.0
      %7939 = vmatpush1.msra.mxu0 %v5957
      %7940 = vmatprep.subr.mxu0 0.0
      %7941 = vmatpush1.msra.mxu0 %v5959
      %7942 = vmatprep.subr.mxu0 0.0
      %7943 = vmatpush1.msra.mxu0 %v5961
      %7944 = vmatprep.subr.mxu0 0.0
      %7945 = vmatpush1.msra.mxu0 %v5963
      %7946 = vmatprep.subr.mxu0 0.0
      %7947 = vmatpush1.msra.mxu0 0.0
      %7948 = vmatprep.subr.mxu0 0.0
      %7949 = vmatpush1.msra.mxu0 0.0
      %7950 = vmatprep.subr.mxu0 0.0
      %7951 = vmatpush1.msra.mxu0 0.0
      %7952 = vmatprep.subr.mxu0 0.0
      %7953 = vmatpush1.msra.mxu0 0.0
      %7954 = vmatprep.subr.mxu0 0.0
      %7955 = vmatpush1.msra.mxu0 0.0
      %7956 = vmatprep.subr.mxu0 0.0
      %7957 = vmatpush1.msra.mxu0 0.0
      %7958 = vmatprep.subr.mxu0 0.0
      %7959 = vmatpush1.msra.mxu0 0.0
      %7960 = vmatprep.subr.mxu0 0.0
      %7961 = vmatpush1.msra.mxu0 0.0
      %7962 = vmatprep.subr.mxu0 0.0
      %7963 = vmatpush1.msra.mxu0 0.0
      %7964 = vmatprep.subr.mxu0 0.0
      %7965 = vmatpush1.msra.mxu0 0.0
      %7966 = vmatprep.subr.mxu0 0.0
      %7967 = vmatpush1.msra.mxu0 0.0
      %7968 = vmatprep.subr.mxu0 0.0
      %7969 = vmatpush1.msra.mxu0 0.0
      %7970 = vmatprep.subr.mxu0 0.0
      %7971 = vmatpush1.msra.mxu0 0.0
      %7972 = vmatprep.subr.mxu0 0.0
      %7973 = vmatpush1.msra.mxu0 0.0
      %7974 = vmatprep.subr.mxu0 0.0
      %7975 = vmatpush1.msra.mxu0 0.0
      %7976 = vmatprep.subr.mxu0 0.0
      %7977 = vmatpush1.msra.mxu0 0.0
      %7978 = vmatprep.subr.mxu0 0.0
      %7979 = vmatpush1.msra.mxu0 0.0
      %7980 = vmatprep.subr.mxu0 0.0
      %7981 = vmatpush1.msra.mxu0 0.0
      %7982 = vmatprep.subr.mxu0 0.0
      %7983 = vmatpush1.msra.mxu0 0.0
      %7984 = vmatprep.mubr.f32.mxu0 0.0
      %7985 = vmatmul.mubr.f32.gmra.mrb[0].mxu0 %v7776
      %v7986 = vpop.f32.mrb[0].mxu0
      %v7987 = vadd.f32 0.0, %v7986
      %v7988 = vpop.f32.mrb[0].mxu0
      %7989 = vmatprep.mubr.f32.mxu0 0.0
      %7990 = vmatmul.mubr.f32.gmra.mrb[0].mxu0 %v7779
      %v7991 = vpop.f32.mrb[0].mxu0
      %v7992 = vadd.f32 0.0, %v7991
      %v7993 = vpop.f32.mrb[0].mxu0
      %7994 = vmatprep.mubr.f32.mxu0 0.0
      %7995 = vmatmul.mubr.f32.gmra.mrb[0].mxu0 %v7782
      %v7996 = vpop.f32.mrb[0].mxu0
      %v7997 = vadd.f32 0.0, %v7996
      %v7998 = vpop.f32.mrb[0].mxu0
      %7999 = vmatprep.mubr.f32.mxu0 0.0
      %8000 = vmatmul.mubr.f32.gmra.mrb[0].mxu0 %v7785
      %v8001 = vpop.f32.mrb[0].mxu0
      %v8002 = vadd.f32 0.0, %v8001
      %v8003 = vpop.f32.mrb[0].mxu0
      %8004 = vmatprep.mubr.f32.mxu0 0.0
      %8005 = vmatmul.mubr.f32.gmra.mrb[0].mxu0 %v7788
      %v8006 = vpop.f32.mrb[0].mxu0
      %v8007 = vadd.f32 0.0, %v8006
      %v8008 = vpop.f32.mrb[0].mxu0
      %8009 = vmatprep.mubr.f32.mxu0 0.0
      %8010 = vmatmul.mubr.f32.gmra.mrb[0].mxu0 %v7791
      %v8011 = vpop.f32.mrb[0].mxu0
      %v8012 = vadd.f32 0.0, %v8011
      %v8013 = vpop.f32.mrb[0].mxu0
      %8014 = vmatprep.mubr.f32.mxu0 0.0
      %8015 = vmatmul.mubr.f32.gmra.mrb[0].mxu0 %v7794
      %v8016 = vpop.f32.mrb[0].mxu0
      %v8017 = vadd.f32 0.0, %v8016
      %v8018 = vpop.f32.mrb[0].mxu0
      %8019 = vmatprep.mubr.f32.mxu0 0.0
      %8020 = vmatmul.mubr.f32.gmra.mrb[0].mxu0 %v7797
      %v8021 = vpop.f32.mrb[0].mxu0
      %v8022 = vadd.f32 0.0, %v8021
      %v8023 = vpop.f32.mrb[0].mxu0
      %8024 = vmatprep.mubr.f32.mxu0 0.0
      %8025 = vmatmul.mubr.f32.gmra.mrb[0].mxu0 %v7800
      %v8026 = vpop.f32.mrb[0].mxu0
      %v8027 = vadd.f32 0.0, %v8026
      %v8028 = vpop.f32.mrb[0].mxu0
      %8029 = vmatprep.mubr.f32.mxu0 0.0
      %8030 = vmatmul.mubr.f32.gmra.mrb[0].mxu0 %v7803
      %v8031 = vpop.f32.mrb[0].mxu0
      %v8032 = vadd.f32 0.0, %v8031
      %v8033 = vpop.f32.mrb[0].mxu0
      %8034 = vdwg.mxu0
      %8035 = vmatprep.subr.mxu0 0.0
      %8036 = vmatpush1.msra.mxu0 %v6106
      %8037 = vmatprep.subr.mxu0 0.0
      %8038 = vmatpush1.msra.mxu0 %v6108
      %8039 = vmatprep.subr.mxu0 0.0
      %8040 = vmatpush1.msra.mxu0 %v6110
      %8041 = vmatprep.subr.mxu0 0.0
      %8042 = vmatpush1.msra.mxu0 %v6112
      %8043 = vmatprep.subr.mxu0 0.0
      %8044 = vmatpush1.msra.mxu0 %v6114
      %8045 = vmatprep.subr.mxu0 0.0
      %8046 = vmatpush1.msra.mxu0 %v6116
      %8047 = vmatprep.subr.mxu0 0.0
      %8048 = vmatpush1.msra.mxu0 %v6118
      %8049 = vmatprep.subr.mxu0 0.0
      %8050 = vmatpush1.msra.mxu0 %v6120
      %8051 = vmatprep.subr.mxu0 0.0
      %8052 = vmatpush1.msra.mxu0 %v6122
      %8053 = vmatprep.subr.mxu0 0.0
      %8054 = vmatpush1.msra.mxu0 %v6124
      %8055 = vmatprep.subr.mxu0 0.0
      %8056 = vmatpush1.msra.mxu0 %v6126
      %8057 = vmatprep.subr.mxu0 0.0
      %8058 = vmatpush1.msra.mxu0 %v6128
      %8059 = vmatprep.subr.mxu0 0.0
      %8060 = vmatpush1.msra.mxu0 %v6130
      %8061 = vmatprep.subr.mxu0 0.0
      %8062 = vmatpush1.msra.mxu0 0.0
      %8063 = vmatprep.subr.mxu0 0.0
      %8064 = vmatpush1.msra.mxu0 0.0
      %8065 = vmatprep.subr.mxu0 0.0
      %8066 = vmatpush1.msra.mxu0 0.0
      %8067 = vmatprep.subr.mxu0 0.0
      %8068 = vmatpush1.msra.mxu0 0.0
      %8069 = vmatprep.subr.mxu0 0.0
      %8070 = vmatpush1.msra.mxu0 0.0
      %8071 = vmatprep.subr.mxu0 0.0
      %8072 = vmatpush1.msra.mxu0 0.0
      %8073 = vmatprep.subr.mxu0 0.0
      %8074 = vmatpush1.msra.mxu0 0.0
      %8075 = vmatprep.subr.mxu0 0.0
      %8076 = vmatpush1.msra.mxu0 0.0
      %8077 = vmatprep.subr.mxu0 0.0
      %8078 = vmatpush1.msra.mxu0 0.0
      %8079 = vmatprep.subr.mxu0 0.0
      %8080 = vmatpush1.msra.mxu0 0.0
      %8081 = vmatprep.subr.mxu0 0.0
      %8082 = vmatpush1.msra.mxu0 0.0
      %8083 = vmatprep.subr.mxu0 0.0
      %8084 = vmatpush1.msra.mxu0 0.0
      %8085 = vmatprep.subr.mxu0 0.0
      %8086 = vmatpush1.msra.mxu0 0.0
      %8087 = vmatprep.subr.mxu0 0.0
      %8088 = vmatpush1.msra.mxu0 0.0
      %8089 = vmatprep.subr.mxu0 0.0
      %8090 = vmatpush1.msra.mxu0 0.0
      %8091 = vmatprep.subr.mxu0 0.0
      %8092 = vmatpush1.msra.mxu0 0.0
      %8093 = vmatprep.subr.mxu0 0.0
      %8094 = vmatpush1.msra.mxu0 0.0
      %8095 = vmatprep.subr.mxu0 0.0
      %8096 = vmatpush1.msra.mxu0 0.0
      %8097 = vmatprep.subr.mxu0 0.0
      %8098 = vmatpush1.msra.mxu0 0.0
      %8099 = vmatprep.mubr.f32.mxu0 0.0
      %8100 = vmatmul.mubr.f32.gmra.mrb[0].mxu0 %v7776
      %v8101 = vpop.f32.mrb[0].mxu0
      %v8102 = vadd.f32 0.0, %v8101
      %v8103 = vpop.f32.mrb[0].mxu0
      %8104 = vmatprep.mubr.f32.mxu0 0.0
      %8105 = vmatmul.mubr.f32.gmra.mrb[0].mxu0 %v7779
      %v8106 = vpop.f32.mrb[0].mxu0
      %v8107 = vadd.f32 0.0, %v8106
      %v8108 = vpop.f32.mrb[0].mxu0
      %8109 = vmatprep.mubr.f32.mxu0 0.0
      %8110 = vmatmul.mubr.f32.gmra.mrb[0].mxu0 %v7782
      %v8111 = vpop.f32.mrb[0].mxu0
      %v8112 = vadd.f32 0.0, %v8111
      %v8113 = vpop.f32.mrb[0].mxu0
      %8114 = vmatprep.mubr.f32.mxu0 0.0
      %8115 = vmatmul.mubr.f32.gmra.mrb[0].mxu0 %v7785
      %v8116 = vpop.f32.mrb[0].mxu0
      %v8117 = vadd.f32 0.0, %v8116
      %v8118 = vpop.f32.mrb[0].mxu0
      %8119 = vmatprep.mubr.f32.mxu0 0.0
      %8120 = vmatmul.mubr.f32.gmra.mrb[0].mxu0 %v7788
      %v8121 = vpop.f32.mrb[0].mxu0
      %v8122 = vadd.f32 0.0, %v8121
      %v8123 = vpop.f32.mrb[0].mxu0
      %8124 = vmatprep.mubr.f32.mxu0 0.0
      %8125 = vmatmul.mubr.f32.gmra.mrb[0].mxu0 %v7791
      %v8126 = vpop.f32.mrb[0].mxu0
      %v8127 = vadd.f32 0.0, %v8126
      %v8128 = vpop.f32.mrb[0].mxu0
      %8129 = vmatprep.mubr.f32.mxu0 0.0
      %8130 = vmatmul.mubr.f32.gmra.mrb[0].mxu0 %v7794
      %v8131 = vpop.f32.mrb[0].mxu0
      %v8132 = vadd.f32 0.0, %v8131
      %v8133 = vpop.f32.mrb[0].mxu0
      %8134 = vmatprep.mubr.f32.mxu0 0.0
      %8135 = vmatmul.mubr.f32.gmra.mrb[0].mxu0 %v7797
      %v8136 = vpop.f32.mrb[0].mxu0
      %v8137 = vadd.f32 0.0, %v8136
      %v8138 = vpop.f32.mrb[0].mxu0
      %8139 = vmatprep.mubr.f32.mxu0 0.0
      %8140 = vmatmul.mubr.f32.gmra.mrb[0].mxu0 %v7800
      %v8141 = vpop.f32.mrb[0].mxu0
      %v8142 = vadd.f32 0.0, %v8141
      %v8143 = vpop.f32.mrb[0].mxu0
      %8144 = vmatprep.mubr.f32.mxu0 0.0
      %8145 = vmatmul.mubr.f32.gmra.mrb[0].mxu0 %v7803
      %v8146 = vpop.f32.mrb[0].mxu0
      %v8147 = vadd.f32 0.0, %v8146
      %v8148 = vpop.f32.mrb[0].mxu0
      %8149 = vdwg.mxu0
      %8150 = vmatprep.subr.mxu0 0.0
      %8151 = vmatpush1.msra.mxu0 %v6273
      %8152 = vmatprep.subr.mxu0 0.0
      %8153 = vmatpush1.msra.mxu0 %v6275
      %8154 = vmatprep.subr.mxu0 0.0
      %8155 = vmatpush1.msra.mxu0 %v6277
      %8156 = vmatprep.subr.mxu0 0.0
      %8157 = vmatpush1.msra.mxu0 %v6279
      %8158 = vmatprep.subr.mxu0 0.0
      %8159 = vmatpush1.msra.mxu0 %v6281
      %8160 = vmatprep.subr.mxu0 0.0
      %8161 = vmatpush1.msra.mxu0 %v6283
      %8162 = vmatprep.subr.mxu0 0.0
      %8163 = vmatpush1.msra.mxu0 %v6285
      %8164 = vmatprep.subr.mxu0 0.0
      %8165 = vmatpush1.msra.mxu0 %v6287
      %8166 = vmatprep.subr.mxu0 0.0
      %8167 = vmatpush1.msra.mxu0 %v6289
      %8168 = vmatprep.subr.mxu0 0.0
      %8169 = vmatpush1.msra.mxu0 %v6291
      %8170 = vmatprep.subr.mxu0 0.0
      %8171 = vmatpush1.msra.mxu0 %v6293
      %8172 = vmatprep.subr.mxu0 0.0
      %8173 = vmatpush1.msra.mxu0 %v6295
      %8174 = vmatprep.subr.mxu0 0.0
      %8175 = vmatpush1.msra.mxu0 %v6297
      %8176 = vmatprep.subr.mxu0 0.0
      %8177 = vmatpush1.msra.mxu0 0.0
      %8178 = vmatprep.subr.mxu0 0.0
      %8179 = vmatpush1.msra.mxu0 0.0
      %8180 = vmatprep.subr.mxu0 0.0
      %8181 = vmatpush1.msra.mxu0 0.0
      %8182 = vmatprep.subr.mxu0 0.0
      %8183 = vmatpush1.msra.mxu0 0.0
      %8184 = vmatprep.subr.mxu0 0.0
      %8185 = vmatpush1.msra.mxu0 0.0
      %8186 = vmatprep.subr.mxu0 0.0
      %8187 = vmatpush1.msra.mxu0 0.0
      %8188 = vmatprep.subr.mxu0 0.0
      %8189 = vmatpush1.msra.mxu0 0.0
      %8190 = vmatprep.subr.mxu0 0.0
      %8191 = vmatpush1.msra.mxu0 0.0
      %8192 = vmatprep.subr.mxu0 0.0
      %8193 = vmatpush1.msra.mxu0 0.0
      %8194 = vmatprep.subr.mxu0 0.0
      %8195 = vmatpush1.msra.mxu0 0.0
      %8196 = vmatprep.subr.mxu0 0.0
      %8197 = vmatpush1.msra.mxu0 0.0
      %8198 = vmatprep.subr.mxu0 0.0
      %8199 = vmatpush1.msra.mxu0 0.0
      %8200 = vmatprep.subr.mxu0 0.0
      %8201 = vmatpush1.msra.mxu0 0.0
      %8202 = vmatprep.subr.mxu0 0.0
      %8203 = vmatpush1.msra.mxu0 0.0
      %8204 = vmatprep.subr.mxu0 0.0
      %8205 = vmatpush1.msra.mxu0 0.0
      %8206 = vmatprep.subr.mxu0 0.0
      %8207 = vmatpush1.msra.mxu0 0.0
      %8208 = vmatprep.subr.mxu0 0.0
      %8209 = vmatpush1.msra.mxu0 0.0
      %8210 = vmatprep.subr.mxu0 0.0
      %8211 = vmatpush1.msra.mxu0 0.0
      %8212 = vmatprep.subr.mxu0 0.0
      %8213 = vmatpush1.msra.mxu0 0.0
      %8214 = vmatprep.mubr.f32.mxu0 0.0
      %8215 = vmatmul.mubr.f32.gmra.mrb[0].mxu0 %v7776
      %v8216 = vpop.f32.mrb[0].mxu0
      %v8217 = vadd.f32 0.0, %v8216
      %v8218 = vpop.f32.mrb[0].mxu0
      %8219 = vmatprep.mubr.f32.mxu0 0.0
      %8220 = vmatmul.mubr.f32.gmra.mrb[0].mxu0 %v7779
      %v8221 = vpop.f32.mrb[0].mxu0
      %v8222 = vadd.f32 0.0, %v8221
      %v8223 = vpop.f32.mrb[0].mxu0
      %8224 = vmatprep.mubr.f32.mxu0 0.0
      %8225 = vmatmul.mubr.f32.gmra.mrb[0].mxu0 %v7782
      %v8226 = vpop.f32.mrb[0].mxu0
      %v8227 = vadd.f32 0.0, %v8226
      %v8228 = vpop.f32.mrb[0].mxu0
      %8229 = vmatprep.mubr.f32.mxu0 0.0
      %8230 = vmatmul.mubr.f32.gmra.mrb[0].mxu0 %v7785
      %v8231 = vpop.f32.mrb[0].mxu0
      %v8232 = vadd.f32 0.0, %v8231
      %v8233 = vpop.f32.mrb[0].mxu0
      %8234 = vmatprep.mubr.f32.mxu0 0.0
      %8235 = vmatmul.mubr.f32.gmra.mrb[0].mxu0 %v7788
      %v8236 = vpop.f32.mrb[0].mxu0
      %v8237 = vadd.f32 0.0, %v8236
      %v8238 = vpop.f32.mrb[0].mxu0
      %8239 = vmatprep.mubr.f32.mxu0 0.0
      %8240 = vmatmul.mubr.f32.gmra.mrb[0].mxu0 %v7791
      %v8241 = vpop.f32.mrb[0].mxu0
      %v8242 = vadd.f32 0.0, %v8241
      %v8243 = vpop.f32.mrb[0].mxu0
      %8244 = vmatprep.mubr.f32.mxu0 0.0
      %8245 = vmatmul.mubr.f32.gmra.mrb[0].mxu0 %v7794
      %v8246 = vpop.f32.mrb[0].mxu0
      %v8247 = vadd.f32 0.0, %v8246
      %v8248 = vpop.f32.mrb[0].mxu0
      %8249 = vmatprep.mubr.f32.mxu0 0.0
      %8250 = vmatmul.mubr.f32.gmra.mrb[0].mxu0 %v7797
      %v8251 = vpop.f32.mrb[0].mxu0
      %v8252 = vadd.f32 0.0, %v8251
      %v8253 = vpop.f32.mrb[0].mxu0
      %8254 = vmatprep.mubr.f32.mxu0 0.0
      %8255 = vmatmul.mubr.f32.gmra.mrb[0].mxu0 %v7800
      %v8256 = vpop.f32.mrb[0].mxu0
      %v8257 = vadd.f32 0.0, %v8256
      %v8258 = vpop.f32.mrb[0].mxu0
      %8259 = vmatprep.mubr.f32.mxu0 0.0
      %8260 = vmatmul.mubr.f32.gmra.mrb[0].mxu0 %v7803
      %v8261 = vpop.f32.mrb[0].mxu0
      %v8262 = vadd.f32 0.0, %v8261
      %v8263 = vpop.f32.mrb[0].mxu0
      %8264 = vdwg.mxu0
      %v8266 = vsel %vm5779, %v7754, 0
      %v8269 = vsel %vm5779, %v7755, 0
      %v8272 = vsel %vm5779, %v7756, 0
      %v8275 = vsel %vm5779, %v7757, 0
      %v8278 = vsel %vm5779, %v7758, 0
      %v8281 = vsel %vm5779, %v7759, 0
      %v8284 = vsel %vm5779, %v7760, 0
      %v8287 = vsel %vm5779, %v7761, 0
      %v8290 = vsel %vm5779, %v7762, 0
      %v8293 = vsel %vm5779, %v7763, 0
      %8295 = vmatprep.subr.mxu0 0.0
      %8296 = vmatpush1.msra.mxu0 %v5654
      %8297 = vmatprep.subr.mxu0 0.0
      %8298 = vmatpush1.msra.mxu0 %v5655
      %8299 = vmatprep.subr.mxu0 0.0
      %8300 = vmatpush1.msra.mxu0 %v5656
      %8301 = vmatprep.subr.mxu0 0.0
      %8302 = vmatpush1.msra.mxu0 %v5657
      %8303 = vmatprep.subr.mxu0 0.0
      %8304 = vmatpush1.msra.mxu0 %v5658
      %8305 = vmatprep.subr.mxu0 0.0
      %8306 = vmatpush1.msra.mxu0 %v5659
      %8307 = vmatprep.subr.mxu0 0.0
      %8308 = vmatpush1.msra.mxu0 %v5660
      %8309 = vmatprep.subr.mxu0 0.0
      %8310 = vmatpush1.msra.mxu0 %v5661
      %8311 = vmatprep.subr.mxu0 0.0
      %8312 = vmatpush1.msra.mxu0 %v5662
      %8313 = vmatprep.subr.mxu0 0.0
      %8314 = vmatpush1.msra.mxu0 %v5663
      %8315 = vmatprep.subr.mxu0 0.0
      %8316 = vmatpush1.msra.mxu0 %v5664
      %8317 = vmatprep.subr.mxu0 0.0
      %8318 = vmatpush1.msra.mxu0 %v5665
      %8319 = vmatprep.subr.mxu0 0.0
      %8320 = vmatpush1.msra.mxu0 %v5666
      %8321 = vmatprep.subr.mxu0 0.0
      %8322 = vmatpush1.msra.mxu0 0.0
      %8323 = vmatprep.subr.mxu0 0.0
      %8324 = vmatpush1.msra.mxu0 0.0
      %8325 = vmatprep.subr.mxu0 0.0
      %8326 = vmatpush1.msra.mxu0 0.0
      %8327 = vmatprep.subr.mxu0 0.0
      %8328 = vmatpush1.msra.mxu0 0.0
      %8329 = vmatprep.subr.mxu0 0.0
      %8330 = vmatpush1.msra.mxu0 0.0
      %8331 = vmatprep.subr.mxu0 0.0
      %8332 = vmatpush1.msra.mxu0 0.0
      %8333 = vmatprep.subr.mxu0 0.0
      %8334 = vmatpush1.msra.mxu0 0.0
      %8335 = vmatprep.subr.mxu0 0.0
      %8336 = vmatpush1.msra.mxu0 0.0
      %8337 = vmatprep.subr.mxu0 0.0
      %8338 = vmatpush1.msra.mxu0 0.0
      %8339 = vmatprep.subr.mxu0 0.0
      %8340 = vmatpush1.msra.mxu0 0.0
      %8341 = vmatprep.subr.mxu0 0.0
      %8342 = vmatpush1.msra.mxu0 0.0
      %8343 = vmatprep.subr.mxu0 0.0
      %8344 = vmatpush1.msra.mxu0 0.0
      %8345 = vmatprep.subr.mxu0 0.0
      %8346 = vmatpush1.msra.mxu0 0.0
      %8347 = vmatprep.subr.mxu0 0.0
      %8348 = vmatpush1.msra.mxu0 0.0
      %8349 = vmatprep.subr.mxu0 0.0
      %8350 = vmatpush1.msra.mxu0 0.0
      %8351 = vmatprep.subr.mxu0 0.0
      %8352 = vmatpush1.msra.mxu0 0.0
      %8353 = vmatprep.subr.mxu0 0.0
      %8354 = vmatpush1.msra.mxu0 0.0
      %8355 = vmatprep.subr.mxu0 0.0
      %8356 = vmatpush1.msra.mxu0 0.0
      %8357 = vmatprep.subr.mxu0 0.0
      %8358 = vmatpush1.msra.mxu0 0.0
      %8359 = vmatprep.mubr.f32.mxu0 0.0
      %8360 = vmatmul.mubr.f32.gmra.mrb[0].mxu0 %v8266
      %v8361 = vpop.f32.mrb[0].mxu0
      %v8362 = vadd.f32 %v7872, %v8361
      %v8363 = vpop.f32.mrb[0].mxu0
      %8364 = vmatprep.mubr.f32.mxu0 0.0
      %8365 = vmatmul.mubr.f32.gmra.mrb[0].mxu0 %v8269
      %v8366 = vpop.f32.mrb[0].mxu0
      %v8367 = vadd.f32 %v7877, %v8366
      %v8368 = vpop.f32.mrb[0].mxu0
      %8369 = vmatprep.mubr.f32.mxu0 0.0
      %8370 = vmatmul.mubr.f32.gmra.mrb[0].mxu0 %v8272
      %v8371 = vpop.f32.mrb[0].mxu0
      %v8372 = vadd.f32 %v7882, %v8371
      %v8373 = vpop.f32.mrb[0].mxu0
      %8374 = vmatprep.mubr.f32.mxu0 0.0
      %8375 = vmatmul.mubr.f32.gmra.mrb[0].mxu0 %v8275
      %v8376 = vpop.f32.mrb[0].mxu0
      %v8377 = vadd.f32 %v7887, %v8376
      %v8378 = vpop.f32.mrb[0].mxu0
      %8379 = vmatprep.mubr.f32.mxu0 0.0
      %8380 = vmatmul.mubr.f32.gmra.mrb[0].mxu0 %v8278
      %v8381 = vpop.f32.mrb[0].mxu0
      %v8382 = vadd.f32 %v7892, %v8381
      %v8383 = vpop.f32.mrb[0].mxu0
      %8384 = vmatprep.mubr.f32.mxu0 0.0
      %8385 = vmatmul.mubr.f32.gmra.mrb[0].mxu0 %v8281
      %v8386 = vpop.f32.mrb[0].mxu0
      %v8387 = vadd.f32 %v7897, %v8386
      %v8388 = vpop.f32.mrb[0].mxu0
      %8389 = vmatprep.mubr.f32.mxu0 0.0
      %8390 = vmatmul.mubr.f32.gmra.mrb[0].mxu0 %v8284
      %v8391 = vpop.f32.mrb[0].mxu0
      %v8392 = vadd.f32 %v7902, %v8391
      %v8393 = vpop.f32.mrb[0].mxu0
      %8394 = vmatprep.mubr.f32.mxu0 0.0
      %8395 = vmatmul.mubr.f32.gmra.mrb[0].mxu0 %v8287
      %v8396 = vpop.f32.mrb[0].mxu0
      %v8397 = vadd.f32 %v7907, %v8396
      %v8398 = vpop.f32.mrb[0].mxu0
      %8399 = vmatprep.mubr.f32.mxu0 0.0
      %8400 = vmatmul.mubr.f32.gmra.mrb[0].mxu0 %v8290
      %v8401 = vpop.f32.mrb[0].mxu0
      %v8402 = vadd.f32 %v7912, %v8401
      %v8403 = vpop.f32.mrb[0].mxu0
      %8404 = vmatprep.mubr.f32.mxu0 0.0
      %8405 = vmatmul.mubr.f32.gmra.mrb[0].mxu0 %v8293
      %v8406 = vpop.f32.mrb[0].mxu0
      %v8407 = vadd.f32 %v7917, %v8406
      %v8408 = vpop.f32.mrb[0].mxu0
      %8409 = vdwg.mxu0
      %8410 = vmatprep.subr.mxu0 0.0
      %8411 = vmatpush1.msra.mxu0 %v5667
      %8412 = vmatprep.subr.mxu0 0.0
      %8413 = vmatpush1.msra.mxu0 %v5668
      %8414 = vmatprep.subr.mxu0 0.0
      %8415 = vmatpush1.msra.mxu0 %v5669
      %8416 = vmatprep.subr.mxu0 0.0
      %8417 = vmatpush1.msra.mxu0 %v5670
      %8418 = vmatprep.subr.mxu0 0.0
      %8419 = vmatpush1.msra.mxu0 %v5671
      %8420 = vmatprep.subr.mxu0 0.0
      %8421 = vmatpush1.msra.mxu0 %v5672
      %8422 = vmatprep.subr.mxu0 0.0
      %8423 = vmatpush1.msra.mxu0 %v5673
      %8424 = vmatprep.subr.mxu0 0.0
      %8425 = vmatpush1.msra.mxu0 %v5674
      %8426 = vmatprep.subr.mxu0 0.0
      %8427 = vmatpush1.msra.mxu0 %v5675
      %8428 = vmatprep.subr.mxu0 0.0
      %8429 = vmatpush1.msra.mxu0 %v5676
      %8430 = vmatprep.subr.mxu0 0.0
      %8431 = vmatpush1.msra.mxu0 %v5677
      %8432 = vmatprep.subr.mxu0 0.0
      %8433 = vmatpush1.msra.mxu0 %v5678
      %8434 = vmatprep.subr.mxu0 0.0
      %8435 = vmatpush1.msra.mxu0 %v5679
      %8436 = vmatprep.subr.mxu0 0.0
      %8437 = vmatpush1.msra.mxu0 0.0
      %8438 = vmatprep.subr.mxu0 0.0
      %8439 = vmatpush1.msra.mxu0 0.0
      %8440 = vmatprep.subr.mxu0 0.0
      %8441 = vmatpush1.msra.mxu0 0.0
      %8442 = vmatprep.subr.mxu0 0.0
      %8443 = vmatpush1.msra.mxu0 0.0
      %8444 = vmatprep.subr.mxu0 0.0
      %8445 = vmatpush1.msra.mxu0 0.0
      %8446 = vmatprep.subr.mxu0 0.0
      %8447 = vmatpush1.msra.mxu0 0.0
      %8448 = vmatprep.subr.mxu0 0.0
      %8449 = vmatpush1.msra.mxu0 0.0
      %8450 = vmatprep.subr.mxu0 0.0
      %8451 = vmatpush1.msra.mxu0 0.0
      %8452 = vmatprep.subr.mxu0 0.0
      %8453 = vmatpush1.msra.mxu0 0.0
      %8454 = vmatprep.subr.mxu0 0.0
      %8455 = vmatpush1.msra.mxu0 0.0
      %8456 = vmatprep.subr.mxu0 0.0
      %8457 = vmatpush1.msra.mxu0 0.0
      %8458 = vmatprep.subr.mxu0 0.0
      %8459 = vmatpush1.msra.mxu0 0.0
      %8460 = vmatprep.subr.mxu0 0.0
      %8461 = vmatpush1.msra.mxu0 0.0
      %8462 = vmatprep.subr.mxu0 0.0
      %8463 = vmatpush1.msra.mxu0 0.0
      %8464 = vmatprep.subr.mxu0 0.0
      %8465 = vmatpush1.msra.mxu0 0.0
      %8466 = vmatprep.subr.mxu0 0.0
      %8467 = vmatpush1.msra.mxu0 0.0
      %8468 = vmatprep.subr.mxu0 0.0
      %8469 = vmatpush1.msra.mxu0 0.0
      %8470 = vmatprep.subr.mxu0 0.0
      %8471 = vmatpush1.msra.mxu0 0.0
      %8472 = vmatprep.subr.mxu0 0.0
      %8473 = vmatpush1.msra.mxu0 0.0
      %8474 = vmatprep.mubr.f32.mxu0 0.0
      %8475 = vmatmul.mubr.f32.gmra.mrb[0].mxu0 %v8266
      %v8476 = vpop.f32.mrb[0].mxu0
      %v8477 = vadd.f32 %v7987, %v8476
      %v8478 = vpop.f32.mrb[0].mxu0
      %8479 = vmatprep.mubr.f32.mxu0 0.0
      %8480 = vmatmul.mubr.f32.gmra.mrb[0].mxu0 %v8269
      %v8481 = vpop.f32.mrb[0].mxu0
      %v8482 = vadd.f32 %v7992, %v8481
      %v8483 = vpop.f32.mrb[0].mxu0
      %8484 = vmatprep.mubr.f32.mxu0 0.0
      %8485 = vmatmul.mubr.f32.gmra.mrb[0].mxu0 %v8272
      %v8486 = vpop.f32.mrb[0].mxu0
      %v8487 = vadd.f32 %v7997, %v8486
      %v8488 = vpop.f32.mrb[0].mxu0
      %8489 = vmatprep.mubr.f32.mxu0 0.0
      %8490 = vmatmul.mubr.f32.gmra.mrb[0].mxu0 %v8275
      %v8491 = vpop.f32.mrb[0].mxu0
      %v8492 = vadd.f32 %v8002, %v8491
      %v8493 = vpop.f32.mrb[0].mxu0
      %8494 = vmatprep.mubr.f32.mxu0 0.0
      %8495 = vmatmul.mubr.f32.gmra.mrb[0].mxu0 %v8278
      %v8496 = vpop.f32.mrb[0].mxu0
      %v8497 = vadd.f32 %v8007, %v8496
      %v8498 = vpop.f32.mrb[0].mxu0
      %8499 = vmatprep.mubr.f32.mxu0 0.0
      %8500 = vmatmul.mubr.f32.gmra.mrb[0].mxu0 %v8281
      %v8501 = vpop.f32.mrb[0].mxu0
      %v8502 = vadd.f32 %v8012, %v8501
      %v8503 = vpop.f32.mrb[0].mxu0
      %8504 = vmatprep.mubr.f32.mxu0 0.0
      %8505 = vmatmul.mubr.f32.gmra.mrb[0].mxu0 %v8284
      %v8506 = vpop.f32.mrb[0].mxu0
      %v8507 = vadd.f32 %v8017, %v8506
      %v8508 = vpop.f32.mrb[0].mxu0
      %8509 = vmatprep.mubr.f32.mxu0 0.0
      %8510 = vmatmul.mubr.f32.gmra.mrb[0].mxu0 %v8287
      %v8511 = vpop.f32.mrb[0].mxu0
      %v8512 = vadd.f32 %v8022, %v8511
      %v8513 = vpop.f32.mrb[0].mxu0
      %8514 = vmatprep.mubr.f32.mxu0 0.0
      %8515 = vmatmul.mubr.f32.gmra.mrb[0].mxu0 %v8290
      %v8516 = vpop.f32.mrb[0].mxu0
      %v8517 = vadd.f32 %v8027, %v8516
      %v8518 = vpop.f32.mrb[0].mxu0
      %8519 = vmatprep.mubr.f32.mxu0 0.0
      %8520 = vmatmul.mubr.f32.gmra.mrb[0].mxu0 %v8293
      %v8521 = vpop.f32.mrb[0].mxu0
      %v8522 = vadd.f32 %v8032, %v8521
      %v8523 = vpop.f32.mrb[0].mxu0
      %8524 = vdwg.mxu0
      %8525 = vmatprep.subr.mxu0 0.0
      %8526 = vmatpush1.msra.mxu0 %v5680
      %8527 = vmatprep.subr.mxu0 0.0
      %8528 = vmatpush1.msra.mxu0 %v5681
      %8529 = vmatprep.subr.mxu0 0.0
      %8530 = vmatpush1.msra.mxu0 %v5682
      %8531 = vmatprep.subr.mxu0 0.0
      %8532 = vmatpush1.msra.mxu0 %v5683
      %8533 = vmatprep.subr.mxu0 0.0
      %8534 = vmatpush1.msra.mxu0 %v5684
      %8535 = vmatprep.subr.mxu0 0.0
      %8536 = vmatpush1.msra.mxu0 %v5685
      %8537 = vmatprep.subr.mxu0 0.0
      %8538 = vmatpush1.msra.mxu0 %v5686
      %8539 = vmatprep.subr.mxu0 0.0
      %8540 = vmatpush1.msra.mxu0 %v5687
      %8541 = vmatprep.subr.mxu0 0.0
      %8542 = vmatpush1.msra.mxu0 %v5688
      %8543 = vmatprep.subr.mxu0 0.0
      %8544 = vmatpush1.msra.mxu0 %v5689
      %8545 = vmatprep.subr.mxu0 0.0
      %8546 = vmatpush1.msra.mxu0 %v5690
      %8547 = vmatprep.subr.mxu0 0.0
      %8548 = vmatpush1.msra.mxu0 %v5691
      %8549 = vmatprep.subr.mxu0 0.0
      %8550 = vmatpush1.msra.mxu0 %v5692
      %8551 = vmatprep.subr.mxu0 0.0
      %8552 = vmatpush1.msra.mxu0 0.0
      %8553 = vmatprep.subr.mxu0 0.0
      %8554 = vmatpush1.msra.mxu0 0.0
      %8555 = vmatprep.subr.mxu0 0.0
      %8556 = vmatpush1.msra.mxu0 0.0
      %8557 = vmatprep.subr.mxu0 0.0
      %8558 = vmatpush1.msra.mxu0 0.0
      %8559 = vmatprep.subr.mxu0 0.0
      %8560 = vmatpush1.msra.mxu0 0.0
      %8561 = vmatprep.subr.mxu0 0.0
      %8562 = vmatpush1.msra.mxu0 0.0
      %8563 = vmatprep.subr.mxu0 0.0
      %8564 = vmatpush1.msra.mxu0 0.0
      %8565 = vmatprep.subr.mxu0 0.0
      %8566 = vmatpush1.msra.mxu0 0.0
      %8567 = vmatprep.subr.mxu0 0.0
      %8568 = vmatpush1.msra.mxu0 0.0
      %8569 = vmatprep.subr.mxu0 0.0
      %8570 = vmatpush1.msra.mxu0 0.0
      %8571 = vmatprep.subr.mxu0 0.0
      %8572 = vmatpush1.msra.mxu0 0.0
      %8573 = vmatprep.subr.mxu0 0.0
      %8574 = vmatpush1.msra.mxu0 0.0
      %8575 = vmatprep.subr.mxu0 0.0
      %8576 = vmatpush1.msra.mxu0 0.0
      %8577 = vmatprep.subr.mxu0 0.0
      %8578 = vmatpush1.msra.mxu0 0.0
      %8579 = vmatprep.subr.mxu0 0.0
      %8580 = vmatpush1.msra.mxu0 0.0
      %8581 = vmatprep.subr.mxu0 0.0
      %8582 = vmatpush1.msra.mxu0 0.0
      %8583 = vmatprep.subr.mxu0 0.0
      %8584 = vmatpush1.msra.mxu0 0.0
      %8585 = vmatprep.subr.mxu0 0.0
      %8586 = vmatpush1.msra.mxu0 0.0
      %8587 = vmatprep.subr.mxu0 0.0
      %8588 = vmatpush1.msra.mxu0 0.0
      %8589 = vmatprep.mubr.f32.mxu0 0.0
      %8590 = vmatmul.mubr.f32.gmra.mrb[0].mxu0 %v8266
      %v8591 = vpop.f32.mrb[0].mxu0
      %v8592 = vadd.f32 %v8102, %v8591
      %v8593 = vpop.f32.mrb[0].mxu0
      %8594 = vmatprep.mubr.f32.mxu0 0.0
      %8595 = vmatmul.mubr.f32.gmra.mrb[0].mxu0 %v8269
      %v8596 = vpop.f32.mrb[0].mxu0
      %v8597 = vadd.f32 %v8107, %v8596
      %v8598 = vpop.f32.mrb[0].mxu0
      %8599 = vmatprep.mubr.f32.mxu0 0.0
      %8600 = vmatmul.mubr.f32.gmra.mrb[0].mxu0 %v8272
      %v8601 = vpop.f32.mrb[0].mxu0
      %v8602 = vadd.f32 %v8112, %v8601
      %v8603 = vpop.f32.mrb[0].mxu0
      %8604 = vmatprep.mubr.f32.mxu0 0.0
      %8605 = vmatmul.mubr.f32.gmra.mrb[0].mxu0 %v8275
      %v8606 = vpop.f32.mrb[0].mxu0
      %v8607 = vadd.f32 %v8117, %v8606
      %v8608 = vpop.f32.mrb[0].mxu0
      %8609 = vmatprep.mubr.f32.mxu0 0.0
      %8610 = vmatmul.mubr.f32.gmra.mrb[0].mxu0 %v8278
      %v8611 = vpop.f32.mrb[0].mxu0
      %v8612 = vadd.f32 %v8122, %v8611
      %v8613 = vpop.f32.mrb[0].mxu0
      %8614 = vmatprep.mubr.f32.mxu0 0.0
      %8615 = vmatmul.mubr.f32.gmra.mrb[0].mxu0 %v8281
      %v8616 = vpop.f32.mrb[0].mxu0
      %v8617 = vadd.f32 %v8127, %v8616
      %v8618 = vpop.f32.mrb[0].mxu0
      %8619 = vmatprep.mubr.f32.mxu0 0.0
      %8620 = vmatmul.mubr.f32.gmra.mrb[0].mxu0 %v8284
      %v8621 = vpop.f32.mrb[0].mxu0
      %v8622 = vadd.f32 %v8132, %v8621
      %v8623 = vpop.f32.mrb[0].mxu0
      %8624 = vmatprep.mubr.f32.mxu0 0.0
      %8625 = vmatmul.mubr.f32.gmra.mrb[0].mxu0 %v8287
      %v8626 = vpop.f32.mrb[0].mxu0
      %v8627 = vadd.f32 %v8137, %v8626
      %v8628 = vpop.f32.mrb[0].mxu0
      %8629 = vmatprep.mubr.f32.mxu0 0.0
      %8630 = vmatmul.mubr.f32.gmra.mrb[0].mxu0 %v8290
      %v8631 = vpop.f32.mrb[0].mxu0
      %v8632 = vadd.f32 %v8142, %v8631
      %v8633 = vpop.f32.mrb[0].mxu0
      %8634 = vmatprep.mubr.f32.mxu0 0.0
      %8635 = vmatmul.mubr.f32.gmra.mrb[0].mxu0 %v8293
      %v8636 = vpop.f32.mrb[0].mxu0
      %v8637 = vadd.f32 %v8147, %v8636
      %v8638 = vpop.f32.mrb[0].mxu0
      %8639 = vdwg.mxu0
      %8640 = vmatprep.subr.mxu0 0.0
      %8641 = vmatpush1.msra.mxu0 %v5693
      %8642 = vmatprep.subr.mxu0 0.0
      %8643 = vmatpush1.msra.mxu0 %v5694
      %8644 = vmatprep.subr.mxu0 0.0
      %8645 = vmatpush1.msra.mxu0 %v5695
      %8646 = vmatprep.subr.mxu0 0.0
      %8647 = vmatpush1.msra.mxu0 %v5696
      %8648 = vmatprep.subr.mxu0 0.0
      %8649 = vmatpush1.msra.mxu0 %v5697
      %8650 = vmatprep.subr.mxu0 0.0
      %8651 = vmatpush1.msra.mxu0 %v5698
      %8652 = vmatprep.subr.mxu0 0.0
      %8653 = vmatpush1.msra.mxu0 %v5699
      %8654 = vmatprep.subr.mxu0 0.0
      %8655 = vmatpush1.msra.mxu0 %v5700
      %8656 = vmatprep.subr.mxu0 0.0
      %8657 = vmatpush1.msra.mxu0 %v5701
      %8658 = vmatprep.subr.mxu0 0.0
      %8659 = vmatpush1.msra.mxu0 %v5702
      %8660 = vmatprep.subr.mxu0 0.0
      %8661 = vmatpush1.msra.mxu0 %v5703
      %8662 = vmatprep.subr.mxu0 0.0
      %8663 = vmatpush1.msra.mxu0 %v5704
      %8664 = vmatprep.subr.mxu0 0.0
      %8665 = vmatpush1.msra.mxu0 %v5705
      %8666 = vmatprep.subr.mxu0 0.0
      %8667 = vmatpush1.msra.mxu0 0.0
      %8668 = vmatprep.subr.mxu0 0.0
      %8669 = vmatpush1.msra.mxu0 0.0
      %8670 = vmatprep.subr.mxu0 0.0
      %8671 = vmatpush1.msra.mxu0 0.0
      %8672 = vmatprep.subr.mxu0 0.0
      %8673 = vmatpush1.msra.mxu0 0.0
      %8674 = vmatprep.subr.mxu0 0.0
      %8675 = vmatpush1.msra.mxu0 0.0
      %8676 = vmatprep.subr.mxu0 0.0
      %8677 = vmatpush1.msra.mxu0 0.0
      %8678 = vmatprep.subr.mxu0 0.0
      %8679 = vmatpush1.msra.mxu0 0.0
      %8680 = vmatprep.subr.mxu0 0.0
      %8681 = vmatpush1.msra.mxu0 0.0
      %8682 = vmatprep.subr.mxu0 0.0
      %8683 = vmatpush1.msra.mxu0 0.0
      %8684 = vmatprep.subr.mxu0 0.0
      %8685 = vmatpush1.msra.mxu0 0.0
      %8686 = vmatprep.subr.mxu0 0.0
      %8687 = vmatpush1.msra.mxu0 0.0
      %8688 = vmatprep.subr.mxu0 0.0
      %8689 = vmatpush1.msra.mxu0 0.0
      %8690 = vmatprep.subr.mxu0 0.0
      %8691 = vmatpush1.msra.mxu0 0.0
      %8692 = vmatprep.subr.mxu0 0.0
      %8693 = vmatpush1.msra.mxu0 0.0
      %8694 = vmatprep.subr.mxu0 0.0
      %8695 = vmatpush1.msra.mxu0 0.0
      %8696 = vmatprep.subr.mxu0 0.0
      %8697 = vmatpush1.msra.mxu0 0.0
      %8698 = vmatprep.subr.mxu0 0.0
      %8699 = vmatpush1.msra.mxu0 0.0
      %8700 = vmatprep.subr.mxu0 0.0
      %8701 = vmatpush1.msra.mxu0 0.0
      %8702 = vmatprep.subr.mxu0 0.0
      %8703 = vmatpush1.msra.mxu0 0.0
      %8704 = vmatprep.mubr.f32.mxu0 0.0
      %8705 = vmatmul.mubr.f32.gmra.mrb[0].mxu0 %v8266
      %v8706 = vpop.f32.mrb[0].mxu0
      %v8707 = vadd.f32 %v8217, %v8706
      %v8708 = vpop.f32.mrb[0].mxu0
      %8709 = vmatprep.mubr.f32.mxu0 0.0
      %8710 = vmatmul.mubr.f32.gmra.mrb[0].mxu0 %v8269
      %v8711 = vpop.f32.mrb[0].mxu0
      %v8712 = vadd.f32 %v8222, %v8711
      %v8713 = vpop.f32.mrb[0].mxu0
      %8714 = vmatprep.mubr.f32.mxu0 0.0
      %8715 = vmatmul.mubr.f32.gmra.mrb[0].mxu0 %v8272
      %v8716 = vpop.f32.mrb[0].mxu0
      %v8717 = vadd.f32 %v8227, %v8716
      %v8718 = vpop.f32.mrb[0].mxu0
      %8719 = vmatprep.mubr.f32.mxu0 0.0
      %8720 = vmatmul.mubr.f32.gmra.mrb[0].mxu0 %v8275
      %v8721 = vpop.f32.mrb[0].mxu0
      %v8722 = vadd.f32 %v8232, %v8721
      %v8723 = vpop.f32.mrb[0].mxu0
      %8724 = vmatprep.mubr.f32.mxu0 0.0
      %8725 = vmatmul.mubr.f32.gmra.mrb[0].mxu0 %v8278
      %v8726 = vpop.f32.mrb[0].mxu0
      %v8727 = vadd.f32 %v8237, %v8726
      %v8728 = vpop.f32.mrb[0].mxu0
      %8729 = vmatprep.mubr.f32.mxu0 0.0
      %8730 = vmatmul.mubr.f32.gmra.mrb[0].mxu0 %v8281
      %v8731 = vpop.f32.mrb[0].mxu0
      %v8732 = vadd.f32 %v8242, %v8731
      %v8733 = vpop.f32.mrb[0].mxu0
      %8734 = vmatprep.mubr.f32.mxu0 0.0
      %8735 = vmatmul.mubr.f32.gmra.mrb[0].mxu0 %v8284
      %v8736 = vpop.f32.mrb[0].mxu0
      %v8737 = vadd.f32 %v8247, %v8736
      %v8738 = vpop.f32.mrb[0].mxu0
      %8739 = vmatprep.mubr.f32.mxu0 0.0
      %8740 = vmatmul.mubr.f32.gmra.mrb[0].mxu0 %v8287
      %v8741 = vpop.f32.mrb[0].mxu0
      %v8742 = vadd.f32 %v8252, %v8741
      %v8743 = vpop.f32.mrb[0].mxu0
      %8744 = vmatprep.mubr.f32.mxu0 0.0
      %8745 = vmatmul.mubr.f32.gmra.mrb[0].mxu0 %v8290
      %v8746 = vpop.f32.mrb[0].mxu0
      %v8747 = vadd.f32 %v8257, %v8746
      %v8748 = vpop.f32.mrb[0].mxu0
      %8749 = vmatprep.mubr.f32.mxu0 0.0
      %8750 = vmatmul.mubr.f32.gmra.mrb[0].mxu0 %v8293
      %v8751 = vpop.f32.mrb[0].mxu0
      %v8752 = vadd.f32 %v8262, %v8751
      %v8753 = vpop.f32.mrb[0].mxu0
      %8754 = vdwg.mxu0
      %s8755 = scalar_lea.vmem %s3, 400
      %v8756 = vld [vmem:[%s8755] sm:$0xff]
      %v8757 = vld [vmem:[%s8755 + $0x8] sm:$0xff]
      %v8758 = vld [vmem:[%s8755 + $0x10] sm:$0xff]
      %v8759 = vld [vmem:[%s8755 + $0x18] sm:$0xff]
      %v8760 = vld [vmem:[%s8755 + $0x20] sm:$0xff]
      %v8761 = vld [vmem:[%s8755 + $0x28] sm:$0xff]
      %v8762 = vld [vmem:[%s8755 + $0x30] sm:$0xff]
      %v8763 = vld [vmem:[%s8755 + $0x38] sm:$0xff]
      %v8764 = vld [vmem:[%s8755 + $0x40] sm:$0xff]
      %v8765 = vld [vmem:[%s8755 + $0x48] sm:$0xff]
      %v8767 = vsel %vm5779, %v8756, 0
      %v8770 = vsel %vm5779, %v8757, 0
      %v8773 = vsel %vm5779, %v8758, 0
      %v8776 = vsel %vm5779, %v8759, 0
      %v8779 = vsel %vm5779, %v8760, 0
      %v8782 = vsel %vm5779, %v8761, 0
      %v8785 = vsel %vm5779, %v8762, 0
      %v8788 = vsel %vm5779, %v8763, 0
      %v8791 = vsel %vm5779, %v8764, 0
      %v8794 = vsel %vm5779, %v8765, 0
      %8796 = vmatprep.subr.mxu0 0.0
      %8797 = vmatpush1.msra.mxu0 %v6928
      %8798 = vmatprep.subr.mxu0 0.0
      %8799 = vmatpush1.msra.mxu0 %v6930
      %8800 = vmatprep.subr.mxu0 0.0
      %8801 = vmatpush1.msra.mxu0 %v6932
      %8802 = vmatprep.subr.mxu0 0.0
      %8803 = vmatpush1.msra.mxu0 %v6934
      %8804 = vmatprep.subr.mxu0 0.0
      %8805 = vmatpush1.msra.mxu0 %v6936
      %8806 = vmatprep.subr.mxu0 0.0
      %8807 = vmatpush1.msra.mxu0 %v6938
      %8808 = vmatprep.subr.mxu0 0.0
      %8809 = vmatpush1.msra.mxu0 %v6940
      %8810 = vmatprep.subr.mxu0 0.0
      %8811 = vmatpush1.msra.mxu0 %v6942
      %8812 = vmatprep.subr.mxu0 0.0
      %8813 = vmatpush1.msra.mxu0 %v6944
      %8814 = vmatprep.subr.mxu0 0.0
      %8815 = vmatpush1.msra.mxu0 %v6946
      %8816 = vmatprep.subr.mxu0 0.0
      %8817 = vmatpush1.msra.mxu0 %v6948
      %8818 = vmatprep.subr.mxu0 0.0
      %8819 = vmatpush1.msra.mxu0 %v6950
      %8820 = vmatprep.subr.mxu0 0.0
      %8821 = vmatpush1.msra.mxu0 %v6952
      %8822 = vmatprep.subr.mxu0 0.0
      %8823 = vmatpush1.msra.mxu0 0.0
      %8824 = vmatprep.subr.mxu0 0.0
      %8825 = vmatpush1.msra.mxu0 0.0
      %8826 = vmatprep.subr.mxu0 0.0
      %8827 = vmatpush1.msra.mxu0 0.0
      %8828 = vmatprep.subr.mxu0 0.0
      %8829 = vmatpush1.msra.mxu0 0.0
      %8830 = vmatprep.subr.mxu0 0.0
      %8831 = vmatpush1.msra.mxu0 0.0
      %8832 = vmatprep.subr.mxu0 0.0
      %8833 = vmatpush1.msra.mxu0 0.0
      %8834 = vmatprep.subr.mxu0 0.0
      %8835 = vmatpush1.msra.mxu0 0.0
      %8836 = vmatprep.subr.mxu0 0.0
      %8837 = vmatpush1.msra.mxu0 0.0
      %8838 = vmatprep.subr.mxu0 0.0
      %8839 = vmatpush1.msra.mxu0 0.0
      %8840 = vmatprep.subr.mxu0 0.0
      %8841 = vmatpush1.msra.mxu0 0.0
      %8842 = vmatprep.subr.mxu0 0.0
      %8843 = vmatpush1.msra.mxu0 0.0
      %8844 = vmatprep.subr.mxu0 0.0
      %8845 = vmatpush1.msra.mxu0 0.0
      %8846 = vmatprep.subr.mxu0 0.0
      %8847 = vmatpush1.msra.mxu0 0.0
      %8848 = vmatprep.subr.mxu0 0.0
      %8849 = vmatpush1.msra.mxu0 0.0
      %8850 = vmatprep.subr.mxu0 0.0
      %8851 = vmatpush1.msra.mxu0 0.0
      %8852 = vmatprep.subr.mxu0 0.0
      %8853 = vmatpush1.msra.mxu0 0.0
      %8854 = vmatprep.subr.mxu0 0.0
      %8855 = vmatpush1.msra.mxu0 0.0
      %8856 = vmatprep.subr.mxu0 0.0
      %8857 = vmatpush1.msra.mxu0 0.0
      %8858 = vmatprep.subr.mxu0 0.0
      %8859 = vmatpush1.msra.mxu0 0.0
      %8860 = vmatprep.mubr.f32.mxu0 0.0
      %8861 = vmatmul.mubr.f32.gmra.mrb[0].mxu0 %v8767
      %v8862 = vpop.f32.mrb[0].mxu0
      %v8863 = vadd.f32 0.0, %v8862
      %v8864 = vpop.f32.mrb[0].mxu0
      %8865 = vmatprep.mubr.f32.mxu0 0.0
      %8866 = vmatmul.mubr.f32.gmra.mrb[0].mxu0 %v8770
      %v8867 = vpop.f32.mrb[0].mxu0
      %v8868 = vadd.f32 0.0, %v8867
      %v8869 = vpop.f32.mrb[0].mxu0
      %8870 = vmatprep.mubr.f32.mxu0 0.0
      %8871 = vmatmul.mubr.f32.gmra.mrb[0].mxu0 %v8773
      %v8872 = vpop.f32.mrb[0].mxu0
      %v8873 = vadd.f32 0.0, %v8872
      %v8874 = vpop.f32.mrb[0].mxu0
      %8875 = vmatprep.mubr.f32.mxu0 0.0
      %8876 = vmatmul.mubr.f32.gmra.mrb[0].mxu0 %v8776
      %v8877 = vpop.f32.mrb[0].mxu0
      %v8878 = vadd.f32 0.0, %v8877
      %v8879 = vpop.f32.mrb[0].mxu0
      %8880 = vmatprep.mubr.f32.mxu0 0.0
      %8881 = vmatmul.mubr.f32.gmra.mrb[0].mxu0 %v8779
      %v8882 = vpop.f32.mrb[0].mxu0
      %v8883 = vadd.f32 0.0, %v8882
      %v8884 = vpop.f32.mrb[0].mxu0
      %8885 = vmatprep.mubr.f32.mxu0 0.0
      %8886 = vmatmul.mubr.f32.gmra.mrb[0].mxu0 %v8782
      %v8887 = vpop.f32.mrb[0].mxu0
      %v8888 = vadd.f32 0.0, %v8887
      %v8889 = vpop.f32.mrb[0].mxu0
      %8890 = vmatprep.mubr.f32.mxu0 0.0
      %8891 = vmatmul.mubr.f32.gmra.mrb[0].mxu0 %v8785
      %v8892 = vpop.f32.mrb[0].mxu0
      %v8893 = vadd.f32 0.0, %v8892
      %v8894 = vpop.f32.mrb[0].mxu0
      %8895 = vmatprep.mubr.f32.mxu0 0.0
      %8896 = vmatmul.mubr.f32.gmra.mrb[0].mxu0 %v8788
      %v8897 = vpop.f32.mrb[0].mxu0
      %v8898 = vadd.f32 0.0, %v8897
      %v8899 = vpop.f32.mrb[0].mxu0
      %8900 = vmatprep.mubr.f32.mxu0 0.0
      %8901 = vmatmul.mubr.f32.gmra.mrb[0].mxu0 %v8791
      %v8902 = vpop.f32.mrb[0].mxu0
      %v8903 = vadd.f32 0.0, %v8902
      %v8904 = vpop.f32.mrb[0].mxu0
      %8905 = vmatprep.mubr.f32.mxu0 0.0
      %8906 = vmatmul.mubr.f32.gmra.mrb[0].mxu0 %v8794
      %v8907 = vpop.f32.mrb[0].mxu0
      %v8908 = vadd.f32 0.0, %v8907
      %v8909 = vpop.f32.mrb[0].mxu0
      %8910 = vdwg.mxu0
      %8911 = vmatprep.subr.mxu0 0.0
      %8912 = vmatpush1.msra.mxu0 %v7112
      %8913 = vmatprep.subr.mxu0 0.0
      %8914 = vmatpush1.msra.mxu0 %v7114
      %8915 = vmatprep.subr.mxu0 0.0
      %8916 = vmatpush1.msra.mxu0 %v7116
      %8917 = vmatprep.subr.mxu0 0.0
      %8918 = vmatpush1.msra.mxu0 %v7118
      %8919 = vmatprep.subr.mxu0 0.0
      %8920 = vmatpush1.msra.mxu0 %v7120
      %8921 = vmatprep.subr.mxu0 0.0
      %8922 = vmatpush1.msra.mxu0 %v7122
      %8923 = vmatprep.subr.mxu0 0.0
      %8924 = vmatpush1.msra.mxu0 %v7124
      %8925 = vmatprep.subr.mxu0 0.0
      %8926 = vmatpush1.msra.mxu0 %v7126
      %8927 = vmatprep.subr.mxu0 0.0
      %8928 = vmatpush1.msra.mxu0 %v7128
      %8929 = vmatprep.subr.mxu0 0.0
      %8930 = vmatpush1.msra.mxu0 %v7130
      %8931 = vmatprep.subr.mxu0 0.0
      %8932 = vmatpush1.msra.mxu0 %v7132
      %8933 = vmatprep.subr.mxu0 0.0
      %8934 = vmatpush1.msra.mxu0 %v7134
      %8935 = vmatprep.subr.mxu0 0.0
      %8936 = vmatpush1.msra.mxu0 %v7136
      %8937 = vmatprep.subr.mxu0 0.0
      %8938 = vmatpush1.msra.mxu0 0.0
      %8939 = vmatprep.subr.mxu0 0.0
      %8940 = vmatpush1.msra.mxu0 0.0
      %8941 = vmatprep.subr.mxu0 0.0
      %8942 = vmatpush1.msra.mxu0 0.0
      %8943 = vmatprep.subr.mxu0 0.0
      %8944 = vmatpush1.msra.mxu0 0.0
      %8945 = vmatprep.subr.mxu0 0.0
      %8946 = vmatpush1.msra.mxu0 0.0
      %8947 = vmatprep.subr.mxu0 0.0
      %8948 = vmatpush1.msra.mxu0 0.0
      %8949 = vmatprep.subr.mxu0 0.0
      %8950 = vmatpush1.msra.mxu0 0.0
      %8951 = vmatprep.subr.mxu0 0.0
      %8952 = vmatpush1.msra.mxu0 0.0
      %8953 = vmatprep.subr.mxu0 0.0
      %8954 = vmatpush1.msra.mxu0 0.0
      %8955 = vmatprep.subr.mxu0 0.0
      %8956 = vmatpush1.msra.mxu0 0.0
      %8957 = vmatprep.subr.mxu0 0.0
      %8958 = vmatpush1.msra.mxu0 0.0
      %8959 = vmatprep.subr.mxu0 0.0
      %8960 = vmatpush1.msra.mxu0 0.0
      %8961 = vmatprep.subr.mxu0 0.0
      %8962 = vmatpush1.msra.mxu0 0.0
      %8963 = vmatprep.subr.mxu0 0.0
      %8964 = vmatpush1.msra.mxu0 0.0
      %8965 = vmatprep.subr.mxu0 0.0
      %8966 = vmatpush1.msra.mxu0 0.0
      %8967 = vmatprep.subr.mxu0 0.0
      %8968 = vmatpush1.msra.mxu0 0.0
      %8969 = vmatprep.subr.mxu0 0.0
      %8970 = vmatpush1.msra.mxu0 0.0
      %8971 = vmatprep.subr.mxu0 0.0
      %8972 = vmatpush1.msra.mxu0 0.0
      %8973 = vmatprep.subr.mxu0 0.0
      %8974 = vmatpush1.msra.mxu0 0.0
      %8975 = vmatprep.mubr.f32.mxu0 0.0
      %8976 = vmatmul.mubr.f32.gmra.mrb[0].mxu0 %v8767
      %v8977 = vpop.f32.mrb[0].mxu0
      %v8978 = vadd.f32 0.0, %v8977
      %v8979 = vpop.f32.mrb[0].mxu0
      %8980 = vmatprep.mubr.f32.mxu0 0.0
      %8981 = vmatmul.mubr.f32.gmra.mrb[0].mxu0 %v8770
      %v8982 = vpop.f32.mrb[0].mxu0
      %v8983 = vadd.f32 0.0, %v8982
      %v8984 = vpop.f32.mrb[0].mxu0
      %8985 = vmatprep.mubr.f32.mxu0 0.0
      %8986 = vmatmul.mubr.f32.gmra.mrb[0].mxu0 %v8773
      %v8987 = vpop.f32.mrb[0].mxu0
      %v8988 = vadd.f32 0.0, %v8987
      %v8989 = vpop.f32.mrb[0].mxu0
      %8990 = vmatprep.mubr.f32.mxu0 0.0
      %8991 = vmatmul.mubr.f32.gmra.mrb[0].mxu0 %v8776
      %v8992 = vpop.f32.mrb[0].mxu0
      %v8993 = vadd.f32 0.0, %v8992
      %v8994 = vpop.f32.mrb[0].mxu0
      %8995 = vmatprep.mubr.f32.mxu0 0.0
      %8996 = vmatmul.mubr.f32.gmra.mrb[0].mxu0 %v8779
      %v8997 = vpop.f32.mrb[0].mxu0
      %v8998 = vadd.f32 0.0, %v8997
      %v8999 = vpop.f32.mrb[0].mxu0
      %9000 = vmatprep.mubr.f32.mxu0 0.0
      %9001 = vmatmul.mubr.f32.gmra.mrb[0].mxu0 %v8782
      %v9002 = vpop.f32.mrb[0].mxu0
      %v9003 = vadd.f32 0.0, %v9002
      %v9004 = vpop.f32.mrb[0].mxu0
      %9005 = vmatprep.mubr.f32.mxu0 0.0
      %9006 = vmatmul.mubr.f32.gmra.mrb[0].mxu0 %v8785
      %v9007 = vpop.f32.mrb[0].mxu0
      %v9008 = vadd.f32 0.0, %v9007
      %v9009 = vpop.f32.mrb[0].mxu0
      %9010 = vmatprep.mubr.f32.mxu0 0.0
      %9011 = vmatmul.mubr.f32.gmra.mrb[0].mxu0 %v8788
      %v9012 = vpop.f32.mrb[0].mxu0
      %v9013 = vadd.f32 0.0, %v9012
      %v9014 = vpop.f32.mrb[0].mxu0
      %9015 = vmatprep.mubr.f32.mxu0 0.0
      %9016 = vmatmul.mubr.f32.gmra.mrb[0].mxu0 %v8791
      %v9017 = vpop.f32.mrb[0].mxu0
      %v9018 = vadd.f32 0.0, %v9017
      %v9019 = vpop.f32.mrb[0].mxu0
      %9020 = vmatprep.mubr.f32.mxu0 0.0
      %9021 = vmatmul.mubr.f32.gmra.mrb[0].mxu0 %v8794
      %v9022 = vpop.f32.mrb[0].mxu0
      %v9023 = vadd.f32 0.0, %v9022
      %v9024 = vpop.f32.mrb[0].mxu0
      %9025 = vdwg.mxu0
      %9026 = vmatprep.subr.mxu0 0.0
      %9027 = vmatpush1.msra.mxu0 %v7266
      %9028 = vmatprep.subr.mxu0 0.0
      %9029 = vmatpush1.msra.mxu0 %v7268
      %9030 = vmatprep.subr.mxu0 0.0
      %9031 = vmatpush1.msra.mxu0 %v7270
      %9032 = vmatprep.subr.mxu0 0.0
      %9033 = vmatpush1.msra.mxu0 %v7272
      %9034 = vmatprep.subr.mxu0 0.0
      %9035 = vmatpush1.msra.mxu0 %v7274
      %9036 = vmatprep.subr.mxu0 0.0
      %9037 = vmatpush1.msra.mxu0 %v7276
      %9038 = vmatprep.subr.mxu0 0.0
      %9039 = vmatpush1.msra.mxu0 %v7278
      %9040 = vmatprep.subr.mxu0 0.0
      %9041 = vmatpush1.msra.mxu0 %v7280
      %9042 = vmatprep.subr.mxu0 0.0
      %9043 = vmatpush1.msra.mxu0 %v7282
      %9044 = vmatprep.subr.mxu0 0.0
      %9045 = vmatpush1.msra.mxu0 %v7284
      %9046 = vmatprep.subr.mxu0 0.0
      %9047 = vmatpush1.msra.mxu0 %v7286
      %9048 = vmatprep.subr.mxu0 0.0
      %9049 = vmatpush1.msra.mxu0 %v7288
      %9050 = vmatprep.subr.mxu0 0.0
      %9051 = vmatpush1.msra.mxu0 %v7290
      %9052 = vmatprep.subr.mxu0 0.0
      %9053 = vmatpush1.msra.mxu0 0.0
      %9054 = vmatprep.subr.mxu0 0.0
      %9055 = vmatpush1.msra.mxu0 0.0
      %9056 = vmatprep.subr.mxu0 0.0
      %9057 = vmatpush1.msra.mxu0 0.0
      %9058 = vmatprep.subr.mxu0 0.0
      %9059 = vmatpush1.msra.mxu0 0.0
      %9060 = vmatprep.subr.mxu0 0.0
      %9061 = vmatpush1.msra.mxu0 0.0
      %9062 = vmatprep.subr.mxu0 0.0
      %9063 = vmatpush1.msra.mxu0 0.0
      %9064 = vmatprep.subr.mxu0 0.0
      %9065 = vmatpush1.msra.mxu0 0.0
      %9066 = vmatprep.subr.mxu0 0.0
      %9067 = vmatpush1.msra.mxu0 0.0
      %9068 = vmatprep.subr.mxu0 0.0
      %9069 = vmatpush1.msra.mxu0 0.0
      %9070 = vmatprep.subr.mxu0 0.0
      %9071 = vmatpush1.msra.mxu0 0.0
      %9072 = vmatprep.subr.mxu0 0.0
      %9073 = vmatpush1.msra.mxu0 0.0
      %9074 = vmatprep.subr.mxu0 0.0
      %9075 = vmatpush1.msra.mxu0 0.0
      %9076 = vmatprep.subr.mxu0 0.0
      %9077 = vmatpush1.msra.mxu0 0.0
      %9078 = vmatprep.subr.mxu0 0.0
      %9079 = vmatpush1.msra.mxu0 0.0
      %9080 = vmatprep.subr.mxu0 0.0
      %9081 = vmatpush1.msra.mxu0 0.0
      %9082 = vmatprep.subr.mxu0 0.0
      %9083 = vmatpush1.msra.mxu0 0.0
      %9084 = vmatprep.subr.mxu0 0.0
      %9085 = vmatpush1.msra.mxu0 0.0
      %9086 = vmatprep.subr.mxu0 0.0
      %9087 = vmatpush1.msra.mxu0 0.0
      %9088 = vmatprep.subr.mxu0 0.0
      %9089 = vmatpush1.msra.mxu0 0.0
      %9090 = vmatprep.mubr.f32.mxu0 0.0
      %9091 = vmatmul.mubr.f32.gmra.mrb[0].mxu0 %v8767
      %v9092 = vpop.f32.mrb[0].mxu0
      %v9093 = vadd.f32 0.0, %v9092
      %v9094 = vpop.f32.mrb[0].mxu0
      %9095 = vmatprep.mubr.f32.mxu0 0.0
      %9096 = vmatmul.mubr.f32.gmra.mrb[0].mxu0 %v8770
      %v9097 = vpop.f32.mrb[0].mxu0
      %v9098 = vadd.f32 0.0, %v9097
      %v9099 = vpop.f32.mrb[0].mxu0
      %9100 = vmatprep.mubr.f32.mxu0 0.0
      %9101 = vmatmul.mubr.f32.gmra.mrb[0].mxu0 %v8773
      %v9102 = vpop.f32.mrb[0].mxu0
      %v9103 = vadd.f32 0.0, %v9102
      %v9104 = vpop.f32.mrb[0].mxu0
      %9105 = vmatprep.mubr.f32.mxu0 0.0
      %9106 = vmatmul.mubr.f32.gmra.mrb[0].mxu0 %v8776
      %v9107 = vpop.f32.mrb[0].mxu0
      %v9108 = vadd.f32 0.0, %v9107
      %v9109 = vpop.f32.mrb[0].mxu0
      %9110 = vmatprep.mubr.f32.mxu0 0.0
      %9111 = vmatmul.mubr.f32.gmra.mrb[0].mxu0 %v8779
      %v9112 = vpop.f32.mrb[0].mxu0
      %v9113 = vadd.f32 0.0, %v9112
      %v9114 = vpop.f32.mrb[0].mxu0
      %9115 = vmatprep.mubr.f32.mxu0 0.0
      %9116 = vmatmul.mubr.f32.gmra.mrb[0].mxu0 %v8782
      %v9117 = vpop.f32.mrb[0].mxu0
      %v9118 = vadd.f32 0.0, %v9117
      %v9119 = vpop.f32.mrb[0].mxu0
      %9120 = vmatprep.mubr.f32.mxu0 0.0
      %9121 = vmatmul.mubr.f32.gmra.mrb[0].mxu0 %v8785
      %v9122 = vpop.f32.mrb[0].mxu0
      %v9123 = vadd.f32 0.0, %v9122
      %v9124 = vpop.f32.mrb[0].mxu0
      %9125 = vmatprep.mubr.f32.mxu0 0.0
      %9126 = vmatmul.mubr.f32.gmra.mrb[0].mxu0 %v8788
      %v9127 = vpop.f32.mrb[0].mxu0
      %v9128 = vadd.f32 0.0, %v9127
      %v9129 = vpop.f32.mrb[0].mxu0
      %9130 = vmatprep.mubr.f32.mxu0 0.0
      %9131 = vmatmul.mubr.f32.gmra.mrb[0].mxu0 %v8791
      %v9132 = vpop.f32.mrb[0].mxu0
      %v9133 = vadd.f32 0.0, %v9132
      %v9134 = vpop.f32.mrb[0].mxu0
      %9135 = vmatprep.mubr.f32.mxu0 0.0
      %9136 = vmatmul.mubr.f32.gmra.mrb[0].mxu0 %v8794
      %v9137 = vpop.f32.mrb[0].mxu0
      %v9138 = vadd.f32 0.0, %v9137
      %v9139 = vpop.f32.mrb[0].mxu0
      %9140 = vdwg.mxu0
      %9141 = vmatprep.subr.mxu0 0.0
      %9142 = vmatpush1.msra.mxu0 %v7420
      %9143 = vmatprep.subr.mxu0 0.0
      %9144 = vmatpush1.msra.mxu0 %v7422
      %9145 = vmatprep.subr.mxu0 0.0
      %9146 = vmatpush1.msra.mxu0 %v7424
      %9147 = vmatprep.subr.mxu0 0.0
      %9148 = vmatpush1.msra.mxu0 %v7426
      %9149 = vmatprep.subr.mxu0 0.0
      %9150 = vmatpush1.msra.mxu0 %v7428
      %9151 = vmatprep.subr.mxu0 0.0
      %9152 = vmatpush1.msra.mxu0 %v7430
      %9153 = vmatprep.subr.mxu0 0.0
      %9154 = vmatpush1.msra.mxu0 %v7432
      %9155 = vmatprep.subr.mxu0 0.0
      %9156 = vmatpush1.msra.mxu0 %v7434
      %9157 = vmatprep.subr.mxu0 0.0
      %9158 = vmatpush1.msra.mxu0 %v7436
      %9159 = vmatprep.subr.mxu0 0.0
      %9160 = vmatpush1.msra.mxu0 %v7438
      %9161 = vmatprep.subr.mxu0 0.0
      %9162 = vmatpush1.msra.mxu0 %v7440
      %9163 = vmatprep.subr.mxu0 0.0
      %9164 = vmatpush1.msra.mxu0 %v7442
      %9165 = vmatprep.subr.mxu0 0.0
      %9166 = vmatpush1.msra.mxu0 %v7444
      %9167 = vmatprep.subr.mxu0 0.0
      %9168 = vmatpush1.msra.mxu0 0.0
      %9169 = vmatprep.subr.mxu0 0.0
      %9170 = vmatpush1.msra.mxu0 0.0
      %9171 = vmatprep.subr.mxu0 0.0
      %9172 = vmatpush1.msra.mxu0 0.0
      %9173 = vmatprep.subr.mxu0 0.0
      %9174 = vmatpush1.msra.mxu0 0.0
      %9175 = vmatprep.subr.mxu0 0.0
      %9176 = vmatpush1.msra.mxu0 0.0
      %9177 = vmatprep.subr.mxu0 0.0
      %9178 = vmatpush1.msra.mxu0 0.0
      %9179 = vmatprep.subr.mxu0 0.0
      %9180 = vmatpush1.msra.mxu0 0.0
      %9181 = vmatprep.subr.mxu0 0.0
      %9182 = vmatpush1.msra.mxu0 0.0
      %9183 = vmatprep.subr.mxu0 0.0
      %9184 = vmatpush1.msra.mxu0 0.0
      %9185 = vmatprep.subr.mxu0 0.0
      %9186 = vmatpush1.msra.mxu0 0.0
      %9187 = vmatprep.subr.mxu0 0.0
      %9188 = vmatpush1.msra.mxu0 0.0
      %9189 = vmatprep.subr.mxu0 0.0
      %9190 = vmatpush1.msra.mxu0 0.0
      %9191 = vmatprep.subr.mxu0 0.0
      %9192 = vmatpush1.msra.mxu0 0.0
      %9193 = vmatprep.subr.mxu0 0.0
      %9194 = vmatpush1.msra.mxu0 0.0
      %9195 = vmatprep.subr.mxu0 0.0
      %9196 = vmatpush1.msra.mxu0 0.0
      %9197 = vmatprep.subr.mxu0 0.0
      %9198 = vmatpush1.msra.mxu0 0.0
      %9199 = vmatprep.subr.mxu0 0.0
      %9200 = vmatpush1.msra.mxu0 0.0
      %9201 = vmatprep.subr.mxu0 0.0
      %9202 = vmatpush1.msra.mxu0 0.0
      %9203 = vmatprep.subr.mxu0 0.0
      %9204 = vmatpush1.msra.mxu0 0.0
      %9205 = vmatprep.mubr.f32.mxu0 0.0
      %9206 = vmatmul.mubr.f32.gmra.mrb[0].mxu0 %v8767
      %v9207 = vpop.f32.mrb[0].mxu0
      %v9208 = vadd.f32 0.0, %v9207
      %v9209 = vpop.f32.mrb[0].mxu0
      %9210 = vmatprep.mubr.f32.mxu0 0.0
      %9211 = vmatmul.mubr.f32.gmra.mrb[0].mxu0 %v8770
      %v9212 = vpop.f32.mrb[0].mxu0
      %v9213 = vadd.f32 0.0, %v9212
      %v9214 = vpop.f32.mrb[0].mxu0
      %9215 = vmatprep.mubr.f32.mxu0 0.0
      %9216 = vmatmul.mubr.f32.gmra.mrb[0].mxu0 %v8773
      %v9217 = vpop.f32.mrb[0].mxu0
      %v9218 = vadd.f32 0.0, %v9217
      %v9219 = vpop.f32.mrb[0].mxu0
      %9220 = vmatprep.mubr.f32.mxu0 0.0
      %9221 = vmatmul.mubr.f32.gmra.mrb[0].mxu0 %v8776
      %v9222 = vpop.f32.mrb[0].mxu0
      %v9223 = vadd.f32 0.0, %v9222
      %v9224 = vpop.f32.mrb[0].mxu0
      %9225 = vmatprep.mubr.f32.mxu0 0.0
      %9226 = vmatmul.mubr.f32.gmra.mrb[0].mxu0 %v8779
      %v9227 = vpop.f32.mrb[0].mxu0
      %v9228 = vadd.f32 0.0, %v9227
      %v9229 = vpop.f32.mrb[0].mxu0
      %9230 = vmatprep.mubr.f32.mxu0 0.0
      %9231 = vmatmul.mubr.f32.gmra.mrb[0].mxu0 %v8782
      %v9232 = vpop.f32.mrb[0].mxu0
      %v9233 = vadd.f32 0.0, %v9232
      %v9234 = vpop.f32.mrb[0].mxu0
      %9235 = vmatprep.mubr.f32.mxu0 0.0
      %9236 = vmatmul.mubr.f32.gmra.mrb[0].mxu0 %v8785
      %v9237 = vpop.f32.mrb[0].mxu0
      %v9238 = vadd.f32 0.0, %v9237
      %v9239 = vpop.f32.mrb[0].mxu0
      %9240 = vmatprep.mubr.f32.mxu0 0.0
      %9241 = vmatmul.mubr.f32.gmra.mrb[0].mxu0 %v8788
      %v9242 = vpop.f32.mrb[0].mxu0
      %v9243 = vadd.f32 0.0, %v9242
      %v9244 = vpop.f32.mrb[0].mxu0
      %9245 = vmatprep.mubr.f32.mxu0 0.0
      %9246 = vmatmul.mubr.f32.gmra.mrb[0].mxu0 %v8791
      %v9247 = vpop.f32.mrb[0].mxu0
      %v9248 = vadd.f32 0.0, %v9247
      %v9249 = vpop.f32.mrb[0].mxu0
      %9250 = vmatprep.mubr.f32.mxu0 0.0
      %9251 = vmatmul.mubr.f32.gmra.mrb[0].mxu0 %v8794
      %v9252 = vpop.f32.mrb[0].mxu0
      %v9253 = vadd.f32 0.0, %v9252
      %v9254 = vpop.f32.mrb[0].mxu0
      %9255 = vdwg.mxu0
      %v9256 = vadd.f32 %v8362, %v8863
      %v9257 = vadd.f32 %v8367, %v8868
      %v9258 = vadd.f32 %v8372, %v8873
      %v9259 = vadd.f32 %v8377, %v8878
      %v9260 = vadd.f32 %v8382, %v8883
      %v9261 = vadd.f32 %v8387, %v8888
      %v9262 = vadd.f32 %v8392, %v8893
      %v9263 = vadd.f32 %v8397, %v8898
      %v9264 = vadd.f32 %v8402, %v8903
      %v9265 = vadd.f32 %v8407, %v8908
      %v9266 = vadd.f32 %v8477, %v8978
      %v9267 = vadd.f32 %v8482, %v8983
      %v9268 = vadd.f32 %v8487, %v8988
      %v9269 = vadd.f32 %v8492, %v8993
      %v9270 = vadd.f32 %v8497, %v8998
      %v9271 = vadd.f32 %v8502, %v9003
      %v9272 = vadd.f32 %v8507, %v9008
      %v9273 = vadd.f32 %v8512, %v9013
      %v9274 = vadd.f32 %v8517, %v9018
      %v9275 = vadd.f32 %v8522, %v9023
      %v9276 = vadd.f32 %v8592, %v9093
      %v9277 = vadd.f32 %v8597, %v9098
      %v9278 = vadd.f32 %v8602, %v9103
      %v9279 = vadd.f32 %v8607, %v9108
      %v9280 = vadd.f32 %v8612, %v9113
      %v9281 = vadd.f32 %v8617, %v9118
      %v9282 = vadd.f32 %v8622, %v9123
      %v9283 = vadd.f32 %v8627, %v9128
      %v9284 = vadd.f32 %v8632, %v9133
      %v9285 = vadd.f32 %v8637, %v9138
      %v9286 = vadd.f32 %v8707, %v9208
      %v9287 = vadd.f32 %v8712, %v9213
      %v9288 = vadd.f32 %v8717, %v9218
      %v9289 = vadd.f32 %v8722, %v9223
      %v9290 = vadd.f32 %v8727, %v9228
      %v9291 = vadd.f32 %v8732, %v9233
      %v9292 = vadd.f32 %v8737, %v9238
      %v9293 = vadd.f32 %v8742, %v9243
      %v9294 = vadd.f32 %v8747, %v9248
      %v9295 = vadd.f32 %v8752, %v9253
      %v9296 = vld [vmem:[%s4] sm:$0xff]
      %v9297 = vld [vmem:[%s4 + $0x8] sm:$0xff]
      %v9298 = vld [vmem:[%s4 + $0x10] sm:$0xff]
      %v9299 = vld [vmem:[%s4 + $0x18] sm:$0xff]
      %v9300 = vld [vmem:[%s4 + $0x20] sm:$0xff]
      %v9301 = vld [vmem:[%s4 + $0x28] sm:$0xff]
      %v9302 = vld [vmem:[%s4 + $0x30] sm:$0xff]
      %v9303 = vld [vmem:[%s4 + $0x38] sm:$0xff]
      %v9304 = vld [vmem:[%s4 + $0x40] sm:$0xff]
      %v9305 = vld [vmem:[%s4 + $0x48] sm:$0xff]
      %9307 = vset.pattern.permute.xlu0 0
      %9308 = vperm.xlu0 %9307, %v9296
      %v9309 = vpop.permute.xlu0 %9308
      %9312 = vset.pattern.permute.xlu0 0
      %9313 = vperm.xlu0 %9312, %v9297
      %v9314 = vpop.permute.xlu0 %9313
      %9317 = vset.pattern.permute.xlu0 0
      %9318 = vperm.xlu0 %9317, %v9298
      %v9319 = vpop.permute.xlu0 %9318
      %9322 = vset.pattern.permute.xlu0 0
      %9323 = vperm.xlu0 %9322, %v9299
      %v9324 = vpop.permute.xlu0 %9323
      %9327 = vset.pattern.permute.xlu0 0
      %9328 = vperm.xlu0 %9327, %v9300
      %v9329 = vpop.permute.xlu0 %9328
      %9332 = vset.pattern.permute.xlu0 0
      %9333 = vperm.xlu0 %9332, %v9301
      %v9334 = vpop.permute.xlu0 %9333
      %9337 = vset.pattern.permute.xlu0 0
      %9338 = vperm.xlu0 %9337, %v9302
      %v9339 = vpop.permute.xlu0 %9338
      %9342 = vset.pattern.permute.xlu0 0
      %9343 = vperm.xlu0 %9342, %v9303
      %v9344 = vpop.permute.xlu0 %9343
      %9347 = vset.pattern.permute.xlu0 0
      %9348 = vperm.xlu0 %9347, %v9304
      %v9349 = vpop.permute.xlu0 %9348
      %9352 = vset.pattern.permute.xlu0 0
      %9353 = vperm.xlu0 %9352, %v9305
      %v9354 = vpop.permute.xlu0 %9353
      %v9356 = vadd.f32 %v9256, %v9309
      %v9357 = vadd.f32 %v9257, %v9314
      %v9358 = vadd.f32 %v9258, %v9319
      %v9359 = vadd.f32 %v9259, %v9324
      %v9360 = vadd.f32 %v9260, %v9329
      %v9361 = vadd.f32 %v9261, %v9334
      %v9362 = vadd.f32 %v9262, %v9339
      %v9363 = vadd.f32 %v9263, %v9344
      %v9364 = vadd.f32 %v9264, %v9349
      %v9365 = vadd.f32 %v9265, %v9354
      %v9366 = vadd.f32 %v9266, %v9309
      %v9367 = vadd.f32 %v9267, %v9314
      %v9368 = vadd.f32 %v9268, %v9319
      %v9369 = vadd.f32 %v9269, %v9324
      %v9370 = vadd.f32 %v9270, %v9329
      %v9371 = vadd.f32 %v9271, %v9334
      %v9372 = vadd.f32 %v9272, %v9339
      %v9373 = vadd.f32 %v9273, %v9344
      %v9374 = vadd.f32 %v9274, %v9349
      %v9375 = vadd.f32 %v9275, %v9354
      %v9376 = vadd.f32 %v9276, %v9309
      %v9377 = vadd.f32 %v9277, %v9314
      %v9378 = vadd.f32 %v9278, %v9319
      %v9379 = vadd.f32 %v9279, %v9324
      %v9380 = vadd.f32 %v9280, %v9329
      %v9381 = vadd.f32 %v9281, %v9334
      %v9382 = vadd.f32 %v9282, %v9339
      %v9383 = vadd.f32 %v9283, %v9344
      %v9384 = vadd.f32 %v9284, %v9349
      %v9385 = vadd.f32 %v9285, %v9354
      %v9386 = vadd.f32 %v9286, %v9309
      %v9387 = vadd.f32 %v9287, %v9314
      %v9388 = vadd.f32 %v9288, %v9319
      %v9389 = vadd.f32 %v9289, %v9324
      %v9390 = vadd.f32 %v9290, %v9329
      %v9391 = vadd.f32 %v9291, %v9334
      %v9392 = vadd.f32 %v9292, %v9339
      %v9393 = vadd.f32 %v9293, %v9344
      %v9394 = vadd.f32 %v9294, %v9349
      %v9395 = vadd.f32 %v9295, %v9354
      %v9396 = vmax.f32 %v9356, 0.0
      %v9397 = vmax.f32 %v9357, 0.0
      %v9398 = vmax.f32 %v9358, 0.0
      %v9399 = vmax.f32 %v9359, 0.0
      %v9400 = vmax.f32 %v9360, 0.0
      %v9401 = vmax.f32 %v9361, 0.0
      %v9402 = vmax.f32 %v9362, 0.0
      %v9403 = vmax.f32 %v9363, 0.0
      %v9404 = vmax.f32 %v9364, 0.0
      %v9405 = vmax.f32 %v9365, 0.0
      %v9406 = vmax.f32 %v9366, 0.0
      %v9407 = vmax.f32 %v9367, 0.0
      %v9408 = vmax.f32 %v9368, 0.0
      %v9409 = vmax.f32 %v9369, 0.0
      %v9410 = vmax.f32 %v9370, 0.0
      %v9411 = vmax.f32 %v9371, 0.0
      %v9412 = vmax.f32 %v9372, 0.0
      %v9413 = vmax.f32 %v9373, 0.0
      %v9414 = vmax.f32 %v9374, 0.0
      %v9415 = vmax.f32 %v9375, 0.0
      %v9416 = vmax.f32 %v9376, 0.0
      %v9417 = vmax.f32 %v9377, 0.0
      %v9418 = vmax.f32 %v9378, 0.0
      %v9419 = vmax.f32 %v9379, 0.0
      %v9420 = vmax.f32 %v9380, 0.0
      %v9421 = vmax.f32 %v9381, 0.0
      %v9422 = vmax.f32 %v9382, 0.0
      %v9423 = vmax.f32 %v9383, 0.0
      %v9424 = vmax.f32 %v9384, 0.0
      %v9425 = vmax.f32 %v9385, 0.0
      %v9426 = vmax.f32 %v9386, 0.0
      %v9427 = vmax.f32 %v9387, 0.0
      %v9428 = vmax.f32 %v9388, 0.0
      %v9429 = vmax.f32 %v9389, 0.0
      %v9430 = vmax.f32 %v9390, 0.0
      %v9431 = vmax.f32 %v9391, 0.0
      %v9432 = vmax.f32 %v9392, 0.0
      %v9433 = vmax.f32 %v9393, 0.0
      %v9434 = vmax.f32 %v9394, 0.0
      %v9435 = vmax.f32 %v9395, 0.0
      %v9436 = vmax.f32 %v7713, %v9396
      %v9437 = vmax.f32 %v7714, %v9397
      %v9438 = vmax.f32 %v7715, %v9398
      %v9439 = vmax.f32 %v7716, %v9399
      %v9440 = vmax.f32 %v7717, %v9400
      %v9441 = vmax.f32 %v7718, %v9401
      %v9442 = vmax.f32 %v7719, %v9402
      %v9443 = vmax.f32 %v7720, %v9403
      %v9444 = vmax.f32 %v7721, %v9404
      %v9445 = vmax.f32 %v7722, %v9405
      %v9446 = vmax.f32 %v7723, %v9406
      %v9447 = vmax.f32 %v7724, %v9407
      %v9448 = vmax.f32 %v7725, %v9408
      %v9449 = vmax.f32 %v7726, %v9409
      %v9450 = vmax.f32 %v7727, %v9410
      %v9451 = vmax.f32 %v7728, %v9411
      %v9452 = vmax.f32 %v7729, %v9412
      %v9453 = vmax.f32 %v7730, %v9413
      %v9454 = vmax.f32 %v7731, %v9414
      %v9455 = vmax.f32 %v7732, %v9415
      %v9456 = vmax.f32 %v7733, %v9416
      %v9457 = vmax.f32 %v7734, %v9417
      %v9458 = vmax.f32 %v7735, %v9418
      %v9459 = vmax.f32 %v7736, %v9419
      %v9460 = vmax.f32 %v7737, %v9420
      %v9461 = vmax.f32 %v7738, %v9421
      %v9462 = vmax.f32 %v7739, %v9422
      %v9463 = vmax.f32 %v7740, %v9423
      %v9464 = vmax.f32 %v7741, %v9424
      %v9465 = vmax.f32 %v7742, %v9425
      %v9466 = vmax.f32 %v7743, %v9426
      %v9467 = vmax.f32 %v7744, %v9427
      %v9468 = vmax.f32 %v7745, %v9428
      %v9469 = vmax.f32 %v7746, %v9429
      %v9470 = vmax.f32 %v7747, %v9430
      %v9471 = vmax.f32 %v7748, %v9431
      %v9472 = vmax.f32 %v7749, %v9432
      %v9473 = vmax.f32 %v7750, %v9433
      %v9474 = vmax.f32 %v7751, %v9434
      %v9475 = vmax.f32 %v7752, %v9435
      %v9476 = vld [vmem:[%s7] sm:$0x1f]
      %vm9477 = vcmask 89088
      %v9479 = vsel %vm9477, %v9476, 0
      %v9482 = vsel %vm9477, %v9436, 0
      %v9485 = vsel %vm9477, %v9437, 0
      %v9488 = vsel %vm9477, %v9438, 0
      %v9491 = vsel %vm9477, %v9439, 0
      %v9494 = vsel %vm9477, %v9440, 0
      %v9497 = vsel %vm9477, %v9441, 0
      %v9500 = vsel %vm9477, %v9442, 0
      %v9503 = vsel %vm9477, %v9443, 0
      %v9506 = vsel %vm9477, %v9444, 0
      %v9509 = vsel %vm9477, %v9445, 0
      %9511 = vmatprep.subr.mxu0 0.0
      %9512 = vmatpush1.xpose.msra.mxu0 %v9482
      %9513 = vmatprep.subr.mxu0 0.0
      %9514 = vmatpush1.xpose.msra.mxu0 %v9485
      %9515 = vmatprep.subr.mxu0 0.0
      %9516 = vmatpush1.xpose.msra.mxu0 %v9488
      %9517 = vmatprep.subr.mxu0 0.0
      %9518 = vmatpush1.xpose.msra.mxu0 %v9491
      %9519 = vmatprep.subr.mxu0 0.0
      %9520 = vmatpush1.xpose.msra.mxu0 %v9494
      %9521 = vmatprep.subr.mxu0 0.0
      %9522 = vmatpush1.xpose.msra.mxu0 %v9497
      %9523 = vmatprep.subr.mxu0 0.0
      %9524 = vmatpush1.xpose.msra.mxu0 %v9500
      %9525 = vmatprep.subr.mxu0 0.0
      %9526 = vmatpush1.xpose.msra.mxu0 %v9503
      %9527 = vmatprep.subr.mxu0 0.0
      %9528 = vmatpush1.xpose.msra.mxu0 %v9506
      %9529 = vmatprep.subr.mxu0 0.0
      %9530 = vmatpush1.xpose.msra.mxu0 %v9509
      %9531 = vmatprep.subr.mxu0 0.0
      %9532 = vmatpush1.xpose.msra.mxu0 0.0
      %9533 = vmatprep.subr.mxu0 0.0
      %9534 = vmatpush1.xpose.msra.mxu0 0.0
      %9535 = vmatprep.subr.mxu0 0.0
      %9536 = vmatpush1.xpose.msra.mxu0 0.0
      %9537 = vmatprep.subr.mxu0 0.0
      %9538 = vmatpush1.xpose.msra.mxu0 0.0
      %9539 = vmatprep.subr.mxu0 0.0
      %9540 = vmatpush1.xpose.msra.mxu0 0.0
      %9541 = vmatprep.subr.mxu0 0.0
      %9542 = vmatpush1.xpose.msra.mxu0 0.0
      %9543 = vmatprep.subr.mxu0 0.0
      %9544 = vmatpush1.xpose.msra.mxu0 0.0
      %9545 = vmatprep.subr.mxu0 0.0
      %9546 = vmatpush1.xpose.msra.mxu0 0.0
      %9547 = vmatprep.subr.mxu0 0.0
      %9548 = vmatpush1.xpose.msra.mxu0 0.0
      %9549 = vmatprep.subr.mxu0 0.0
      %9550 = vmatpush1.xpose.msra.mxu0 0.0
      %9551 = vmatprep.subr.mxu0 0.0
      %9552 = vmatpush1.xpose.msra.mxu0 0.0
      %9553 = vmatprep.subr.mxu0 0.0
      %9554 = vmatpush1.xpose.msra.mxu0 0.0
      %9555 = vmatprep.subr.mxu0 0.0
      %9556 = vmatpush1.xpose.msra.mxu0 0.0
      %9557 = vmatprep.subr.mxu0 0.0
      %9558 = vmatpush1.xpose.msra.mxu0 0.0
      %9559 = vmatprep.subr.mxu0 0.0
      %9560 = vmatpush1.xpose.msra.mxu0 0.0
      %9561 = vmatprep.subr.mxu0 0.0
      %9562 = vmatpush1.xpose.msra.mxu0 0.0
      %9563 = vmatprep.subr.mxu0 0.0
      %9564 = vmatpush1.xpose.msra.mxu0 0.0
      %9565 = vmatprep.subr.mxu0 0.0
      %9566 = vmatpush1.xpose.msra.mxu0 0.0
      %9567 = vmatprep.subr.mxu0 0.0
      %9568 = vmatpush1.xpose.msra.mxu0 0.0
      %9569 = vmatprep.subr.mxu0 0.0
      %9570 = vmatpush1.xpose.msra.mxu0 0.0
      %9571 = vmatprep.subr.mxu0 0.0
      %9572 = vmatpush1.xpose.msra.mxu0 0.0
      %9573 = vmatprep.subr.mxu0 0.0
      %9574 = vmatpush1.xpose.msra.mxu0 0.0
      %9575 = vmatprep.mubr.f32.mxu0 0.0
      %9576 = vmatmul.mubr.f32.gmra.mrb[0].mxu0 %v9479
      %v9577 = vpop.f32.mrb[0].mxu0
      %v9578 = vadd.f32 0.0, %v9577
      %v9579 = vpop.f32.mrb[0].mxu0
      %9580 = vdwg.mxu0
      %v9582 = vsel %vm9477, %v9446, 0
      %v9585 = vsel %vm9477, %v9447, 0
      %v9588 = vsel %vm9477, %v9448, 0
      %v9591 = vsel %vm9477, %v9449, 0
      %v9594 = vsel %vm9477, %v9450, 0
      %v9597 = vsel %vm9477, %v9451, 0
      %v9600 = vsel %vm9477, %v9452, 0
      %v9603 = vsel %vm9477, %v9453, 0
      %v9606 = vsel %vm9477, %v9454, 0
      %v9609 = vsel %vm9477, %v9455, 0
      %9611 = vmatprep.subr.mxu0 0.0
      %9612 = vmatpush1.xpose.msra.mxu0 %v9582
      %9613 = vmatprep.subr.mxu0 0.0
      %9614 = vmatpush1.xpose.msra.mxu0 %v9585
      %9615 = vmatprep.subr.mxu0 0.0
      %9616 = vmatpush1.xpose.msra.mxu0 %v9588
      %9617 = vmatprep.subr.mxu0 0.0
      %9618 = vmatpush1.xpose.msra.mxu0 %v9591
      %9619 = vmatprep.subr.mxu0 0.0
      %9620 = vmatpush1.xpose.msra.mxu0 %v9594
      %9621 = vmatprep.subr.mxu0 0.0
      %9622 = vmatpush1.xpose.msra.mxu0 %v9597
      %9623 = vmatprep.subr.mxu0 0.0
      %9624 = vmatpush1.xpose.msra.mxu0 %v9600
      %9625 = vmatprep.subr.mxu0 0.0
      %9626 = vmatpush1.xpose.msra.mxu0 %v9603
      %9627 = vmatprep.subr.mxu0 0.0
      %9628 = vmatpush1.xpose.msra.mxu0 %v9606
      %9629 = vmatprep.subr.mxu0 0.0
      %9630 = vmatpush1.xpose.msra.mxu0 %v9609
      %9631 = vmatprep.subr.mxu0 0.0
      %9632 = vmatpush1.xpose.msra.mxu0 0.0
      %9633 = vmatprep.subr.mxu0 0.0
      %9634 = vmatpush1.xpose.msra.mxu0 0.0
      %9635 = vmatprep.subr.mxu0 0.0
      %9636 = vmatpush1.xpose.msra.mxu0 0.0
      %9637 = vmatprep.subr.mxu0 0.0
      %9638 = vmatpush1.xpose.msra.mxu0 0.0
      %9639 = vmatprep.subr.mxu0 0.0
      %9640 = vmatpush1.xpose.msra.mxu0 0.0
      %9641 = vmatprep.subr.mxu0 0.0
      %9642 = vmatpush1.xpose.msra.mxu0 0.0
      %9643 = vmatprep.subr.mxu0 0.0
      %9644 = vmatpush1.xpose.msra.mxu0 0.0
      %9645 = vmatprep.subr.mxu0 0.0
      %9646 = vmatpush1.xpose.msra.mxu0 0.0
      %9647 = vmatprep.subr.mxu0 0.0
      %9648 = vmatpush1.xpose.msra.mxu0 0.0
      %9649 = vmatprep.subr.mxu0 0.0
      %9650 = vmatpush1.xpose.msra.mxu0 0.0
      %9651 = vmatprep.subr.mxu0 0.0
      %9652 = vmatpush1.xpose.msra.mxu0 0.0
      %9653 = vmatprep.subr.mxu0 0.0
      %9654 = vmatpush1.xpose.msra.mxu0 0.0
      %9655 = vmatprep.subr.mxu0 0.0
      %9656 = vmatpush1.xpose.msra.mxu0 0.0
      %9657 = vmatprep.subr.mxu0 0.0
      %9658 = vmatpush1.xpose.msra.mxu0 0.0
      %9659 = vmatprep.subr.mxu0 0.0
      %9660 = vmatpush1.xpose.msra.mxu0 0.0
      %9661 = vmatprep.subr.mxu0 0.0
      %9662 = vmatpush1.xpose.msra.mxu0 0.0
      %9663 = vmatprep.subr.mxu0 0.0
      %9664 = vmatpush1.xpose.msra.mxu0 0.0
      %9665 = vmatprep.subr.mxu0 0.0
      %9666 = vmatpush1.xpose.msra.mxu0 0.0
      %9667 = vmatprep.subr.mxu0 0.0
      %9668 = vmatpush1.xpose.msra.mxu0 0.0
      %9669 = vmatprep.subr.mxu0 0.0
      %9670 = vmatpush1.xpose.msra.mxu0 0.0
      %9671 = vmatprep.subr.mxu0 0.0
      %9672 = vmatpush1.xpose.msra.mxu0 0.0
      %9673 = vmatprep.subr.mxu0 0.0
      %9674 = vmatpush1.xpose.msra.mxu0 0.0
      %9675 = vmatprep.mubr.f32.mxu0 0.0
      %9676 = vmatmul.mubr.f32.gmra.mrb[0].mxu0 %v9479
      %v9677 = vpop.f32.mrb[0].mxu0
      %v9678 = vadd.f32 0.0, %v9677
      %v9679 = vpop.f32.mrb[0].mxu0
      %9680 = vdwg.mxu0
      %v9682 = vsel %vm9477, %v9456, 0
      %v9685 = vsel %vm9477, %v9457, 0
      %v9688 = vsel %vm9477, %v9458, 0
      %v9691 = vsel %vm9477, %v9459, 0
      %v9694 = vsel %vm9477, %v9460, 0
      %v9697 = vsel %vm9477, %v9461, 0
      %v9700 = vsel %vm9477, %v9462, 0
      %v9703 = vsel %vm9477, %v9463, 0
      %v9706 = vsel %vm9477, %v9464, 0
      %v9709 = vsel %vm9477, %v9465, 0
      %9711 = vmatprep.subr.mxu0 0.0
      %9712 = vmatpush1.xpose.msra.mxu0 %v9682
      %9713 = vmatprep.subr.mxu0 0.0
      %9714 = vmatpush1.xpose.msra.mxu0 %v9685
      %9715 = vmatprep.subr.mxu0 0.0
      %9716 = vmatpush1.xpose.msra.mxu0 %v9688
      %9717 = vmatprep.subr.mxu0 0.0
      %9718 = vmatpush1.xpose.msra.mxu0 %v9691
      %9719 = vmatprep.subr.mxu0 0.0
      %9720 = vmatpush1.xpose.msra.mxu0 %v9694
      %9721 = vmatprep.subr.mxu0 0.0
      %9722 = vmatpush1.xpose.msra.mxu0 %v9697
      %9723 = vmatprep.subr.mxu0 0.0
      %9724 = vmatpush1.xpose.msra.mxu0 %v9700
      %9725 = vmatprep.subr.mxu0 0.0
      %9726 = vmatpush1.xpose.msra.mxu0 %v9703
      %9727 = vmatprep.subr.mxu0 0.0
      %9728 = vmatpush1.xpose.msra.mxu0 %v9706
      %9729 = vmatprep.subr.mxu0 0.0
      %9730 = vmatpush1.xpose.msra.mxu0 %v9709
      %9731 = vmatprep.subr.mxu0 0.0
      %9732 = vmatpush1.xpose.msra.mxu0 0.0
      %9733 = vmatprep.subr.mxu0 0.0
      %9734 = vmatpush1.xpose.msra.mxu0 0.0
      %9735 = vmatprep.subr.mxu0 0.0
      %9736 = vmatpush1.xpose.msra.mxu0 0.0
      %9737 = vmatprep.subr.mxu0 0.0
      %9738 = vmatpush1.xpose.msra.mxu0 0.0
      %9739 = vmatprep.subr.mxu0 0.0
      %9740 = vmatpush1.xpose.msra.mxu0 0.0
      %9741 = vmatprep.subr.mxu0 0.0
      %9742 = vmatpush1.xpose.msra.mxu0 0.0
      %9743 = vmatprep.subr.mxu0 0.0
      %9744 = vmatpush1.xpose.msra.mxu0 0.0
      %9745 = vmatprep.subr.mxu0 0.0
      %9746 = vmatpush1.xpose.msra.mxu0 0.0
      %9747 = vmatprep.subr.mxu0 0.0
      %9748 = vmatpush1.xpose.msra.mxu0 0.0
      %9749 = vmatprep.subr.mxu0 0.0
      %9750 = vmatpush1.xpose.msra.mxu0 0.0
      %9751 = vmatprep.subr.mxu0 0.0
      %9752 = vmatpush1.xpose.msra.mxu0 0.0
      %9753 = vmatprep.subr.mxu0 0.0
      %9754 = vmatpush1.xpose.msra.mxu0 0.0
      %9755 = vmatprep.subr.mxu0 0.0
      %9756 = vmatpush1.xpose.msra.mxu0 0.0
      %9757 = vmatprep.subr.mxu0 0.0
      %9758 = vmatpush1.xpose.msra.mxu0 0.0
      %9759 = vmatprep.subr.mxu0 0.0
      %9760 = vmatpush1.xpose.msra.mxu0 0.0
      %9761 = vmatprep.subr.mxu0 0.0
      %9762 = vmatpush1.xpose.msra.mxu0 0.0
      %9763 = vmatprep.subr.mxu0 0.0
      %9764 = vmatpush1.xpose.msra.mxu0 0.0
      %9765 = vmatprep.subr.mxu0 0.0
      %9766 = vmatpush1.xpose.msra.mxu0 0.0
      %9767 = vmatprep.subr.mxu0 0.0
      %9768 = vmatpush1.xpose.msra.mxu0 0.0
      %9769 = vmatprep.subr.mxu0 0.0
      %9770 = vmatpush1.xpose.msra.mxu0 0.0
      %9771 = vmatprep.subr.mxu0 0.0
      %9772 = vmatpush1.xpose.msra.mxu0 0.0
      %9773 = vmatprep.subr.mxu0 0.0
      %9774 = vmatpush1.xpose.msra.mxu0 0.0
      %9775 = vmatprep.mubr.f32.mxu0 0.0
      %9776 = vmatmul.mubr.f32.gmra.mrb[0].mxu0 %v9479
      %v9777 = vpop.f32.mrb[0].mxu0
      %v9778 = vadd.f32 0.0, %v9777
      %v9779 = vpop.f32.mrb[0].mxu0
      %9780 = vdwg.mxu0
      %v9782 = vsel %vm9477, %v9466, 0
      %v9785 = vsel %vm9477, %v9467, 0
      %v9788 = vsel %vm9477, %v9468, 0
      %v9791 = vsel %vm9477, %v9469, 0
      %v9794 = vsel %vm9477, %v9470, 0
      %v9797 = vsel %vm9477, %v9471, 0
      %v9800 = vsel %vm9477, %v9472, 0
      %v9803 = vsel %vm9477, %v9473, 0
      %v9806 = vsel %vm9477, %v9474, 0
      %v9809 = vsel %vm9477, %v9475, 0
      %9811 = vmatprep.subr.mxu0 0.0
      %9812 = vmatpush1.xpose.msra.mxu0 %v9782
      %9813 = vmatprep.subr.mxu0 0.0
      %9814 = vmatpush1.xpose.msra.mxu0 %v9785
      %9815 = vmatprep.subr.mxu0 0.0
      %9816 = vmatpush1.xpose.msra.mxu0 %v9788
      %9817 = vmatprep.subr.mxu0 0.0
      %9818 = vmatpush1.xpose.msra.mxu0 %v9791
      %9819 = vmatprep.subr.mxu0 0.0
      %9820 = vmatpush1.xpose.msra.mxu0 %v9794
      %9821 = vmatprep.subr.mxu0 0.0
      %9822 = vmatpush1.xpose.msra.mxu0 %v9797
      %9823 = vmatprep.subr.mxu0 0.0
      %9824 = vmatpush1.xpose.msra.mxu0 %v9800
      %9825 = vmatprep.subr.mxu0 0.0
      %9826 = vmatpush1.xpose.msra.mxu0 %v9803
      %9827 = vmatprep.subr.mxu0 0.0
      %9828 = vmatpush1.xpose.msra.mxu0 %v9806
      %9829 = vmatprep.subr.mxu0 0.0
      %9830 = vmatpush1.xpose.msra.mxu0 %v9809
      %9831 = vmatprep.subr.mxu0 0.0
      %9832 = vmatpush1.xpose.msra.mxu0 0.0
      %9833 = vmatprep.subr.mxu0 0.0
      %9834 = vmatpush1.xpose.msra.mxu0 0.0
      %9835 = vmatprep.subr.mxu0 0.0
      %9836 = vmatpush1.xpose.msra.mxu0 0.0
      %9837 = vmatprep.subr.mxu0 0.0
      %9838 = vmatpush1.xpose.msra.mxu0 0.0
      %9839 = vmatprep.subr.mxu0 0.0
      %9840 = vmatpush1.xpose.msra.mxu0 0.0
      %9841 = vmatprep.subr.mxu0 0.0
      %9842 = vmatpush1.xpose.msra.mxu0 0.0
      %9843 = vmatprep.subr.mxu0 0.0
      %9844 = vmatpush1.xpose.msra.mxu0 0.0
      %9845 = vmatprep.subr.mxu0 0.0
      %9846 = vmatpush1.xpose.msra.mxu0 0.0
      %9847 = vmatprep.subr.mxu0 0.0
      %9848 = vmatpush1.xpose.msra.mxu0 0.0
      %9849 = vmatprep.subr.mxu0 0.0
      %9850 = vmatpush1.xpose.msra.mxu0 0.0
      %9851 = vmatprep.subr.mxu0 0.0
      %9852 = vmatpush1.xpose.msra.mxu0 0.0
      %9853 = vmatprep.subr.mxu0 0.0
      %9854 = vmatpush1.xpose.msra.mxu0 0.0
      %9855 = vmatprep.subr.mxu0 0.0
      %9856 = vmatpush1.xpose.msra.mxu0 0.0
      %9857 = vmatprep.subr.mxu0 0.0
      %9858 = vmatpush1.xpose.msra.mxu0 0.0
      %9859 = vmatprep.subr.mxu0 0.0
      %9860 = vmatpush1.xpose.msra.mxu0 0.0
      %9861 = vmatprep.subr.mxu0 0.0
      %9862 = vmatpush1.xpose.msra.mxu0 0.0
      %9863 = vmatprep.subr.mxu0 0.0
      %9864 = vmatpush1.xpose.msra.mxu0 0.0
      %9865 = vmatprep.subr.mxu0 0.0
      %9866 = vmatpush1.xpose.msra.mxu0 0.0
      %9867 = vmatprep.subr.mxu0 0.0
      %9868 = vmatpush1.xpose.msra.mxu0 0.0
      %9869 = vmatprep.subr.mxu0 0.0
      %9870 = vmatpush1.xpose.msra.mxu0 0.0
      %9871 = vmatprep.subr.mxu0 0.0
      %9872 = vmatpush1.xpose.msra.mxu0 0.0
      %9873 = vmatprep.subr.mxu0 0.0
      %9874 = vmatpush1.xpose.msra.mxu0 0.0
      %9875 = vmatprep.mubr.f32.mxu0 0.0
      %9876 = vmatmul.mubr.f32.gmra.mrb[0].mxu0 %v9479
      %v9877 = vpop.f32.mrb[0].mxu0
      %v9878 = vadd.f32 0.0, %v9877
      %v9879 = vpop.f32.mrb[0].mxu0
      %9880 = vdwg.mxu0
      %v9881 = vld [vmem:[%s8] sm:$0x1f]
      %v9883 = vsel %vm9477, %v9881, 0
      %9885 = vmatprep.subr.mxu0 0.0
      %9886 = vmatpush1.xpose.msra.mxu0 %v9482
      %9887 = vmatprep.subr.mxu0 0.0
      %9888 = vmatpush1.xpose.msra.mxu0 %v9485
      %9889 = vmatprep.subr.mxu0 0.0
      %9890 = vmatpush1.xpose.msra.mxu0 %v9488
      %9891 = vmatprep.subr.mxu0 0.0
      %9892 = vmatpush1.xpose.msra.mxu0 %v9491
      %9893 = vmatprep.subr.mxu0 0.0
      %9894 = vmatpush1.xpose.msra.mxu0 %v9494
      %9895 = vmatprep.subr.mxu0 0.0
      %9896 = vmatpush1.xpose.msra.mxu0 %v9497
      %9897 = vmatprep.subr.mxu0 0.0
      %9898 = vmatpush1.xpose.msra.mxu0 %v9500
      %9899 = vmatprep.subr.mxu0 0.0
      %9900 = vmatpush1.xpose.msra.mxu0 %v9503
      %9901 = vmatprep.subr.mxu0 0.0
      %9902 = vmatpush1.xpose.msra.mxu0 %v9506
      %9903 = vmatprep.subr.mxu0 0.0
      %9904 = vmatpush1.xpose.msra.mxu0 %v9509
      %9905 = vmatprep.subr.mxu0 0.0
      %9906 = vmatpush1.xpose.msra.mxu0 0.0
      %9907 = vmatprep.subr.mxu0 0.0
      %9908 = vmatpush1.xpose.msra.mxu0 0.0
      %9909 = vmatprep.subr.mxu0 0.0
      %9910 = vmatpush1.xpose.msra.mxu0 0.0
      %9911 = vmatprep.subr.mxu0 0.0
      %9912 = vmatpush1.xpose.msra.mxu0 0.0
      %9913 = vmatprep.subr.mxu0 0.0
      %9914 = vmatpush1.xpose.msra.mxu0 0.0
      %9915 = vmatprep.subr.mxu0 0.0
      %9916 = vmatpush1.xpose.msra.mxu0 0.0
      %9917 = vmatprep.subr.mxu0 0.0
      %9918 = vmatpush1.xpose.msra.mxu0 0.0
      %9919 = vmatprep.subr.mxu0 0.0
      %9920 = vmatpush1.xpose.msra.mxu0 0.0
      %9921 = vmatprep.subr.mxu0 0.0
      %9922 = vmatpush1.xpose.msra.mxu0 0.0
      %9923 = vmatprep.subr.mxu0 0.0
      %9924 = vmatpush1.xpose.msra.mxu0 0.0
      %9925 = vmatprep.subr.mxu0 0.0
      %9926 = vmatpush1.xpose.msra.mxu0 0.0
      %9927 = vmatprep.subr.mxu0 0.0
      %9928 = vmatpush1.xpose.msra.mxu0 0.0
      %9929 = vmatprep.subr.mxu0 0.0
      %9930 = vmatpush1.xpose.msra.mxu0 0.0
      %9931 = vmatprep.subr.mxu0 0.0
      %9932 = vmatpush1.xpose.msra.mxu0 0.0
      %9933 = vmatprep.subr.mxu0 0.0
      %9934 = vmatpush1.xpose.msra.mxu0 0.0
      %9935 = vmatprep.subr.mxu0 0.0
      %9936 = vmatpush1.xpose.msra.mxu0 0.0
      %9937 = vmatprep.subr.mxu0 0.0
      %9938 = vmatpush1.xpose.msra.mxu0 0.0
      %9939 = vmatprep.subr.mxu0 0.0
      %9940 = vmatpush1.xpose.msra.mxu0 0.0
      %9941 = vmatprep.subr.mxu0 0.0
      %9942 = vmatpush1.xpose.msra.mxu0 0.0
      %9943 = vmatprep.subr.mxu0 0.0
      %9944 = vmatpush1.xpose.msra.mxu0 0.0
      %9945 = vmatprep.subr.mxu0 0.0
      %9946 = vmatpush1.xpose.msra.mxu0 0.0
      %9947 = vmatprep.subr.mxu0 0.0
      %9948 = vmatpush1.xpose.msra.mxu0 0.0
      %9949 = vmatprep.mubr.f32.mxu0 0.0
      %9950 = vmatmul.mubr.f32.gmra.mrb[0].mxu0 %v9883
      %v9951 = vpop.f32.mrb[0].mxu0
      %v9952 = vadd.f32 0.0, %v9951
      %v9953 = vpop.f32.mrb[0].mxu0
      %9954 = vdwg.mxu0
      %9955 = vmatprep.subr.mxu0 0.0
      %9956 = vmatpush1.xpose.msra.mxu0 %v9582
      %9957 = vmatprep.subr.mxu0 0.0
      %9958 = vmatpush1.xpose.msra.mxu0 %v9585
      %9959 = vmatprep.subr.mxu0 0.0
      %9960 = vmatpush1.xpose.msra.mxu0 %v9588
      %9961 = vmatprep.subr.mxu0 0.0
      %9962 = vmatpush1.xpose.msra.mxu0 %v9591
      %9963 = vmatprep.subr.mxu0 0.0
      %9964 = vmatpush1.xpose.msra.mxu0 %v9594
      %9965 = vmatprep.subr.mxu0 0.0
      %9966 = vmatpush1.xpose.msra.mxu0 %v9597
      %9967 = vmatprep.subr.mxu0 0.0
      %9968 = vmatpush1.xpose.msra.mxu0 %v9600
      %9969 = vmatprep.subr.mxu0 0.0
      %9970 = vmatpush1.xpose.msra.mxu0 %v9603
      %9971 = vmatprep.subr.mxu0 0.0
      %9972 = vmatpush1.xpose.msra.mxu0 %v9606
      %9973 = vmatprep.subr.mxu0 0.0
      %9974 = vmatpush1.xpose.msra.mxu0 %v9609
      %9975 = vmatprep.subr.mxu0 0.0
      %9976 = vmatpush1.xpose.msra.mxu0 0.0
      %9977 = vmatprep.subr.mxu0 0.0
      %9978 = vmatpush1.xpose.msra.mxu0 0.0
      %9979 = vmatprep.subr.mxu0 0.0
      %9980 = vmatpush1.xpose.msra.mxu0 0.0
      %9981 = vmatprep.subr.mxu0 0.0
      %9982 = vmatpush1.xpose.msra.mxu0 0.0
      %9983 = vmatprep.subr.mxu0 0.0
      %9984 = vmatpush1.xpose.msra.mxu0 0.0
      %9985 = vmatprep.subr.mxu0 0.0
      %9986 = vmatpush1.xpose.msra.mxu0 0.0
      %9987 = vmatprep.subr.mxu0 0.0
      %9988 = vmatpush1.xpose.msra.mxu0 0.0
      %9989 = vmatprep.subr.mxu0 0.0
      %9990 = vmatpush1.xpose.msra.mxu0 0.0
      %9991 = vmatprep.subr.mxu0 0.0
      %9992 = vmatpush1.xpose.msra.mxu0 0.0
      %9993 = vmatprep.subr.mxu0 0.0
      %9994 = vmatpush1.xpose.msra.mxu0 0.0
      %9995 = vmatprep.subr.mxu0 0.0
      %9996 = vmatpush1.xpose.msra.mxu0 0.0
      %9997 = vmatprep.subr.mxu0 0.0
      %9998 = vmatpush1.xpose.msra.mxu0 0.0
      %9999 = vmatprep.subr.mxu0 0.0
      %10000 = vmatpush1.xpose.msra.mxu0 0.0
      %10001 = vmatprep.subr.mxu0 0.0
      %10002 = vmatpush1.xpose.msra.mxu0 0.0
      %10003 = vmatprep.subr.mxu0 0.0
      %10004 = vmatpush1.xpose.msra.mxu0 0.0
      %10005 = vmatprep.subr.mxu0 0.0
      %10006 = vmatpush1.xpose.msra.mxu0 0.0
      %10007 = vmatprep.subr.mxu0 0.0
      %10008 = vmatpush1.xpose.msra.mxu0 0.0
      %10009 = vmatprep.subr.mxu0 0.0
      %10010 = vmatpush1.xpose.msra.mxu0 0.0
      %10011 = vmatprep.subr.mxu0 0.0
      %10012 = vmatpush1.xpose.msra.mxu0 0.0
      %10013 = vmatprep.subr.mxu0 0.0
      %10014 = vmatpush1.xpose.msra.mxu0 0.0
      %10015 = vmatprep.subr.mxu0 0.0
      %10016 = vmatpush1.xpose.msra.mxu0 0.0
      %10017 = vmatprep.subr.mxu0 0.0
      %10018 = vmatpush1.xpose.msra.mxu0 0.0
      %10019 = vmatprep.mubr.f32.mxu0 0.0
      %10020 = vmatmul.mubr.f32.gmra.mrb[0].mxu0 %v9883
      %v10021 = vpop.f32.mrb[0].mxu0
      %v10022 = vadd.f32 0.0, %v10021
      %v10023 = vpop.f32.mrb[0].mxu0
      %10024 = vdwg.mxu0
      %10025 = vmatprep.subr.mxu0 0.0
      %10026 = vmatpush1.xpose.msra.mxu0 %v9682
      %10027 = vmatprep.subr.mxu0 0.0
      %10028 = vmatpush1.xpose.msra.mxu0 %v9685
      %10029 = vmatprep.subr.mxu0 0.0
      %10030 = vmatpush1.xpose.msra.mxu0 %v9688
      %10031 = vmatprep.subr.mxu0 0.0
      %10032 = vmatpush1.xpose.msra.mxu0 %v9691
      %10033 = vmatprep.subr.mxu0 0.0
      %10034 = vmatpush1.xpose.msra.mxu0 %v9694
      %10035 = vmatprep.subr.mxu0 0.0
      %10036 = vmatpush1.xpose.msra.mxu0 %v9697
      %10037 = vmatprep.subr.mxu0 0.0
      %10038 = vmatpush1.xpose.msra.mxu0 %v9700
      %10039 = vmatprep.subr.mxu0 0.0
      %10040 = vmatpush1.xpose.msra.mxu0 %v9703
      %10041 = vmatprep.subr.mxu0 0.0
      %10042 = vmatpush1.xpose.msra.mxu0 %v9706
      %10043 = vmatprep.subr.mxu0 0.0
      %10044 = vmatpush1.xpose.msra.mxu0 %v9709
      %10045 = vmatprep.subr.mxu0 0.0
      %10046 = vmatpush1.xpose.msra.mxu0 0.0
      %10047 = vmatprep.subr.mxu0 0.0
      %10048 = vmatpush1.xpose.msra.mxu0 0.0
      %10049 = vmatprep.subr.mxu0 0.0
      %10050 = vmatpush1.xpose.msra.mxu0 0.0
      %10051 = vmatprep.subr.mxu0 0.0
      %10052 = vmatpush1.xpose.msra.mxu0 0.0
      %10053 = vmatprep.subr.mxu0 0.0
      %10054 = vmatpush1.xpose.msra.mxu0 0.0
      %10055 = vmatprep.subr.mxu0 0.0
      %10056 = vmatpush1.xpose.msra.mxu0 0.0
      %10057 = vmatprep.subr.mxu0 0.0
      %10058 = vmatpush1.xpose.msra.mxu0 0.0
      %10059 = vmatprep.subr.mxu0 0.0
      %10060 = vmatpush1.xpose.msra.mxu0 0.0
      %10061 = vmatprep.subr.mxu0 0.0
      %10062 = vmatpush1.xpose.msra.mxu0 0.0
      %10063 = vmatprep.subr.mxu0 0.0
      %10064 = vmatpush1.xpose.msra.mxu0 0.0
      %10065 = vmatprep.subr.mxu0 0.0
      %10066 = vmatpush1.xpose.msra.mxu0 0.0
      %10067 = vmatprep.subr.mxu0 0.0
      %10068 = vmatpush1.xpose.msra.mxu0 0.0
      %10069 = vmatprep.subr.mxu0 0.0
      %10070 = vmatpush1.xpose.msra.mxu0 0.0
      %10071 = vmatprep.subr.mxu0 0.0
      %10072 = vmatpush1.xpose.msra.mxu0 0.0
      %10073 = vmatprep.subr.mxu0 0.0
      %10074 = vmatpush1.xpose.msra.mxu0 0.0
      %10075 = vmatprep.subr.mxu0 0.0
      %10076 = vmatpush1.xpose.msra.mxu0 0.0
      %10077 = vmatprep.subr.mxu0 0.0
      %10078 = vmatpush1.xpose.msra.mxu0 0.0
      %10079 = vmatprep.subr.mxu0 0.0
      %10080 = vmatpush1.xpose.msra.mxu0 0.0
      %10081 = vmatprep.subr.mxu0 0.0
      %10082 = vmatpush1.xpose.msra.mxu0 0.0
      %10083 = vmatprep.subr.mxu0 0.0
      %10084 = vmatpush1.xpose.msra.mxu0 0.0
      %10085 = vmatprep.subr.mxu0 0.0
      %10086 = vmatpush1.xpose.msra.mxu0 0.0
      %10087 = vmatprep.subr.mxu0 0.0
      %10088 = vmatpush1.xpose.msra.mxu0 0.0
      %10089 = vmatprep.mubr.f32.mxu0 0.0
      %10090 = vmatmul.mubr.f32.gmra.mrb[0].mxu0 %v9883
      %v10091 = vpop.f32.mrb[0].mxu0
      %v10092 = vadd.f32 0.0, %v10091
      %v10093 = vpop.f32.mrb[0].mxu0
      %10094 = vdwg.mxu0
      %10095 = vmatprep.subr.mxu0 0.0
      %10096 = vmatpush1.xpose.msra.mxu0 %v9782
      %10097 = vmatprep.subr.mxu0 0.0
      %10098 = vmatpush1.xpose.msra.mxu0 %v9785
      %10099 = vmatprep.subr.mxu0 0.0
      %10100 = vmatpush1.xpose.msra.mxu0 %v9788
      %10101 = vmatprep.subr.mxu0 0.0
      %10102 = vmatpush1.xpose.msra.mxu0 %v9791
      %10103 = vmatprep.subr.mxu0 0.0
      %10104 = vmatpush1.xpose.msra.mxu0 %v9794
      %10105 = vmatprep.subr.mxu0 0.0
      %10106 = vmatpush1.xpose.msra.mxu0 %v9797
      %10107 = vmatprep.subr.mxu0 0.0
      %10108 = vmatpush1.xpose.msra.mxu0 %v9800
      %10109 = vmatprep.subr.mxu0 0.0
      %10110 = vmatpush1.xpose.msra.mxu0 %v9803
      %10111 = vmatprep.subr.mxu0 0.0
      %10112 = vmatpush1.xpose.msra.mxu0 %v9806
      %10113 = vmatprep.subr.mxu0 0.0
      %10114 = vmatpush1.xpose.msra.mxu0 %v9809
      %10115 = vmatprep.subr.mxu0 0.0
      %10116 = vmatpush1.xpose.msra.mxu0 0.0
      %10117 = vmatprep.subr.mxu0 0.0
      %10118 = vmatpush1.xpose.msra.mxu0 0.0
      %10119 = vmatprep.subr.mxu0 0.0
      %10120 = vmatpush1.xpose.msra.mxu0 0.0
      %10121 = vmatprep.subr.mxu0 0.0
      %10122 = vmatpush1.xpose.msra.mxu0 0.0
      %10123 = vmatprep.subr.mxu0 0.0
      %10124 = vmatpush1.xpose.msra.mxu0 0.0
      %10125 = vmatprep.subr.mxu0 0.0
      %10126 = vmatpush1.xpose.msra.mxu0 0.0
      %10127 = vmatprep.subr.mxu0 0.0
      %10128 = vmatpush1.xpose.msra.mxu0 0.0
      %10129 = vmatprep.subr.mxu0 0.0
      %10130 = vmatpush1.xpose.msra.mxu0 0.0
      %10131 = vmatprep.subr.mxu0 0.0
      %10132 = vmatpush1.xpose.msra.mxu0 0.0
      %10133 = vmatprep.subr.mxu0 0.0
      %10134 = vmatpush1.xpose.msra.mxu0 0.0
      %10135 = vmatprep.subr.mxu0 0.0
      %10136 = vmatpush1.xpose.msra.mxu0 0.0
      %10137 = vmatprep.subr.mxu0 0.0
      %10138 = vmatpush1.xpose.msra.mxu0 0.0
      %10139 = vmatprep.subr.mxu0 0.0
      %10140 = vmatpush1.xpose.msra.mxu0 0.0
      %10141 = vmatprep.subr.mxu0 0.0
      %10142 = vmatpush1.xpose.msra.mxu0 0.0
      %10143 = vmatprep.subr.mxu0 0.0
      %10144 = vmatpush1.xpose.msra.mxu0 0.0
      %10145 = vmatprep.subr.mxu0 0.0
      %10146 = vmatpush1.xpose.msra.mxu0 0.0
      %10147 = vmatprep.subr.mxu0 0.0
      %10148 = vmatpush1.xpose.msra.mxu0 0.0
      %10149 = vmatprep.subr.mxu0 0.0
      %10150 = vmatpush1.xpose.msra.mxu0 0.0
      %10151 = vmatprep.subr.mxu0 0.0
      %10152 = vmatpush1.xpose.msra.mxu0 0.0
      %10153 = vmatprep.subr.mxu0 0.0
      %10154 = vmatpush1.xpose.msra.mxu0 0.0
      %10155 = vmatprep.subr.mxu0 0.0
      %10156 = vmatpush1.xpose.msra.mxu0 0.0
      %10157 = vmatprep.subr.mxu0 0.0
      %10158 = vmatpush1.xpose.msra.mxu0 0.0
      %10159 = vmatprep.mubr.f32.mxu0 0.0
      %10160 = vmatmul.mubr.f32.gmra.mrb[0].mxu0 %v9883
      %v10161 = vpop.f32.mrb[0].mxu0
      %v10162 = vadd.f32 0.0, %v10161
      %v10163 = vpop.f32.mrb[0].mxu0
      %10164 = vdwg.mxu0
      %v10165 = vmax.f32 %v9578, %v9952
      %v10166 = vmax.f32 %v9678, %v10022
      %v10167 = vmax.f32 %v9778, %v10092
      %v10168 = vmax.f32 %v9878, %v10162
      %vm10169 = vcmask 651264
      %10170 = vst.msk [vmem:[%s337] sm:$0x1f] %vm10169, %v10165
      %10171 = vst.msk [vmem:[%s337 + $0x8] sm:$0x1f] %vm10169, %v10166
      %10172 = vst.msk [vmem:[%s337 + $0x10] sm:$0x1f] %vm10169, %v10167
      %10173 = vst.msk [vmem:[%s337 + $0x18] sm:$0x1f] %vm10169, %v10168
      %s10174 = smul.u32 4, %s20
      %p10175 = scmp.lt.s32.totalorder %s10174, 7
      %s10176 = scalar_select %p10175, %s10174, 7
      %s10177 = smul.addr %s10176, 8
      %s10178 = scalar_lea.vmem %s9, %s10177
      // Predicated region
      $region57: #{net_forward.2} parent=55 // pred_check
        %p10179 = pneg %p232
      $region58: #{net_forward.2} parent=55 // pred_check_branch
        %10181 = sbr.rel (%p10179) target = $region60
      $region59: #{net_forward.2} parent=55 // pred_region
        %s10182 = smul.u32 4, %s20
      $region60: #{net_forward.2} parent=55 // pred_fallthru
        _
    $region56: #{net_forward.2} parent=5 // pred_fallthru
      _
    %p10183 = scmp.le.s32.totalorder 2, %s15
    // Predicated region
    $region61: #{net_forward.2} parent=5 // pred_check
      %p10184 = pneg %p10183
    $region62: #{net_forward.2} parent=5 // pred_check_branch
      %10186 = sbr.rel (%p10184) target = $region64
    $region63: #{net_forward.2} parent=5 // pred_region
      %s10187 = ssub.s32 %s15, 2
      // Predicated region
      $region65: #{net_forward.2} parent=63 // pred_check
        %p10188 = pneg %p238
      $region66: #{net_forward.2} parent=63 // pred_check_branch
        %10190 = sbr.rel (%p10188) target = $region68
      $region67: #{net_forward.2} parent=63 // pred_region
        %s10191 = smul.u32 4, %s21
        %p10192 = scmp.lt.s32.totalorder %s10191, 7
        %s10193 = scalar_select %p10192, %s10191, 7
        %s10194 = smul.addr %s10193, 8
        %s10195 = scalar_lea.vmem %s9, %s10194
      $region68: #{net_forward.2} parent=63 // pred_fallthru
        _
    $region64: #{net_forward.2} parent=5 // pred_fallthru
      _
  $region6: #{net_forward.2} parent=0 // loop_footer
    %s19 = sadd.s32 1, %s15
  $region7: #{net_forward.2} parent=0 // loop_footer_branch
    %14 = sbr.rel target = $region3
  $region8: #{net_forward.2} parent=0 // loop_exit
    _

</llo_original>
